<compile_context>
chip_gen: v6e
topology: v6e:2x2x1
jax: 0.10.0
libtpu: 0.0.40
codegen_flags: <defaults>
</compile_context>

<pallas_src>
import functools

import jax
import jax.numpy as jnp
from jax.experimental import pallas as pl
from jax.experimental.pallas import tpu as pltpu


def _round_up(x, m):
    return (x + m - 1) // m * m


# --------------------------------------------------------------------------
# Kernel 1: conv-as-matmul with fused per-channel sum / sum-of-squares.
#   grid = (n_m, n_k); accumulate directly into the resident output block.
# --------------------------------------------------------------------------
def _conv_matmul_kernel(a_ref, b_ref, o_ref, sum_ref, sq_ref, *, m_valid, tm):
    m = pl.program_id(0)
    k = pl.program_id(1)

    @pl.when(k == 0)
    def _():
        o_ref[...] = jnp.zeros_like(o_ref)

    o_ref[...] += jnp.dot(a_ref[...], b_ref[...],
                          preferred_element_type=jnp.float32)

    @pl.when(k == pl.num_programs(1) - 1)
    def _():
        out = o_ref[...]                                   # (tm, Npad)
        npad = out.shape[1]
        # Mask padded rows so BatchNorm statistics only see real pixels.
        row = jax.lax.broadcasted_iota(jnp.int32, out.shape, 0) + m * tm
        masked = jnp.where(row < m_valid, out, 0.0)
        # Partial (sublane-grouped) column sums for this M tile: (8, Npad).
        grouped = masked.reshape(tm // 8, 8, npad)
        sum_ref[...] = jnp.sum(grouped, axis=0)
        sq_ref[...] = jnp.sum(grouped * grouped, axis=0)


# --------------------------------------------------------------------------
# Kernel 2: BatchNorm (precomputed per-channel scale/shift) + activation.
# Writes only the valid Cout lanes (output array is (Mpad, Cout)).
# --------------------------------------------------------------------------
def _bn_act_kernel(x_ref, scale_ref, shift_ref, o_ref, *, sigmoid):
    y = x_ref[...] * scale_ref[...] + shift_ref[...]
    if sigmoid:
        y = 1.0 / (1.0 + jnp.exp(-y))
    else:
        y = jnp.maximum(y, 0.0)
    o_ref[...] = y[:, :o_ref.shape[1]]


# --------------------------------------------------------------------------
# One Patch_Conv layer: Conv2d(k=4, stride, pad=1) -> BatchNorm2d -> act.
# x is NHWC; returns NHWC.
# --------------------------------------------------------------------------
_TM_TARGET = 512    # rows per M tile
_TK_TARGET = 1024   # contraction depth per K step


def patch_conv_layer(x, w, gamma, beta, *, stride, sigmoid):
    # x: (N, H, W, Cin), w: (Cout, Cin, 4, 4), gamma/beta: (Cout,)
    N, H, W, Cin = x.shape
    Cout = w.shape[0]
    kh = kw = 4

    # --- im2col (XLA glue), NHWC -> (M, K) with K ordered (tap, cin) ---------
    xp = jnp.pad(x, ((0, 0), (1, 1), (1, 1), (0, 0)))
    Hp, Wp = H + 2, W + 2
    Ho = (Hp - kh) // stride + 1
    Wo = (Wp - kw) // stride + 1
    cols = []
    for i in range(kh):
        for j in range(kw):
            cols.append(xp[:, i:i + stride * Ho:stride,
                            j:j + stride * Wo:stride, :])    # (N, Ho, Wo, Cin)
    # Concatenate along the lane (channel) axis: contiguous per-tap slabs,
    # and the trailing reshape to (M, K) is free.
    patches = jnp.concatenate(cols, axis=-1)                  # (N, Ho, Wo, 16*Cin)
    M = N * Ho * Wo
    K = kh * kw * Cin
    patches = patches.reshape(M, K)

    # --- tiling (bounded VMEM, pipelined DMA, megacore-splittable M axis) ---
    if M <= _TM_TARGET:
        Mpad = _round_up(M, 8)
        tm = Mpad
    else:
        Mpad = _round_up(M, _TM_TARGET)
        tm = _TM_TARGET
    Kpad = _round_up(K, 128)
    if Kpad <= _TK_TARGET:
        tk = Kpad
    else:
        Kpad = _round_up(Kpad, _TK_TARGET)
        tk = _TK_TARGET
    Npad = _round_up(Cout, 128)
    n_m = Mpad // tm
    n_k = Kpad // tk

    a = patches
    if (Mpad, Kpad) != (M, K):
        a = jnp.pad(patches, ((0, Mpad - M), (0, Kpad - K)))
    # Weight as (K, Cout) with K ordered (tap, cin) to match the im2col above.
    wmat = w.transpose(2, 3, 1, 0).reshape(K, Cout)
    b_mat = wmat
    if (Kpad, Npad) != (K, Cout):
        b_mat = jnp.pad(wmat, ((0, Kpad - K), (0, Npad - Cout)))

    out, psum, psq = pl.pallas_call(
        functools.partial(_conv_matmul_kernel, m_valid=M, tm=tm),
        out_shape=(jax.ShapeDtypeStruct((Mpad, Npad), jnp.float32),
                   jax.ShapeDtypeStruct((n_m * 8, Npad), jnp.float32),
                   jax.ShapeDtypeStruct((n_m * 8, Npad), jnp.float32)),
        grid_spec=pltpu.PrefetchScalarGridSpec(
            num_scalar_prefetch=0,
            grid=(n_m, n_k),
            in_specs=[pl.BlockSpec((tm, tk), lambda m, k: (m, k)),
                      pl.BlockSpec((tk, Npad), lambda m, k: (k, 0))],
            out_specs=[pl.BlockSpec((tm, Npad), lambda m, k: (m, 0)),
                       pl.BlockSpec((8, Npad), lambda m, k: (m, 0)),
                       pl.BlockSpec((8, Npad), lambda m, k: (m, 0))]),
        compiler_params=pltpu.CompilerParams(
            dimension_semantics=("parallel", "arbitrary")),
    )(a, b_mat)

    # --- per-channel batch stats -> BN scale/shift (tiny (Npad,) glue) ------
    csum = jnp.sum(psum, axis=0)                              # (Npad,)
    csq = jnp.sum(psq, axis=0)
    mean = csum / M
    var = jnp.maximum(csq / M - mean * mean, 0.0)             # biased var (train-mode BN)
    inv = jax.lax.rsqrt(var + 1e-5)
    g = gamma if Cout == Npad else jnp.pad(gamma, (0, Npad - Cout))
    bt = beta if Cout == Npad else jnp.pad(beta, (0, Npad - Cout))
    gi = g * inv
    scale = gi.reshape(1, Npad)
    shift = (bt - mean * gi).reshape(1, Npad)

    # --- BN + activation, M-tiled / pipelined; writes unpadded channel width -
    y = pl.pallas_call(
        functools.partial(_bn_act_kernel, sigmoid=sigmoid),
        out_shape=jax.ShapeDtypeStruct((Mpad, Cout), jnp.float32),
        grid_spec=pltpu.PrefetchScalarGridSpec(
            num_scalar_prefetch=0,
            grid=(n_m,),
            in_specs=[pl.BlockSpec((tm, Npad), lambda m: (m, 0)),
                      pl.BlockSpec((1, Npad), lambda m: (0, 0)),
                      pl.BlockSpec((1, Npad), lambda m: (0, 0))],
            out_specs=pl.BlockSpec((tm, Cout), lambda m: (m, 0))),
        compiler_params=pltpu.CompilerParams(
            dimension_semantics=("parallel",)),
    )(out, scale, shift)

    # keep NHWC for the next layer (no transpose needed)
    return y[:M].reshape(N, Ho, Wo, Cout)


# --------------------------------------------------------------------------
# PatchGan = 5 Patch_Conv layers
# --------------------------------------------------------------------------
_LAYER_CFG = [  # (out_channels, stride, sigmoid)
    (64, 2, False),
    (128, 2, False),
    (256, 2, False),
    (512, 1, False),
    (1, 1, True),
]


def init_patchgan_params(input_channel, key):
    params = []
    cin = input_channel
    for (cout, _, _) in _LAYER_CFG:
        key, kw_, kb_, kg_, kbe_ = jax.random.split(key, 5)
        w = jax.random.normal(kw_, (cout, cin, 4, 4), jnp.float32) * 0.05
        b = jax.random.normal(kb_, (cout,), jnp.float32) * 0.05
        gamma = 1.0 + 0.1 * jax.random.normal(kg_, (cout,), jnp.float32)
        beta = 0.1 * jax.random.normal(kbe_, (cout,), jnp.float32)
        params.append((w, b, gamma, beta))
        cin = cout
    return params


def patchgan_forward(x, params):
    # x: NCHW (PyTorch layout); convert once to NHWC, run, convert back once.
    out = jnp.transpose(x, (0, 2, 3, 1))
    for (w, b, gamma, beta), (_, stride, sigmoid) in zip(params, _LAYER_CFG):
        del b  # Conv bias cancels exactly under train-mode BatchNorm.
        out = patch_conv_layer(out, w, gamma, beta,
                               stride=stride, sigmoid=sigmoid)
    return jnp.transpose(out, (0, 3, 1, 2))


# --------------------------------------------------------------------------
# Pure-JAX reference (for a sanity check only)
# --------------------------------------------------------------------------
def _reference_forward(x, params):
    out = x
    for (w, b, gamma, beta), (_, stride, sigmoid) in zip(params, _LAYER_CFG):
        out = jax.lax.conv_general_dilated(
            out, w, window_strides=(stride, stride),
            padding=((1, 1), (1, 1)),
            dimension_numbers=('NCHW', 'OIHW', 'NCHW'))
        out = out + b[None, :, None, None]
        mean = jnp.mean(out, axis=(0, 2, 3), keepdims=True)
        var = jnp.var(out, axis=(0, 2, 3), keepdims=True)
        out = (out - mean) * jax.lax.rsqrt(var + 1e-5)
        out = out * gamma[None, :, None, None] + beta[None, :, None, None]
        out = jax.nn.sigmoid(out) if sigmoid else jnp.maximum(out, 0.0)
    return out


if __name__ == "__main__":
    key = jax.random.PRNGKey(0)
    k_x, k_p = jax.random.split(key)

    # Small but valid input: spatial 32 so that all five layers (three stride-2,
    # two stride-1 with k=4, p=1) yield positive output sizes: 32->16->8->4->3->2.
    input_channel = 4
    x = jax.random.normal(k_x, (2, input_channel, 32, 32), jnp.float32)
    params = init_patchgan_params(input_channel, k_p)

    out = jax.jit(patchgan_forward)(x, params)
    out = jax.block_until_ready(out)

    assert out.shape == (2, 1, 2, 2), out.shape

    ref = jax.block_until_ready(_reference_forward(x, params))
    assert jnp.all(jnp.isfinite(out))
    assert jnp.allclose(out, ref, atol=1e-3, rtol=1e-3), (
        float(jnp.max(jnp.abs(out - ref))))

    print("KERNEL_OK")
</pallas_src>

<mosaic_0001>
module attributes {stable_mosaic.version = 11 : i64} {
  func.func @_conv_matmul_kernel(%arg0: i32, %arg1: i32, %arg2: memref<512x128xf32, #tpu.memory_space<vmem>>, %arg3: memref<128x128xf32, #tpu.memory_space<vmem>>, %arg4: memref<512x128xf32, #tpu.memory_space<vmem>>, %arg5: memref<8x128xf32, #tpu.memory_space<vmem>>, %arg6: memref<8x128xf32, #tpu.memory_space<vmem>>) attributes {dimension_semantics = [#tpu.dimension_semantics<parallel>, #tpu.dimension_semantics<arbitrary>], iteration_bounds = array<i64: 1, 1>, scalar_prefetch = 0 : i64, scratch_operands = 0 : i64, tpu.core_type = #tpu.core_type<tc>, window_params = [{transform_indices = @transform_0, window_bounds = array<i64: 512, 128>}, {transform_indices = @transform_1, window_bounds = array<i64: 128, 128>}, {transform_indices = @transform_2, window_bounds = array<i64: 512, 128>}, {transform_indices = @transform_3, window_bounds = array<i64: 8, 128>}, {transform_indices = @transform_4, window_bounds = array<i64: 8, 128>}]} {
    %c0_i32 = arith.constant 0 : i32
    %0 = arith.cmpi eq, %arg1, %c0_i32 : i32
    %1 = arith.extui %0 : i1 to i32
    %c0_i32_0 = arith.constant 0 : i32
    %2 = arith.cmpi ne, %1, %c0_i32_0 : i32
    scf.if %2 {
      %cst_10 = arith.constant 0.000000e+00 : f32
      %12 = vector.broadcast %cst_10 : f32 to vector<512x128xf32>
      %c0_11 = arith.constant 0 : index
      %c0_12 = arith.constant 0 : index
      %13 = vector.load %arg4[%c0_11, %c0_12] : memref<512x128xf32, #tpu.memory_space<vmem>>, vector<512x128xf32>
      tpu.vector_store %arg4[%c0_11, %c0_12], %12 {strides = array<i32>} : memref<512x128xf32, #tpu.memory_space<vmem>>, vector<512x128xf32>,
    } else {
    }
    %c0 = arith.constant 0 : index
    %c0_1 = arith.constant 0 : index
    %3 = vector.load %arg4[%c0, %c0_1] : memref<512x128xf32, #tpu.memory_space<vmem>>, vector<512x128xf32>
    %c0_2 = arith.constant 0 : index
    %c0_3 = arith.constant 0 : index
    %4 = vector.load %arg2[%c0_2, %c0_3] : memref<512x128xf32, #tpu.memory_space<vmem>>, vector<512x128xf32>
    %c0_4 = arith.constant 0 : index
    %c0_5 = arith.constant 0 : index
    %5 = vector.load %arg3[%c0_4, %c0_5] : memref<128x128xf32, #tpu.memory_space<vmem>>, vector<128x128xf32>
    %cst = arith.constant dense<0.000000e+00> : vector<512x128xf32>
    %6 = tpu.matmul %4, %5, %cst {dimension_numbers = #tpu.dot_dimension_numbers<[1], [0], [0], [1], [0, 0, 1, 1], [], []>} : vector<512x128xf32>, vector<128x128xf32>, vector<512x128xf32> -> vector<512x128xf32>
    %7 = arith.addf %3, %6 : vector<512x128xf32>
    %c0_6 = arith.constant 0 : index
    %c0_7 = arith.constant 0 : index
    %8 = vector.load %arg4[%c0_6, %c0_7] : memref<512x128xf32, #tpu.memory_space<vmem>>, vector<512x128xf32>
    tpu.vector_store %arg4[%c0_6, %c0_7], %7 {strides = array<i32>} : memref<512x128xf32, #tpu.memory_space<vmem>>, vector<512x128xf32>,
    %c0_i32_8 = arith.constant 0 : i32
    %9 = arith.cmpi eq, %arg1, %c0_i32_8 : i32
    %10 = arith.extui %9 : i1 to i32
    %c0_i32_9 = arith.constant 0 : i32
    %11 = arith.cmpi ne, %10, %c0_i32_9 : i32
    scf.if %11 {
      %c0_10 = arith.constant 0 : index
      %c0_11 = arith.constant 0 : index
      %12 = vector.load %arg4[%c0_10, %c0_11] : memref<512x128xf32, #tpu.memory_space<vmem>>, vector<512x128xf32>
      %13 = tpu.iota {dimensions = array<i32: 0>} : vector<512x128xi32>
      %c512_i32 = arith.constant 512 : i32
      %14 = arith.muli %arg0, %c512_i32 : i32
      %15 = vector.broadcast %14 : i32 to vector<512x128xi32>
      %16 = arith.addi %13, %15 : vector<512x128xi32>
      %c512_i32_12 = arith.constant 512 : i32
      %17 = vector.broadcast %c512_i32_12 : i32 to vector<512x128xi32>
      %18 = arith.cmpi slt, %16, %17 : vector<512x128xi32>
      %cst_13 = arith.constant 0.000000e+00 : f32
      %19 = vector.broadcast %cst_13 : f32 to vector<512x128xf32>
      %20 = arith.select %18, %12, %19 : vector<512x128xi1>, vector<512x128xf32>
      %21 = vector.shape_cast %20 : vector<512x128xf32> to vector<64x8x128xf32>
      %cst_14 = arith.constant dense<0.000000e+00> : vector<8x128xf32>
      %22 = vector.multi_reduction <add>, %21, %cst_14 [0] : vector<64x8x128xf32> to vector<8x128xf32>
      %c0_15 = arith.constant 0 : index
      %c0_16 = arith.constant 0 : index
      %23 = vector.load %arg5[%c0_15, %c0_16] : memref<8x128xf32, #tpu.memory_space<vmem>>, vector<8x128xf32>
      tpu.vector_store %arg5[%c0_15, %c0_16], %22 {strides = array<i32>} : memref<8x128xf32, #tpu.memory_space<vmem>>, vector<8x128xf32>,
      %24 = arith.mulf %21, %21 : vector<64x8x128xf32>
      %cst_17 = arith.constant dense<0.000000e+00> : vector<8x128xf32>
      %25 = vector.multi_reduction <add>, %24, %cst_17 [0] : vector<64x8x128xf32> to vector<8x128xf32>
      %c0_18 = arith.constant 0 : index
      %c0_19 = arith.constant 0 : index
      %26 = vector.load %arg6[%c0_18, %c0_19] : memref<8x128xf32, #tpu.memory_space<vmem>>, vector<8x128xf32>
      tpu.vector_store %arg6[%c0_18, %c0_19], %25 {strides = array<i32>} : memref<8x128xf32, #tpu.memory_space<vmem>>, vector<8x128xf32>,
    } else {
    }
    return
  }
  func.func @transform_0(%arg0: i32, %arg1: i32) -> (i32, i32) {
    %c0_i32 = arith.constant 0 : i32
    return %arg0, %arg1 : i32, i32
  }
  func.func @transform_1(%arg0: i32, %arg1: i32) -> (i32, i32) {
    %c0_i32 = arith.constant 0 : i32
    %c0_i32_0 = arith.constant 0 : i32
    return %arg1, %c0_i32 : i32, i32
  }
  func.func @transform_2(%arg0: i32, %arg1: i32) -> (i32, i32) {
    %c0_i32 = arith.constant 0 : i32
    %c0_i32_0 = arith.constant 0 : i32
    return %arg0, %c0_i32 : i32, i32
  }
  func.func @transform_3(%arg0: i32, %arg1: i32) -> (i32, i32) {
    %c0_i32 = arith.constant 0 : i32
    %c0_i32_0 = arith.constant 0 : i32
    return %arg0, %c0_i32 : i32, i32
  }
  func.func @transform_4(%arg0: i32, %arg1: i32) -> (i32, i32) {
    %c0_i32 = arith.constant 0 : i32
    %c0_i32_0 = arith.constant 0 : i32
    return %arg0, %c0_i32 : i32, i32
  }
}

module attributes {stable_mosaic.version = 11 : i64} {
  func.func @_bn_act_kernel(%arg0: i32, %arg1: memref<512x128xf32, #tpu.memory_space<vmem>>, %arg2: memref<1x128xf32, #tpu.memory_space<vmem>>, %arg3: memref<1x128xf32, #tpu.memory_space<vmem>>, %arg4: memref<512x64xf32, #tpu.memory_space<vmem>>) attributes {dimension_semantics = [#tpu.dimension_semantics<parallel>], iteration_bounds = array<i64: 1>, scalar_prefetch = 0 : i64, scratch_operands = 0 : i64, tpu.core_type = #tpu.core_type<tc>, window_params = [{transform_indices = @transform_0, window_bounds = array<i64: 512, 128>}, {pipeline_mode = #tpu.pipeline_mode<synchronous>, transform_indices = @transform_1, window_bounds = array<i64: 1, 128>}, {pipeline_mode = #tpu.pipeline_mode<synchronous>, transform_indices = @transform_2, window_bounds = array<i64: 1, 128>}, {transform_indices = @transform_3, window_bounds = array<i64: 512, 64>}]} {
    %c0 = arith.constant 0 : index
    %c0_0 = arith.constant 0 : index
    %0 = vector.load %arg1[%c0, %c0_0] : memref<512x128xf32, #tpu.memory_space<vmem>>, vector<512x128xf32>
    %c0_1 = arith.constant 0 : index
    %c0_2 = arith.constant 0 : index
    %1 = vector.load %arg2[%c0_1, %c0_2] : memref<1x128xf32, #tpu.memory_space<vmem>>, vector<1x128xf32>
    %2 = vector.broadcast %1 : vector<1x128xf32> to vector<512x128xf32>
    %3 = arith.mulf %0, %2 : vector<512x128xf32>
    %c0_3 = arith.constant 0 : index
    %c0_4 = arith.constant 0 : index
    %4 = vector.load %arg3[%c0_3, %c0_4] : memref<1x128xf32, #tpu.memory_space<vmem>>, vector<1x128xf32>
    %5 = vector.broadcast %4 : vector<1x128xf32> to vector<512x128xf32>
    %6 = arith.addf %3, %5 : vector<512x128xf32>
    %cst = arith.constant 0.000000e+00 : f32
    %7 = vector.broadcast %cst : f32 to vector<512x128xf32>
    %8 = arith.maximumf %6, %7 : vector<512x128xf32>
    %9 = vector.extract_strided_slice %8 {offsets = [0, 0], sizes = [512, 64], strides = [1, 1]} : vector<512x128xf32> to vector<512x64xf32>
    %c0_5 = arith.constant 0 : index
    %c0_6 = arith.constant 0 : index
    %10 = vector.load %arg4[%c0_5, %c0_6] : memref<512x64xf32, #tpu.memory_space<vmem>>, vector<512x64xf32>
    tpu.vector_store %arg4[%c0_5, %c0_6], %9 {strides = array<i32>} : memref<512x64xf32, #tpu.memory_space<vmem>>, vector<512x64xf32>,
    return
  }
  func.func @transform_0(%arg0: i32) -> (i32, i32) {
    %c0_i32 = arith.constant 0 : i32
    %c0_i32_0 = arith.constant 0 : i32
    return %arg0, %c0_i32 : i32, i32
  }
  func.func @transform_1(%arg0: i32) -> (i32, i32) {
    %c0_i32 = arith.constant 0 : i32
    %c0_i32_0 = arith.constant 0 : i32
    %c0_i32_1 = arith.constant 0 : i32
    return %c0_i32, %c0_i32_0 : i32, i32
  }
  func.func @transform_2(%arg0: i32) -> (i32, i32) {
    %c0_i32 = arith.constant 0 : i32
    %c0_i32_0 = arith.constant 0 : i32
    %c0_i32_1 = arith.constant 0 : i32
    return %c0_i32, %c0_i32_0 : i32, i32
  }
  func.func @transform_3(%arg0: i32) -> (i32, i32) {
    %c0_i32 = arith.constant 0 : i32
    %c0_i32_0 = arith.constant 0 : i32
    return %arg0, %c0_i32 : i32, i32
  }
}

module attributes {stable_mosaic.version = 11 : i64} {
  func.func @_conv_matmul_kernel(%arg0: i32, %arg1: i32, %arg2: memref<128x1024xf32, #tpu.memory_space<vmem>>, %arg3: memref<1024x128xf32, #tpu.memory_space<vmem>>, %arg4: memref<128x128xf32, #tpu.memory_space<vmem>>, %arg5: memref<8x128xf32, #tpu.memory_space<vmem>>, %arg6: memref<8x128xf32, #tpu.memory_space<vmem>>) attributes {dimension_semantics = [#tpu.dimension_semantics<parallel>, #tpu.dimension_semantics<arbitrary>], iteration_bounds = array<i64: 1, 1>, scalar_prefetch = 0 : i64, scratch_operands = 0 : i64, tpu.core_type = #tpu.core_type<tc>, window_params = [{transform_indices = @transform_0, window_bounds = array<i64: 128, 1024>}, {transform_indices = @transform_1, window_bounds = array<i64: 1024, 128>}, {transform_indices = @transform_2, window_bounds = array<i64: 128, 128>}, {transform_indices = @transform_3, window_bounds = array<i64: 8, 128>}, {transform_indices = @transform_4, window_bounds = array<i64: 8, 128>}]} {
    %c0_i32 = arith.constant 0 : i32
    %0 = arith.cmpi eq, %arg1, %c0_i32 : i32
    %1 = arith.extui %0 : i1 to i32
    %c0_i32_0 = arith.constant 0 : i32
    %2 = arith.cmpi ne, %1, %c0_i32_0 : i32
    scf.if %2 {
      %cst_10 = arith.constant 0.000000e+00 : f32
      %12 = vector.broadcast %cst_10 : f32 to vector<128x128xf32>
      %c0_11 = arith.constant 0 : index
      %c0_12 = arith.constant 0 : index
      %13 = vector.load %arg4[%c0_11, %c0_12] : memref<128x128xf32, #tpu.memory_space<vmem>>, vector<128x128xf32>
      tpu.vector_store %arg4[%c0_11, %c0_12], %12 {strides = array<i32>} : memref<128x128xf32, #tpu.memory_space<vmem>>, vector<128x128xf32>,
    } else {
    }
    %c0 = arith.constant 0 : index
    %c0_1 = arith.constant 0 : index
    %3 = vector.load %arg4[%c0, %c0_1] : memref<128x128xf32, #tpu.memory_space<vmem>>, vector<128x128xf32>
    %c0_2 = arith.constant 0 : index
    %c0_3 = arith.constant 0 : index
    %4 = vector.load %arg2[%c0_2, %c0_3] : memref<128x1024xf32, #tpu.memory_space<vmem>>, vector<128x1024xf32>
    %c0_4 = arith.constant 0 : index
    %c0_5 = arith.constant 0 : index
    %5 = vector.load %arg3[%c0_4, %c0_5] : memref<1024x128xf32, #tpu.memory_space<vmem>>, vector<1024x128xf32>
    %cst = arith.constant dense<0.000000e+00> : vector<128x128xf32>
    %6 = tpu.matmul %4, %5, %cst {dimension_numbers = #tpu.dot_dimension_numbers<[1], [0], [0], [1], [0, 0, 1, 1], [], []>} : vector<128x1024xf32>, vector<1024x128xf32>, vector<128x128xf32> -> vector<128x128xf32>
    %7 = arith.addf %3, %6 : vector<128x128xf32>
    %c0_6 = arith.constant 0 : index
    %c0_7 = arith.constant 0 : index
    %8 = vector.load %arg4[%c0_6, %c0_7] : memref<128x128xf32, #tpu.memory_space<vmem>>, vector<128x128xf32>
    tpu.vector_store %arg4[%c0_6, %c0_7], %7 {strides = array<i32>} : memref<128x128xf32, #tpu.memory_space<vmem>>, vector<128x128xf32>,
    %c0_i32_8 = arith.constant 0 : i32
    %9 = arith.cmpi eq, %arg1, %c0_i32_8 : i32
    %10 = arith.extui %9 : i1 to i32
    %c0_i32_9 = arith.constant 0 : i32
    %11 = arith.cmpi ne, %10, %c0_i32_9 : i32
    scf.if %11 {
      %c0_10 = arith.constant 0 : index
      %c0_11 = arith.constant 0 : index
      %12 = vector.load %arg4[%c0_10, %c0_11] : memref<128x128xf32, #tpu.memory_space<vmem>>, vector<128x128xf32>
      %13 = tpu.iota {dimensions = array<i32: 0>} : vector<128x128xi32>
      %c128_i32 = arith.constant 128 : i32
      %14 = arith.muli %arg0, %c128_i32 : i32
      %15 = vector.broadcast %14 : i32 to vector<128x128xi32>
      %16 = arith.addi %13, %15 : vector<128x128xi32>
      %c128_i32_12 = arith.constant 128 : i32
      %17 = vector.broadcast %c128_i32_12 : i32 to vector<128x128xi32>
      %18 = arith.cmpi slt, %16, %17 : vector<128x128xi32>
      %cst_13 = arith.constant 0.000000e+00 : f32
      %19 = vector.broadcast %cst_13 : f32 to vector<128x128xf32>
      %20 = arith.select %18, %12, %19 : vector<128x128xi1>, vector<128x128xf32>
      %21 = vector.shape_cast %20 : vector<128x128xf32> to vector<16x8x128xf32>
      %cst_14 = arith.constant dense<0.000000e+00> : vector<8x128xf32>
      %22 = vector.multi_reduction <add>, %21, %cst_14 [0] : vector<16x8x128xf32> to vector<8x128xf32>
      %c0_15 = arith.constant 0 : index
      %c0_16 = arith.constant 0 : index
      %23 = vector.load %arg5[%c0_15, %c0_16] : memref<8x128xf32, #tpu.memory_space<vmem>>, vector<8x128xf32>
      tpu.vector_store %arg5[%c0_15, %c0_16], %22 {strides = array<i32>} : memref<8x128xf32, #tpu.memory_space<vmem>>, vector<8x128xf32>,
      %24 = arith.mulf %21, %21 : vector<16x8x128xf32>
      %cst_17 = arith.constant dense<0.000000e+00> : vector<8x128xf32>
      %25 = vector.multi_reduction <add>, %24, %cst_17 [0] : vector<16x8x128xf32> to vector<8x128xf32>
      %c0_18 = arith.constant 0 : index
      %c0_19 = arith.constant 0 : index
      %26 = vector.load %arg6[%c0_18, %c0_19] : memref<8x128xf32, #tpu.memory_space<vmem>>, vector<8x128xf32>
      tpu.vector_store %arg6[%c0_18, %c0_19], %25 {strides = array<i32>} : memref<8x128xf32, #tpu.memory_space<vmem>>, vector<8x128xf32>,
    } else {
    }
    return
  }
  func.func @transform_0(%arg0: i32, %arg1: i32) -> (i32, i32) {
    %c0_i32 = arith.constant 0 : i32
    return %arg0, %arg1 : i32, i32
  }
  func.func @transform_1(%arg0: i32, %arg1: i32) -> (i32, i32) {
    %c0_i32 = arith.constant 0 : i32
    %c0_i32_0 = arith.constant 0 : i32
    return %arg1, %c0_i32 : i32, i32
  }
  func.func @transform_2(%arg0: i32, %arg1: i32) -> (i32, i32) {
    %c0_i32 = arith.constant 0 : i32
    %c0_i32_0 = arith.constant 0 : i32
    return %arg0, %c0_i32 : i32, i32
  }
  func.func @transform_3(%arg0: i32, %arg1: i32) -> (i32, i32) {
    %c0_i32 = arith.constant 0 : i32
    %c0_i32_0 = arith.constant 0 : i32
    return %arg0, %c0_i32 : i32, i32
  }
  func.func @transform_4(%arg0: i32, %arg1: i32) -> (i32, i32) {
    %c0_i32 = arith.constant 0 : i32
    %c0_i32_0 = arith.constant 0 : i32
    return %arg0, %c0_i32 : i32, i32
  }
}

module attributes {stable_mosaic.version = 11 : i64} {
  func.func @_bn_act_kernel(%arg0: i32, %arg1: memref<128x128xf32, #tpu.memory_space<vmem>>, %arg2: memref<1x128xf32, #tpu.memory_space<vmem>>, %arg3: memref<1x128xf32, #tpu.memory_space<vmem>>, %arg4: memref<128x128xf32, #tpu.memory_space<vmem>>) attributes {dimension_semantics = [#tpu.dimension_semantics<parallel>], iteration_bounds = array<i64: 1>, scalar_prefetch = 0 : i64, scratch_operands = 0 : i64, tpu.core_type = #tpu.core_type<tc>, window_params = [{transform_indices = @transform_0, window_bounds = array<i64: 128, 128>}, {pipeline_mode = #tpu.pipeline_mode<synchronous>, transform_indices = @transform_1, window_bounds = array<i64: 1, 128>}, {pipeline_mode = #tpu.pipeline_mode<synchronous>, transform_indices = @transform_2, window_bounds = array<i64: 1, 128>}, {transform_indices = @transform_3, window_bounds = array<i64: 128, 128>}]} {
    %c0 = arith.constant 0 : index
    %c0_0 = arith.constant 0 : index
    %0 = vector.load %arg1[%c0, %c0_0] : memref<128x128xf32, #tpu.memory_space<vmem>>, vector<128x128xf32>
    %c0_1 = arith.constant 0 : index
    %c0_2 = arith.constant 0 : index
    %1 = vector.load %arg2[%c0_1, %c0_2] : memref<1x128xf32, #tpu.memory_space<vmem>>, vector<1x128xf32>
    %2 = vector.broadcast %1 : vector<1x128xf32> to vector<128x128xf32>
    %3 = arith.mulf %0, %2 : vector<128x128xf32>
    %c0_3 = arith.constant 0 : index
    %c0_4 = arith.constant 0 : index
    %4 = vector.load %arg3[%c0_3, %c0_4] : memref<1x128xf32, #tpu.memory_space<vmem>>, vector<1x128xf32>
    %5 = vector.broadcast %4 : vector<1x128xf32> to vector<128x128xf32>
    %6 = arith.addf %3, %5 : vector<128x128xf32>
    %cst = arith.constant 0.000000e+00 : f32
    %7 = vector.broadcast %cst : f32 to vector<128x128xf32>
    %8 = arith.maximumf %6, %7 : vector<128x128xf32>
    %c0_5 = arith.constant 0 : index
    %c0_6 = arith.constant 0 : index
    %9 = vector.load %arg4[%c0_5, %c0_6] : memref<128x128xf32, #tpu.memory_space<vmem>>, vector<128x128xf32>
    tpu.vector_store %arg4[%c0_5, %c0_6], %8 {strides = array<i32>} : memref<128x128xf32, #tpu.memory_space<vmem>>, vector<128x128xf32>,
    return
  }
  func.func @transform_0(%arg0: i32) -> (i32, i32) {
    %c0_i32 = arith.constant 0 : i32
    %c0_i32_0 = arith.constant 0 : i32
    return %arg0, %c0_i32 : i32, i32
  }
  func.func @transform_1(%arg0: i32) -> (i32, i32) {
    %c0_i32 = arith.constant 0 : i32
    %c0_i32_0 = arith.constant 0 : i32
    %c0_i32_1 = arith.constant 0 : i32
    return %c0_i32, %c0_i32_0 : i32, i32
  }
  func.func @transform_2(%arg0: i32) -> (i32, i32) {
    %c0_i32 = arith.constant 0 : i32
    %c0_i32_0 = arith.constant 0 : i32
    %c0_i32_1 = arith.constant 0 : i32
    return %c0_i32, %c0_i32_0 : i32, i32
  }
  func.func @transform_3(%arg0: i32) -> (i32, i32) {
    %c0_i32 = arith.constant 0 : i32
    %c0_i32_0 = arith.constant 0 : i32
    return %arg0, %c0_i32 : i32, i32
  }
}

module attributes {stable_mosaic.version = 11 : i64} {
  func.func @_bn_act_kernel(%arg0: i32, %arg1: memref<32x256xf32, #tpu.memory_space<vmem>>, %arg2: memref<1x256xf32, #tpu.memory_space<vmem>>, %arg3: memref<1x256xf32, #tpu.memory_space<vmem>>, %arg4: memref<32x256xf32, #tpu.memory_space<vmem>>) attributes {dimension_semantics = [#tpu.dimension_semantics<parallel>], iteration_bounds = array<i64: 1>, scalar_prefetch = 0 : i64, scratch_operands = 0 : i64, tpu.core_type = #tpu.core_type<tc>, window_params = [{transform_indices = @transform_0, window_bounds = array<i64: 32, 256>}, {pipeline_mode = #tpu.pipeline_mode<synchronous>, transform_indices = @transform_1, window_bounds = array<i64: 1, 256>}, {pipeline_mode = #tpu.pipeline_mode<synchronous>, transform_indices = @transform_2, window_bounds = array<i64: 1, 256>}, {transform_indices = @transform_3, window_bounds = array<i64: 32, 256>}]} {
    %c0 = arith.constant 0 : index
    %c0_0 = arith.constant 0 : index
    %0 = vector.load %arg1[%c0, %c0_0] : memref<32x256xf32, #tpu.memory_space<vmem>>, vector<32x256xf32>
    %c0_1 = arith.constant 0 : index
    %c0_2 = arith.constant 0 : index
    %1 = vector.load %arg2[%c0_1, %c0_2] : memref<1x256xf32, #tpu.memory_space<vmem>>, vector<1x256xf32>
    %2 = vector.broadcast %1 : vector<1x256xf32> to vector<32x256xf32>
    %3 = arith.mulf %0, %2 : vector<32x256xf32>
    %c0_3 = arith.constant 0 : index
    %c0_4 = arith.constant 0 : index
    %4 = vector.load %arg3[%c0_3, %c0_4] : memref<1x256xf32, #tpu.memory_space<vmem>>, vector<1x256xf32>
    %5 = vector.broadcast %4 : vector<1x256xf32> to vector<32x256xf32>
    %6 = arith.addf %3, %5 : vector<32x256xf32>
    %cst = arith.constant 0.000000e+00 : f32
    %7 = vector.broadcast %cst : f32 to vector<32x256xf32>
    %8 = arith.maximumf %6, %7 : vector<32x256xf32>
    %c0_5 = arith.constant 0 : index
    %c0_6 = arith.constant 0 : index
    %9 = vector.load %arg4[%c0_5, %c0_6] : memref<32x256xf32, #tpu.memory_space<vmem>>, vector<32x256xf32>
    tpu.vector_store %arg4[%c0_5, %c0_6], %8 {strides = array<i32>} : memref<32x256xf32, #tpu.memory_space<vmem>>, vector<32x256xf32>,
    return
  }
  func.func @transform_0(%arg0: i32) -> (i32, i32) {
    %c0_i32 = arith.constant 0 : i32
    %c0_i32_0 = arith.constant 0 : i32
    return %arg0, %c0_i32 : i32, i32
  }
  func.func @transform_1(%arg0: i32) -> (i32, i32) {
    %c0_i32 = arith.constant 0 : i32
    %c0_i32_0 = arith.constant 0 : i32
    %c0_i32_1 = arith.constant 0 : i32
    return %c0_i32, %c0_i32_0 : i32, i32
  }
  func.func @transform_2(%arg0: i32) -> (i32, i32) {
    %c0_i32 = arith.constant 0 : i32
    %c0_i32_0 = arith.constant 0 : i32
    %c0_i32_1 = arith.constant 0 : i32
    return %c0_i32, %c0_i32_0 : i32, i32
  }
  func.func @transform_3(%arg0: i32) -> (i32, i32) {
    %c0_i32 = arith.constant 0 : i32
    %c0_i32_0 = arith.constant 0 : i32
    return %arg0, %c0_i32 : i32, i32
  }
}

module attributes {stable_mosaic.version = 11 : i64} {
  func.func @_conv_matmul_kernel(%arg0: i32, %arg1: i32, %arg2: memref<32x1024xf32, #tpu.memory_space<vmem>>, %arg3: memref<1024x256xf32, #tpu.memory_space<vmem>>, %arg4: memref<32x256xf32, #tpu.memory_space<vmem>>, %arg5: memref<8x256xf32, #tpu.memory_space<vmem>>, %arg6: memref<8x256xf32, #tpu.memory_space<vmem>>) attributes {dimension_semantics = [#tpu.dimension_semantics<parallel>, #tpu.dimension_semantics<arbitrary>], iteration_bounds = array<i64: 1, 2>, scalar_prefetch = 0 : i64, scratch_operands = 0 : i64, tpu.core_type = #tpu.core_type<tc>, window_params = [{transform_indices = @transform_0, window_bounds = array<i64: 32, 1024>}, {transform_indices = @transform_1, window_bounds = array<i64: 1024, 256>}, {transform_indices = @transform_2, window_bounds = array<i64: 32, 256>}, {transform_indices = @transform_3, window_bounds = array<i64: 8, 256>}, {transform_indices = @transform_4, window_bounds = array<i64: 8, 256>}]} {
    %c0_i32 = arith.constant 0 : i32
    %0 = arith.cmpi eq, %arg1, %c0_i32 : i32
    %1 = arith.extui %0 : i1 to i32
    %c0_i32_0 = arith.constant 0 : i32
    %2 = arith.cmpi ne, %1, %c0_i32_0 : i32
    scf.if %2 {
      %cst_9 = arith.constant 0.000000e+00 : f32
      %12 = vector.broadcast %cst_9 : f32 to vector<32x256xf32>
      %c0_10 = arith.constant 0 : index
      %c0_11 = arith.constant 0 : index
      %13 = vector.load %arg4[%c0_10, %c0_11] : memref<32x256xf32, #tpu.memory_space<vmem>>, vector<32x256xf32>
      tpu.vector_store %arg4[%c0_10, %c0_11], %12 {strides = array<i32>} : memref<32x256xf32, #tpu.memory_space<vmem>>, vector<32x256xf32>,
    } else {
    }
    %c0 = arith.constant 0 : index
    %c0_1 = arith.constant 0 : index
    %3 = vector.load %arg4[%c0, %c0_1] : memref<32x256xf32, #tpu.memory_space<vmem>>, vector<32x256xf32>
    %c0_2 = arith.constant 0 : index
    %c0_3 = arith.constant 0 : index
    %4 = vector.load %arg2[%c0_2, %c0_3] : memref<32x1024xf32, #tpu.memory_space<vmem>>, vector<32x1024xf32>
    %c0_4 = arith.constant 0 : index
    %c0_5 = arith.constant 0 : index
    %5 = vector.load %arg3[%c0_4, %c0_5] : memref<1024x256xf32, #tpu.memory_space<vmem>>, vector<1024x256xf32>
    %cst = arith.constant dense<0.000000e+00> : vector<32x256xf32>
    %6 = tpu.matmul %4, %5, %cst {dimension_numbers = #tpu.dot_dimension_numbers<[1], [0], [0], [1], [0, 0, 1, 1], [], []>} : vector<32x1024xf32>, vector<1024x256xf32>, vector<32x256xf32> -> vector<32x256xf32>
    %7 = arith.addf %3, %6 : vector<32x256xf32>
    %c0_6 = arith.constant 0 : index
    %c0_7 = arith.constant 0 : index
    %8 = vector.load %arg4[%c0_6, %c0_7] : memref<32x256xf32, #tpu.memory_space<vmem>>, vector<32x256xf32>
    tpu.vector_store %arg4[%c0_6, %c0_7], %7 {strides = array<i32>} : memref<32x256xf32, #tpu.memory_space<vmem>>, vector<32x256xf32>,
    %c1_i32 = arith.constant 1 : i32
    %9 = arith.cmpi eq, %arg1, %c1_i32 : i32
    %10 = arith.extui %9 : i1 to i32
    %c0_i32_8 = arith.constant 0 : i32
    %11 = arith.cmpi ne, %10, %c0_i32_8 : i32
    scf.if %11 {
      %c0_9 = arith.constant 0 : index
      %c0_10 = arith.constant 0 : index
      %12 = vector.load %arg4[%c0_9, %c0_10] : memref<32x256xf32, #tpu.memory_space<vmem>>, vector<32x256xf32>
      %13 = tpu.iota {dimensions = array<i32: 0>} : vector<32x256xi32>
      %c32_i32 = arith.constant 32 : i32
      %14 = arith.muli %arg0, %c32_i32 : i32
      %15 = vector.broadcast %14 : i32 to vector<32x256xi32>
      %16 = arith.addi %13, %15 : vector<32x256xi32>
      %c32_i32_11 = arith.constant 32 : i32
      %17 = vector.broadcast %c32_i32_11 : i32 to vector<32x256xi32>
      %18 = arith.cmpi slt, %16, %17 : vector<32x256xi32>
      %cst_12 = arith.constant 0.000000e+00 : f32
      %19 = vector.broadcast %cst_12 : f32 to vector<32x256xf32>
      %20 = arith.select %18, %12, %19 : vector<32x256xi1>, vector<32x256xf32>
      %21 = vector.shape_cast %20 : vector<32x256xf32> to vector<4x8x256xf32>
      %cst_13 = arith.constant dense<0.000000e+00> : vector<8x256xf32>
      %22 = vector.multi_reduction <add>, %21, %cst_13 [0] : vector<4x8x256xf32> to vector<8x256xf32>
      %c0_14 = arith.constant 0 : index
      %c0_15 = arith.constant 0 : index
      %23 = vector.load %arg5[%c0_14, %c0_15] : memref<8x256xf32, #tpu.memory_space<vmem>>, vector<8x256xf32>
      tpu.vector_store %arg5[%c0_14, %c0_15], %22 {strides = array<i32>} : memref<8x256xf32, #tpu.memory_space<vmem>>, vector<8x256xf32>,
      %24 = arith.mulf %21, %21 : vector<4x8x256xf32>
      %cst_16 = arith.constant dense<0.000000e+00> : vector<8x256xf32>
      %25 = vector.multi_reduction <add>, %24, %cst_16 [0] : vector<4x8x256xf32> to vector<8x256xf32>
      %c0_17 = arith.constant 0 : index
      %c0_18 = arith.constant 0 : index
      %26 = vector.load %arg6[%c0_17, %c0_18] : memref<8x256xf32, #tpu.memory_space<vmem>>, vector<8x256xf32>
      tpu.vector_store %arg6[%c0_17, %c0_18], %25 {strides = array<i32>} : memref<8x256xf32, #tpu.memory_space<vmem>>, vector<8x256xf32>,
    } else {
    }
    return
  }
  func.func @transform_0(%arg0: i32, %arg1: i32) -> (i32, i32) {
    %c0_i32 = arith.constant 0 : i32
    return %arg0, %arg1 : i32, i32
  }
  func.func @transform_1(%arg0: i32, %arg1: i32) -> (i32, i32) {
    %c0_i32 = arith.constant 0 : i32
    %c0_i32_0 = arith.constant 0 : i32
    return %arg1, %c0_i32 : i32, i32
  }
  func.func @transform_2(%arg0: i32, %arg1: i32) -> (i32, i32) {
    %c0_i32 = arith.constant 0 : i32
    %c0_i32_0 = arith.constant 0 : i32
    return %arg0, %c0_i32 : i32, i32
  }
  func.func @transform_3(%arg0: i32, %arg1: i32) -> (i32, i32) {
    %c0_i32 = arith.constant 0 : i32
    %c0_i32_0 = arith.constant 0 : i32
    return %arg0, %c0_i32 : i32, i32
  }
  func.func @transform_4(%arg0: i32, %arg1: i32) -> (i32, i32) {
    %c0_i32 = arith.constant 0 : i32
    %c0_i32_0 = arith.constant 0 : i32
    return %arg0, %c0_i32 : i32, i32
  }
}

module attributes {stable_mosaic.version = 11 : i64} {
  func.func @_conv_matmul_kernel(%arg0: i32, %arg1: i32, %arg2: memref<24x1024xf32, #tpu.memory_space<vmem>>, %arg3: memref<1024x512xf32, #tpu.memory_space<vmem>>, %arg4: memref<24x512xf32, #tpu.memory_space<vmem>>, %arg5: memref<8x512xf32, #tpu.memory_space<vmem>>, %arg6: memref<8x512xf32, #tpu.memory_space<vmem>>) attributes {dimension_semantics = [#tpu.dimension_semantics<parallel>, #tpu.dimension_semantics<arbitrary>], iteration_bounds = array<i64: 1, 4>, scalar_prefetch = 0 : i64, scratch_operands = 0 : i64, tpu.core_type = #tpu.core_type<tc>, window_params = [{transform_indices = @transform_0, window_bounds = array<i64: 24, 1024>}, {transform_indices = @transform_1, window_bounds = array<i64: 1024, 512>}, {transform_indices = @transform_2, window_bounds = array<i64: 24, 512>}, {transform_indices = @transform_3, window_bounds = array<i64: 8, 512>}, {transform_indices = @transform_4, window_bounds = array<i64: 8, 512>}]} {
    %c0_i32 = arith.constant 0 : i32
    %0 = arith.cmpi eq, %arg1, %c0_i32 : i32
    %1 = arith.extui %0 : i1 to i32
    %c0_i32_0 = arith.constant 0 : i32
    %2 = arith.cmpi ne, %1, %c0_i32_0 : i32
    scf.if %2 {
      %cst_9 = arith.constant 0.000000e+00 : f32
      %12 = vector.broadcast %cst_9 : f32 to vector<24x512xf32>
      %c0_10 = arith.constant 0 : index
      %c0_11 = arith.constant 0 : index
      %13 = vector.load %arg4[%c0_10, %c0_11] : memref<24x512xf32, #tpu.memory_space<vmem>>, vector<24x512xf32>
      tpu.vector_store %arg4[%c0_10, %c0_11], %12 {strides = array<i32>} : memref<24x512xf32, #tpu.memory_space<vmem>>, vector<24x512xf32>,
    } else {
    }
    %c0 = arith.constant 0 : index
    %c0_1 = arith.constant 0 : index
    %3 = vector.load %arg4[%c0, %c0_1] : memref<24x512xf32, #tpu.memory_space<vmem>>, vector<24x512xf32>
    %c0_2 = arith.constant 0 : index
    %c0_3 = arith.constant 0 : index
    %4 = vector.load %arg2[%c0_2, %c0_3] : memref<24x1024xf32, #tpu.memory_space<vmem>>, vector<24x1024xf32>
    %c0_4 = arith.constant 0 : index
    %c0_5 = arith.constant 0 : index
    %5 = vector.load %arg3[%c0_4, %c0_5] : memref<1024x512xf32, #tpu.memory_space<vmem>>, vector<1024x512xf32>
    %cst = arith.constant dense<0.000000e+00> : vector<24x512xf32>
    %6 = tpu.matmul %4, %5, %cst {dimension_numbers = #tpu.dot_dimension_numbers<[1], [0], [0], [1], [0, 0, 1, 1], [], []>} : vector<24x1024xf32>, vector<1024x512xf32>, vector<24x512xf32> -> vector<24x512xf32>
    %7 = arith.addf %3, %6 : vector<24x512xf32>
    %c0_6 = arith.constant 0 : index
    %c0_7 = arith.constant 0 : index
    %8 = vector.load %arg4[%c0_6, %c0_7] : memref<24x512xf32, #tpu.memory_space<vmem>>, vector<24x512xf32>
    tpu.vector_store %arg4[%c0_6, %c0_7], %7 {strides = array<i32>} : memref<24x512xf32, #tpu.memory_space<vmem>>, vector<24x512xf32>,
    %c3_i32 = arith.constant 3 : i32
    %9 = arith.cmpi eq, %arg1, %c3_i32 : i32
    %10 = arith.extui %9 : i1 to i32
    %c0_i32_8 = arith.constant 0 : i32
    %11 = arith.cmpi ne, %10, %c0_i32_8 : i32
    scf.if %11 {
      %c0_9 = arith.constant 0 : index
      %c0_10 = arith.constant 0 : index
      %12 = vector.load %arg4[%c0_9, %c0_10] : memref<24x512xf32, #tpu.memory_space<vmem>>, vector<24x512xf32>
      %13 = tpu.iota {dimensions = array<i32: 0>} : vector<24x512xi32>
      %c24_i32 = arith.constant 24 : i32
      %14 = arith.muli %arg0, %c24_i32 : i32
      %15 = vector.broadcast %14 : i32 to vector<24x512xi32>
      %16 = arith.addi %13, %15 : vector<24x512xi32>
      %c18_i32 = arith.constant 18 : i32
      %17 = vector.broadcast %c18_i32 : i32 to vector<24x512xi32>
      %18 = arith.cmpi slt, %16, %17 : vector<24x512xi32>
      %cst_11 = arith.constant 0.000000e+00 : f32
      %19 = vector.broadcast %cst_11 : f32 to vector<24x512xf32>
      %20 = arith.select %18, %12, %19 : vector<24x512xi1>, vector<24x512xf32>
      %21 = vector.shape_cast %20 : vector<24x512xf32> to vector<3x8x512xf32>
      %cst_12 = arith.constant dense<0.000000e+00> : vector<8x512xf32>
      %22 = vector.multi_reduction <add>, %21, %cst_12 [0] : vector<3x8x512xf32> to vector<8x512xf32>
      %c0_13 = arith.constant 0 : index
      %c0_14 = arith.constant 0 : index
      %23 = vector.load %arg5[%c0_13, %c0_14] : memref<8x512xf32, #tpu.memory_space<vmem>>, vector<8x512xf32>
      tpu.vector_store %arg5[%c0_13, %c0_14], %22 {strides = array<i32>} : memref<8x512xf32, #tpu.memory_space<vmem>>, vector<8x512xf32>,
      %24 = arith.mulf %21, %21 : vector<3x8x512xf32>
      %cst_15 = arith.constant dense<0.000000e+00> : vector<8x512xf32>
      %25 = vector.multi_reduction <add>, %24, %cst_15 [0] : vector<3x8x512xf32> to vector<8x512xf32>
      %c0_16 = arith.constant 0 : index
      %c0_17 = arith.constant 0 : index
      %26 = vector.load %arg6[%c0_16, %c0_17] : memref<8x512xf32, #tpu.memory_space<vmem>>, vector<8x512xf32>
      tpu.vector_store %arg6[%c0_16, %c0_17], %25 {strides = array<i32>} : memref<8x512xf32, #tpu.memory_space<vmem>>, vector<8x512xf32>,
    } else {
    }
    return
  }
  func.func @transform_0(%arg0: i32, %arg1: i32) -> (i32, i32) {
    %c0_i32 = arith.constant 0 : i32
    return %arg0, %arg1 : i32, i32
  }
  func.func @transform_1(%arg0: i32, %arg1: i32) -> (i32, i32) {
    %c0_i32 = arith.constant 0 : i32
    %c0_i32_0 = arith.constant 0 : i32
    return %arg1, %c0_i32 : i32, i32
  }
  func.func @transform_2(%arg0: i32, %arg1: i32) -> (i32, i32) {
    %c0_i32 = arith.constant 0 : i32
    %c0_i32_0 = arith.constant 0 : i32
    return %arg0, %c0_i32 : i32, i32
  }
  func.func @transform_3(%arg0: i32, %arg1: i32) -> (i32, i32) {
    %c0_i32 = arith.constant 0 : i32
    %c0_i32_0 = arith.constant 0 : i32
    return %arg0, %c0_i32 : i32, i32
  }
  func.func @transform_4(%arg0: i32, %arg1: i32) -> (i32, i32) {
    %c0_i32 = arith.constant 0 : i32
    %c0_i32_0 = arith.constant 0 : i32
    return %arg0, %c0_i32 : i32, i32
  }
}

module attributes {stable_mosaic.version = 11 : i64} {
  func.func @_bn_act_kernel(%arg0: i32, %arg1: memref<24x512xf32, #tpu.memory_space<vmem>>, %arg2: memref<1x512xf32, #tpu.memory_space<vmem>>, %arg3: memref<1x512xf32, #tpu.memory_space<vmem>>, %arg4: memref<24x512xf32, #tpu.memory_space<vmem>>) attributes {dimension_semantics = [#tpu.dimension_semantics<parallel>], iteration_bounds = array<i64: 1>, scalar_prefetch = 0 : i64, scratch_operands = 0 : i64, tpu.core_type = #tpu.core_type<tc>, window_params = [{transform_indices = @transform_0, window_bounds = array<i64: 24, 512>}, {pipeline_mode = #tpu.pipeline_mode<synchronous>, transform_indices = @transform_1, window_bounds = array<i64: 1, 512>}, {pipeline_mode = #tpu.pipeline_mode<synchronous>, transform_indices = @transform_2, window_bounds = array<i64: 1, 512>}, {transform_indices = @transform_3, window_bounds = array<i64: 24, 512>}]} {
    %c0 = arith.constant 0 : index
    %c0_0 = arith.constant 0 : index
    %0 = vector.load %arg1[%c0, %c0_0] : memref<24x512xf32, #tpu.memory_space<vmem>>, vector<24x512xf32>
    %c0_1 = arith.constant 0 : index
    %c0_2 = arith.constant 0 : index
    %1 = vector.load %arg2[%c0_1, %c0_2] : memref<1x512xf32, #tpu.memory_space<vmem>>, vector<1x512xf32>
    %2 = vector.broadcast %1 : vector<1x512xf32> to vector<24x512xf32>
    %3 = arith.mulf %0, %2 : vector<24x512xf32>
    %c0_3 = arith.constant 0 : index
    %c0_4 = arith.constant 0 : index
    %4 = vector.load %arg3[%c0_3, %c0_4] : memref<1x512xf32, #tpu.memory_space<vmem>>, vector<1x512xf32>
    %5 = vector.broadcast %4 : vector<1x512xf32> to vector<24x512xf32>
    %6 = arith.addf %3, %5 : vector<24x512xf32>
    %cst = arith.constant 0.000000e+00 : f32
    %7 = vector.broadcast %cst : f32 to vector<24x512xf32>
    %8 = arith.maximumf %6, %7 : vector<24x512xf32>
    %c0_5 = arith.constant 0 : index
    %c0_6 = arith.constant 0 : index
    %9 = vector.load %arg4[%c0_5, %c0_6] : memref<24x512xf32, #tpu.memory_space<vmem>>, vector<24x512xf32>
    tpu.vector_store %arg4[%c0_5, %c0_6], %8 {strides = array<i32>} : memref<24x512xf32, #tpu.memory_space<vmem>>, vector<24x512xf32>,
    return
  }
  func.func @transform_0(%arg0: i32) -> (i32, i32) {
    %c0_i32 = arith.constant 0 : i32
    %c0_i32_0 = arith.constant 0 : i32
    return %arg0, %c0_i32 : i32, i32
  }
  func.func @transform_1(%arg0: i32) -> (i32, i32) {
    %c0_i32 = arith.constant 0 : i32
    %c0_i32_0 = arith.constant 0 : i32
    %c0_i32_1 = arith.constant 0 : i32
    return %c0_i32, %c0_i32_0 : i32, i32
  }
  func.func @transform_2(%arg0: i32) -> (i32, i32) {
    %c0_i32 = arith.constant 0 : i32
    %c0_i32_0 = arith.constant 0 : i32
    %c0_i32_1 = arith.constant 0 : i32
    return %c0_i32, %c0_i32_0 : i32, i32
  }
  func.func @transform_3(%arg0: i32) -> (i32, i32) {
    %c0_i32 = arith.constant 0 : i32
    %c0_i32_0 = arith.constant 0 : i32
    return %arg0, %c0_i32 : i32, i32
  }
}

module attributes {stable_mosaic.version = 11 : i64} {
  func.func @_conv_matmul_kernel(%arg0: i32, %arg1: i32, %arg2: memref<8x1024xf32, #tpu.memory_space<vmem>>, %arg3: memref<1024x128xf32, #tpu.memory_space<vmem>>, %arg4: memref<8x128xf32, #tpu.memory_space<vmem>>, %arg5: memref<8x128xf32, #tpu.memory_space<vmem>>, %arg6: memref<8x128xf32, #tpu.memory_space<vmem>>) attributes {dimension_semantics = [#tpu.dimension_semantics<parallel>, #tpu.dimension_semantics<arbitrary>], iteration_bounds = array<i64: 1, 8>, scalar_prefetch = 0 : i64, scratch_operands = 0 : i64, tpu.core_type = #tpu.core_type<tc>, window_params = [{transform_indices = @transform_0, window_bounds = array<i64: 8, 1024>}, {transform_indices = @transform_1, window_bounds = array<i64: 1024, 128>}, {transform_indices = @transform_2, window_bounds = array<i64: 8, 128>}, {transform_indices = @transform_3, window_bounds = array<i64: 8, 128>}, {transform_indices = @transform_4, window_bounds = array<i64: 8, 128>}]} {
    %c0_i32 = arith.constant 0 : i32
    %0 = arith.cmpi eq, %arg1, %c0_i32 : i32
    %1 = arith.extui %0 : i1 to i32
    %c0_i32_0 = arith.constant 0 : i32
    %2 = arith.cmpi ne, %1, %c0_i32_0 : i32
    scf.if %2 {
      %cst_9 = arith.constant 0.000000e+00 : f32
      %12 = vector.broadcast %cst_9 : f32 to vector<8x128xf32>
      %c0_10 = arith.constant 0 : index
      %c0_11 = arith.constant 0 : index
      %13 = vector.load %arg4[%c0_10, %c0_11] : memref<8x128xf32, #tpu.memory_space<vmem>>, vector<8x128xf32>
      tpu.vector_store %arg4[%c0_10, %c0_11], %12 {strides = array<i32>} : memref<8x128xf32, #tpu.memory_space<vmem>>, vector<8x128xf32>,
    } else {
    }
    %c0 = arith.constant 0 : index
    %c0_1 = arith.constant 0 : index
    %3 = vector.load %arg4[%c0, %c0_1] : memref<8x128xf32, #tpu.memory_space<vmem>>, vector<8x128xf32>
    %c0_2 = arith.constant 0 : index
    %c0_3 = arith.constant 0 : index
    %4 = vector.load %arg2[%c0_2, %c0_3] : memref<8x1024xf32, #tpu.memory_space<vmem>>, vector<8x1024xf32>
    %c0_4 = arith.constant 0 : index
    %c0_5 = arith.constant 0 : index
    %5 = vector.load %arg3[%c0_4, %c0_5] : memref<1024x128xf32, #tpu.memory_space<vmem>>, vector<1024x128xf32>
    %cst = arith.constant dense<0.000000e+00> : vector<8x128xf32>
    %6 = tpu.matmul %4, %5, %cst {dimension_numbers = #tpu.dot_dimension_numbers<[1], [0], [0], [1], [0, 0, 1, 1], [], []>} : vector<8x1024xf32>, vector<1024x128xf32>, vector<8x128xf32> -> vector<8x128xf32>
    %7 = arith.addf %3, %6 : vector<8x128xf32>
    %c0_6 = arith.constant 0 : index
    %c0_7 = arith.constant 0 : index
    %8 = vector.load %arg4[%c0_6, %c0_7] : memref<8x128xf32, #tpu.memory_space<vmem>>, vector<8x128xf32>
    tpu.vector_store %arg4[%c0_6, %c0_7], %7 {strides = array<i32>} : memref<8x128xf32, #tpu.memory_space<vmem>>, vector<8x128xf32>,
    %c7_i32 = arith.constant 7 : i32
    %9 = arith.cmpi eq, %arg1, %c7_i32 : i32
    %10 = arith.extui %9 : i1 to i32
    %c0_i32_8 = arith.constant 0 : i32
    %11 = arith.cmpi ne, %10, %c0_i32_8 : i32
    scf.if %11 {
      %c0_9 = arith.constant 0 : index
      %c0_10 = arith.constant 0 : index
      %12 = vector.load %arg4[%c0_9, %c0_10] : memref<8x128xf32, #tpu.memory_space<vmem>>, vector<8x128xf32>
      %13 = tpu.iota {dimensions = array<i32: 0>} : vector<8x128xi32>
      %c8_i32 = arith.constant 8 : i32
      %14 = arith.muli %arg0, %c8_i32 : i32
      %15 = vector.broadcast %14 : i32 to vector<8x128xi32>
      %16 = arith.addi %13, %15 : vector<8x128xi32>
      %c8_i32_11 = arith.constant 8 : i32
      %17 = vector.broadcast %c8_i32_11 : i32 to vector<8x128xi32>
      %18 = arith.cmpi slt, %16, %17 : vector<8x128xi32>
      %cst_12 = arith.constant 0.000000e+00 : f32
      %19 = vector.broadcast %cst_12 : f32 to vector<8x128xf32>
      %20 = arith.select %18, %12, %19 : vector<8x128xi1>, vector<8x128xf32>
      %21 = vector.shape_cast %20 : vector<8x128xf32> to vector<1x8x128xf32>
      %cst_13 = arith.constant dense<0.000000e+00> : vector<8x128xf32>
      %22 = vector.multi_reduction <add>, %21, %cst_13 [0] : vector<1x8x128xf32> to vector<8x128xf32>
      %c0_14 = arith.constant 0 : index
      %c0_15 = arith.constant 0 : index
      %23 = vector.load %arg5[%c0_14, %c0_15] : memref<8x128xf32, #tpu.memory_space<vmem>>, vector<8x128xf32>
      tpu.vector_store %arg5[%c0_14, %c0_15], %22 {strides = array<i32>} : memref<8x128xf32, #tpu.memory_space<vmem>>, vector<8x128xf32>,
      %24 = arith.mulf %21, %21 : vector<1x8x128xf32>
      %cst_16 = arith.constant dense<0.000000e+00> : vector<8x128xf32>
      %25 = vector.multi_reduction <add>, %24, %cst_16 [0] : vector<1x8x128xf32> to vector<8x128xf32>
      %c0_17 = arith.constant 0 : index
      %c0_18 = arith.constant 0 : index
      %26 = vector.load %arg6[%c0_17, %c0_18] : memref<8x128xf32, #tpu.memory_space<vmem>>, vector<8x128xf32>
      tpu.vector_store %arg6[%c0_17, %c0_18], %25 {strides = array<i32>} : memref<8x128xf32, #tpu.memory_space<vmem>>, vector<8x128xf32>,
    } else {
    }
    return
  }
  func.func @transform_0(%arg0: i32, %arg1: i32) -> (i32, i32) {
    %c0_i32 = arith.constant 0 : i32
    return %arg0, %arg1 : i32, i32
  }
  func.func @transform_1(%arg0: i32, %arg1: i32) -> (i32, i32) {
    %c0_i32 = arith.constant 0 : i32
    %c0_i32_0 = arith.constant 0 : i32
    return %arg1, %c0_i32 : i32, i32
  }
  func.func @transform_2(%arg0: i32, %arg1: i32) -> (i32, i32) {
    %c0_i32 = arith.constant 0 : i32
    %c0_i32_0 = arith.constant 0 : i32
    return %arg0, %c0_i32 : i32, i32
  }
  func.func @transform_3(%arg0: i32, %arg1: i32) -> (i32, i32) {
    %c0_i32 = arith.constant 0 : i32
    %c0_i32_0 = arith.constant 0 : i32
    return %arg0, %c0_i32 : i32, i32
  }
  func.func @transform_4(%arg0: i32, %arg1: i32) -> (i32, i32) {
    %c0_i32 = arith.constant 0 : i32
    %c0_i32_0 = arith.constant 0 : i32
    return %arg0, %c0_i32 : i32, i32
  }
}

module attributes {stable_mosaic.version = 11 : i64} {
  func.func @_bn_act_kernel(%arg0: i32, %arg1: memref<8x128xf32, #tpu.memory_space<vmem>>, %arg2: memref<1x128xf32, #tpu.memory_space<vmem>>, %arg3: memref<1x128xf32, #tpu.memory_space<vmem>>, %arg4: memref<8x1xf32, #tpu.memory_space<vmem>>) attributes {dimension_semantics = [#tpu.dimension_semantics<parallel>], iteration_bounds = array<i64: 1>, scalar_prefetch = 0 : i64, scratch_operands = 0 : i64, tpu.core_type = #tpu.core_type<tc>, window_params = [{transform_indices = @transform_0, window_bounds = array<i64: 8, 128>}, {pipeline_mode = #tpu.pipeline_mode<synchronous>, transform_indices = @transform_1, window_bounds = array<i64: 1, 128>}, {pipeline_mode = #tpu.pipeline_mode<synchronous>, transform_indices = @transform_2, window_bounds = array<i64: 1, 128>}, {transform_indices = @transform_3, window_bounds = array<i64: 8, 1>}]} {
    %c0 = arith.constant 0 : index
    %c0_0 = arith.constant 0 : index
    %0 = vector.load %arg1[%c0, %c0_0] : memref<8x128xf32, #tpu.memory_space<vmem>>, vector<8x128xf32>
    %c0_1 = arith.constant 0 : index
    %c0_2 = arith.constant 0 : index
    %1 = vector.load %arg2[%c0_1, %c0_2] : memref<1x128xf32, #tpu.memory_space<vmem>>, vector<1x128xf32>
    %2 = vector.broadcast %1 : vector<1x128xf32> to vector<8x128xf32>
    %3 = arith.mulf %0, %2 : vector<8x128xf32>
    %c0_3 = arith.constant 0 : index
    %c0_4 = arith.constant 0 : index
    %4 = vector.load %arg3[%c0_3, %c0_4] : memref<1x128xf32, #tpu.memory_space<vmem>>, vector<1x128xf32>
    %5 = vector.broadcast %4 : vector<1x128xf32> to vector<8x128xf32>
    %6 = arith.addf %3, %5 : vector<8x128xf32>
    %cst = arith.constant 0.000000e+00 : f32
    %7 = vector.broadcast %cst : f32 to vector<8x128xf32>
    %8 = arith.subf %7, %6 : vector<8x128xf32>
    %9 = math.exp %8 : vector<8x128xf32>
    %cst_5 = arith.constant 1.000000e+00 : f32
    %10 = vector.broadcast %cst_5 : f32 to vector<8x128xf32>
    %11 = arith.addf %10, %9 : vector<8x128xf32>
    %cst_6 = arith.constant 1.000000e+00 : f32
    %12 = vector.broadcast %cst_6 : f32 to vector<8x128xf32>
    %13 = arith.divf %12, %11 : vector<8x128xf32>
    %14 = vector.extract_strided_slice %13 {offsets = [0, 0], sizes = [8, 1], strides = [1, 1]} : vector<8x128xf32> to vector<8x1xf32>
    %c0_7 = arith.constant 0 : index
    %c0_8 = arith.constant 0 : index
    %15 = vector.load %arg4[%c0_7, %c0_8] : memref<8x1xf32, #tpu.memory_space<vmem>>, vector<8x1xf32>
    tpu.vector_store %arg4[%c0_7, %c0_8], %14 {strides = array<i32>} : memref<8x1xf32, #tpu.memory_space<vmem>>, vector<8x1xf32>,
    return
  }
  func.func @transform_0(%arg0: i32) -> (i32, i32) {
    %c0_i32 = arith.constant 0 : i32
    %c0_i32_0 = arith.constant 0 : i32
    return %arg0, %c0_i32 : i32, i32
  }
  func.func @transform_1(%arg0: i32) -> (i32, i32) {
    %c0_i32 = arith.constant 0 : i32
    %c0_i32_0 = arith.constant 0 : i32
    %c0_i32_1 = arith.constant 0 : i32
    return %c0_i32, %c0_i32_0 : i32, i32
  }
  func.func @transform_2(%arg0: i32) -> (i32, i32) {
    %c0_i32 = arith.constant 0 : i32
    %c0_i32_0 = arith.constant 0 : i32
    %c0_i32_1 = arith.constant 0 : i32
    return %c0_i32, %c0_i32_0 : i32, i32
  }
  func.func @transform_3(%arg0: i32) -> (i32, i32) {
    %c0_i32 = arith.constant 0 : i32
    %c0_i32_0 = arith.constant 0 : i32
    return %arg0, %c0_i32 : i32, i32
  }
}

</mosaic_0001>

<llo_original>
// kernel: patchgan_forward.11
$region0: #{patchgan_forward.11}
  #allocation0 [shape = 'u32[]', space=smem, size = 0x4, offset = 0x4, fixed_abs, tag = 'smem constant byte address 0x4 - core index']
  #allocation1 [shape = 'u32[144,128]{1,0:T(1,128)}', space=vmem, size = 0x12000, scoped, tag = 'internal scratch']
  %s0 = inlined_call_operand.vmem [shape: f32[512,128], index: 0, kind: input, shape index: {}]
  %s1 = inlined_call_operand.vmem [shape: f32[1,128], index: 1, kind: input, shape index: {}]
  %s2 = inlined_call_operand.vmem [shape: f32[1,128], index: 2, kind: input, shape index: {}]
  %s3 = inlined_call_operand.vmem [shape: f32[512,64], index: 3, kind: output, shape index: {}]
  %s4 = sld [smem:[#allocation0]]
  $region22: #{patchgan_forward.11} parent=0
    _
  %s6 = ssub.s32 1, %s4
  %s7 = scalar_select 0, %s6, %s4
  // Predicated region
  $region2: #{patchgan_forward.11} parent=0 // pred_check
    _
  $region3: #{patchgan_forward.11} parent=0 // pred_check_branch
    %9 = sbr.rel (0) target = $region5
  $region4: #{patchgan_forward.11} parent=0 // pred_region
    _
  $region5: #{patchgan_forward.11} parent=0 // pred_fallthru
    _
  // Predicated region
  $region6: #{patchgan_forward.11} parent=0 // pred_check
    _
  $region7: #{patchgan_forward.11} parent=0 // pred_check_branch
    %11 = sbr.rel (0) target = $region9
  $region8: #{patchgan_forward.11} parent=0 // pred_region
    _
  $region9: #{patchgan_forward.11} parent=0 // pred_fallthru
    _
  // Predicated region
  $region10: #{patchgan_forward.11} parent=0 // pred_check
    _
  $region11: #{patchgan_forward.11} parent=0 // pred_check_branch
    %13 = sbr.rel (0) target = $region13
  $region12: #{patchgan_forward.11} parent=0 // pred_region
    _
  $region13: #{patchgan_forward.11} parent=0 // pred_fallthru
    _
  %v14 = vld [vmem:[%s0] sm:$0xff]
  %v15 = vld [vmem:[%s0 + $0x8] sm:$0xff]
  %v16 = vld [vmem:[%s0 + $0x10] sm:$0xff]
  %v17 = vld [vmem:[%s0 + $0x18] sm:$0xff]
  %v18 = vld [vmem:[%s0 + $0x20] sm:$0xff]
  %v19 = vld [vmem:[%s0 + $0x28] sm:$0xff]
  %v20 = vld [vmem:[%s0 + $0x30] sm:$0xff]
  %v21 = vld [vmem:[%s0 + $0x38] sm:$0xff]
  %v22 = vld [vmem:[%s0 + $0x40] sm:$0xff]
  %v23 = vld [vmem:[%s0 + $0x48] sm:$0xff]
  %v24 = vld [vmem:[%s0 + $0x50] sm:$0xff]
  %v25 = vld [vmem:[%s0 + $0x58] sm:$0xff]
  %v26 = vld [vmem:[%s0 + $0x60] sm:$0xff]
  %v27 = vld [vmem:[%s0 + $0x68] sm:$0xff]
  %v28 = vld [vmem:[%s0 + $0x70] sm:$0xff]
  %v29 = vld [vmem:[%s0 + $0x78] sm:$0xff]
  %v30 = vld [vmem:[%s0 + $0x80] sm:$0xff]
  %v31 = vld [vmem:[%s0 + $0x88] sm:$0xff]
  %v32 = vld [vmem:[%s0 + $0x90] sm:$0xff]
  %v33 = vld [vmem:[%s0 + $0x98] sm:$0xff]
  %v34 = vld [vmem:[%s0 + $0xa0] sm:$0xff]
  %v35 = vld [vmem:[%s0 + $0xa8] sm:$0xff]
  %v36 = vld [vmem:[%s0 + $0xb0] sm:$0xff]
  %v37 = vld [vmem:[%s0 + $0xb8] sm:$0xff]
  %v38 = vld [vmem:[%s0 + $0xc0] sm:$0xff]
  %v39 = vld [vmem:[%s0 + $0xc8] sm:$0xff]
  %v40 = vld [vmem:[%s0 + $0xd0] sm:$0xff]
  %v41 = vld [vmem:[%s0 + $0xd8] sm:$0xff]
  %v42 = vld [vmem:[%s0 + $0xe0] sm:$0xff]
  %v43 = vld [vmem:[%s0 + $0xe8] sm:$0xff]
  %v44 = vld [vmem:[%s0 + $0xf0] sm:$0xff]
  %v45 = vld [vmem:[%s0 + $0xf8] sm:$0xff]
  %v46 = vld [vmem:[%s0 + $0x100] sm:$0xff]
  %v47 = vld [vmem:[%s0 + $0x108] sm:$0xff]
  %v48 = vld [vmem:[%s0 + $0x110] sm:$0xff]
  %v49 = vld [vmem:[%s0 + $0x118] sm:$0xff]
  %v50 = vld [vmem:[%s0 + $0x120] sm:$0xff]
  %v51 = vld [vmem:[%s0 + $0x128] sm:$0xff]
  %v52 = vld [vmem:[%s0 + $0x130] sm:$0xff]
  %v53 = vld [vmem:[%s0 + $0x138] sm:$0xff]
  %v54 = vld [vmem:[%s0 + $0x140] sm:$0xff]
  %v55 = vld [vmem:[%s0 + $0x148] sm:$0xff]
  %v56 = vld [vmem:[%s0 + $0x150] sm:$0xff]
  %v57 = vld [vmem:[%s0 + $0x158] sm:$0xff]
  %v58 = vld [vmem:[%s0 + $0x160] sm:$0xff]
  %v59 = vld [vmem:[%s0 + $0x168] sm:$0xff]
  %v60 = vld [vmem:[%s0 + $0x170] sm:$0xff]
  %v61 = vld [vmem:[%s0 + $0x178] sm:$0xff]
  %v62 = vld [vmem:[%s0 + $0x180] sm:$0xff]
  %v63 = vld [vmem:[%s0 + $0x188] sm:$0xff]
  %v64 = vld [vmem:[%s0 + $0x190] sm:$0xff]
  %v65 = vld [vmem:[%s0 + $0x198] sm:$0xff]
  %v66 = vld [vmem:[%s0 + $0x1a0] sm:$0xff]
  %v67 = vld [vmem:[%s0 + $0x1a8] sm:$0xff]
  %v68 = vld [vmem:[%s0 + $0x1b0] sm:$0xff]
  %v69 = vld [vmem:[%s0 + $0x1b8] sm:$0xff]
  %v70 = vld [vmem:[%s0 + $0x1c0] sm:$0xff]
  %v71 = vld [vmem:[%s0 + $0x1c8] sm:$0xff]
  %v72 = vld [vmem:[%s0 + $0x1d0] sm:$0xff]
  %v73 = vld [vmem:[%s0 + $0x1d8] sm:$0xff]
  %v74 = vld [vmem:[%s0 + $0x1e0] sm:$0xff]
  %v75 = vld [vmem:[%s0 + $0x1e8] sm:$0xff]
  %v76 = vld [vmem:[%s0 + $0x1f0] sm:$0xff]
  %v77 = vld [vmem:[%s0 + $0x1f8] sm:$0xff]
  %v78 = vld [vmem:[%s1] sm:$0x1]
  %v80 = vlaneseq
  %v81 = vshrl.u32 %v80, 7
  %v82 = vsub.s32 0, %v81
  %v83 = vrot.slane %v78, %v82
  %v85 = vmul.f32 %v14, %v83
  %v86 = vmul.f32 %v15, %v83
  %v87 = vmul.f32 %v16, %v83
  %v88 = vmul.f32 %v17, %v83
  %v89 = vmul.f32 %v18, %v83
  %v90 = vmul.f32 %v19, %v83
  %v91 = vmul.f32 %v20, %v83
  %v92 = vmul.f32 %v21, %v83
  %v93 = vmul.f32 %v22, %v83
  %v94 = vmul.f32 %v23, %v83
  %v95 = vmul.f32 %v24, %v83
  %v96 = vmul.f32 %v25, %v83
  %v97 = vmul.f32 %v26, %v83
  %v98 = vmul.f32 %v27, %v83
  %v99 = vmul.f32 %v28, %v83
  %v100 = vmul.f32 %v29, %v83
  %v101 = vmul.f32 %v30, %v83
  %v102 = vmul.f32 %v31, %v83
  %v103 = vmul.f32 %v32, %v83
  %v104 = vmul.f32 %v33, %v83
  %v105 = vmul.f32 %v34, %v83
  %v106 = vmul.f32 %v35, %v83
  %v107 = vmul.f32 %v36, %v83
  %v108 = vmul.f32 %v37, %v83
  %v109 = vmul.f32 %v38, %v83
  %v110 = vmul.f32 %v39, %v83
  %v111 = vmul.f32 %v40, %v83
  %v112 = vmul.f32 %v41, %v83
  %v113 = vmul.f32 %v42, %v83
  %v114 = vmul.f32 %v43, %v83
  %v115 = vmul.f32 %v44, %v83
  %v116 = vmul.f32 %v45, %v83
  %v117 = vmul.f32 %v46, %v83
  %v118 = vmul.f32 %v47, %v83
  %v119 = vmul.f32 %v48, %v83
  %v120 = vmul.f32 %v49, %v83
  %v121 = vmul.f32 %v50, %v83
  %v122 = vmul.f32 %v51, %v83
  %v123 = vmul.f32 %v52, %v83
  %v124 = vmul.f32 %v53, %v83
  %v125 = vmul.f32 %v54, %v83
  %v126 = vmul.f32 %v55, %v83
  %v127 = vmul.f32 %v56, %v83
  %v128 = vmul.f32 %v57, %v83
  %v129 = vmul.f32 %v58, %v83
  %v130 = vmul.f32 %v59, %v83
  %v131 = vmul.f32 %v60, %v83
  %v132 = vmul.f32 %v61, %v83
  %v133 = vmul.f32 %v62, %v83
  %v134 = vmul.f32 %v63, %v83
  %v135 = vmul.f32 %v64, %v83
  %v136 = vmul.f32 %v65, %v83
  %v137 = vmul.f32 %v66, %v83
  %v138 = vmul.f32 %v67, %v83
  %v139 = vmul.f32 %v68, %v83
  %v140 = vmul.f32 %v69, %v83
  %v141 = vmul.f32 %v70, %v83
  %v142 = vmul.f32 %v71, %v83
  %v143 = vmul.f32 %v72, %v83
  %v144 = vmul.f32 %v73, %v83
  %v145 = vmul.f32 %v74, %v83
  %v146 = vmul.f32 %v75, %v83
  %v147 = vmul.f32 %v76, %v83
  %v148 = vmul.f32 %v77, %v83
  %v149 = vld [vmem:[%s2] sm:$0x1]
  %v151 = vlaneseq
  %v152 = vshrl.u32 %v151, 7
  %v153 = vsub.s32 0, %v152
  %v154 = vrot.slane %v149, %v153
  %v156 = vadd.f32 %v85, %v154
  %v157 = vadd.f32 %v86, %v154
  %v158 = vadd.f32 %v87, %v154
  %v159 = vadd.f32 %v88, %v154
  %v160 = vadd.f32 %v89, %v154
  %v161 = vadd.f32 %v90, %v154
  %v162 = vadd.f32 %v91, %v154
  %v163 = vadd.f32 %v92, %v154
  %v164 = vadd.f32 %v93, %v154
  %v165 = vadd.f32 %v94, %v154
  %v166 = vadd.f32 %v95, %v154
  %v167 = vadd.f32 %v96, %v154
  %v168 = vadd.f32 %v97, %v154
  %v169 = vadd.f32 %v98, %v154
  %v170 = vadd.f32 %v99, %v154
  %v171 = vadd.f32 %v100, %v154
  %v172 = vadd.f32 %v101, %v154
  %v173 = vadd.f32 %v102, %v154
  %v174 = vadd.f32 %v103, %v154
  %v175 = vadd.f32 %v104, %v154
  %v176 = vadd.f32 %v105, %v154
  %v177 = vadd.f32 %v106, %v154
  %v178 = vadd.f32 %v107, %v154
  %v179 = vadd.f32 %v108, %v154
  %v180 = vadd.f32 %v109, %v154
  %v181 = vadd.f32 %v110, %v154
  %v182 = vadd.f32 %v111, %v154
  %v183 = vadd.f32 %v112, %v154
  %v184 = vadd.f32 %v113, %v154
  %v185 = vadd.f32 %v114, %v154
  %v186 = vadd.f32 %v115, %v154
  %v187 = vadd.f32 %v116, %v154
  %v188 = vadd.f32 %v117, %v154
  %v189 = vadd.f32 %v118, %v154
  %v190 = vadd.f32 %v119, %v154
  %v191 = vadd.f32 %v120, %v154
  %v192 = vadd.f32 %v121, %v154
  %v193 = vadd.f32 %v122, %v154
  %v194 = vadd.f32 %v123, %v154
  %v195 = vadd.f32 %v124, %v154
  %v196 = vadd.f32 %v125, %v154
  %v197 = vadd.f32 %v126, %v154
  %v198 = vadd.f32 %v127, %v154
  %v199 = vadd.f32 %v128, %v154
  %v200 = vadd.f32 %v129, %v154
  %v201 = vadd.f32 %v130, %v154
  %v202 = vadd.f32 %v131, %v154
  %v203 = vadd.f32 %v132, %v154
  %v204 = vadd.f32 %v133, %v154
  %v205 = vadd.f32 %v134, %v154
  %v206 = vadd.f32 %v135, %v154
  %v207 = vadd.f32 %v136, %v154
  %v208 = vadd.f32 %v137, %v154
  %v209 = vadd.f32 %v138, %v154
  %v210 = vadd.f32 %v139, %v154
  %v211 = vadd.f32 %v140, %v154
  %v212 = vadd.f32 %v141, %v154
  %v213 = vadd.f32 %v142, %v154
  %v214 = vadd.f32 %v143, %v154
  %v215 = vadd.f32 %v144, %v154
  %v216 = vadd.f32 %v145, %v154
  %v217 = vadd.f32 %v146, %v154
  %v218 = vadd.f32 %v147, %v154
  %v219 = vadd.f32 %v148, %v154
  %v220 = vmax.f32 %v156, 0.0
  %v221 = vmax.f32 %v157, 0.0
  %v222 = vmax.f32 %v158, 0.0
  %v223 = vmax.f32 %v159, 0.0
  %v224 = vmax.f32 %v160, 0.0
  %v225 = vmax.f32 %v161, 0.0
  %v226 = vmax.f32 %v162, 0.0
  %v227 = vmax.f32 %v163, 0.0
  %v228 = vmax.f32 %v164, 0.0
  %v229 = vmax.f32 %v165, 0.0
  %v230 = vmax.f32 %v166, 0.0
  %v231 = vmax.f32 %v167, 0.0
  %v232 = vmax.f32 %v168, 0.0
  %v233 = vmax.f32 %v169, 0.0
  %v234 = vmax.f32 %v170, 0.0
  %v235 = vmax.f32 %v171, 0.0
  %v236 = vmax.f32 %v172, 0.0
  %v237 = vmax.f32 %v173, 0.0
  %v238 = vmax.f32 %v174, 0.0
  %v239 = vmax.f32 %v175, 0.0
  %v240 = vmax.f32 %v176, 0.0
  %v241 = vmax.f32 %v177, 0.0
  %v242 = vmax.f32 %v178, 0.0
  %v243 = vmax.f32 %v179, 0.0
  %v244 = vmax.f32 %v180, 0.0
  %v245 = vmax.f32 %v181, 0.0
  %v246 = vmax.f32 %v182, 0.0
  %v247 = vmax.f32 %v183, 0.0
  %v248 = vmax.f32 %v184, 0.0
  %v249 = vmax.f32 %v185, 0.0
  %v250 = vmax.f32 %v186, 0.0
  %v251 = vmax.f32 %v187, 0.0
  %v252 = vmax.f32 %v188, 0.0
  %v253 = vmax.f32 %v189, 0.0
  %v254 = vmax.f32 %v190, 0.0
  %v255 = vmax.f32 %v191, 0.0
  %v256 = vmax.f32 %v192, 0.0
  %v257 = vmax.f32 %v193, 0.0
  %v258 = vmax.f32 %v194, 0.0
  %v259 = vmax.f32 %v195, 0.0
  %v260 = vmax.f32 %v196, 0.0
  %v261 = vmax.f32 %v197, 0.0
  %v262 = vmax.f32 %v198, 0.0
  %v263 = vmax.f32 %v199, 0.0
  %v264 = vmax.f32 %v200, 0.0
  %v265 = vmax.f32 %v201, 0.0
  %v266 = vmax.f32 %v202, 0.0
  %v267 = vmax.f32 %v203, 0.0
  %v268 = vmax.f32 %v204, 0.0
  %v269 = vmax.f32 %v205, 0.0
  %v270 = vmax.f32 %v206, 0.0
  %v271 = vmax.f32 %v207, 0.0
  %v272 = vmax.f32 %v208, 0.0
  %v273 = vmax.f32 %v209, 0.0
  %v274 = vmax.f32 %v210, 0.0
  %v275 = vmax.f32 %v211, 0.0
  %v276 = vmax.f32 %v212, 0.0
  %v277 = vmax.f32 %v213, 0.0
  %v278 = vmax.f32 %v214, 0.0
  %v279 = vmax.f32 %v215, 0.0
  %v280 = vmax.f32 %v216, 0.0
  %v281 = vmax.f32 %v217, 0.0
  %v282 = vmax.f32 %v218, 0.0
  %v283 = vmax.f32 %v219, 0.0
  %vm284 = vcmask 523264
  %285 = vst.msk [vmem:[%s3] sm:$0xff] %vm284, %v220
  %286 = vst.msk [vmem:[%s3 + $0x8] sm:$0xff] %vm284, %v221
  %287 = vst.msk [vmem:[%s3 + $0x10] sm:$0xff] %vm284, %v222
  %288 = vst.msk [vmem:[%s3 + $0x18] sm:$0xff] %vm284, %v223
  %289 = vst.msk [vmem:[%s3 + $0x20] sm:$0xff] %vm284, %v224
  %290 = vst.msk [vmem:[%s3 + $0x28] sm:$0xff] %vm284, %v225
  %291 = vst.msk [vmem:[%s3 + $0x30] sm:$0xff] %vm284, %v226
  %292 = vst.msk [vmem:[%s3 + $0x38] sm:$0xff] %vm284, %v227
  %293 = vst.msk [vmem:[%s3 + $0x40] sm:$0xff] %vm284, %v228
  %294 = vst.msk [vmem:[%s3 + $0x48] sm:$0xff] %vm284, %v229
  %295 = vst.msk [vmem:[%s3 + $0x50] sm:$0xff] %vm284, %v230
  %296 = vst.msk [vmem:[%s3 + $0x58] sm:$0xff] %vm284, %v231
  %297 = vst.msk [vmem:[%s3 + $0x60] sm:$0xff] %vm284, %v232
  %298 = vst.msk [vmem:[%s3 + $0x68] sm:$0xff] %vm284, %v233
  %299 = vst.msk [vmem:[%s3 + $0x70] sm:$0xff] %vm284, %v234
  %300 = vst.msk [vmem:[%s3 + $0x78] sm:$0xff] %vm284, %v235
  %301 = vst.msk [vmem:[%s3 + $0x80] sm:$0xff] %vm284, %v236
  %302 = vst.msk [vmem:[%s3 + $0x88] sm:$0xff] %vm284, %v237
  %303 = vst.msk [vmem:[%s3 + $0x90] sm:$0xff] %vm284, %v238
  %304 = vst.msk [vmem:[%s3 + $0x98] sm:$0xff] %vm284, %v239
  %305 = vst.msk [vmem:[%s3 + $0xa0] sm:$0xff] %vm284, %v240
  %306 = vst.msk [vmem:[%s3 + $0xa8] sm:$0xff] %vm284, %v241
  %307 = vst.msk [vmem:[%s3 + $0xb0] sm:$0xff] %vm284, %v242
  %308 = vst.msk [vmem:[%s3 + $0xb8] sm:$0xff] %vm284, %v243
  %309 = vst.msk [vmem:[%s3 + $0xc0] sm:$0xff] %vm284, %v244
  %310 = vst.msk [vmem:[%s3 + $0xc8] sm:$0xff] %vm284, %v245
  %311 = vst.msk [vmem:[%s3 + $0xd0] sm:$0xff] %vm284, %v246
  %312 = vst.msk [vmem:[%s3 + $0xd8] sm:$0xff] %vm284, %v247
  %313 = vst.msk [vmem:[%s3 + $0xe0] sm:$0xff] %vm284, %v248
  %314 = vst.msk [vmem:[%s3 + $0xe8] sm:$0xff] %vm284, %v249
  %315 = vst.msk [vmem:[%s3 + $0xf0] sm:$0xff] %vm284, %v250
  %316 = vst.msk [vmem:[%s3 + $0xf8] sm:$0xff] %vm284, %v251
  %317 = vst.msk [vmem:[%s3 + $0x100] sm:$0xff] %vm284, %v252
  %318 = vst.msk [vmem:[%s3 + $0x108] sm:$0xff] %vm284, %v253
  %319 = vst.msk [vmem:[%s3 + $0x110] sm:$0xff] %vm284, %v254
  %320 = vst.msk [vmem:[%s3 + $0x118] sm:$0xff] %vm284, %v255
  %321 = vst.msk [vmem:[%s3 + $0x120] sm:$0xff] %vm284, %v256
  %322 = vst.msk [vmem:[%s3 + $0x128] sm:$0xff] %vm284, %v257
  %323 = vst.msk [vmem:[%s3 + $0x130] sm:$0xff] %vm284, %v258
  %324 = vst.msk [vmem:[%s3 + $0x138] sm:$0xff] %vm284, %v259
  %325 = vst.msk [vmem:[%s3 + $0x140] sm:$0xff] %vm284, %v260
  %326 = vst.msk [vmem:[%s3 + $0x148] sm:$0xff] %vm284, %v261
  %327 = vst.msk [vmem:[%s3 + $0x150] sm:$0xff] %vm284, %v262
  %328 = vst.msk [vmem:[%s3 + $0x158] sm:$0xff] %vm284, %v263
  %329 = vst.msk [vmem:[%s3 + $0x160] sm:$0xff] %vm284, %v264
  %330 = vst.msk [vmem:[%s3 + $0x168] sm:$0xff] %vm284, %v265
  %331 = vst.msk [vmem:[%s3 + $0x170] sm:$0xff] %vm284, %v266
  %332 = vst.msk [vmem:[%s3 + $0x178] sm:$0xff] %vm284, %v267
  %333 = vst.msk [vmem:[%s3 + $0x180] sm:$0xff] %vm284, %v268
  %334 = vst.msk [vmem:[%s3 + $0x188] sm:$0xff] %vm284, %v269
  %335 = vst.msk [vmem:[%s3 + $0x190] sm:$0xff] %vm284, %v270
  %336 = vst.msk [vmem:[%s3 + $0x198] sm:$0xff] %vm284, %v271
  %337 = vst.msk [vmem:[%s3 + $0x1a0] sm:$0xff] %vm284, %v272
  %338 = vst.msk [vmem:[%s3 + $0x1a8] sm:$0xff] %vm284, %v273
  %339 = vst.msk [vmem:[%s3 + $0x1b0] sm:$0xff] %vm284, %v274
  %340 = vst.msk [vmem:[%s3 + $0x1b8] sm:$0xff] %vm284, %v275
  %341 = vst.msk [vmem:[%s3 + $0x1c0] sm:$0xff] %vm284, %v276
  %342 = vst.msk [vmem:[%s3 + $0x1c8] sm:$0xff] %vm284, %v277
  %343 = vst.msk [vmem:[%s3 + $0x1d0] sm:$0xff] %vm284, %v278
  %344 = vst.msk [vmem:[%s3 + $0x1d8] sm:$0xff] %vm284, %v279
  %345 = vst.msk [vmem:[%s3 + $0x1e0] sm:$0xff] %vm284, %v280
  %346 = vst.msk [vmem:[%s3 + $0x1e8] sm:$0xff] %vm284, %v281
  %347 = vst.msk [vmem:[%s3 + $0x1f0] sm:$0xff] %vm284, %v282
  %348 = vst.msk [vmem:[%s3 + $0x1f8] sm:$0xff] %vm284, %v283
  // Predicated region
  $region14: #{patchgan_forward.11} parent=0 // pred_check
    _
  $region15: #{patchgan_forward.11} parent=0 // pred_check_branch
    %350 = sbr.rel (0) target = $region17
  $region16: #{patchgan_forward.11} parent=0 // pred_region
    _
  $region17: #{patchgan_forward.11} parent=0 // pred_fallthru
    _
  // Predicated region
  $region18: #{patchgan_forward.11} parent=0 // pred_check
    _
  $region19: #{patchgan_forward.11} parent=0 // pred_check_branch
    %352 = sbr.rel (0) target = $region21
  $region20: #{patchgan_forward.11} parent=0 // pred_region
    _
  $region21: #{patchgan_forward.11} parent=0 // pred_fallthru
    _

// kernel: patchgan_forward.10
$region0: #{patchgan_forward.10}
  #allocation0 [shape = 'u32[]', space=smem, size = 0x4, offset = 0x4, fixed_abs, tag = 'smem constant byte address 0x4 - core index']
  #allocation1 [shape = 'u32[144,128]{1,0:T(1,128)}', space=vmem, size = 0x12000, scoped, tag = 'internal scratch']
  %s0 = inlined_call_operand.vmem [shape: f32[512,128], index: 0, kind: input, shape index: {}]
  %s1 = inlined_call_operand.vmem [shape: f32[128,128], index: 1, kind: input, shape index: {}]
  %s2 = inlined_call_operand.vmem [shape: f32[512,128], index: 2, kind: output, shape index: {0}]
  %s3 = inlined_call_operand.vmem [shape: f32[8,128], index: 3, kind: output, shape index: {1}]
  %s4 = inlined_call_operand.vmem [shape: f32[8,128], index: 4, kind: output, shape index: {2}]
  %5 = xla_tuple %s2, %s3, %s4
  %s6 = sld [smem:[#allocation0]]
  $region42: #{patchgan_forward.10} parent=0
    _
  %s8 = ssub.s32 1, %s6
  %s9 = scalar_select 0, %s8, %s6
  // Predicated region
  $region2: #{patchgan_forward.10} parent=0 // pred_check
    _
  $region3: #{patchgan_forward.10} parent=0 // pred_check_branch
    %11 = sbr.rel (0) target = $region5
  $region4: #{patchgan_forward.10} parent=0 // pred_region
    _
  $region5: #{patchgan_forward.10} parent=0 // pred_fallthru
    _
  // Predicated region
  $region6: #{patchgan_forward.10} parent=0 // pred_check
    _
  $region7: #{patchgan_forward.10} parent=0 // pred_check_branch
    %13 = sbr.rel (0) target = $region9
  $region8: #{patchgan_forward.10} parent=0 // pred_region
    _
  $region9: #{patchgan_forward.10} parent=0 // pred_fallthru
    _
  %p14 = scmp.eq.s32.totalorder 0, 0
  // Predicated region
  $region10: #{patchgan_forward.10} parent=0 // pred_check
    %p15 = pneg %p14
  $region11: #{patchgan_forward.10} parent=0 // pred_check_branch
    %17 = sbr.rel (%p15) target = $region13
  $region12: #{patchgan_forward.10} parent=0 // pred_region
    %18 = vst [vmem:[%s2] sm:$0xff] 0.0
    %19 = vst [vmem:[%s2 + $0x8] sm:$0xff] 0.0
    %20 = vst [vmem:[%s2 + $0x10] sm:$0xff] 0.0
    %21 = vst [vmem:[%s2 + $0x18] sm:$0xff] 0.0
    %22 = vst [vmem:[%s2 + $0x20] sm:$0xff] 0.0
    %23 = vst [vmem:[%s2 + $0x28] sm:$0xff] 0.0
    %24 = vst [vmem:[%s2 + $0x30] sm:$0xff] 0.0
    %25 = vst [vmem:[%s2 + $0x38] sm:$0xff] 0.0
    %26 = vst [vmem:[%s2 + $0x40] sm:$0xff] 0.0
    %27 = vst [vmem:[%s2 + $0x48] sm:$0xff] 0.0
    %28 = vst [vmem:[%s2 + $0x50] sm:$0xff] 0.0
    %29 = vst [vmem:[%s2 + $0x58] sm:$0xff] 0.0
    %30 = vst [vmem:[%s2 + $0x60] sm:$0xff] 0.0
    %31 = vst [vmem:[%s2 + $0x68] sm:$0xff] 0.0
    %32 = vst [vmem:[%s2 + $0x70] sm:$0xff] 0.0
    %33 = vst [vmem:[%s2 + $0x78] sm:$0xff] 0.0
    %34 = vst [vmem:[%s2 + $0x80] sm:$0xff] 0.0
    %35 = vst [vmem:[%s2 + $0x88] sm:$0xff] 0.0
    %36 = vst [vmem:[%s2 + $0x90] sm:$0xff] 0.0
    %37 = vst [vmem:[%s2 + $0x98] sm:$0xff] 0.0
    %38 = vst [vmem:[%s2 + $0xa0] sm:$0xff] 0.0
    %39 = vst [vmem:[%s2 + $0xa8] sm:$0xff] 0.0
    %40 = vst [vmem:[%s2 + $0xb0] sm:$0xff] 0.0
    %41 = vst [vmem:[%s2 + $0xb8] sm:$0xff] 0.0
    %42 = vst [vmem:[%s2 + $0xc0] sm:$0xff] 0.0
    %43 = vst [vmem:[%s2 + $0xc8] sm:$0xff] 0.0
    %44 = vst [vmem:[%s2 + $0xd0] sm:$0xff] 0.0
    %45 = vst [vmem:[%s2 + $0xd8] sm:$0xff] 0.0
    %46 = vst [vmem:[%s2 + $0xe0] sm:$0xff] 0.0
    %47 = vst [vmem:[%s2 + $0xe8] sm:$0xff] 0.0
    %48 = vst [vmem:[%s2 + $0xf0] sm:$0xff] 0.0
    %49 = vst [vmem:[%s2 + $0xf8] sm:$0xff] 0.0
    %50 = vst [vmem:[%s2 + $0x100] sm:$0xff] 0.0
    %51 = vst [vmem:[%s2 + $0x108] sm:$0xff] 0.0
    %52 = vst [vmem:[%s2 + $0x110] sm:$0xff] 0.0
    %53 = vst [vmem:[%s2 + $0x118] sm:$0xff] 0.0
    %54 = vst [vmem:[%s2 + $0x120] sm:$0xff] 0.0
    %55 = vst [vmem:[%s2 + $0x128] sm:$0xff] 0.0
    %56 = vst [vmem:[%s2 + $0x130] sm:$0xff] 0.0
    %57 = vst [vmem:[%s2 + $0x138] sm:$0xff] 0.0
    %58 = vst [vmem:[%s2 + $0x140] sm:$0xff] 0.0
    %59 = vst [vmem:[%s2 + $0x148] sm:$0xff] 0.0
    %60 = vst [vmem:[%s2 + $0x150] sm:$0xff] 0.0
    %61 = vst [vmem:[%s2 + $0x158] sm:$0xff] 0.0
    %62 = vst [vmem:[%s2 + $0x160] sm:$0xff] 0.0
    %63 = vst [vmem:[%s2 + $0x168] sm:$0xff] 0.0
    %64 = vst [vmem:[%s2 + $0x170] sm:$0xff] 0.0
    %65 = vst [vmem:[%s2 + $0x178] sm:$0xff] 0.0
    %66 = vst [vmem:[%s2 + $0x180] sm:$0xff] 0.0
    %67 = vst [vmem:[%s2 + $0x188] sm:$0xff] 0.0
    %68 = vst [vmem:[%s2 + $0x190] sm:$0xff] 0.0
    %69 = vst [vmem:[%s2 + $0x198] sm:$0xff] 0.0
    %70 = vst [vmem:[%s2 + $0x1a0] sm:$0xff] 0.0
    %71 = vst [vmem:[%s2 + $0x1a8] sm:$0xff] 0.0
    %72 = vst [vmem:[%s2 + $0x1b0] sm:$0xff] 0.0
    %73 = vst [vmem:[%s2 + $0x1b8] sm:$0xff] 0.0
    %74 = vst [vmem:[%s2 + $0x1c0] sm:$0xff] 0.0
    %75 = vst [vmem:[%s2 + $0x1c8] sm:$0xff] 0.0
    %76 = vst [vmem:[%s2 + $0x1d0] sm:$0xff] 0.0
    %77 = vst [vmem:[%s2 + $0x1d8] sm:$0xff] 0.0
    %78 = vst [vmem:[%s2 + $0x1e0] sm:$0xff] 0.0
    %79 = vst [vmem:[%s2 + $0x1e8] sm:$0xff] 0.0
    %80 = vst [vmem:[%s2 + $0x1f0] sm:$0xff] 0.0
    %81 = vst [vmem:[%s2 + $0x1f8] sm:$0xff] 0.0
  $region13: #{patchgan_forward.10} parent=0 // pred_fallthru
    _
  %v82 = vld [vmem:[%s2] sm:$0xff]
  %v83 = vld [vmem:[%s2 + $0x8] sm:$0xff]
  %v84 = vld [vmem:[%s2 + $0x10] sm:$0xff]
  %v85 = vld [vmem:[%s2 + $0x18] sm:$0xff]
  %v86 = vld [vmem:[%s2 + $0x20] sm:$0xff]
  %v87 = vld [vmem:[%s2 + $0x28] sm:$0xff]
  %v88 = vld [vmem:[%s2 + $0x30] sm:$0xff]
  %v89 = vld [vmem:[%s2 + $0x38] sm:$0xff]
  %v90 = vld [vmem:[%s2 + $0x40] sm:$0xff]
  %v91 = vld [vmem:[%s2 + $0x48] sm:$0xff]
  %v92 = vld [vmem:[%s2 + $0x50] sm:$0xff]
  %v93 = vld [vmem:[%s2 + $0x58] sm:$0xff]
  %v94 = vld [vmem:[%s2 + $0x60] sm:$0xff]
  %v95 = vld [vmem:[%s2 + $0x68] sm:$0xff]
  %v96 = vld [vmem:[%s2 + $0x70] sm:$0xff]
  %v97 = vld [vmem:[%s2 + $0x78] sm:$0xff]
  %v98 = vld [vmem:[%s2 + $0x80] sm:$0xff]
  %v99 = vld [vmem:[%s2 + $0x88] sm:$0xff]
  %v100 = vld [vmem:[%s2 + $0x90] sm:$0xff]
  %v101 = vld [vmem:[%s2 + $0x98] sm:$0xff]
  %v102 = vld [vmem:[%s2 + $0xa0] sm:$0xff]
  %v103 = vld [vmem:[%s2 + $0xa8] sm:$0xff]
  %v104 = vld [vmem:[%s2 + $0xb0] sm:$0xff]
  %v105 = vld [vmem:[%s2 + $0xb8] sm:$0xff]
  %v106 = vld [vmem:[%s2 + $0xc0] sm:$0xff]
  %v107 = vld [vmem:[%s2 + $0xc8] sm:$0xff]
  %v108 = vld [vmem:[%s2 + $0xd0] sm:$0xff]
  %v109 = vld [vmem:[%s2 + $0xd8] sm:$0xff]
  %v110 = vld [vmem:[%s2 + $0xe0] sm:$0xff]
  %v111 = vld [vmem:[%s2 + $0xe8] sm:$0xff]
  %v112 = vld [vmem:[%s2 + $0xf0] sm:$0xff]
  %v113 = vld [vmem:[%s2 + $0xf8] sm:$0xff]
  %v114 = vld [vmem:[%s2 + $0x100] sm:$0xff]
  %v115 = vld [vmem:[%s2 + $0x108] sm:$0xff]
  %v116 = vld [vmem:[%s2 + $0x110] sm:$0xff]
  %v117 = vld [vmem:[%s2 + $0x118] sm:$0xff]
  %v118 = vld [vmem:[%s2 + $0x120] sm:$0xff]
  %v119 = vld [vmem:[%s2 + $0x128] sm:$0xff]
  %v120 = vld [vmem:[%s2 + $0x130] sm:$0xff]
  %v121 = vld [vmem:[%s2 + $0x138] sm:$0xff]
  %v122 = vld [vmem:[%s2 + $0x140] sm:$0xff]
  %v123 = vld [vmem:[%s2 + $0x148] sm:$0xff]
  %v124 = vld [vmem:[%s2 + $0x150] sm:$0xff]
  %v125 = vld [vmem:[%s2 + $0x158] sm:$0xff]
  %v126 = vld [vmem:[%s2 + $0x160] sm:$0xff]
  %v127 = vld [vmem:[%s2 + $0x168] sm:$0xff]
  %v128 = vld [vmem:[%s2 + $0x170] sm:$0xff]
  %v129 = vld [vmem:[%s2 + $0x178] sm:$0xff]
  %v130 = vld [vmem:[%s2 + $0x180] sm:$0xff]
  %v131 = vld [vmem:[%s2 + $0x188] sm:$0xff]
  %v132 = vld [vmem:[%s2 + $0x190] sm:$0xff]
  %v133 = vld [vmem:[%s2 + $0x198] sm:$0xff]
  %v134 = vld [vmem:[%s2 + $0x1a0] sm:$0xff]
  %v135 = vld [vmem:[%s2 + $0x1a8] sm:$0xff]
  %v136 = vld [vmem:[%s2 + $0x1b0] sm:$0xff]
  %v137 = vld [vmem:[%s2 + $0x1b8] sm:$0xff]
  %v138 = vld [vmem:[%s2 + $0x1c0] sm:$0xff]
  %v139 = vld [vmem:[%s2 + $0x1c8] sm:$0xff]
  %v140 = vld [vmem:[%s2 + $0x1d0] sm:$0xff]
  %v141 = vld [vmem:[%s2 + $0x1d8] sm:$0xff]
  %v142 = vld [vmem:[%s2 + $0x1e0] sm:$0xff]
  %v143 = vld [vmem:[%s2 + $0x1e8] sm:$0xff]
  %v144 = vld [vmem:[%s2 + $0x1f0] sm:$0xff]
  %v145 = vld [vmem:[%s2 + $0x1f8] sm:$0xff]
  %v146 = vld [vmem:[%s0] sm:$0xff]
  %v147 = vld [vmem:[%s0 + $0x8] sm:$0xff]
  %v148 = vld [vmem:[%s0 + $0x10] sm:$0xff]
  %v149 = vld [vmem:[%s0 + $0x18] sm:$0xff]
  %v150 = vld [vmem:[%s0 + $0x20] sm:$0xff]
  %v151 = vld [vmem:[%s0 + $0x28] sm:$0xff]
  %v152 = vld [vmem:[%s0 + $0x30] sm:$0xff]
  %v153 = vld [vmem:[%s0 + $0x38] sm:$0xff]
  %v154 = vld [vmem:[%s0 + $0x40] sm:$0xff]
  %v155 = vld [vmem:[%s0 + $0x48] sm:$0xff]
  %v156 = vld [vmem:[%s0 + $0x50] sm:$0xff]
  %v157 = vld [vmem:[%s0 + $0x58] sm:$0xff]
  %v158 = vld [vmem:[%s0 + $0x60] sm:$0xff]
  %v159 = vld [vmem:[%s0 + $0x68] sm:$0xff]
  %v160 = vld [vmem:[%s0 + $0x70] sm:$0xff]
  %v161 = vld [vmem:[%s0 + $0x78] sm:$0xff]
  %v162 = vld [vmem:[%s0 + $0x80] sm:$0xff]
  %v163 = vld [vmem:[%s0 + $0x88] sm:$0xff]
  %v164 = vld [vmem:[%s0 + $0x90] sm:$0xff]
  %v165 = vld [vmem:[%s0 + $0x98] sm:$0xff]
  %v166 = vld [vmem:[%s0 + $0xa0] sm:$0xff]
  %v167 = vld [vmem:[%s0 + $0xa8] sm:$0xff]
  %v168 = vld [vmem:[%s0 + $0xb0] sm:$0xff]
  %v169 = vld [vmem:[%s0 + $0xb8] sm:$0xff]
  %v170 = vld [vmem:[%s0 + $0xc0] sm:$0xff]
  %v171 = vld [vmem:[%s0 + $0xc8] sm:$0xff]
  %v172 = vld [vmem:[%s0 + $0xd0] sm:$0xff]
  %v173 = vld [vmem:[%s0 + $0xd8] sm:$0xff]
  %v174 = vld [vmem:[%s0 + $0xe0] sm:$0xff]
  %v175 = vld [vmem:[%s0 + $0xe8] sm:$0xff]
  %v176 = vld [vmem:[%s0 + $0xf0] sm:$0xff]
  %v177 = vld [vmem:[%s0 + $0xf8] sm:$0xff]
  %v178 = vld [vmem:[%s0 + $0x100] sm:$0xff]
  %v179 = vld [vmem:[%s0 + $0x108] sm:$0xff]
  %v180 = vld [vmem:[%s0 + $0x110] sm:$0xff]
  %v181 = vld [vmem:[%s0 + $0x118] sm:$0xff]
  %v182 = vld [vmem:[%s0 + $0x120] sm:$0xff]
  %v183 = vld [vmem:[%s0 + $0x128] sm:$0xff]
  %v184 = vld [vmem:[%s0 + $0x130] sm:$0xff]
  %v185 = vld [vmem:[%s0 + $0x138] sm:$0xff]
  %v186 = vld [vmem:[%s0 + $0x140] sm:$0xff]
  %v187 = vld [vmem:[%s0 + $0x148] sm:$0xff]
  %v188 = vld [vmem:[%s0 + $0x150] sm:$0xff]
  %v189 = vld [vmem:[%s0 + $0x158] sm:$0xff]
  %v190 = vld [vmem:[%s0 + $0x160] sm:$0xff]
  %v191 = vld [vmem:[%s0 + $0x168] sm:$0xff]
  %v192 = vld [vmem:[%s0 + $0x170] sm:$0xff]
  %v193 = vld [vmem:[%s0 + $0x178] sm:$0xff]
  %v194 = vld [vmem:[%s0 + $0x180] sm:$0xff]
  %v195 = vld [vmem:[%s0 + $0x188] sm:$0xff]
  %v196 = vld [vmem:[%s0 + $0x190] sm:$0xff]
  %v197 = vld [vmem:[%s0 + $0x198] sm:$0xff]
  %v198 = vld [vmem:[%s0 + $0x1a0] sm:$0xff]
  %v199 = vld [vmem:[%s0 + $0x1a8] sm:$0xff]
  %v200 = vld [vmem:[%s0 + $0x1b0] sm:$0xff]
  %v201 = vld [vmem:[%s0 + $0x1b8] sm:$0xff]
  %v202 = vld [vmem:[%s0 + $0x1c0] sm:$0xff]
  %v203 = vld [vmem:[%s0 + $0x1c8] sm:$0xff]
  %v204 = vld [vmem:[%s0 + $0x1d0] sm:$0xff]
  %v205 = vld [vmem:[%s0 + $0x1d8] sm:$0xff]
  %v206 = vld [vmem:[%s0 + $0x1e0] sm:$0xff]
  %v207 = vld [vmem:[%s0 + $0x1e8] sm:$0xff]
  %v208 = vld [vmem:[%s0 + $0x1f0] sm:$0xff]
  %v209 = vld [vmem:[%s0 + $0x1f8] sm:$0xff]
  %v210 = vld [vmem:[%s1] sm:$0xff]
  %v211 = vld [vmem:[%s1 + $0x8] sm:$0xff]
  %v212 = vld [vmem:[%s1 + $0x10] sm:$0xff]
  %v213 = vld [vmem:[%s1 + $0x18] sm:$0xff]
  %v214 = vld [vmem:[%s1 + $0x20] sm:$0xff]
  %v215 = vld [vmem:[%s1 + $0x28] sm:$0xff]
  %v216 = vld [vmem:[%s1 + $0x30] sm:$0xff]
  %v217 = vld [vmem:[%s1 + $0x38] sm:$0xff]
  %v218 = vld [vmem:[%s1 + $0x40] sm:$0xff]
  %v219 = vld [vmem:[%s1 + $0x48] sm:$0xff]
  %v220 = vld [vmem:[%s1 + $0x50] sm:$0xff]
  %v221 = vld [vmem:[%s1 + $0x58] sm:$0xff]
  %v222 = vld [vmem:[%s1 + $0x60] sm:$0xff]
  %v223 = vld [vmem:[%s1 + $0x68] sm:$0xff]
  %v224 = vld [vmem:[%s1 + $0x70] sm:$0xff]
  %v225 = vld [vmem:[%s1 + $0x78] sm:$0xff]
  %226 = vmatprep.subr.mxu0 0.0
  %227 = vmatpush1.msra.mxu0 %v225
  %228 = vmatprep.subr.mxu0 0.0
  %229 = vmatpush1.msra.mxu0 %v224
  %230 = vmatprep.subr.mxu0 0.0
  %231 = vmatpush1.msra.mxu0 %v223
  %232 = vmatprep.subr.mxu0 0.0
  %233 = vmatpush1.msra.mxu0 %v222
  %234 = vmatprep.subr.mxu0 0.0
  %235 = vmatpush1.msra.mxu0 %v221
  %236 = vmatprep.subr.mxu0 0.0
  %237 = vmatpush1.msra.mxu0 %v220
  %238 = vmatprep.subr.mxu0 0.0
  %239 = vmatpush1.msra.mxu0 %v219
  %240 = vmatprep.subr.mxu0 0.0
  %241 = vmatpush1.msra.mxu0 %v218
  %242 = vmatprep.subr.mxu0 0.0
  %243 = vmatpush1.msra.mxu0 %v217
  %244 = vmatprep.subr.mxu0 0.0
  %245 = vmatpush1.msra.mxu0 %v216
  %246 = vmatprep.subr.mxu0 0.0
  %247 = vmatpush1.msra.mxu0 %v215
  %248 = vmatprep.subr.mxu0 0.0
  %249 = vmatpush1.msra.mxu0 %v214
  %250 = vmatprep.subr.mxu0 0.0
  %251 = vmatpush1.msra.mxu0 %v213
  %252 = vmatprep.subr.mxu0 0.0
  %253 = vmatpush1.msra.mxu0 %v212
  %254 = vmatprep.subr.mxu0 0.0
  %255 = vmatpush1.msra.mxu0 %v211
  %256 = vmatprep.subr.mxu0 0.0
  %257 = vmatpush1.msra.mxu0 %v210
  %258 = vmatprep.subr.mxu0 0.0
  %259 = vmatpush2.msra.mxu0 0.0
  %260 = vmatprep.subr.mxu0 0.0
  %261 = vmatpush2.msra.mxu0 0.0
  %262 = vmatprep.subr.mxu0 0.0
  %263 = vmatpush2.msra.mxu0 0.0
  %264 = vmatprep.subr.mxu0 0.0
  %265 = vmatpush2.msra.mxu0 0.0
  %266 = vmatprep.subr.mxu0 0.0
  %267 = vmatpush2.msra.mxu0 0.0
  %268 = vmatprep.subr.mxu0 0.0
  %269 = vmatpush2.msra.mxu0 0.0
  %270 = vmatprep.subr.mxu0 0.0
  %271 = vmatpush2.msra.mxu0 0.0
  %272 = vmatprep.subr.mxu0 0.0
  %273 = vmatpush2.msra.mxu0 0.0
  %274 = vmatprep.subr.mxu0 0.0
  %275 = vmatpush2.msra.mxu0 0.0
  %276 = vmatprep.subr.mxu0 0.0
  %277 = vmatpush2.msra.mxu0 0.0
  %278 = vmatprep.subr.mxu0 0.0
  %279 = vmatpush2.msra.mxu0 0.0
  %280 = vmatprep.subr.mxu0 0.0
  %281 = vmatpush2.msra.mxu0 0.0
  %282 = vmatprep.subr.mxu0 0.0
  %283 = vmatpush2.msra.mxu0 0.0
  %284 = vmatprep.subr.mxu0 0.0
  %285 = vmatpush2.msra.mxu0 0.0
  %286 = vmatprep.subr.mxu0 0.0
  %287 = vmatpush2.msra.mxu0 0.0
  %288 = vmatprep.subr.mxu0 0.0
  %289 = vmatpush2.msra.mxu0 0.0
  %290 = vmatprep.mubr.f32.mxu0 0.0
  %291 = vmatmul.mubr.f32.gmra.mxu0 %v146
  %v292 = vpop.f32.mrf.mxu0
  %v293 = vadd.f32 0.0, %v292
  %v294 = vpop.f32.mrf.mxu0
  %295 = vmatprep.mubr.f32.mxu0 0.0
  %296 = vmatmul.mubr.f32.gmra.mxu0 %v147
  %v297 = vpop.f32.mrf.mxu0
  %v298 = vadd.f32 0.0, %v297
  %v299 = vpop.f32.mrf.mxu0
  %300 = vmatprep.mubr.f32.mxu0 0.0
  %301 = vmatmul.mubr.f32.gmra.mxu0 %v148
  %v302 = vpop.f32.mrf.mxu0
  %v303 = vadd.f32 0.0, %v302
  %v304 = vpop.f32.mrf.mxu0
  %305 = vmatprep.mubr.f32.mxu0 0.0
  %306 = vmatmul.mubr.f32.gmra.mxu0 %v149
  %v307 = vpop.f32.mrf.mxu0
  %v308 = vadd.f32 0.0, %v307
  %v309 = vpop.f32.mrf.mxu0
  %310 = vmatprep.mubr.f32.mxu0 0.0
  %311 = vmatmul.mubr.f32.gmra.mxu0 %v150
  %v312 = vpop.f32.mrf.mxu0
  %v313 = vadd.f32 0.0, %v312
  %v314 = vpop.f32.mrf.mxu0
  %315 = vmatprep.mubr.f32.mxu0 0.0
  %316 = vmatmul.mubr.f32.gmra.mxu0 %v151
  %v317 = vpop.f32.mrf.mxu0
  %v318 = vadd.f32 0.0, %v317
  %v319 = vpop.f32.mrf.mxu0
  %320 = vmatprep.mubr.f32.mxu0 0.0
  %321 = vmatmul.mubr.f32.gmra.mxu0 %v152
  %v322 = vpop.f32.mrf.mxu0
  %v323 = vadd.f32 0.0, %v322
  %v324 = vpop.f32.mrf.mxu0
  %325 = vmatprep.mubr.f32.mxu0 0.0
  %326 = vmatmul.mubr.f32.gmra.mxu0 %v153
  %v327 = vpop.f32.mrf.mxu0
  %v328 = vadd.f32 0.0, %v327
  %v329 = vpop.f32.mrf.mxu0
  %330 = vmatprep.mubr.f32.mxu0 0.0
  %331 = vmatmul.mubr.f32.gmra.mxu0 %v154
  %v332 = vpop.f32.mrf.mxu0
  %v333 = vadd.f32 0.0, %v332
  %v334 = vpop.f32.mrf.mxu0
  %335 = vmatprep.mubr.f32.mxu0 0.0
  %336 = vmatmul.mubr.f32.gmra.mxu0 %v155
  %v337 = vpop.f32.mrf.mxu0
  %v338 = vadd.f32 0.0, %v337
  %v339 = vpop.f32.mrf.mxu0
  %340 = vmatprep.mubr.f32.mxu0 0.0
  %341 = vmatmul.mubr.f32.gmra.mxu0 %v156
  %v342 = vpop.f32.mrf.mxu0
  %v343 = vadd.f32 0.0, %v342
  %v344 = vpop.f32.mrf.mxu0
  %345 = vmatprep.mubr.f32.mxu0 0.0
  %346 = vmatmul.mubr.f32.gmra.mxu0 %v157
  %v347 = vpop.f32.mrf.mxu0
  %v348 = vadd.f32 0.0, %v347
  %v349 = vpop.f32.mrf.mxu0
  %350 = vmatprep.mubr.f32.mxu0 0.0
  %351 = vmatmul.mubr.f32.gmra.mxu0 %v158
  %v352 = vpop.f32.mrf.mxu0
  %v353 = vadd.f32 0.0, %v352
  %v354 = vpop.f32.mrf.mxu0
  %355 = vmatprep.mubr.f32.mxu0 0.0
  %356 = vmatmul.mubr.f32.gmra.mxu0 %v159
  %v357 = vpop.f32.mrf.mxu0
  %v358 = vadd.f32 0.0, %v357
  %v359 = vpop.f32.mrf.mxu0
  %360 = vmatprep.mubr.f32.mxu0 0.0
  %361 = vmatmul.mubr.f32.gmra.mxu0 %v160
  %v362 = vpop.f32.mrf.mxu0
  %v363 = vadd.f32 0.0, %v362
  %v364 = vpop.f32.mrf.mxu0
  %365 = vmatprep.mubr.f32.mxu0 0.0
  %366 = vmatmul.mubr.f32.gmra.mxu0 %v161
  %v367 = vpop.f32.mrf.mxu0
  %v368 = vadd.f32 0.0, %v367
  %v369 = vpop.f32.mrf.mxu0
  %370 = vmatprep.mubr.f32.mxu0 0.0
  %371 = vmatmul.mubr.f32.gmra.mxu0 %v162
  %v372 = vpop.f32.mrf.mxu0
  %v373 = vadd.f32 0.0, %v372
  %v374 = vpop.f32.mrf.mxu0
  %375 = vmatprep.mubr.f32.mxu0 0.0
  %376 = vmatmul.mubr.f32.gmra.mxu0 %v163
  %v377 = vpop.f32.mrf.mxu0
  %v378 = vadd.f32 0.0, %v377
  %v379 = vpop.f32.mrf.mxu0
  %380 = vmatprep.mubr.f32.mxu0 0.0
  %381 = vmatmul.mubr.f32.gmra.mxu0 %v164
  %v382 = vpop.f32.mrf.mxu0
  %v383 = vadd.f32 0.0, %v382
  %v384 = vpop.f32.mrf.mxu0
  %385 = vmatprep.mubr.f32.mxu0 0.0
  %386 = vmatmul.mubr.f32.gmra.mxu0 %v165
  %v387 = vpop.f32.mrf.mxu0
  %v388 = vadd.f32 0.0, %v387
  %v389 = vpop.f32.mrf.mxu0
  %390 = vmatprep.mubr.f32.mxu0 0.0
  %391 = vmatmul.mubr.f32.gmra.mxu0 %v166
  %v392 = vpop.f32.mrf.mxu0
  %v393 = vadd.f32 0.0, %v392
  %v394 = vpop.f32.mrf.mxu0
  %395 = vmatprep.mubr.f32.mxu0 0.0
  %396 = vmatmul.mubr.f32.gmra.mxu0 %v167
  %v397 = vpop.f32.mrf.mxu0
  %v398 = vadd.f32 0.0, %v397
  %v399 = vpop.f32.mrf.mxu0
  %400 = vmatprep.mubr.f32.mxu0 0.0
  %401 = vmatmul.mubr.f32.gmra.mxu0 %v168
  %v402 = vpop.f32.mrf.mxu0
  %v403 = vadd.f32 0.0, %v402
  %v404 = vpop.f32.mrf.mxu0
  %405 = vmatprep.mubr.f32.mxu0 0.0
  %406 = vmatmul.mubr.f32.gmra.mxu0 %v169
  %v407 = vpop.f32.mrf.mxu0
  %v408 = vadd.f32 0.0, %v407
  %v409 = vpop.f32.mrf.mxu0
  %410 = vmatprep.mubr.f32.mxu0 0.0
  %411 = vmatmul.mubr.f32.gmra.mxu0 %v170
  %v412 = vpop.f32.mrf.mxu0
  %v413 = vadd.f32 0.0, %v412
  %v414 = vpop.f32.mrf.mxu0
  %415 = vmatprep.mubr.f32.mxu0 0.0
  %416 = vmatmul.mubr.f32.gmra.mxu0 %v171
  %v417 = vpop.f32.mrf.mxu0
  %v418 = vadd.f32 0.0, %v417
  %v419 = vpop.f32.mrf.mxu0
  %420 = vmatprep.mubr.f32.mxu0 0.0
  %421 = vmatmul.mubr.f32.gmra.mxu0 %v172
  %v422 = vpop.f32.mrf.mxu0
  %v423 = vadd.f32 0.0, %v422
  %v424 = vpop.f32.mrf.mxu0
  %425 = vmatprep.mubr.f32.mxu0 0.0
  %426 = vmatmul.mubr.f32.gmra.mxu0 %v173
  %v427 = vpop.f32.mrf.mxu0
  %v428 = vadd.f32 0.0, %v427
  %v429 = vpop.f32.mrf.mxu0
  %430 = vmatprep.mubr.f32.mxu0 0.0
  %431 = vmatmul.mubr.f32.gmra.mxu0 %v174
  %v432 = vpop.f32.mrf.mxu0
  %v433 = vadd.f32 0.0, %v432
  %v434 = vpop.f32.mrf.mxu0
  %435 = vmatprep.mubr.f32.mxu0 0.0
  %436 = vmatmul.mubr.f32.gmra.mxu0 %v175
  %v437 = vpop.f32.mrf.mxu0
  %v438 = vadd.f32 0.0, %v437
  %v439 = vpop.f32.mrf.mxu0
  %440 = vmatprep.mubr.f32.mxu0 0.0
  %441 = vmatmul.mubr.f32.gmra.mxu0 %v176
  %v442 = vpop.f32.mrf.mxu0
  %v443 = vadd.f32 0.0, %v442
  %v444 = vpop.f32.mrf.mxu0
  %445 = vmatprep.mubr.f32.mxu0 0.0
  %446 = vmatmul.mubr.f32.gmra.mxu0 %v177
  %v447 = vpop.f32.mrf.mxu0
  %v448 = vadd.f32 0.0, %v447
  %v449 = vpop.f32.mrf.mxu0
  %450 = vmatprep.mubr.f32.mxu0 0.0
  %451 = vmatmul.mubr.f32.gmra.mxu0 %v178
  %v452 = vpop.f32.mrf.mxu0
  %v453 = vadd.f32 0.0, %v452
  %v454 = vpop.f32.mrf.mxu0
  %455 = vmatprep.mubr.f32.mxu0 0.0
  %456 = vmatmul.mubr.f32.gmra.mxu0 %v179
  %v457 = vpop.f32.mrf.mxu0
  %v458 = vadd.f32 0.0, %v457
  %v459 = vpop.f32.mrf.mxu0
  %460 = vmatprep.mubr.f32.mxu0 0.0
  %461 = vmatmul.mubr.f32.gmra.mxu0 %v180
  %v462 = vpop.f32.mrf.mxu0
  %v463 = vadd.f32 0.0, %v462
  %v464 = vpop.f32.mrf.mxu0
  %465 = vmatprep.mubr.f32.mxu0 0.0
  %466 = vmatmul.mubr.f32.gmra.mxu0 %v181
  %v467 = vpop.f32.mrf.mxu0
  %v468 = vadd.f32 0.0, %v467
  %v469 = vpop.f32.mrf.mxu0
  %470 = vmatprep.mubr.f32.mxu0 0.0
  %471 = vmatmul.mubr.f32.gmra.mxu0 %v182
  %v472 = vpop.f32.mrf.mxu0
  %v473 = vadd.f32 0.0, %v472
  %v474 = vpop.f32.mrf.mxu0
  %475 = vmatprep.mubr.f32.mxu0 0.0
  %476 = vmatmul.mubr.f32.gmra.mxu0 %v183
  %v477 = vpop.f32.mrf.mxu0
  %v478 = vadd.f32 0.0, %v477
  %v479 = vpop.f32.mrf.mxu0
  %480 = vmatprep.mubr.f32.mxu0 0.0
  %481 = vmatmul.mubr.f32.gmra.mxu0 %v184
  %v482 = vpop.f32.mrf.mxu0
  %v483 = vadd.f32 0.0, %v482
  %v484 = vpop.f32.mrf.mxu0
  %485 = vmatprep.mubr.f32.mxu0 0.0
  %486 = vmatmul.mubr.f32.gmra.mxu0 %v185
  %v487 = vpop.f32.mrf.mxu0
  %v488 = vadd.f32 0.0, %v487
  %v489 = vpop.f32.mrf.mxu0
  %490 = vmatprep.mubr.f32.mxu0 0.0
  %491 = vmatmul.mubr.f32.gmra.mxu0 %v186
  %v492 = vpop.f32.mrf.mxu0
  %v493 = vadd.f32 0.0, %v492
  %v494 = vpop.f32.mrf.mxu0
  %495 = vmatprep.mubr.f32.mxu0 0.0
  %496 = vmatmul.mubr.f32.gmra.mxu0 %v187
  %v497 = vpop.f32.mrf.mxu0
  %v498 = vadd.f32 0.0, %v497
  %v499 = vpop.f32.mrf.mxu0
  %500 = vmatprep.mubr.f32.mxu0 0.0
  %501 = vmatmul.mubr.f32.gmra.mxu0 %v188
  %v502 = vpop.f32.mrf.mxu0
  %v503 = vadd.f32 0.0, %v502
  %v504 = vpop.f32.mrf.mxu0
  %505 = vmatprep.mubr.f32.mxu0 0.0
  %506 = vmatmul.mubr.f32.gmra.mxu0 %v189
  %v507 = vpop.f32.mrf.mxu0
  %v508 = vadd.f32 0.0, %v507
  %v509 = vpop.f32.mrf.mxu0
  %510 = vmatprep.mubr.f32.mxu0 0.0
  %511 = vmatmul.mubr.f32.gmra.mxu0 %v190
  %v512 = vpop.f32.mrf.mxu0
  %v513 = vadd.f32 0.0, %v512
  %v514 = vpop.f32.mrf.mxu0
  %515 = vmatprep.mubr.f32.mxu0 0.0
  %516 = vmatmul.mubr.f32.gmra.mxu0 %v191
  %v517 = vpop.f32.mrf.mxu0
  %v518 = vadd.f32 0.0, %v517
  %v519 = vpop.f32.mrf.mxu0
  %520 = vmatprep.mubr.f32.mxu0 0.0
  %521 = vmatmul.mubr.f32.gmra.mxu0 %v192
  %v522 = vpop.f32.mrf.mxu0
  %v523 = vadd.f32 0.0, %v522
  %v524 = vpop.f32.mrf.mxu0
  %525 = vmatprep.mubr.f32.mxu0 0.0
  %526 = vmatmul.mubr.f32.gmra.mxu0 %v193
  %v527 = vpop.f32.mrf.mxu0
  %v528 = vadd.f32 0.0, %v527
  %v529 = vpop.f32.mrf.mxu0
  %530 = vmatprep.mubr.f32.mxu0 0.0
  %531 = vmatmul.mubr.f32.gmra.mxu0 %v194
  %v532 = vpop.f32.mrf.mxu0
  %v533 = vadd.f32 0.0, %v532
  %v534 = vpop.f32.mrf.mxu0
  %535 = vmatprep.mubr.f32.mxu0 0.0
  %536 = vmatmul.mubr.f32.gmra.mxu0 %v195
  %v537 = vpop.f32.mrf.mxu0
  %v538 = vadd.f32 0.0, %v537
  %v539 = vpop.f32.mrf.mxu0
  %540 = vmatprep.mubr.f32.mxu0 0.0
  %541 = vmatmul.mubr.f32.gmra.mxu0 %v196
  %v542 = vpop.f32.mrf.mxu0
  %v543 = vadd.f32 0.0, %v542
  %v544 = vpop.f32.mrf.mxu0
  %545 = vmatprep.mubr.f32.mxu0 0.0
  %546 = vmatmul.mubr.f32.gmra.mxu0 %v197
  %v547 = vpop.f32.mrf.mxu0
  %v548 = vadd.f32 0.0, %v547
  %v549 = vpop.f32.mrf.mxu0
  %550 = vmatprep.mubr.f32.mxu0 0.0
  %551 = vmatmul.mubr.f32.gmra.mxu0 %v198
  %v552 = vpop.f32.mrf.mxu0
  %v553 = vadd.f32 0.0, %v552
  %v554 = vpop.f32.mrf.mxu0
  %555 = vmatprep.mubr.f32.mxu0 0.0
  %556 = vmatmul.mubr.f32.gmra.mxu0 %v199
  %v557 = vpop.f32.mrf.mxu0
  %v558 = vadd.f32 0.0, %v557
  %v559 = vpop.f32.mrf.mxu0
  %560 = vmatprep.mubr.f32.mxu0 0.0
  %561 = vmatmul.mubr.f32.gmra.mxu0 %v200
  %v562 = vpop.f32.mrf.mxu0
  %v563 = vadd.f32 0.0, %v562
  %v564 = vpop.f32.mrf.mxu0
  %565 = vmatprep.mubr.f32.mxu0 0.0
  %566 = vmatmul.mubr.f32.gmra.mxu0 %v201
  %v567 = vpop.f32.mrf.mxu0
  %v568 = vadd.f32 0.0, %v567
  %v569 = vpop.f32.mrf.mxu0
  %570 = vmatprep.mubr.f32.mxu0 0.0
  %571 = vmatmul.mubr.f32.gmra.mxu0 %v202
  %v572 = vpop.f32.mrf.mxu0
  %v573 = vadd.f32 0.0, %v572
  %v574 = vpop.f32.mrf.mxu0
  %575 = vmatprep.mubr.f32.mxu0 0.0
  %576 = vmatmul.mubr.f32.gmra.mxu0 %v203
  %v577 = vpop.f32.mrf.mxu0
  %v578 = vadd.f32 0.0, %v577
  %v579 = vpop.f32.mrf.mxu0
  %580 = vmatprep.mubr.f32.mxu0 0.0
  %581 = vmatmul.mubr.f32.gmra.mxu0 %v204
  %v582 = vpop.f32.mrf.mxu0
  %v583 = vadd.f32 0.0, %v582
  %v584 = vpop.f32.mrf.mxu0
  %585 = vmatprep.mubr.f32.mxu0 0.0
  %586 = vmatmul.mubr.f32.gmra.mxu0 %v205
  %v587 = vpop.f32.mrf.mxu0
  %v588 = vadd.f32 0.0, %v587
  %v589 = vpop.f32.mrf.mxu0
  %590 = vmatprep.mubr.f32.mxu0 0.0
  %591 = vmatmul.mubr.f32.gmra.mxu0 %v206
  %v592 = vpop.f32.mrf.mxu0
  %v593 = vadd.f32 0.0, %v592
  %v594 = vpop.f32.mrf.mxu0
  %595 = vmatprep.mubr.f32.mxu0 0.0
  %596 = vmatmul.mubr.f32.gmra.mxu0 %v207
  %v597 = vpop.f32.mrf.mxu0
  %v598 = vadd.f32 0.0, %v597
  %v599 = vpop.f32.mrf.mxu0
  %600 = vmatprep.mubr.f32.mxu0 0.0
  %601 = vmatmul.mubr.f32.gmra.mxu0 %v208
  %v602 = vpop.f32.mrf.mxu0
  %v603 = vadd.f32 0.0, %v602
  %v604 = vpop.f32.mrf.mxu0
  %605 = vmatprep.mubr.f32.mxu0 0.0
  %606 = vmatmul.mubr.f32.gmra.mxu0 %v209
  %v607 = vpop.f32.mrf.mxu0
  %v608 = vadd.f32 0.0, %v607
  %v609 = vpop.f32.mrf.mxu0
  %610 = vdwg.mxu0
  %v611 = vadd.f32 %v82, %v293
  %v612 = vadd.f32 %v83, %v298
  %v613 = vadd.f32 %v84, %v303
  %v614 = vadd.f32 %v85, %v308
  %v615 = vadd.f32 %v86, %v313
  %v616 = vadd.f32 %v87, %v318
  %v617 = vadd.f32 %v88, %v323
  %v618 = vadd.f32 %v89, %v328
  %v619 = vadd.f32 %v90, %v333
  %v620 = vadd.f32 %v91, %v338
  %v621 = vadd.f32 %v92, %v343
  %v622 = vadd.f32 %v93, %v348
  %v623 = vadd.f32 %v94, %v353
  %v624 = vadd.f32 %v95, %v358
  %v625 = vadd.f32 %v96, %v363
  %v626 = vadd.f32 %v97, %v368
  %v627 = vadd.f32 %v98, %v373
  %v628 = vadd.f32 %v99, %v378
  %v629 = vadd.f32 %v100, %v383
  %v630 = vadd.f32 %v101, %v388
  %v631 = vadd.f32 %v102, %v393
  %v632 = vadd.f32 %v103, %v398
  %v633 = vadd.f32 %v104, %v403
  %v634 = vadd.f32 %v105, %v408
  %v635 = vadd.f32 %v106, %v413
  %v636 = vadd.f32 %v107, %v418
  %v637 = vadd.f32 %v108, %v423
  %v638 = vadd.f32 %v109, %v428
  %v639 = vadd.f32 %v110, %v433
  %v640 = vadd.f32 %v111, %v438
  %v641 = vadd.f32 %v112, %v443
  %v642 = vadd.f32 %v113, %v448
  %v643 = vadd.f32 %v114, %v453
  %v644 = vadd.f32 %v115, %v458
  %v645 = vadd.f32 %v116, %v463
  %v646 = vadd.f32 %v117, %v468
  %v647 = vadd.f32 %v118, %v473
  %v648 = vadd.f32 %v119, %v478
  %v649 = vadd.f32 %v120, %v483
  %v650 = vadd.f32 %v121, %v488
  %v651 = vadd.f32 %v122, %v493
  %v652 = vadd.f32 %v123, %v498
  %v653 = vadd.f32 %v124, %v503
  %v654 = vadd.f32 %v125, %v508
  %v655 = vadd.f32 %v126, %v513
  %v656 = vadd.f32 %v127, %v518
  %v657 = vadd.f32 %v128, %v523
  %v658 = vadd.f32 %v129, %v528
  %v659 = vadd.f32 %v130, %v533
  %v660 = vadd.f32 %v131, %v538
  %v661 = vadd.f32 %v132, %v543
  %v662 = vadd.f32 %v133, %v548
  %v663 = vadd.f32 %v134, %v553
  %v664 = vadd.f32 %v135, %v558
  %v665 = vadd.f32 %v136, %v563
  %v666 = vadd.f32 %v137, %v568
  %v667 = vadd.f32 %v138, %v573
  %v668 = vadd.f32 %v139, %v578
  %v669 = vadd.f32 %v140, %v583
  %v670 = vadd.f32 %v141, %v588
  %v671 = vadd.f32 %v142, %v593
  %v672 = vadd.f32 %v143, %v598
  %v673 = vadd.f32 %v144, %v603
  %v674 = vadd.f32 %v145, %v608
  %675 = vst [vmem:[%s2] sm:$0xff] %v611
  %676 = vst [vmem:[%s2 + $0x8] sm:$0xff] %v612
  %677 = vst [vmem:[%s2 + $0x10] sm:$0xff] %v613
  %678 = vst [vmem:[%s2 + $0x18] sm:$0xff] %v614
  %679 = vst [vmem:[%s2 + $0x20] sm:$0xff] %v615
  %680 = vst [vmem:[%s2 + $0x28] sm:$0xff] %v616
  %681 = vst [vmem:[%s2 + $0x30] sm:$0xff] %v617
  %682 = vst [vmem:[%s2 + $0x38] sm:$0xff] %v618
  %683 = vst [vmem:[%s2 + $0x40] sm:$0xff] %v619
  %684 = vst [vmem:[%s2 + $0x48] sm:$0xff] %v620
  %685 = vst [vmem:[%s2 + $0x50] sm:$0xff] %v621
  %686 = vst [vmem:[%s2 + $0x58] sm:$0xff] %v622
  %687 = vst [vmem:[%s2 + $0x60] sm:$0xff] %v623
  %688 = vst [vmem:[%s2 + $0x68] sm:$0xff] %v624
  %689 = vst [vmem:[%s2 + $0x70] sm:$0xff] %v625
  %690 = vst [vmem:[%s2 + $0x78] sm:$0xff] %v626
  %691 = vst [vmem:[%s2 + $0x80] sm:$0xff] %v627
  %692 = vst [vmem:[%s2 + $0x88] sm:$0xff] %v628
  %693 = vst [vmem:[%s2 + $0x90] sm:$0xff] %v629
  %694 = vst [vmem:[%s2 + $0x98] sm:$0xff] %v630
  %695 = vst [vmem:[%s2 + $0xa0] sm:$0xff] %v631
  %696 = vst [vmem:[%s2 + $0xa8] sm:$0xff] %v632
  %697 = vst [vmem:[%s2 + $0xb0] sm:$0xff] %v633
  %698 = vst [vmem:[%s2 + $0xb8] sm:$0xff] %v634
  %699 = vst [vmem:[%s2 + $0xc0] sm:$0xff] %v635
  %700 = vst [vmem:[%s2 + $0xc8] sm:$0xff] %v636
  %701 = vst [vmem:[%s2 + $0xd0] sm:$0xff] %v637
  %702 = vst [vmem:[%s2 + $0xd8] sm:$0xff] %v638
  %703 = vst [vmem:[%s2 + $0xe0] sm:$0xff] %v639
  %704 = vst [vmem:[%s2 + $0xe8] sm:$0xff] %v640
  %705 = vst [vmem:[%s2 + $0xf0] sm:$0xff] %v641
  %706 = vst [vmem:[%s2 + $0xf8] sm:$0xff] %v642
  %707 = vst [vmem:[%s2 + $0x100] sm:$0xff] %v643
  %708 = vst [vmem:[%s2 + $0x108] sm:$0xff] %v644
  %709 = vst [vmem:[%s2 + $0x110] sm:$0xff] %v645
  %710 = vst [vmem:[%s2 + $0x118] sm:$0xff] %v646
  %711 = vst [vmem:[%s2 + $0x120] sm:$0xff] %v647
  %712 = vst [vmem:[%s2 + $0x128] sm:$0xff] %v648
  %713 = vst [vmem:[%s2 + $0x130] sm:$0xff] %v649
  %714 = vst [vmem:[%s2 + $0x138] sm:$0xff] %v650
  %715 = vst [vmem:[%s2 + $0x140] sm:$0xff] %v651
  %716 = vst [vmem:[%s2 + $0x148] sm:$0xff] %v652
  %717 = vst [vmem:[%s2 + $0x150] sm:$0xff] %v653
  %718 = vst [vmem:[%s2 + $0x158] sm:$0xff] %v654
  %719 = vst [vmem:[%s2 + $0x160] sm:$0xff] %v655
  %720 = vst [vmem:[%s2 + $0x168] sm:$0xff] %v656
  %721 = vst [vmem:[%s2 + $0x170] sm:$0xff] %v657
  %722 = vst [vmem:[%s2 + $0x178] sm:$0xff] %v658
  %723 = vst [vmem:[%s2 + $0x180] sm:$0xff] %v659
  %724 = vst [vmem:[%s2 + $0x188] sm:$0xff] %v660
  %725 = vst [vmem:[%s2 + $0x190] sm:$0xff] %v661
  %726 = vst [vmem:[%s2 + $0x198] sm:$0xff] %v662
  %727 = vst [vmem:[%s2 + $0x1a0] sm:$0xff] %v663
  %728 = vst [vmem:[%s2 + $0x1a8] sm:$0xff] %v664
  %729 = vst [vmem:[%s2 + $0x1b0] sm:$0xff] %v665
  %730 = vst [vmem:[%s2 + $0x1b8] sm:$0xff] %v666
  %731 = vst [vmem:[%s2 + $0x1c0] sm:$0xff] %v667
  %732 = vst [vmem:[%s2 + $0x1c8] sm:$0xff] %v668
  %733 = vst [vmem:[%s2 + $0x1d0] sm:$0xff] %v669
  %734 = vst [vmem:[%s2 + $0x1d8] sm:$0xff] %v670
  %735 = vst [vmem:[%s2 + $0x1e0] sm:$0xff] %v671
  %736 = vst [vmem:[%s2 + $0x1e8] sm:$0xff] %v672
  %737 = vst [vmem:[%s2 + $0x1f0] sm:$0xff] %v673
  %738 = vst [vmem:[%s2 + $0x1f8] sm:$0xff] %v674
  // Predicated region
  $region14: #{patchgan_forward.10} parent=0 // pred_check
    %p739 = pneg %p14
  $region15: #{patchgan_forward.10} parent=0 // pred_check_branch
    %741 = sbr.rel (%p739) target = $region17
  $region16: #{patchgan_forward.10} parent=0 // pred_region
    %v742 = vld [vmem:[%s2] sm:$0xff]
    %v743 = vld [vmem:[%s2 + $0x8] sm:$0xff]
    %v744 = vld [vmem:[%s2 + $0x10] sm:$0xff]
    %v745 = vld [vmem:[%s2 + $0x18] sm:$0xff]
    %v746 = vld [vmem:[%s2 + $0x20] sm:$0xff]
    %v747 = vld [vmem:[%s2 + $0x28] sm:$0xff]
    %v748 = vld [vmem:[%s2 + $0x30] sm:$0xff]
    %v749 = vld [vmem:[%s2 + $0x38] sm:$0xff]
    %v750 = vld [vmem:[%s2 + $0x40] sm:$0xff]
    %v751 = vld [vmem:[%s2 + $0x48] sm:$0xff]
    %v752 = vld [vmem:[%s2 + $0x50] sm:$0xff]
    %v753 = vld [vmem:[%s2 + $0x58] sm:$0xff]
    %v754 = vld [vmem:[%s2 + $0x60] sm:$0xff]
    %v755 = vld [vmem:[%s2 + $0x68] sm:$0xff]
    %v756 = vld [vmem:[%s2 + $0x70] sm:$0xff]
    %v757 = vld [vmem:[%s2 + $0x78] sm:$0xff]
    %v758 = vld [vmem:[%s2 + $0x80] sm:$0xff]
    %v759 = vld [vmem:[%s2 + $0x88] sm:$0xff]
    %v760 = vld [vmem:[%s2 + $0x90] sm:$0xff]
    %v761 = vld [vmem:[%s2 + $0x98] sm:$0xff]
    %v762 = vld [vmem:[%s2 + $0xa0] sm:$0xff]
    %v763 = vld [vmem:[%s2 + $0xa8] sm:$0xff]
    %v764 = vld [vmem:[%s2 + $0xb0] sm:$0xff]
    %v765 = vld [vmem:[%s2 + $0xb8] sm:$0xff]
    %v766 = vld [vmem:[%s2 + $0xc0] sm:$0xff]
    %v767 = vld [vmem:[%s2 + $0xc8] sm:$0xff]
    %v768 = vld [vmem:[%s2 + $0xd0] sm:$0xff]
    %v769 = vld [vmem:[%s2 + $0xd8] sm:$0xff]
    %v770 = vld [vmem:[%s2 + $0xe0] sm:$0xff]
    %v771 = vld [vmem:[%s2 + $0xe8] sm:$0xff]
    %v772 = vld [vmem:[%s2 + $0xf0] sm:$0xff]
    %v773 = vld [vmem:[%s2 + $0xf8] sm:$0xff]
    %v774 = vld [vmem:[%s2 + $0x100] sm:$0xff]
    %v775 = vld [vmem:[%s2 + $0x108] sm:$0xff]
    %v776 = vld [vmem:[%s2 + $0x110] sm:$0xff]
    %v777 = vld [vmem:[%s2 + $0x118] sm:$0xff]
    %v778 = vld [vmem:[%s2 + $0x120] sm:$0xff]
    %v779 = vld [vmem:[%s2 + $0x128] sm:$0xff]
    %v780 = vld [vmem:[%s2 + $0x130] sm:$0xff]
    %v781 = vld [vmem:[%s2 + $0x138] sm:$0xff]
    %v782 = vld [vmem:[%s2 + $0x140] sm:$0xff]
    %v783 = vld [vmem:[%s2 + $0x148] sm:$0xff]
    %v784 = vld [vmem:[%s2 + $0x150] sm:$0xff]
    %v785 = vld [vmem:[%s2 + $0x158] sm:$0xff]
    %v786 = vld [vmem:[%s2 + $0x160] sm:$0xff]
    %v787 = vld [vmem:[%s2 + $0x168] sm:$0xff]
    %v788 = vld [vmem:[%s2 + $0x170] sm:$0xff]
    %v789 = vld [vmem:[%s2 + $0x178] sm:$0xff]
    %v790 = vld [vmem:[%s2 + $0x180] sm:$0xff]
    %v791 = vld [vmem:[%s2 + $0x188] sm:$0xff]
    %v792 = vld [vmem:[%s2 + $0x190] sm:$0xff]
    %v793 = vld [vmem:[%s2 + $0x198] sm:$0xff]
    %v794 = vld [vmem:[%s2 + $0x1a0] sm:$0xff]
    %v795 = vld [vmem:[%s2 + $0x1a8] sm:$0xff]
    %v796 = vld [vmem:[%s2 + $0x1b0] sm:$0xff]
    %v797 = vld [vmem:[%s2 + $0x1b8] sm:$0xff]
    %v798 = vld [vmem:[%s2 + $0x1c0] sm:$0xff]
    %v799 = vld [vmem:[%s2 + $0x1c8] sm:$0xff]
    %v800 = vld [vmem:[%s2 + $0x1d0] sm:$0xff]
    %v801 = vld [vmem:[%s2 + $0x1d8] sm:$0xff]
    %v802 = vld [vmem:[%s2 + $0x1e0] sm:$0xff]
    %v803 = vld [vmem:[%s2 + $0x1e8] sm:$0xff]
    %v804 = vld [vmem:[%s2 + $0x1f0] sm:$0xff]
    %v805 = vld [vmem:[%s2 + $0x1f8] sm:$0xff]
    %v806 = vlaneseq
    %v807 = vshrl.u32 %v806, 7
    %v808 = vadd.s32 %v807, 8
    %v809 = vadd.s32 %v807, 16
    %v810 = vadd.s32 %v807, 24
    %v811 = vadd.s32 %v807, 32
    %v812 = vadd.s32 %v807, 40
    %v813 = vadd.s32 %v807, 48
    %v814 = vadd.s32 %v807, 56
    %v815 = vadd.s32 %v807, 64
    %v816 = vadd.s32 %v807, 72
    %v817 = vadd.s32 %v807, 80
    %v818 = vadd.s32 %v807, 88
    %v819 = vadd.s32 %v807, 96
    %v820 = vadd.s32 %v807, 104
    %v821 = vadd.s32 %v807, 112
    %v822 = vadd.s32 %v807, 120
    %v823 = vadd.s32 %v807, 128
    %v824 = vadd.s32 %v807, 136
    %v825 = vadd.s32 %v807, 144
    %v826 = vadd.s32 %v807, 152
    %v827 = vadd.s32 %v807, 160
    %v828 = vadd.s32 %v807, 168
    %v829 = vadd.s32 %v807, 176
    %v830 = vadd.s32 %v807, 184
    %v831 = vadd.s32 %v807, 192
    %v832 = vadd.s32 %v807, 200
    %v833 = vadd.s32 %v807, 208
    %v834 = vadd.s32 %v807, 216
    %v835 = vadd.s32 %v807, 224
    %v836 = vadd.s32 %v807, 232
    %v837 = vadd.s32 %v807, 240
    %v838 = vadd.s32 %v807, 248
    %v839 = vadd.s32 %v807, 256
    %v840 = vadd.s32 %v807, 264
    %v841 = vadd.s32 %v807, 272
    %v842 = vadd.s32 %v807, 280
    %v843 = vadd.s32 %v807, 288
    %v844 = vadd.s32 %v807, 296
    %v845 = vadd.s32 %v807, 304
    %v846 = vadd.s32 %v807, 312
    %v847 = vadd.s32 %v807, 320
    %v848 = vadd.s32 %v807, 328
    %v849 = vadd.s32 %v807, 336
    %v850 = vadd.s32 %v807, 344
    %v851 = vadd.s32 %v807, 352
    %v852 = vadd.s32 %v807, 360
    %v853 = vadd.s32 %v807, 368
    %v854 = vadd.s32 %v807, 376
    %v855 = vadd.s32 %v807, 384
    %v856 = vadd.s32 %v807, 392
    %v857 = vadd.s32 %v807, 400
    %v858 = vadd.s32 %v807, 408
    %v859 = vadd.s32 %v807, 416
    %v860 = vadd.s32 %v807, 424
    %v861 = vadd.s32 %v807, 432
    %v862 = vadd.s32 %v807, 440
    %v863 = vadd.s32 %v807, 448
    %v864 = vadd.s32 %v807, 456
    %v865 = vadd.s32 %v807, 464
    %v866 = vadd.s32 %v807, 472
    %v867 = vadd.s32 %v807, 480
    %v868 = vadd.s32 %v807, 488
    %v869 = vadd.s32 %v807, 496
    %v870 = vadd.s32 %v807, 504
    %s871 = smul.u32 0, 512
    %v872 = vstv %s871
    %v873 = vadd.s32 %v807, %v872
    %v874 = vadd.s32 %v808, %v872
    %v875 = vadd.s32 %v809, %v872
    %v876 = vadd.s32 %v810, %v872
    %v877 = vadd.s32 %v811, %v872
    %v878 = vadd.s32 %v812, %v872
    %v879 = vadd.s32 %v813, %v872
    %v880 = vadd.s32 %v814, %v872
    %v881 = vadd.s32 %v815, %v872
    %v882 = vadd.s32 %v816, %v872
    %v883 = vadd.s32 %v817, %v872
    %v884 = vadd.s32 %v818, %v872
    %v885 = vadd.s32 %v819, %v872
    %v886 = vadd.s32 %v820, %v872
    %v887 = vadd.s32 %v821, %v872
    %v888 = vadd.s32 %v822, %v872
    %v889 = vadd.s32 %v823, %v872
    %v890 = vadd.s32 %v824, %v872
    %v891 = vadd.s32 %v825, %v872
    %v892 = vadd.s32 %v826, %v872
    %v893 = vadd.s32 %v827, %v872
    %v894 = vadd.s32 %v828, %v872
    %v895 = vadd.s32 %v829, %v872
    %v896 = vadd.s32 %v830, %v872
    %v897 = vadd.s32 %v831, %v872
    %v898 = vadd.s32 %v832, %v872
    %v899 = vadd.s32 %v833, %v872
    %v900 = vadd.s32 %v834, %v872
    %v901 = vadd.s32 %v835, %v872
    %v902 = vadd.s32 %v836, %v872
    %v903 = vadd.s32 %v837, %v872
    %v904 = vadd.s32 %v838, %v872
    %v905 = vadd.s32 %v839, %v872
    %v906 = vadd.s32 %v840, %v872
    %v907 = vadd.s32 %v841, %v872
    %v908 = vadd.s32 %v842, %v872
    %v909 = vadd.s32 %v843, %v872
    %v910 = vadd.s32 %v844, %v872
    %v911 = vadd.s32 %v845, %v872
    %v912 = vadd.s32 %v846, %v872
    %v913 = vadd.s32 %v847, %v872
    %v914 = vadd.s32 %v848, %v872
    %v915 = vadd.s32 %v849, %v872
    %v916 = vadd.s32 %v850, %v872
    %v917 = vadd.s32 %v851, %v872
    %v918 = vadd.s32 %v852, %v872
    %v919 = vadd.s32 %v853, %v872
    %v920 = vadd.s32 %v854, %v872
    %v921 = vadd.s32 %v855, %v872
    %v922 = vadd.s32 %v856, %v872
    %v923 = vadd.s32 %v857, %v872
    %v924 = vadd.s32 %v858, %v872
    %v925 = vadd.s32 %v859, %v872
    %v926 = vadd.s32 %v860, %v872
    %v927 = vadd.s32 %v861, %v872
    %v928 = vadd.s32 %v862, %v872
    %v929 = vadd.s32 %v863, %v872
    %v930 = vadd.s32 %v864, %v872
    %v931 = vadd.s32 %v865, %v872
    %v932 = vadd.s32 %v866, %v872
    %v933 = vadd.s32 %v867, %v872
    %v934 = vadd.s32 %v868, %v872
    %v935 = vadd.s32 %v869, %v872
    %v936 = vadd.s32 %v870, %v872
    %vm937 = vcmp.lt.s32.totalorder %v873, 512
    %vm938 = vcmp.lt.s32.totalorder %v874, 512
    %vm939 = vcmp.lt.s32.totalorder %v875, 512
    %vm940 = vcmp.lt.s32.totalorder %v876, 512
    %vm941 = vcmp.lt.s32.totalorder %v877, 512
    %vm942 = vcmp.lt.s32.totalorder %v878, 512
    %vm943 = vcmp.lt.s32.totalorder %v879, 512
    %vm944 = vcmp.lt.s32.totalorder %v880, 512
    %vm945 = vcmp.lt.s32.totalorder %v881, 512
    %vm946 = vcmp.lt.s32.totalorder %v882, 512
    %vm947 = vcmp.lt.s32.totalorder %v883, 512
    %vm948 = vcmp.lt.s32.totalorder %v884, 512
    %vm949 = vcmp.lt.s32.totalorder %v885, 512
    %vm950 = vcmp.lt.s32.totalorder %v886, 512
    %vm951 = vcmp.lt.s32.totalorder %v887, 512
    %vm952 = vcmp.lt.s32.totalorder %v888, 512
    %vm953 = vcmp.lt.s32.totalorder %v889, 512
    %vm954 = vcmp.lt.s32.totalorder %v890, 512
    %vm955 = vcmp.lt.s32.totalorder %v891, 512
    %vm956 = vcmp.lt.s32.totalorder %v892, 512
    %vm957 = vcmp.lt.s32.totalorder %v893, 512
    %vm958 = vcmp.lt.s32.totalorder %v894, 512
    %vm959 = vcmp.lt.s32.totalorder %v895, 512
    %vm960 = vcmp.lt.s32.totalorder %v896, 512
    %vm961 = vcmp.lt.s32.totalorder %v897, 512
    %vm962 = vcmp.lt.s32.totalorder %v898, 512
    %vm963 = vcmp.lt.s32.totalorder %v899, 512
    %vm964 = vcmp.lt.s32.totalorder %v900, 512
    %vm965 = vcmp.lt.s32.totalorder %v901, 512
    %vm966 = vcmp.lt.s32.totalorder %v902, 512
    %vm967 = vcmp.lt.s32.totalorder %v903, 512
    %vm968 = vcmp.lt.s32.totalorder %v904, 512
    %vm969 = vcmp.lt.s32.totalorder %v905, 512
    %vm970 = vcmp.lt.s32.totalorder %v906, 512
    %vm971 = vcmp.lt.s32.totalorder %v907, 512
    %vm972 = vcmp.lt.s32.totalorder %v908, 512
    %vm973 = vcmp.lt.s32.totalorder %v909, 512
    %vm974 = vcmp.lt.s32.totalorder %v910, 512
    %vm975 = vcmp.lt.s32.totalorder %v911, 512
    %vm976 = vcmp.lt.s32.totalorder %v912, 512
    %vm977 = vcmp.lt.s32.totalorder %v913, 512
    %vm978 = vcmp.lt.s32.totalorder %v914, 512
    %vm979 = vcmp.lt.s32.totalorder %v915, 512
    %vm980 = vcmp.lt.s32.totalorder %v916, 512
    %vm981 = vcmp.lt.s32.totalorder %v917, 512
    %vm982 = vcmp.lt.s32.totalorder %v918, 512
    %vm983 = vcmp.lt.s32.totalorder %v919, 512
    %vm984 = vcmp.lt.s32.totalorder %v920, 512
    %vm985 = vcmp.lt.s32.totalorder %v921, 512
    %vm986 = vcmp.lt.s32.totalorder %v922, 512
    %vm987 = vcmp.lt.s32.totalorder %v923, 512
    %vm988 = vcmp.lt.s32.totalorder %v924, 512
    %vm989 = vcmp.lt.s32.totalorder %v925, 512
    %vm990 = vcmp.lt.s32.totalorder %v926, 512
    %vm991 = vcmp.lt.s32.totalorder %v927, 512
    %vm992 = vcmp.lt.s32.totalorder %v928, 512
    %vm993 = vcmp.lt.s32.totalorder %v929, 512
    %vm994 = vcmp.lt.s32.totalorder %v930, 512
    %vm995 = vcmp.lt.s32.totalorder %v931, 512
    %vm996 = vcmp.lt.s32.totalorder %v932, 512
    %vm997 = vcmp.lt.s32.totalorder %v933, 512
    %vm998 = vcmp.lt.s32.totalorder %v934, 512
    %vm999 = vcmp.lt.s32.totalorder %v935, 512
    %vm1000 = vcmp.lt.s32.totalorder %v936, 512
    %v1001 = vsel %vm937, %v742, 0.0
    %v1002 = vsel %vm938, %v743, 0.0
    %v1003 = vsel %vm939, %v744, 0.0
    %v1004 = vsel %vm940, %v745, 0.0
    %v1005 = vsel %vm941, %v746, 0.0
    %v1006 = vsel %vm942, %v747, 0.0
    %v1007 = vsel %vm943, %v748, 0.0
    %v1008 = vsel %vm944, %v749, 0.0
    %v1009 = vsel %vm945, %v750, 0.0
    %v1010 = vsel %vm946, %v751, 0.0
    %v1011 = vsel %vm947, %v752, 0.0
    %v1012 = vsel %vm948, %v753, 0.0
    %v1013 = vsel %vm949, %v754, 0.0
    %v1014 = vsel %vm950, %v755, 0.0
    %v1015 = vsel %vm951, %v756, 0.0
    %v1016 = vsel %vm952, %v757, 0.0
    %v1017 = vsel %vm953, %v758, 0.0
    %v1018 = vsel %vm954, %v759, 0.0
    %v1019 = vsel %vm955, %v760, 0.0
    %v1020 = vsel %vm956, %v761, 0.0
    %v1021 = vsel %vm957, %v762, 0.0
    %v1022 = vsel %vm958, %v763, 0.0
    %v1023 = vsel %vm959, %v764, 0.0
    %v1024 = vsel %vm960, %v765, 0.0
    %v1025 = vsel %vm961, %v766, 0.0
    %v1026 = vsel %vm962, %v767, 0.0
    %v1027 = vsel %vm963, %v768, 0.0
    %v1028 = vsel %vm964, %v769, 0.0
    %v1029 = vsel %vm965, %v770, 0.0
    %v1030 = vsel %vm966, %v771, 0.0
    %v1031 = vsel %vm967, %v772, 0.0
    %v1032 = vsel %vm968, %v773, 0.0
    %v1033 = vsel %vm969, %v774, 0.0
    %v1034 = vsel %vm970, %v775, 0.0
    %v1035 = vsel %vm971, %v776, 0.0
    %v1036 = vsel %vm972, %v777, 0.0
    %v1037 = vsel %vm973, %v778, 0.0
    %v1038 = vsel %vm974, %v779, 0.0
    %v1039 = vsel %vm975, %v780, 0.0
    %v1040 = vsel %vm976, %v781, 0.0
    %v1041 = vsel %vm977, %v782, 0.0
    %v1042 = vsel %vm978, %v783, 0.0
    %v1043 = vsel %vm979, %v784, 0.0
    %v1044 = vsel %vm980, %v785, 0.0
    %v1045 = vsel %vm981, %v786, 0.0
    %v1046 = vsel %vm982, %v787, 0.0
    %v1047 = vsel %vm983, %v788, 0.0
    %v1048 = vsel %vm984, %v789, 0.0
    %v1049 = vsel %vm985, %v790, 0.0
    %v1050 = vsel %vm986, %v791, 0.0
    %v1051 = vsel %vm987, %v792, 0.0
    %v1052 = vsel %vm988, %v793, 0.0
    %v1053 = vsel %vm989, %v794, 0.0
    %v1054 = vsel %vm990, %v795, 0.0
    %v1055 = vsel %vm991, %v796, 0.0
    %v1056 = vsel %vm992, %v797, 0.0
    %v1057 = vsel %vm993, %v798, 0.0
    %v1058 = vsel %vm994, %v799, 0.0
    %v1059 = vsel %vm995, %v800, 0.0
    %v1060 = vsel %vm996, %v801, 0.0
    %v1061 = vsel %vm997, %v802, 0.0
    %v1062 = vsel %vm998, %v803, 0.0
    %v1063 = vsel %vm999, %v804, 0.0
    %v1064 = vsel %vm1000, %v805, 0.0
    %v1065 = vadd.f32 %v1001, %v1002
    %v1066 = vadd.f32 %v1065, %v1003
    %v1067 = vadd.f32 %v1066, %v1004
    %v1068 = vadd.f32 %v1067, %v1005
    %v1069 = vadd.f32 %v1068, %v1006
    %v1070 = vadd.f32 %v1069, %v1007
    %v1071 = vadd.f32 %v1070, %v1008
    %v1072 = vadd.f32 %v1071, %v1009
    %v1073 = vadd.f32 %v1072, %v1010
    %v1074 = vadd.f32 %v1073, %v1011
    %v1075 = vadd.f32 %v1074, %v1012
    %v1076 = vadd.f32 %v1075, %v1013
    %v1077 = vadd.f32 %v1076, %v1014
    %v1078 = vadd.f32 %v1077, %v1015
    %v1079 = vadd.f32 %v1078, %v1016
    %v1080 = vadd.f32 %v1079, %v1017
    %v1081 = vadd.f32 %v1080, %v1018
    %v1082 = vadd.f32 %v1081, %v1019
    %v1083 = vadd.f32 %v1082, %v1020
    %v1084 = vadd.f32 %v1083, %v1021
    %v1085 = vadd.f32 %v1084, %v1022
    %v1086 = vadd.f32 %v1085, %v1023
    %v1087 = vadd.f32 %v1086, %v1024
    %v1088 = vadd.f32 %v1087, %v1025
    %v1089 = vadd.f32 %v1088, %v1026
    %v1090 = vadd.f32 %v1089, %v1027
    %v1091 = vadd.f32 %v1090, %v1028
    %v1092 = vadd.f32 %v1091, %v1029
    %v1093 = vadd.f32 %v1092, %v1030
    %v1094 = vadd.f32 %v1093, %v1031
    %v1095 = vadd.f32 %v1094, %v1032
    %v1096 = vadd.f32 %v1095, %v1033
    %v1097 = vadd.f32 %v1096, %v1034
    %v1098 = vadd.f32 %v1097, %v1035
    %v1099 = vadd.f32 %v1098, %v1036
    %v1100 = vadd.f32 %v1099, %v1037
    %v1101 = vadd.f32 %v1100, %v1038
    %v1102 = vadd.f32 %v1101, %v1039
    %v1103 = vadd.f32 %v1102, %v1040
    %v1104 = vadd.f32 %v1103, %v1041
    %v1105 = vadd.f32 %v1104, %v1042
    %v1106 = vadd.f32 %v1105, %v1043
    %v1107 = vadd.f32 %v1106, %v1044
    %v1108 = vadd.f32 %v1107, %v1045
    %v1109 = vadd.f32 %v1108, %v1046
    %v1110 = vadd.f32 %v1109, %v1047
    %v1111 = vadd.f32 %v1110, %v1048
    %v1112 = vadd.f32 %v1111, %v1049
    %v1113 = vadd.f32 %v1112, %v1050
    %v1114 = vadd.f32 %v1113, %v1051
    %v1115 = vadd.f32 %v1114, %v1052
    %v1116 = vadd.f32 %v1115, %v1053
    %v1117 = vadd.f32 %v1116, %v1054
    %v1118 = vadd.f32 %v1117, %v1055
    %v1119 = vadd.f32 %v1118, %v1056
    %v1120 = vadd.f32 %v1119, %v1057
    %v1121 = vadd.f32 %v1120, %v1058
    %v1122 = vadd.f32 %v1121, %v1059
    %v1123 = vadd.f32 %v1122, %v1060
    %v1124 = vadd.f32 %v1123, %v1061
    %v1125 = vadd.f32 %v1124, %v1062
    %v1126 = vadd.f32 %v1125, %v1063
    %v1127 = vadd.f32 %v1126, %v1064
    %1128 = vst [vmem:[%s3] sm:$0xff] %v1127
    %v1129 = vmul.f32 %v1001, %v1001
    %v1130 = vmul.f32 %v1002, %v1002
    %v1131 = vmul.f32 %v1003, %v1003
    %v1132 = vmul.f32 %v1004, %v1004
    %v1133 = vmul.f32 %v1005, %v1005
    %v1134 = vmul.f32 %v1006, %v1006
    %v1135 = vmul.f32 %v1007, %v1007
    %v1136 = vmul.f32 %v1008, %v1008
    %v1137 = vmul.f32 %v1009, %v1009
    %v1138 = vmul.f32 %v1010, %v1010
    %v1139 = vmul.f32 %v1011, %v1011
    %v1140 = vmul.f32 %v1012, %v1012
    %v1141 = vmul.f32 %v1013, %v1013
    %v1142 = vmul.f32 %v1014, %v1014
    %v1143 = vmul.f32 %v1015, %v1015
    %v1144 = vmul.f32 %v1016, %v1016
    %v1145 = vmul.f32 %v1017, %v1017
    %v1146 = vmul.f32 %v1018, %v1018
    %v1147 = vmul.f32 %v1019, %v1019
    %v1148 = vmul.f32 %v1020, %v1020
    %v1149 = vmul.f32 %v1021, %v1021
    %v1150 = vmul.f32 %v1022, %v1022
    %v1151 = vmul.f32 %v1023, %v1023
    %v1152 = vmul.f32 %v1024, %v1024
    %v1153 = vmul.f32 %v1025, %v1025
    %v1154 = vmul.f32 %v1026, %v1026
    %v1155 = vmul.f32 %v1027, %v1027
    %v1156 = vmul.f32 %v1028, %v1028
    %v1157 = vmul.f32 %v1029, %v1029
    %v1158 = vmul.f32 %v1030, %v1030
    %v1159 = vmul.f32 %v1031, %v1031
    %v1160 = vmul.f32 %v1032, %v1032
    %v1161 = vmul.f32 %v1033, %v1033
    %v1162 = vmul.f32 %v1034, %v1034
    %v1163 = vmul.f32 %v1035, %v1035
    %v1164 = vmul.f32 %v1036, %v1036
    %v1165 = vmul.f32 %v1037, %v1037
    %v1166 = vmul.f32 %v1038, %v1038
    %v1167 = vmul.f32 %v1039, %v1039
    %v1168 = vmul.f32 %v1040, %v1040
    %v1169 = vmul.f32 %v1041, %v1041
    %v1170 = vmul.f32 %v1042, %v1042
    %v1171 = vmul.f32 %v1043, %v1043
    %v1172 = vmul.f32 %v1044, %v1044
    %v1173 = vmul.f32 %v1045, %v1045
    %v1174 = vmul.f32 %v1046, %v1046
    %v1175 = vmul.f32 %v1047, %v1047
    %v1176 = vmul.f32 %v1048, %v1048
    %v1177 = vmul.f32 %v1049, %v1049
    %v1178 = vmul.f32 %v1050, %v1050
    %v1179 = vmul.f32 %v1051, %v1051
    %v1180 = vmul.f32 %v1052, %v1052
    %v1181 = vmul.f32 %v1053, %v1053
    %v1182 = vmul.f32 %v1054, %v1054
    %v1183 = vmul.f32 %v1055, %v1055
    %v1184 = vmul.f32 %v1056, %v1056
    %v1185 = vmul.f32 %v1057, %v1057
    %v1186 = vmul.f32 %v1058, %v1058
    %v1187 = vmul.f32 %v1059, %v1059
    %v1188 = vmul.f32 %v1060, %v1060
    %v1189 = vmul.f32 %v1061, %v1061
    %v1190 = vmul.f32 %v1062, %v1062
    %v1191 = vmul.f32 %v1063, %v1063
    %v1192 = vmul.f32 %v1064, %v1064
    %v1193 = vadd.f32 %v1129, %v1130
    %v1194 = vadd.f32 %v1193, %v1131
    %v1195 = vadd.f32 %v1194, %v1132
    %v1196 = vadd.f32 %v1195, %v1133
    %v1197 = vadd.f32 %v1196, %v1134
    %v1198 = vadd.f32 %v1197, %v1135
    %v1199 = vadd.f32 %v1198, %v1136
    %v1200 = vadd.f32 %v1199, %v1137
    %v1201 = vadd.f32 %v1200, %v1138
    %v1202 = vadd.f32 %v1201, %v1139
    %v1203 = vadd.f32 %v1202, %v1140
    %v1204 = vadd.f32 %v1203, %v1141
    %v1205 = vadd.f32 %v1204, %v1142
    %v1206 = vadd.f32 %v1205, %v1143
    %v1207 = vadd.f32 %v1206, %v1144
    %v1208 = vadd.f32 %v1207, %v1145
    %v1209 = vadd.f32 %v1208, %v1146
    %v1210 = vadd.f32 %v1209, %v1147
    %v1211 = vadd.f32 %v1210, %v1148
    %v1212 = vadd.f32 %v1211, %v1149
    %v1213 = vadd.f32 %v1212, %v1150
    %v1214 = vadd.f32 %v1213, %v1151
    %v1215 = vadd.f32 %v1214, %v1152
    %v1216 = vadd.f32 %v1215, %v1153
    %v1217 = vadd.f32 %v1216, %v1154
    %v1218 = vadd.f32 %v1217, %v1155
    %v1219 = vadd.f32 %v1218, %v1156
    %v1220 = vadd.f32 %v1219, %v1157
    %v1221 = vadd.f32 %v1220, %v1158
    %v1222 = vadd.f32 %v1221, %v1159
    %v1223 = vadd.f32 %v1222, %v1160
    %v1224 = vadd.f32 %v1223, %v1161
    %v1225 = vadd.f32 %v1224, %v1162
    %v1226 = vadd.f32 %v1225, %v1163
    %v1227 = vadd.f32 %v1226, %v1164
    %v1228 = vadd.f32 %v1227, %v1165
    %v1229 = vadd.f32 %v1228, %v1166
    %v1230 = vadd.f32 %v1229, %v1167
    %v1231 = vadd.f32 %v1230, %v1168
    %v1232 = vadd.f32 %v1231, %v1169
    %v1233 = vadd.f32 %v1232, %v1170
    %v1234 = vadd.f32 %v1233, %v1171
    %v1235 = vadd.f32 %v1234, %v1172
    %v1236 = vadd.f32 %v1235, %v1173
    %v1237 = vadd.f32 %v1236, %v1174
    %v1238 = vadd.f32 %v1237, %v1175
    %v1239 = vadd.f32 %v1238, %v1176
    %v1240 = vadd.f32 %v1239, %v1177
    %v1241 = vadd.f32 %v1240, %v1178
    %v1242 = vadd.f32 %v1241, %v1179
    %v1243 = vadd.f32 %v1242, %v1180
    %v1244 = vadd.f32 %v1243, %v1181
    %v1245 = vadd.f32 %v1244, %v1182
    %v1246 = vadd.f32 %v1245, %v1183
    %v1247 = vadd.f32 %v1246, %v1184
    %v1248 = vadd.f32 %v1247, %v1185
    %v1249 = vadd.f32 %v1248, %v1186
    %v1250 = vadd.f32 %v1249, %v1187
    %v1251 = vadd.f32 %v1250, %v1188
    %v1252 = vadd.f32 %v1251, %v1189
    %v1253 = vadd.f32 %v1252, %v1190
    %v1254 = vadd.f32 %v1253, %v1191
    %v1255 = vadd.f32 %v1254, %v1192
    %1256 = vst [vmem:[%s4] sm:$0xff] %v1255
  $region17: #{patchgan_forward.10} parent=0 // pred_fallthru
    _
  // Predicated region
  $region18: #{patchgan_forward.10} parent=0 // pred_check
    _
  $region19: #{patchgan_forward.10} parent=0 // pred_check_branch
    %1258 = sbr.rel (0) target = $region21
  $region20: #{patchgan_forward.10} parent=0 // pred_region
    _
  $region21: #{patchgan_forward.10} parent=0 // pred_fallthru
    _
  // Predicated region
  $region22: #{patchgan_forward.10} parent=0 // pred_check
    _
  $region23: #{patchgan_forward.10} parent=0 // pred_check_branch
    %1260 = sbr.rel (0) target = $region25
  $region24: #{patchgan_forward.10} parent=0 // pred_region
    _
  $region25: #{patchgan_forward.10} parent=0 // pred_fallthru
    _
  // Predicated region
  $region26: #{patchgan_forward.10} parent=0 // pred_check
    _
  $region27: #{patchgan_forward.10} parent=0 // pred_check_branch
    %1262 = sbr.rel (0) target = $region29
  $region28: #{patchgan_forward.10} parent=0 // pred_region
    _
  $region29: #{patchgan_forward.10} parent=0 // pred_fallthru
    _
  // Predicated region
  $region30: #{patchgan_forward.10} parent=0 // pred_check
    _
  $region31: #{patchgan_forward.10} parent=0 // pred_check_branch
    %1264 = sbr.rel (0) target = $region33
  $region32: #{patchgan_forward.10} parent=0 // pred_region
    _
  $region33: #{patchgan_forward.10} parent=0 // pred_fallthru
    _
  // Predicated region
  $region34: #{patchgan_forward.10} parent=0 // pred_check
    _
  $region35: #{patchgan_forward.10} parent=0 // pred_check_branch
    %1266 = sbr.rel (0) target = $region37
  $region36: #{patchgan_forward.10} parent=0 // pred_region
    _
  $region37: #{patchgan_forward.10} parent=0 // pred_fallthru
    _
  // Predicated region
  $region38: #{patchgan_forward.10} parent=0 // pred_check
    _
  $region39: #{patchgan_forward.10} parent=0 // pred_check_branch
    %1268 = sbr.rel (0) target = $region41
  $region40: #{patchgan_forward.10} parent=0 // pred_region
    _
  $region41: #{patchgan_forward.10} parent=0 // pred_fallthru
    _

// kernel: patchgan_forward.13
$region0: #{patchgan_forward.13}
  #allocation0 [shape = 'u32[]', space=smem, size = 0x4, offset = 0x4, fixed_abs, tag = 'smem constant byte address 0x4 - core index']
  #allocation1 [shape = 'u32[144,128]{1,0:T(1,128)}', space=vmem, size = 0x12000, scoped, tag = 'internal scratch']
  %s0 = inlined_call_operand.vmem [shape: f32[128,128], index: 0, kind: input, shape index: {}]
  %s1 = inlined_call_operand.vmem [shape: f32[1,128], index: 1, kind: input, shape index: {}]
  %s2 = inlined_call_operand.vmem [shape: f32[1,128], index: 2, kind: input, shape index: {}]
  %s3 = inlined_call_operand.vmem [shape: f32[128,128], index: 3, kind: output, shape index: {}]
  %s4 = sld [smem:[#allocation0]]
  $region22: #{patchgan_forward.13} parent=0
    _
  %s6 = ssub.s32 1, %s4
  %s7 = scalar_select 0, %s6, %s4
  // Predicated region
  $region2: #{patchgan_forward.13} parent=0 // pred_check
    _
  $region3: #{patchgan_forward.13} parent=0 // pred_check_branch
    %9 = sbr.rel (0) target = $region5
  $region4: #{patchgan_forward.13} parent=0 // pred_region
    _
  $region5: #{patchgan_forward.13} parent=0 // pred_fallthru
    _
  // Predicated region
  $region6: #{patchgan_forward.13} parent=0 // pred_check
    _
  $region7: #{patchgan_forward.13} parent=0 // pred_check_branch
    %11 = sbr.rel (0) target = $region9
  $region8: #{patchgan_forward.13} parent=0 // pred_region
    _
  $region9: #{patchgan_forward.13} parent=0 // pred_fallthru
    _
  // Predicated region
  $region10: #{patchgan_forward.13} parent=0 // pred_check
    _
  $region11: #{patchgan_forward.13} parent=0 // pred_check_branch
    %13 = sbr.rel (0) target = $region13
  $region12: #{patchgan_forward.13} parent=0 // pred_region
    _
  $region13: #{patchgan_forward.13} parent=0 // pred_fallthru
    _
  %v14 = vld [vmem:[%s0] sm:$0xff]
  %v15 = vld [vmem:[%s0 + $0x8] sm:$0xff]
  %v16 = vld [vmem:[%s0 + $0x10] sm:$0xff]
  %v17 = vld [vmem:[%s0 + $0x18] sm:$0xff]
  %v18 = vld [vmem:[%s0 + $0x20] sm:$0xff]
  %v19 = vld [vmem:[%s0 + $0x28] sm:$0xff]
  %v20 = vld [vmem:[%s0 + $0x30] sm:$0xff]
  %v21 = vld [vmem:[%s0 + $0x38] sm:$0xff]
  %v22 = vld [vmem:[%s0 + $0x40] sm:$0xff]
  %v23 = vld [vmem:[%s0 + $0x48] sm:$0xff]
  %v24 = vld [vmem:[%s0 + $0x50] sm:$0xff]
  %v25 = vld [vmem:[%s0 + $0x58] sm:$0xff]
  %v26 = vld [vmem:[%s0 + $0x60] sm:$0xff]
  %v27 = vld [vmem:[%s0 + $0x68] sm:$0xff]
  %v28 = vld [vmem:[%s0 + $0x70] sm:$0xff]
  %v29 = vld [vmem:[%s0 + $0x78] sm:$0xff]
  %v30 = vld [vmem:[%s1] sm:$0x1]
  %v32 = vlaneseq
  %v33 = vshrl.u32 %v32, 7
  %v34 = vsub.s32 0, %v33
  %v35 = vrot.slane %v30, %v34
  %v37 = vmul.f32 %v14, %v35
  %v38 = vmul.f32 %v15, %v35
  %v39 = vmul.f32 %v16, %v35
  %v40 = vmul.f32 %v17, %v35
  %v41 = vmul.f32 %v18, %v35
  %v42 = vmul.f32 %v19, %v35
  %v43 = vmul.f32 %v20, %v35
  %v44 = vmul.f32 %v21, %v35
  %v45 = vmul.f32 %v22, %v35
  %v46 = vmul.f32 %v23, %v35
  %v47 = vmul.f32 %v24, %v35
  %v48 = vmul.f32 %v25, %v35
  %v49 = vmul.f32 %v26, %v35
  %v50 = vmul.f32 %v27, %v35
  %v51 = vmul.f32 %v28, %v35
  %v52 = vmul.f32 %v29, %v35
  %v53 = vld [vmem:[%s2] sm:$0x1]
  %v55 = vlaneseq
  %v56 = vshrl.u32 %v55, 7
  %v57 = vsub.s32 0, %v56
  %v58 = vrot.slane %v53, %v57
  %v60 = vadd.f32 %v37, %v58
  %v61 = vadd.f32 %v38, %v58
  %v62 = vadd.f32 %v39, %v58
  %v63 = vadd.f32 %v40, %v58
  %v64 = vadd.f32 %v41, %v58
  %v65 = vadd.f32 %v42, %v58
  %v66 = vadd.f32 %v43, %v58
  %v67 = vadd.f32 %v44, %v58
  %v68 = vadd.f32 %v45, %v58
  %v69 = vadd.f32 %v46, %v58
  %v70 = vadd.f32 %v47, %v58
  %v71 = vadd.f32 %v48, %v58
  %v72 = vadd.f32 %v49, %v58
  %v73 = vadd.f32 %v50, %v58
  %v74 = vadd.f32 %v51, %v58
  %v75 = vadd.f32 %v52, %v58
  %v76 = vmax.f32 %v60, 0.0
  %v77 = vmax.f32 %v61, 0.0
  %v78 = vmax.f32 %v62, 0.0
  %v79 = vmax.f32 %v63, 0.0
  %v80 = vmax.f32 %v64, 0.0
  %v81 = vmax.f32 %v65, 0.0
  %v82 = vmax.f32 %v66, 0.0
  %v83 = vmax.f32 %v67, 0.0
  %v84 = vmax.f32 %v68, 0.0
  %v85 = vmax.f32 %v69, 0.0
  %v86 = vmax.f32 %v70, 0.0
  %v87 = vmax.f32 %v71, 0.0
  %v88 = vmax.f32 %v72, 0.0
  %v89 = vmax.f32 %v73, 0.0
  %v90 = vmax.f32 %v74, 0.0
  %v91 = vmax.f32 %v75, 0.0
  %92 = vst [vmem:[%s3] sm:$0xff] %v76
  %93 = vst [vmem:[%s3 + $0x8] sm:$0xff] %v77
  %94 = vst [vmem:[%s3 + $0x10] sm:$0xff] %v78
  %95 = vst [vmem:[%s3 + $0x18] sm:$0xff] %v79
  %96 = vst [vmem:[%s3 + $0x20] sm:$0xff] %v80
  %97 = vst [vmem:[%s3 + $0x28] sm:$0xff] %v81
  %98 = vst [vmem:[%s3 + $0x30] sm:$0xff] %v82
  %99 = vst [vmem:[%s3 + $0x38] sm:$0xff] %v83
  %100 = vst [vmem:[%s3 + $0x40] sm:$0xff] %v84
  %101 = vst [vmem:[%s3 + $0x48] sm:$0xff] %v85
  %102 = vst [vmem:[%s3 + $0x50] sm:$0xff] %v86
  %103 = vst [vmem:[%s3 + $0x58] sm:$0xff] %v87
  %104 = vst [vmem:[%s3 + $0x60] sm:$0xff] %v88
  %105 = vst [vmem:[%s3 + $0x68] sm:$0xff] %v89
  %106 = vst [vmem:[%s3 + $0x70] sm:$0xff] %v90
  %107 = vst [vmem:[%s3 + $0x78] sm:$0xff] %v91
  // Predicated region
  $region14: #{patchgan_forward.13} parent=0 // pred_check
    _
  $region15: #{patchgan_forward.13} parent=0 // pred_check_branch
    %109 = sbr.rel (0) target = $region17
  $region16: #{patchgan_forward.13} parent=0 // pred_region
    _
  $region17: #{patchgan_forward.13} parent=0 // pred_fallthru
    _
  // Predicated region
  $region18: #{patchgan_forward.13} parent=0 // pred_check
    _
  $region19: #{patchgan_forward.13} parent=0 // pred_check_branch
    %111 = sbr.rel (0) target = $region21
  $region20: #{patchgan_forward.13} parent=0 // pred_region
    _
  $region21: #{patchgan_forward.13} parent=0 // pred_fallthru
    _

// kernel: patchgan_forward.12
$region0: #{patchgan_forward.12}
  #allocation0 [shape = 'u32[]', space=smem, size = 0x4, offset = 0x4, fixed_abs, tag = 'smem constant byte address 0x4 - core index']
  #allocation1 [shape = 'u32[144,128]{1,0:T(1,128)}', space=vmem, size = 0x12000, scoped, tag = 'internal scratch']
  %s0 = inlined_call_operand.vmem [shape: f32[128,1024], index: 0, kind: input, shape index: {}]
  %s1 = inlined_call_operand.vmem [shape: f32[1024,128], index: 1, kind: input, shape index: {}]
  %s2 = inlined_call_operand.vmem [shape: f32[128,128], index: 2, kind: output, shape index: {0}]
  %s3 = inlined_call_operand.vmem [shape: f32[8,128], index: 3, kind: output, shape index: {1}]
  %s4 = inlined_call_operand.vmem [shape: f32[8,128], index: 4, kind: output, shape index: {2}]
  %5 = xla_tuple %s2, %s3, %s4
  %s6 = sld [smem:[#allocation0]]
  $region42: #{patchgan_forward.12} parent=0
    _
  %s8 = ssub.s32 1, %s6
  %s9 = scalar_select 0, %s8, %s6
  // Predicated region
  $region2: #{patchgan_forward.12} parent=0 // pred_check
    _
  $region3: #{patchgan_forward.12} parent=0 // pred_check_branch
    %11 = sbr.rel (0) target = $region5
  $region4: #{patchgan_forward.12} parent=0 // pred_region
    _
  $region5: #{patchgan_forward.12} parent=0 // pred_fallthru
    _
  // Predicated region
  $region6: #{patchgan_forward.12} parent=0 // pred_check
    _
  $region7: #{patchgan_forward.12} parent=0 // pred_check_branch
    %13 = sbr.rel (0) target = $region9
  $region8: #{patchgan_forward.12} parent=0 // pred_region
    _
  $region9: #{patchgan_forward.12} parent=0 // pred_fallthru
    _
  %p14 = scmp.eq.s32.totalorder 0, 0
  // Predicated region
  $region10: #{patchgan_forward.12} parent=0 // pred_check
    %p15 = pneg %p14
  $region11: #{patchgan_forward.12} parent=0 // pred_check_branch
    %17 = sbr.rel (%p15) target = $region13
  $region12: #{patchgan_forward.12} parent=0 // pred_region
    %18 = vst [vmem:[%s2] sm:$0xff] 0.0
    %19 = vst [vmem:[%s2 + $0x8] sm:$0xff] 0.0
    %20 = vst [vmem:[%s2 + $0x10] sm:$0xff] 0.0
    %21 = vst [vmem:[%s2 + $0x18] sm:$0xff] 0.0
    %22 = vst [vmem:[%s2 + $0x20] sm:$0xff] 0.0
    %23 = vst [vmem:[%s2 + $0x28] sm:$0xff] 0.0
    %24 = vst [vmem:[%s2 + $0x30] sm:$0xff] 0.0
    %25 = vst [vmem:[%s2 + $0x38] sm:$0xff] 0.0
    %26 = vst [vmem:[%s2 + $0x40] sm:$0xff] 0.0
    %27 = vst [vmem:[%s2 + $0x48] sm:$0xff] 0.0
    %28 = vst [vmem:[%s2 + $0x50] sm:$0xff] 0.0
    %29 = vst [vmem:[%s2 + $0x58] sm:$0xff] 0.0
    %30 = vst [vmem:[%s2 + $0x60] sm:$0xff] 0.0
    %31 = vst [vmem:[%s2 + $0x68] sm:$0xff] 0.0
    %32 = vst [vmem:[%s2 + $0x70] sm:$0xff] 0.0
    %33 = vst [vmem:[%s2 + $0x78] sm:$0xff] 0.0
  $region13: #{patchgan_forward.12} parent=0 // pred_fallthru
    _
  %v34 = vld [vmem:[%s2] sm:$0xff]
  %v35 = vld [vmem:[%s2 + $0x8] sm:$0xff]
  %v36 = vld [vmem:[%s2 + $0x10] sm:$0xff]
  %v37 = vld [vmem:[%s2 + $0x18] sm:$0xff]
  %v38 = vld [vmem:[%s2 + $0x20] sm:$0xff]
  %v39 = vld [vmem:[%s2 + $0x28] sm:$0xff]
  %v40 = vld [vmem:[%s2 + $0x30] sm:$0xff]
  %v41 = vld [vmem:[%s2 + $0x38] sm:$0xff]
  %v42 = vld [vmem:[%s2 + $0x40] sm:$0xff]
  %v43 = vld [vmem:[%s2 + $0x48] sm:$0xff]
  %v44 = vld [vmem:[%s2 + $0x50] sm:$0xff]
  %v45 = vld [vmem:[%s2 + $0x58] sm:$0xff]
  %v46 = vld [vmem:[%s2 + $0x60] sm:$0xff]
  %v47 = vld [vmem:[%s2 + $0x68] sm:$0xff]
  %v48 = vld [vmem:[%s2 + $0x70] sm:$0xff]
  %v49 = vld [vmem:[%s2 + $0x78] sm:$0xff]
  %v50 = vld [vmem:[%s0] sm:$0xff]
  %v51 = vld [vmem:[%s0 + $0x8] sm:$0xff]
  %v52 = vld [vmem:[%s0 + $0x10] sm:$0xff]
  %v53 = vld [vmem:[%s0 + $0x18] sm:$0xff]
  %v54 = vld [vmem:[%s0 + $0x20] sm:$0xff]
  %v55 = vld [vmem:[%s0 + $0x28] sm:$0xff]
  %v56 = vld [vmem:[%s0 + $0x30] sm:$0xff]
  %v57 = vld [vmem:[%s0 + $0x38] sm:$0xff]
  %v58 = vld [vmem:[%s0 + $0x40] sm:$0xff]
  %v59 = vld [vmem:[%s0 + $0x48] sm:$0xff]
  %v60 = vld [vmem:[%s0 + $0x50] sm:$0xff]
  %v61 = vld [vmem:[%s0 + $0x58] sm:$0xff]
  %v62 = vld [vmem:[%s0 + $0x60] sm:$0xff]
  %v63 = vld [vmem:[%s0 + $0x68] sm:$0xff]
  %v64 = vld [vmem:[%s0 + $0x70] sm:$0xff]
  %v65 = vld [vmem:[%s0 + $0x78] sm:$0xff]
  %v66 = vld [vmem:[%s0 + $0x80] sm:$0xff]
  %v67 = vld [vmem:[%s0 + $0x88] sm:$0xff]
  %v68 = vld [vmem:[%s0 + $0x90] sm:$0xff]
  %v69 = vld [vmem:[%s0 + $0x98] sm:$0xff]
  %v70 = vld [vmem:[%s0 + $0xa0] sm:$0xff]
  %v71 = vld [vmem:[%s0 + $0xa8] sm:$0xff]
  %v72 = vld [vmem:[%s0 + $0xb0] sm:$0xff]
  %v73 = vld [vmem:[%s0 + $0xb8] sm:$0xff]
  %v74 = vld [vmem:[%s0 + $0xc0] sm:$0xff]
  %v75 = vld [vmem:[%s0 + $0xc8] sm:$0xff]
  %v76 = vld [vmem:[%s0 + $0xd0] sm:$0xff]
  %v77 = vld [vmem:[%s0 + $0xd8] sm:$0xff]
  %v78 = vld [vmem:[%s0 + $0xe0] sm:$0xff]
  %v79 = vld [vmem:[%s0 + $0xe8] sm:$0xff]
  %v80 = vld [vmem:[%s0 + $0xf0] sm:$0xff]
  %v81 = vld [vmem:[%s0 + $0xf8] sm:$0xff]
  %v82 = vld [vmem:[%s0 + $0x100] sm:$0xff]
  %v83 = vld [vmem:[%s0 + $0x108] sm:$0xff]
  %v84 = vld [vmem:[%s0 + $0x110] sm:$0xff]
  %v85 = vld [vmem:[%s0 + $0x118] sm:$0xff]
  %v86 = vld [vmem:[%s0 + $0x120] sm:$0xff]
  %v87 = vld [vmem:[%s0 + $0x128] sm:$0xff]
  %v88 = vld [vmem:[%s0 + $0x130] sm:$0xff]
  %v89 = vld [vmem:[%s0 + $0x138] sm:$0xff]
  %v90 = vld [vmem:[%s0 + $0x140] sm:$0xff]
  %v91 = vld [vmem:[%s0 + $0x148] sm:$0xff]
  %v92 = vld [vmem:[%s0 + $0x150] sm:$0xff]
  %v93 = vld [vmem:[%s0 + $0x158] sm:$0xff]
  %v94 = vld [vmem:[%s0 + $0x160] sm:$0xff]
  %v95 = vld [vmem:[%s0 + $0x168] sm:$0xff]
  %v96 = vld [vmem:[%s0 + $0x170] sm:$0xff]
  %v97 = vld [vmem:[%s0 + $0x178] sm:$0xff]
  %v98 = vld [vmem:[%s0 + $0x180] sm:$0xff]
  %v99 = vld [vmem:[%s0 + $0x188] sm:$0xff]
  %v100 = vld [vmem:[%s0 + $0x190] sm:$0xff]
  %v101 = vld [vmem:[%s0 + $0x198] sm:$0xff]
  %v102 = vld [vmem:[%s0 + $0x1a0] sm:$0xff]
  %v103 = vld [vmem:[%s0 + $0x1a8] sm:$0xff]
  %v104 = vld [vmem:[%s0 + $0x1b0] sm:$0xff]
  %v105 = vld [vmem:[%s0 + $0x1b8] sm:$0xff]
  %v106 = vld [vmem:[%s0 + $0x1c0] sm:$0xff]
  %v107 = vld [vmem:[%s0 + $0x1c8] sm:$0xff]
  %v108 = vld [vmem:[%s0 + $0x1d0] sm:$0xff]
  %v109 = vld [vmem:[%s0 + $0x1d8] sm:$0xff]
  %v110 = vld [vmem:[%s0 + $0x1e0] sm:$0xff]
  %v111 = vld [vmem:[%s0 + $0x1e8] sm:$0xff]
  %v112 = vld [vmem:[%s0 + $0x1f0] sm:$0xff]
  %v113 = vld [vmem:[%s0 + $0x1f8] sm:$0xff]
  %v114 = vld [vmem:[%s0 + $0x200] sm:$0xff]
  %v115 = vld [vmem:[%s0 + $0x208] sm:$0xff]
  %v116 = vld [vmem:[%s0 + $0x210] sm:$0xff]
  %v117 = vld [vmem:[%s0 + $0x218] sm:$0xff]
  %v118 = vld [vmem:[%s0 + $0x220] sm:$0xff]
  %v119 = vld [vmem:[%s0 + $0x228] sm:$0xff]
  %v120 = vld [vmem:[%s0 + $0x230] sm:$0xff]
  %v121 = vld [vmem:[%s0 + $0x238] sm:$0xff]
  %v122 = vld [vmem:[%s0 + $0x240] sm:$0xff]
  %v123 = vld [vmem:[%s0 + $0x248] sm:$0xff]
  %v124 = vld [vmem:[%s0 + $0x250] sm:$0xff]
  %v125 = vld [vmem:[%s0 + $0x258] sm:$0xff]
  %v126 = vld [vmem:[%s0 + $0x260] sm:$0xff]
  %v127 = vld [vmem:[%s0 + $0x268] sm:$0xff]
  %v128 = vld [vmem:[%s0 + $0x270] sm:$0xff]
  %v129 = vld [vmem:[%s0 + $0x278] sm:$0xff]
  %v130 = vld [vmem:[%s0 + $0x280] sm:$0xff]
  %v131 = vld [vmem:[%s0 + $0x288] sm:$0xff]
  %v132 = vld [vmem:[%s0 + $0x290] sm:$0xff]
  %v133 = vld [vmem:[%s0 + $0x298] sm:$0xff]
  %v134 = vld [vmem:[%s0 + $0x2a0] sm:$0xff]
  %v135 = vld [vmem:[%s0 + $0x2a8] sm:$0xff]
  %v136 = vld [vmem:[%s0 + $0x2b0] sm:$0xff]
  %v137 = vld [vmem:[%s0 + $0x2b8] sm:$0xff]
  %v138 = vld [vmem:[%s0 + $0x2c0] sm:$0xff]
  %v139 = vld [vmem:[%s0 + $0x2c8] sm:$0xff]
  %v140 = vld [vmem:[%s0 + $0x2d0] sm:$0xff]
  %v141 = vld [vmem:[%s0 + $0x2d8] sm:$0xff]
  %v142 = vld [vmem:[%s0 + $0x2e0] sm:$0xff]
  %v143 = vld [vmem:[%s0 + $0x2e8] sm:$0xff]
  %v144 = vld [vmem:[%s0 + $0x2f0] sm:$0xff]
  %v145 = vld [vmem:[%s0 + $0x2f8] sm:$0xff]
  %v146 = vld [vmem:[%s0 + $0x300] sm:$0xff]
  %v147 = vld [vmem:[%s0 + $0x308] sm:$0xff]
  %v148 = vld [vmem:[%s0 + $0x310] sm:$0xff]
  %v149 = vld [vmem:[%s0 + $0x318] sm:$0xff]
  %v150 = vld [vmem:[%s0 + $0x320] sm:$0xff]
  %v151 = vld [vmem:[%s0 + $0x328] sm:$0xff]
  %v152 = vld [vmem:[%s0 + $0x330] sm:$0xff]
  %v153 = vld [vmem:[%s0 + $0x338] sm:$0xff]
  %v154 = vld [vmem:[%s0 + $0x340] sm:$0xff]
  %v155 = vld [vmem:[%s0 + $0x348] sm:$0xff]
  %v156 = vld [vmem:[%s0 + $0x350] sm:$0xff]
  %v157 = vld [vmem:[%s0 + $0x358] sm:$0xff]
  %v158 = vld [vmem:[%s0 + $0x360] sm:$0xff]
  %v159 = vld [vmem:[%s0 + $0x368] sm:$0xff]
  %v160 = vld [vmem:[%s0 + $0x370] sm:$0xff]
  %v161 = vld [vmem:[%s0 + $0x378] sm:$0xff]
  %v162 = vld [vmem:[%s0 + $0x380] sm:$0xff]
  %v163 = vld [vmem:[%s0 + $0x388] sm:$0xff]
  %v164 = vld [vmem:[%s0 + $0x390] sm:$0xff]
  %v165 = vld [vmem:[%s0 + $0x398] sm:$0xff]
  %v166 = vld [vmem:[%s0 + $0x3a0] sm:$0xff]
  %v167 = vld [vmem:[%s0 + $0x3a8] sm:$0xff]
  %v168 = vld [vmem:[%s0 + $0x3b0] sm:$0xff]
  %v169 = vld [vmem:[%s0 + $0x3b8] sm:$0xff]
  %v170 = vld [vmem:[%s0 + $0x3c0] sm:$0xff]
  %v171 = vld [vmem:[%s0 + $0x3c8] sm:$0xff]
  %v172 = vld [vmem:[%s0 + $0x3d0] sm:$0xff]
  %v173 = vld [vmem:[%s0 + $0x3d8] sm:$0xff]
  %v174 = vld [vmem:[%s0 + $0x3e0] sm:$0xff]
  %v175 = vld [vmem:[%s0 + $0x3e8] sm:$0xff]
  %v176 = vld [vmem:[%s0 + $0x3f0] sm:$0xff]
  %v177 = vld [vmem:[%s0 + $0x3f8] sm:$0xff]
  %v178 = vld [vmem:[%s1] sm:$0xff]
  %v179 = vld [vmem:[%s1 + $0x8] sm:$0xff]
  %v180 = vld [vmem:[%s1 + $0x10] sm:$0xff]
  %v181 = vld [vmem:[%s1 + $0x18] sm:$0xff]
  %v182 = vld [vmem:[%s1 + $0x20] sm:$0xff]
  %v183 = vld [vmem:[%s1 + $0x28] sm:$0xff]
  %v184 = vld [vmem:[%s1 + $0x30] sm:$0xff]
  %v185 = vld [vmem:[%s1 + $0x38] sm:$0xff]
  %v186 = vld [vmem:[%s1 + $0x40] sm:$0xff]
  %v187 = vld [vmem:[%s1 + $0x48] sm:$0xff]
  %v188 = vld [vmem:[%s1 + $0x50] sm:$0xff]
  %v189 = vld [vmem:[%s1 + $0x58] sm:$0xff]
  %v190 = vld [vmem:[%s1 + $0x60] sm:$0xff]
  %v191 = vld [vmem:[%s1 + $0x68] sm:$0xff]
  %v192 = vld [vmem:[%s1 + $0x70] sm:$0xff]
  %v193 = vld [vmem:[%s1 + $0x78] sm:$0xff]
  %v194 = vld [vmem:[%s1 + $0x80] sm:$0xff]
  %v195 = vld [vmem:[%s1 + $0x88] sm:$0xff]
  %v196 = vld [vmem:[%s1 + $0x90] sm:$0xff]
  %v197 = vld [vmem:[%s1 + $0x98] sm:$0xff]
  %v198 = vld [vmem:[%s1 + $0xa0] sm:$0xff]
  %v199 = vld [vmem:[%s1 + $0xa8] sm:$0xff]
  %v200 = vld [vmem:[%s1 + $0xb0] sm:$0xff]
  %v201 = vld [vmem:[%s1 + $0xb8] sm:$0xff]
  %v202 = vld [vmem:[%s1 + $0xc0] sm:$0xff]
  %v203 = vld [vmem:[%s1 + $0xc8] sm:$0xff]
  %v204 = vld [vmem:[%s1 + $0xd0] sm:$0xff]
  %v205 = vld [vmem:[%s1 + $0xd8] sm:$0xff]
  %v206 = vld [vmem:[%s1 + $0xe0] sm:$0xff]
  %v207 = vld [vmem:[%s1 + $0xe8] sm:$0xff]
  %v208 = vld [vmem:[%s1 + $0xf0] sm:$0xff]
  %v209 = vld [vmem:[%s1 + $0xf8] sm:$0xff]
  %v210 = vld [vmem:[%s1 + $0x100] sm:$0xff]
  %v211 = vld [vmem:[%s1 + $0x108] sm:$0xff]
  %v212 = vld [vmem:[%s1 + $0x110] sm:$0xff]
  %v213 = vld [vmem:[%s1 + $0x118] sm:$0xff]
  %v214 = vld [vmem:[%s1 + $0x120] sm:$0xff]
  %v215 = vld [vmem:[%s1 + $0x128] sm:$0xff]
  %v216 = vld [vmem:[%s1 + $0x130] sm:$0xff]
  %v217 = vld [vmem:[%s1 + $0x138] sm:$0xff]
  %v218 = vld [vmem:[%s1 + $0x140] sm:$0xff]
  %v219 = vld [vmem:[%s1 + $0x148] sm:$0xff]
  %v220 = vld [vmem:[%s1 + $0x150] sm:$0xff]
  %v221 = vld [vmem:[%s1 + $0x158] sm:$0xff]
  %v222 = vld [vmem:[%s1 + $0x160] sm:$0xff]
  %v223 = vld [vmem:[%s1 + $0x168] sm:$0xff]
  %v224 = vld [vmem:[%s1 + $0x170] sm:$0xff]
  %v225 = vld [vmem:[%s1 + $0x178] sm:$0xff]
  %v226 = vld [vmem:[%s1 + $0x180] sm:$0xff]
  %v227 = vld [vmem:[%s1 + $0x188] sm:$0xff]
  %v228 = vld [vmem:[%s1 + $0x190] sm:$0xff]
  %v229 = vld [vmem:[%s1 + $0x198] sm:$0xff]
  %v230 = vld [vmem:[%s1 + $0x1a0] sm:$0xff]
  %v231 = vld [vmem:[%s1 + $0x1a8] sm:$0xff]
  %v232 = vld [vmem:[%s1 + $0x1b0] sm:$0xff]
  %v233 = vld [vmem:[%s1 + $0x1b8] sm:$0xff]
  %v234 = vld [vmem:[%s1 + $0x1c0] sm:$0xff]
  %v235 = vld [vmem:[%s1 + $0x1c8] sm:$0xff]
  %v236 = vld [vmem:[%s1 + $0x1d0] sm:$0xff]
  %v237 = vld [vmem:[%s1 + $0x1d8] sm:$0xff]
  %v238 = vld [vmem:[%s1 + $0x1e0] sm:$0xff]
  %v239 = vld [vmem:[%s1 + $0x1e8] sm:$0xff]
  %v240 = vld [vmem:[%s1 + $0x1f0] sm:$0xff]
  %v241 = vld [vmem:[%s1 + $0x1f8] sm:$0xff]
  %v242 = vld [vmem:[%s1 + $0x200] sm:$0xff]
  %v243 = vld [vmem:[%s1 + $0x208] sm:$0xff]
  %v244 = vld [vmem:[%s1 + $0x210] sm:$0xff]
  %v245 = vld [vmem:[%s1 + $0x218] sm:$0xff]
  %v246 = vld [vmem:[%s1 + $0x220] sm:$0xff]
  %v247 = vld [vmem:[%s1 + $0x228] sm:$0xff]
  %v248 = vld [vmem:[%s1 + $0x230] sm:$0xff]
  %v249 = vld [vmem:[%s1 + $0x238] sm:$0xff]
  %v250 = vld [vmem:[%s1 + $0x240] sm:$0xff]
  %v251 = vld [vmem:[%s1 + $0x248] sm:$0xff]
  %v252 = vld [vmem:[%s1 + $0x250] sm:$0xff]
  %v253 = vld [vmem:[%s1 + $0x258] sm:$0xff]
  %v254 = vld [vmem:[%s1 + $0x260] sm:$0xff]
  %v255 = vld [vmem:[%s1 + $0x268] sm:$0xff]
  %v256 = vld [vmem:[%s1 + $0x270] sm:$0xff]
  %v257 = vld [vmem:[%s1 + $0x278] sm:$0xff]
  %v258 = vld [vmem:[%s1 + $0x280] sm:$0xff]
  %v259 = vld [vmem:[%s1 + $0x288] sm:$0xff]
  %v260 = vld [vmem:[%s1 + $0x290] sm:$0xff]
  %v261 = vld [vmem:[%s1 + $0x298] sm:$0xff]
  %v262 = vld [vmem:[%s1 + $0x2a0] sm:$0xff]
  %v263 = vld [vmem:[%s1 + $0x2a8] sm:$0xff]
  %v264 = vld [vmem:[%s1 + $0x2b0] sm:$0xff]
  %v265 = vld [vmem:[%s1 + $0x2b8] sm:$0xff]
  %v266 = vld [vmem:[%s1 + $0x2c0] sm:$0xff]
  %v267 = vld [vmem:[%s1 + $0x2c8] sm:$0xff]
  %v268 = vld [vmem:[%s1 + $0x2d0] sm:$0xff]
  %v269 = vld [vmem:[%s1 + $0x2d8] sm:$0xff]
  %v270 = vld [vmem:[%s1 + $0x2e0] sm:$0xff]
  %v271 = vld [vmem:[%s1 + $0x2e8] sm:$0xff]
  %v272 = vld [vmem:[%s1 + $0x2f0] sm:$0xff]
  %v273 = vld [vmem:[%s1 + $0x2f8] sm:$0xff]
  %v274 = vld [vmem:[%s1 + $0x300] sm:$0xff]
  %v275 = vld [vmem:[%s1 + $0x308] sm:$0xff]
  %v276 = vld [vmem:[%s1 + $0x310] sm:$0xff]
  %v277 = vld [vmem:[%s1 + $0x318] sm:$0xff]
  %v278 = vld [vmem:[%s1 + $0x320] sm:$0xff]
  %v279 = vld [vmem:[%s1 + $0x328] sm:$0xff]
  %v280 = vld [vmem:[%s1 + $0x330] sm:$0xff]
  %v281 = vld [vmem:[%s1 + $0x338] sm:$0xff]
  %v282 = vld [vmem:[%s1 + $0x340] sm:$0xff]
  %v283 = vld [vmem:[%s1 + $0x348] sm:$0xff]
  %v284 = vld [vmem:[%s1 + $0x350] sm:$0xff]
  %v285 = vld [vmem:[%s1 + $0x358] sm:$0xff]
  %v286 = vld [vmem:[%s1 + $0x360] sm:$0xff]
  %v287 = vld [vmem:[%s1 + $0x368] sm:$0xff]
  %v288 = vld [vmem:[%s1 + $0x370] sm:$0xff]
  %v289 = vld [vmem:[%s1 + $0x378] sm:$0xff]
  %v290 = vld [vmem:[%s1 + $0x380] sm:$0xff]
  %v291 = vld [vmem:[%s1 + $0x388] sm:$0xff]
  %v292 = vld [vmem:[%s1 + $0x390] sm:$0xff]
  %v293 = vld [vmem:[%s1 + $0x398] sm:$0xff]
  %v294 = vld [vmem:[%s1 + $0x3a0] sm:$0xff]
  %v295 = vld [vmem:[%s1 + $0x3a8] sm:$0xff]
  %v296 = vld [vmem:[%s1 + $0x3b0] sm:$0xff]
  %v297 = vld [vmem:[%s1 + $0x3b8] sm:$0xff]
  %v298 = vld [vmem:[%s1 + $0x3c0] sm:$0xff]
  %v299 = vld [vmem:[%s1 + $0x3c8] sm:$0xff]
  %v300 = vld [vmem:[%s1 + $0x3d0] sm:$0xff]
  %v301 = vld [vmem:[%s1 + $0x3d8] sm:$0xff]
  %v302 = vld [vmem:[%s1 + $0x3e0] sm:$0xff]
  %v303 = vld [vmem:[%s1 + $0x3e8] sm:$0xff]
  %v304 = vld [vmem:[%s1 + $0x3f0] sm:$0xff]
  %v305 = vld [vmem:[%s1 + $0x3f8] sm:$0xff]
  %306 = vmatprep.subr.mxu0 0.0
  %307 = vmatpush1.msra.mxu0 %v193
  %308 = vmatprep.subr.mxu0 0.0
  %309 = vmatpush1.msra.mxu0 %v192
  %310 = vmatprep.subr.mxu0 0.0
  %311 = vmatpush1.msra.mxu0 %v191
  %312 = vmatprep.subr.mxu0 0.0
  %313 = vmatpush1.msra.mxu0 %v190
  %314 = vmatprep.subr.mxu0 0.0
  %315 = vmatpush1.msra.mxu0 %v189
  %316 = vmatprep.subr.mxu0 0.0
  %317 = vmatpush1.msra.mxu0 %v188
  %318 = vmatprep.subr.mxu0 0.0
  %319 = vmatpush1.msra.mxu0 %v187
  %320 = vmatprep.subr.mxu0 0.0
  %321 = vmatpush1.msra.mxu0 %v186
  %322 = vmatprep.subr.mxu0 0.0
  %323 = vmatpush1.msra.mxu0 %v185
  %324 = vmatprep.subr.mxu0 0.0
  %325 = vmatpush1.msra.mxu0 %v184
  %326 = vmatprep.subr.mxu0 0.0
  %327 = vmatpush1.msra.mxu0 %v183
  %328 = vmatprep.subr.mxu0 0.0
  %329 = vmatpush1.msra.mxu0 %v182
  %330 = vmatprep.subr.mxu0 0.0
  %331 = vmatpush1.msra.mxu0 %v181
  %332 = vmatprep.subr.mxu0 0.0
  %333 = vmatpush1.msra.mxu0 %v180
  %334 = vmatprep.subr.mxu0 0.0
  %335 = vmatpush1.msra.mxu0 %v179
  %336 = vmatprep.subr.mxu0 0.0
  %337 = vmatpush1.msra.mxu0 %v178
  %338 = vmatprep.subr.mxu0 0.0
  %339 = vmatpush2.msra.mxu0 %v209
  %340 = vmatprep.subr.mxu0 0.0
  %341 = vmatpush2.msra.mxu0 %v208
  %342 = vmatprep.subr.mxu0 0.0
  %343 = vmatpush2.msra.mxu0 %v207
  %344 = vmatprep.subr.mxu0 0.0
  %345 = vmatpush2.msra.mxu0 %v206
  %346 = vmatprep.subr.mxu0 0.0
  %347 = vmatpush2.msra.mxu0 %v205
  %348 = vmatprep.subr.mxu0 0.0
  %349 = vmatpush2.msra.mxu0 %v204
  %350 = vmatprep.subr.mxu0 0.0
  %351 = vmatpush2.msra.mxu0 %v203
  %352 = vmatprep.subr.mxu0 0.0
  %353 = vmatpush2.msra.mxu0 %v202
  %354 = vmatprep.subr.mxu0 0.0
  %355 = vmatpush2.msra.mxu0 %v201
  %356 = vmatprep.subr.mxu0 0.0
  %357 = vmatpush2.msra.mxu0 %v200
  %358 = vmatprep.subr.mxu0 0.0
  %359 = vmatpush2.msra.mxu0 %v199
  %360 = vmatprep.subr.mxu0 0.0
  %361 = vmatpush2.msra.mxu0 %v198
  %362 = vmatprep.subr.mxu0 0.0
  %363 = vmatpush2.msra.mxu0 %v197
  %364 = vmatprep.subr.mxu0 0.0
  %365 = vmatpush2.msra.mxu0 %v196
  %366 = vmatprep.subr.mxu0 0.0
  %367 = vmatpush2.msra.mxu0 %v195
  %368 = vmatprep.subr.mxu0 0.0
  %369 = vmatpush2.msra.mxu0 %v194
  %370 = vmatprep.mubr.f32.mxu0 %v51
  %371 = vmatmul.mubr.f32.gmra.mxu0 %v50
  %v372 = vpop.f32.mrf.mxu0
  %v373 = vadd.f32 0.0, %v372
  %v374 = vpop.f32.mrf.mxu0
  %375 = vmatprep.mubr.f32.mxu0 %v59
  %376 = vmatmul.mubr.f32.gmra.mxu0 %v58
  %v377 = vpop.f32.mrf.mxu0
  %v378 = vadd.f32 0.0, %v377
  %v379 = vpop.f32.mrf.mxu0
  %380 = vmatprep.mubr.f32.mxu0 %v67
  %381 = vmatmul.mubr.f32.gmra.mxu0 %v66
  %v382 = vpop.f32.mrf.mxu0
  %v383 = vadd.f32 0.0, %v382
  %v384 = vpop.f32.mrf.mxu0
  %385 = vmatprep.mubr.f32.mxu0 %v75
  %386 = vmatmul.mubr.f32.gmra.mxu0 %v74
  %v387 = vpop.f32.mrf.mxu0
  %v388 = vadd.f32 0.0, %v387
  %v389 = vpop.f32.mrf.mxu0
  %390 = vmatprep.mubr.f32.mxu0 %v83
  %391 = vmatmul.mubr.f32.gmra.mxu0 %v82
  %v392 = vpop.f32.mrf.mxu0
  %v393 = vadd.f32 0.0, %v392
  %v394 = vpop.f32.mrf.mxu0
  %395 = vmatprep.mubr.f32.mxu0 %v91
  %396 = vmatmul.mubr.f32.gmra.mxu0 %v90
  %v397 = vpop.f32.mrf.mxu0
  %v398 = vadd.f32 0.0, %v397
  %v399 = vpop.f32.mrf.mxu0
  %400 = vmatprep.mubr.f32.mxu0 %v99
  %401 = vmatmul.mubr.f32.gmra.mxu0 %v98
  %v402 = vpop.f32.mrf.mxu0
  %v403 = vadd.f32 0.0, %v402
  %v404 = vpop.f32.mrf.mxu0
  %405 = vmatprep.mubr.f32.mxu0 %v107
  %406 = vmatmul.mubr.f32.gmra.mxu0 %v106
  %v407 = vpop.f32.mrf.mxu0
  %v408 = vadd.f32 0.0, %v407
  %v409 = vpop.f32.mrf.mxu0
  %410 = vmatprep.mubr.f32.mxu0 %v115
  %411 = vmatmul.mubr.f32.gmra.mxu0 %v114
  %v412 = vpop.f32.mrf.mxu0
  %v413 = vadd.f32 0.0, %v412
  %v414 = vpop.f32.mrf.mxu0
  %415 = vmatprep.mubr.f32.mxu0 %v123
  %416 = vmatmul.mubr.f32.gmra.mxu0 %v122
  %v417 = vpop.f32.mrf.mxu0
  %v418 = vadd.f32 0.0, %v417
  %v419 = vpop.f32.mrf.mxu0
  %420 = vmatprep.mubr.f32.mxu0 %v131
  %421 = vmatmul.mubr.f32.gmra.mxu0 %v130
  %v422 = vpop.f32.mrf.mxu0
  %v423 = vadd.f32 0.0, %v422
  %v424 = vpop.f32.mrf.mxu0
  %425 = vmatprep.mubr.f32.mxu0 %v139
  %426 = vmatmul.mubr.f32.gmra.mxu0 %v138
  %v427 = vpop.f32.mrf.mxu0
  %v428 = vadd.f32 0.0, %v427
  %v429 = vpop.f32.mrf.mxu0
  %430 = vmatprep.mubr.f32.mxu0 %v147
  %431 = vmatmul.mubr.f32.gmra.mxu0 %v146
  %v432 = vpop.f32.mrf.mxu0
  %v433 = vadd.f32 0.0, %v432
  %v434 = vpop.f32.mrf.mxu0
  %435 = vmatprep.mubr.f32.mxu0 %v155
  %436 = vmatmul.mubr.f32.gmra.mxu0 %v154
  %v437 = vpop.f32.mrf.mxu0
  %v438 = vadd.f32 0.0, %v437
  %v439 = vpop.f32.mrf.mxu0
  %440 = vmatprep.mubr.f32.mxu0 %v163
  %441 = vmatmul.mubr.f32.gmra.mxu0 %v162
  %v442 = vpop.f32.mrf.mxu0
  %v443 = vadd.f32 0.0, %v442
  %v444 = vpop.f32.mrf.mxu0
  %445 = vmatprep.mubr.f32.mxu0 %v171
  %446 = vmatmul.mubr.f32.gmra.mxu0 %v170
  %v447 = vpop.f32.mrf.mxu0
  %v448 = vadd.f32 0.0, %v447
  %v449 = vpop.f32.mrf.mxu0
  %450 = vdwg.mxu0
  %451 = vmatprep.subr.mxu0 0.0
  %452 = vmatpush1.msra.mxu0 %v225
  %453 = vmatprep.subr.mxu0 0.0
  %454 = vmatpush1.msra.mxu0 %v224
  %455 = vmatprep.subr.mxu0 0.0
  %456 = vmatpush1.msra.mxu0 %v223
  %457 = vmatprep.subr.mxu0 0.0
  %458 = vmatpush1.msra.mxu0 %v222
  %459 = vmatprep.subr.mxu0 0.0
  %460 = vmatpush1.msra.mxu0 %v221
  %461 = vmatprep.subr.mxu0 0.0
  %462 = vmatpush1.msra.mxu0 %v220
  %463 = vmatprep.subr.mxu0 0.0
  %464 = vmatpush1.msra.mxu0 %v219
  %465 = vmatprep.subr.mxu0 0.0
  %466 = vmatpush1.msra.mxu0 %v218
  %467 = vmatprep.subr.mxu0 0.0
  %468 = vmatpush1.msra.mxu0 %v217
  %469 = vmatprep.subr.mxu0 0.0
  %470 = vmatpush1.msra.mxu0 %v216
  %471 = vmatprep.subr.mxu0 0.0
  %472 = vmatpush1.msra.mxu0 %v215
  %473 = vmatprep.subr.mxu0 0.0
  %474 = vmatpush1.msra.mxu0 %v214
  %475 = vmatprep.subr.mxu0 0.0
  %476 = vmatpush1.msra.mxu0 %v213
  %477 = vmatprep.subr.mxu0 0.0
  %478 = vmatpush1.msra.mxu0 %v212
  %479 = vmatprep.subr.mxu0 0.0
  %480 = vmatpush1.msra.mxu0 %v211
  %481 = vmatprep.subr.mxu0 0.0
  %482 = vmatpush1.msra.mxu0 %v210
  %483 = vmatprep.subr.mxu0 0.0
  %484 = vmatpush2.msra.mxu0 %v241
  %485 = vmatprep.subr.mxu0 0.0
  %486 = vmatpush2.msra.mxu0 %v240
  %487 = vmatprep.subr.mxu0 0.0
  %488 = vmatpush2.msra.mxu0 %v239
  %489 = vmatprep.subr.mxu0 0.0
  %490 = vmatpush2.msra.mxu0 %v238
  %491 = vmatprep.subr.mxu0 0.0
  %492 = vmatpush2.msra.mxu0 %v237
  %493 = vmatprep.subr.mxu0 0.0
  %494 = vmatpush2.msra.mxu0 %v236
  %495 = vmatprep.subr.mxu0 0.0
  %496 = vmatpush2.msra.mxu0 %v235
  %497 = vmatprep.subr.mxu0 0.0
  %498 = vmatpush2.msra.mxu0 %v234
  %499 = vmatprep.subr.mxu0 0.0
  %500 = vmatpush2.msra.mxu0 %v233
  %501 = vmatprep.subr.mxu0 0.0
  %502 = vmatpush2.msra.mxu0 %v232
  %503 = vmatprep.subr.mxu0 0.0
  %504 = vmatpush2.msra.mxu0 %v231
  %505 = vmatprep.subr.mxu0 0.0
  %506 = vmatpush2.msra.mxu0 %v230
  %507 = vmatprep.subr.mxu0 0.0
  %508 = vmatpush2.msra.mxu0 %v229
  %509 = vmatprep.subr.mxu0 0.0
  %510 = vmatpush2.msra.mxu0 %v228
  %511 = vmatprep.subr.mxu0 0.0
  %512 = vmatpush2.msra.mxu0 %v227
  %513 = vmatprep.subr.mxu0 0.0
  %514 = vmatpush2.msra.mxu0 %v226
  %515 = vmatprep.mubr.f32.mxu0 %v53
  %516 = vmatmul.mubr.f32.gmra.mxu0 %v52
  %v517 = vpop.f32.mrf.mxu0
  %v518 = vadd.f32 %v373, %v517
  %v519 = vpop.f32.mrf.mxu0
  %520 = vmatprep.mubr.f32.mxu0 %v61
  %521 = vmatmul.mubr.f32.gmra.mxu0 %v60
  %v522 = vpop.f32.mrf.mxu0
  %v523 = vadd.f32 %v378, %v522
  %v524 = vpop.f32.mrf.mxu0
  %525 = vmatprep.mubr.f32.mxu0 %v69
  %526 = vmatmul.mubr.f32.gmra.mxu0 %v68
  %v527 = vpop.f32.mrf.mxu0
  %v528 = vadd.f32 %v383, %v527
  %v529 = vpop.f32.mrf.mxu0
  %530 = vmatprep.mubr.f32.mxu0 %v77
  %531 = vmatmul.mubr.f32.gmra.mxu0 %v76
  %v532 = vpop.f32.mrf.mxu0
  %v533 = vadd.f32 %v388, %v532
  %v534 = vpop.f32.mrf.mxu0
  %535 = vmatprep.mubr.f32.mxu0 %v85
  %536 = vmatmul.mubr.f32.gmra.mxu0 %v84
  %v537 = vpop.f32.mrf.mxu0
  %v538 = vadd.f32 %v393, %v537
  %v539 = vpop.f32.mrf.mxu0
  %540 = vmatprep.mubr.f32.mxu0 %v93
  %541 = vmatmul.mubr.f32.gmra.mxu0 %v92
  %v542 = vpop.f32.mrf.mxu0
  %v543 = vadd.f32 %v398, %v542
  %v544 = vpop.f32.mrf.mxu0
  %545 = vmatprep.mubr.f32.mxu0 %v101
  %546 = vmatmul.mubr.f32.gmra.mxu0 %v100
  %v547 = vpop.f32.mrf.mxu0
  %v548 = vadd.f32 %v403, %v547
  %v549 = vpop.f32.mrf.mxu0
  %550 = vmatprep.mubr.f32.mxu0 %v109
  %551 = vmatmul.mubr.f32.gmra.mxu0 %v108
  %v552 = vpop.f32.mrf.mxu0
  %v553 = vadd.f32 %v408, %v552
  %v554 = vpop.f32.mrf.mxu0
  %555 = vmatprep.mubr.f32.mxu0 %v117
  %556 = vmatmul.mubr.f32.gmra.mxu0 %v116
  %v557 = vpop.f32.mrf.mxu0
  %v558 = vadd.f32 %v413, %v557
  %v559 = vpop.f32.mrf.mxu0
  %560 = vmatprep.mubr.f32.mxu0 %v125
  %561 = vmatmul.mubr.f32.gmra.mxu0 %v124
  %v562 = vpop.f32.mrf.mxu0
  %v563 = vadd.f32 %v418, %v562
  %v564 = vpop.f32.mrf.mxu0
  %565 = vmatprep.mubr.f32.mxu0 %v133
  %566 = vmatmul.mubr.f32.gmra.mxu0 %v132
  %v567 = vpop.f32.mrf.mxu0
  %v568 = vadd.f32 %v423, %v567
  %v569 = vpop.f32.mrf.mxu0
  %570 = vmatprep.mubr.f32.mxu0 %v141
  %571 = vmatmul.mubr.f32.gmra.mxu0 %v140
  %v572 = vpop.f32.mrf.mxu0
  %v573 = vadd.f32 %v428, %v572
  %v574 = vpop.f32.mrf.mxu0
  %575 = vmatprep.mubr.f32.mxu0 %v149
  %576 = vmatmul.mubr.f32.gmra.mxu0 %v148
  %v577 = vpop.f32.mrf.mxu0
  %v578 = vadd.f32 %v433, %v577
  %v579 = vpop.f32.mrf.mxu0
  %580 = vmatprep.mubr.f32.mxu0 %v157
  %581 = vmatmul.mubr.f32.gmra.mxu0 %v156
  %v582 = vpop.f32.mrf.mxu0
  %v583 = vadd.f32 %v438, %v582
  %v584 = vpop.f32.mrf.mxu0
  %585 = vmatprep.mubr.f32.mxu0 %v165
  %586 = vmatmul.mubr.f32.gmra.mxu0 %v164
  %v587 = vpop.f32.mrf.mxu0
  %v588 = vadd.f32 %v443, %v587
  %v589 = vpop.f32.mrf.mxu0
  %590 = vmatprep.mubr.f32.mxu0 %v173
  %591 = vmatmul.mubr.f32.gmra.mxu0 %v172
  %v592 = vpop.f32.mrf.mxu0
  %v593 = vadd.f32 %v448, %v592
  %v594 = vpop.f32.mrf.mxu0
  %595 = vdwg.mxu0
  %596 = vmatprep.subr.mxu0 0.0
  %597 = vmatpush1.msra.mxu0 %v257
  %598 = vmatprep.subr.mxu0 0.0
  %599 = vmatpush1.msra.mxu0 %v256
  %600 = vmatprep.subr.mxu0 0.0
  %601 = vmatpush1.msra.mxu0 %v255
  %602 = vmatprep.subr.mxu0 0.0
  %603 = vmatpush1.msra.mxu0 %v254
  %604 = vmatprep.subr.mxu0 0.0
  %605 = vmatpush1.msra.mxu0 %v253
  %606 = vmatprep.subr.mxu0 0.0
  %607 = vmatpush1.msra.mxu0 %v252
  %608 = vmatprep.subr.mxu0 0.0
  %609 = vmatpush1.msra.mxu0 %v251
  %610 = vmatprep.subr.mxu0 0.0
  %611 = vmatpush1.msra.mxu0 %v250
  %612 = vmatprep.subr.mxu0 0.0
  %613 = vmatpush1.msra.mxu0 %v249
  %614 = vmatprep.subr.mxu0 0.0
  %615 = vmatpush1.msra.mxu0 %v248
  %616 = vmatprep.subr.mxu0 0.0
  %617 = vmatpush1.msra.mxu0 %v247
  %618 = vmatprep.subr.mxu0 0.0
  %619 = vmatpush1.msra.mxu0 %v246
  %620 = vmatprep.subr.mxu0 0.0
  %621 = vmatpush1.msra.mxu0 %v245
  %622 = vmatprep.subr.mxu0 0.0
  %623 = vmatpush1.msra.mxu0 %v244
  %624 = vmatprep.subr.mxu0 0.0
  %625 = vmatpush1.msra.mxu0 %v243
  %626 = vmatprep.subr.mxu0 0.0
  %627 = vmatpush1.msra.mxu0 %v242
  %628 = vmatprep.subr.mxu0 0.0
  %629 = vmatpush2.msra.mxu0 %v273
  %630 = vmatprep.subr.mxu0 0.0
  %631 = vmatpush2.msra.mxu0 %v272
  %632 = vmatprep.subr.mxu0 0.0
  %633 = vmatpush2.msra.mxu0 %v271
  %634 = vmatprep.subr.mxu0 0.0
  %635 = vmatpush2.msra.mxu0 %v270
  %636 = vmatprep.subr.mxu0 0.0
  %637 = vmatpush2.msra.mxu0 %v269
  %638 = vmatprep.subr.mxu0 0.0
  %639 = vmatpush2.msra.mxu0 %v268
  %640 = vmatprep.subr.mxu0 0.0
  %641 = vmatpush2.msra.mxu0 %v267
  %642 = vmatprep.subr.mxu0 0.0
  %643 = vmatpush2.msra.mxu0 %v266
  %644 = vmatprep.subr.mxu0 0.0
  %645 = vmatpush2.msra.mxu0 %v265
  %646 = vmatprep.subr.mxu0 0.0
  %647 = vmatpush2.msra.mxu0 %v264
  %648 = vmatprep.subr.mxu0 0.0
  %649 = vmatpush2.msra.mxu0 %v263
  %650 = vmatprep.subr.mxu0 0.0
  %651 = vmatpush2.msra.mxu0 %v262
  %652 = vmatprep.subr.mxu0 0.0
  %653 = vmatpush2.msra.mxu0 %v261
  %654 = vmatprep.subr.mxu0 0.0
  %655 = vmatpush2.msra.mxu0 %v260
  %656 = vmatprep.subr.mxu0 0.0
  %657 = vmatpush2.msra.mxu0 %v259
  %658 = vmatprep.subr.mxu0 0.0
  %659 = vmatpush2.msra.mxu0 %v258
  %660 = vmatprep.mubr.f32.mxu0 %v55
  %661 = vmatmul.mubr.f32.gmra.mxu0 %v54
  %v662 = vpop.f32.mrf.mxu0
  %v663 = vadd.f32 %v518, %v662
  %v664 = vpop.f32.mrf.mxu0
  %665 = vmatprep.mubr.f32.mxu0 %v63
  %666 = vmatmul.mubr.f32.gmra.mxu0 %v62
  %v667 = vpop.f32.mrf.mxu0
  %v668 = vadd.f32 %v523, %v667
  %v669 = vpop.f32.mrf.mxu0
  %670 = vmatprep.mubr.f32.mxu0 %v71
  %671 = vmatmul.mubr.f32.gmra.mxu0 %v70
  %v672 = vpop.f32.mrf.mxu0
  %v673 = vadd.f32 %v528, %v672
  %v674 = vpop.f32.mrf.mxu0
  %675 = vmatprep.mubr.f32.mxu0 %v79
  %676 = vmatmul.mubr.f32.gmra.mxu0 %v78
  %v677 = vpop.f32.mrf.mxu0
  %v678 = vadd.f32 %v533, %v677
  %v679 = vpop.f32.mrf.mxu0
  %680 = vmatprep.mubr.f32.mxu0 %v87
  %681 = vmatmul.mubr.f32.gmra.mxu0 %v86
  %v682 = vpop.f32.mrf.mxu0
  %v683 = vadd.f32 %v538, %v682
  %v684 = vpop.f32.mrf.mxu0
  %685 = vmatprep.mubr.f32.mxu0 %v95
  %686 = vmatmul.mubr.f32.gmra.mxu0 %v94
  %v687 = vpop.f32.mrf.mxu0
  %v688 = vadd.f32 %v543, %v687
  %v689 = vpop.f32.mrf.mxu0
  %690 = vmatprep.mubr.f32.mxu0 %v103
  %691 = vmatmul.mubr.f32.gmra.mxu0 %v102
  %v692 = vpop.f32.mrf.mxu0
  %v693 = vadd.f32 %v548, %v692
  %v694 = vpop.f32.mrf.mxu0
  %695 = vmatprep.mubr.f32.mxu0 %v111
  %696 = vmatmul.mubr.f32.gmra.mxu0 %v110
  %v697 = vpop.f32.mrf.mxu0
  %v698 = vadd.f32 %v553, %v697
  %v699 = vpop.f32.mrf.mxu0
  %700 = vmatprep.mubr.f32.mxu0 %v119
  %701 = vmatmul.mubr.f32.gmra.mxu0 %v118
  %v702 = vpop.f32.mrf.mxu0
  %v703 = vadd.f32 %v558, %v702
  %v704 = vpop.f32.mrf.mxu0
  %705 = vmatprep.mubr.f32.mxu0 %v127
  %706 = vmatmul.mubr.f32.gmra.mxu0 %v126
  %v707 = vpop.f32.mrf.mxu0
  %v708 = vadd.f32 %v563, %v707
  %v709 = vpop.f32.mrf.mxu0
  %710 = vmatprep.mubr.f32.mxu0 %v135
  %711 = vmatmul.mubr.f32.gmra.mxu0 %v134
  %v712 = vpop.f32.mrf.mxu0
  %v713 = vadd.f32 %v568, %v712
  %v714 = vpop.f32.mrf.mxu0
  %715 = vmatprep.mubr.f32.mxu0 %v143
  %716 = vmatmul.mubr.f32.gmra.mxu0 %v142
  %v717 = vpop.f32.mrf.mxu0
  %v718 = vadd.f32 %v573, %v717
  %v719 = vpop.f32.mrf.mxu0
  %720 = vmatprep.mubr.f32.mxu0 %v151
  %721 = vmatmul.mubr.f32.gmra.mxu0 %v150
  %v722 = vpop.f32.mrf.mxu0
  %v723 = vadd.f32 %v578, %v722
  %v724 = vpop.f32.mrf.mxu0
  %725 = vmatprep.mubr.f32.mxu0 %v159
  %726 = vmatmul.mubr.f32.gmra.mxu0 %v158
  %v727 = vpop.f32.mrf.mxu0
  %v728 = vadd.f32 %v583, %v727
  %v729 = vpop.f32.mrf.mxu0
  %730 = vmatprep.mubr.f32.mxu0 %v167
  %731 = vmatmul.mubr.f32.gmra.mxu0 %v166
  %v732 = vpop.f32.mrf.mxu0
  %v733 = vadd.f32 %v588, %v732
  %v734 = vpop.f32.mrf.mxu0
  %735 = vmatprep.mubr.f32.mxu0 %v175
  %736 = vmatmul.mubr.f32.gmra.mxu0 %v174
  %v737 = vpop.f32.mrf.mxu0
  %v738 = vadd.f32 %v593, %v737
  %v739 = vpop.f32.mrf.mxu0
  %740 = vdwg.mxu0
  %741 = vmatprep.subr.mxu0 0.0
  %742 = vmatpush1.msra.mxu0 %v289
  %743 = vmatprep.subr.mxu0 0.0
  %744 = vmatpush1.msra.mxu0 %v288
  %745 = vmatprep.subr.mxu0 0.0
  %746 = vmatpush1.msra.mxu0 %v287
  %747 = vmatprep.subr.mxu0 0.0
  %748 = vmatpush1.msra.mxu0 %v286
  %749 = vmatprep.subr.mxu0 0.0
  %750 = vmatpush1.msra.mxu0 %v285
  %751 = vmatprep.subr.mxu0 0.0
  %752 = vmatpush1.msra.mxu0 %v284
  %753 = vmatprep.subr.mxu0 0.0
  %754 = vmatpush1.msra.mxu0 %v283
  %755 = vmatprep.subr.mxu0 0.0
  %756 = vmatpush1.msra.mxu0 %v282
  %757 = vmatprep.subr.mxu0 0.0
  %758 = vmatpush1.msra.mxu0 %v281
  %759 = vmatprep.subr.mxu0 0.0
  %760 = vmatpush1.msra.mxu0 %v280
  %761 = vmatprep.subr.mxu0 0.0
  %762 = vmatpush1.msra.mxu0 %v279
  %763 = vmatprep.subr.mxu0 0.0
  %764 = vmatpush1.msra.mxu0 %v278
  %765 = vmatprep.subr.mxu0 0.0
  %766 = vmatpush1.msra.mxu0 %v277
  %767 = vmatprep.subr.mxu0 0.0
  %768 = vmatpush1.msra.mxu0 %v276
  %769 = vmatprep.subr.mxu0 0.0
  %770 = vmatpush1.msra.mxu0 %v275
  %771 = vmatprep.subr.mxu0 0.0
  %772 = vmatpush1.msra.mxu0 %v274
  %773 = vmatprep.subr.mxu0 0.0
  %774 = vmatpush2.msra.mxu0 %v305
  %775 = vmatprep.subr.mxu0 0.0
  %776 = vmatpush2.msra.mxu0 %v304
  %777 = vmatprep.subr.mxu0 0.0
  %778 = vmatpush2.msra.mxu0 %v303
  %779 = vmatprep.subr.mxu0 0.0
  %780 = vmatpush2.msra.mxu0 %v302
  %781 = vmatprep.subr.mxu0 0.0
  %782 = vmatpush2.msra.mxu0 %v301
  %783 = vmatprep.subr.mxu0 0.0
  %784 = vmatpush2.msra.mxu0 %v300
  %785 = vmatprep.subr.mxu0 0.0
  %786 = vmatpush2.msra.mxu0 %v299
  %787 = vmatprep.subr.mxu0 0.0
  %788 = vmatpush2.msra.mxu0 %v298
  %789 = vmatprep.subr.mxu0 0.0
  %790 = vmatpush2.msra.mxu0 %v297
  %791 = vmatprep.subr.mxu0 0.0
  %792 = vmatpush2.msra.mxu0 %v296
  %793 = vmatprep.subr.mxu0 0.0
  %794 = vmatpush2.msra.mxu0 %v295
  %795 = vmatprep.subr.mxu0 0.0
  %796 = vmatpush2.msra.mxu0 %v294
  %797 = vmatprep.subr.mxu0 0.0
  %798 = vmatpush2.msra.mxu0 %v293
  %799 = vmatprep.subr.mxu0 0.0
  %800 = vmatpush2.msra.mxu0 %v292
  %801 = vmatprep.subr.mxu0 0.0
  %802 = vmatpush2.msra.mxu0 %v291
  %803 = vmatprep.subr.mxu0 0.0
  %804 = vmatpush2.msra.mxu0 %v290
  %805 = vmatprep.mubr.f32.mxu0 %v57
  %806 = vmatmul.mubr.f32.gmra.mxu0 %v56
  %v807 = vpop.f32.mrf.mxu0
  %v808 = vadd.f32 %v663, %v807
  %v809 = vpop.f32.mrf.mxu0
  %810 = vmatprep.mubr.f32.mxu0 %v65
  %811 = vmatmul.mubr.f32.gmra.mxu0 %v64
  %v812 = vpop.f32.mrf.mxu0
  %v813 = vadd.f32 %v668, %v812
  %v814 = vpop.f32.mrf.mxu0
  %815 = vmatprep.mubr.f32.mxu0 %v73
  %816 = vmatmul.mubr.f32.gmra.mxu0 %v72
  %v817 = vpop.f32.mrf.mxu0
  %v818 = vadd.f32 %v673, %v817
  %v819 = vpop.f32.mrf.mxu0
  %820 = vmatprep.mubr.f32.mxu0 %v81
  %821 = vmatmul.mubr.f32.gmra.mxu0 %v80
  %v822 = vpop.f32.mrf.mxu0
  %v823 = vadd.f32 %v678, %v822
  %v824 = vpop.f32.mrf.mxu0
  %825 = vmatprep.mubr.f32.mxu0 %v89
  %826 = vmatmul.mubr.f32.gmra.mxu0 %v88
  %v827 = vpop.f32.mrf.mxu0
  %v828 = vadd.f32 %v683, %v827
  %v829 = vpop.f32.mrf.mxu0
  %830 = vmatprep.mubr.f32.mxu0 %v97
  %831 = vmatmul.mubr.f32.gmra.mxu0 %v96
  %v832 = vpop.f32.mrf.mxu0
  %v833 = vadd.f32 %v688, %v832
  %v834 = vpop.f32.mrf.mxu0
  %835 = vmatprep.mubr.f32.mxu0 %v105
  %836 = vmatmul.mubr.f32.gmra.mxu0 %v104
  %v837 = vpop.f32.mrf.mxu0
  %v838 = vadd.f32 %v693, %v837
  %v839 = vpop.f32.mrf.mxu0
  %840 = vmatprep.mubr.f32.mxu0 %v113
  %841 = vmatmul.mubr.f32.gmra.mxu0 %v112
  %v842 = vpop.f32.mrf.mxu0
  %v843 = vadd.f32 %v698, %v842
  %v844 = vpop.f32.mrf.mxu0
  %845 = vmatprep.mubr.f32.mxu0 %v121
  %846 = vmatmul.mubr.f32.gmra.mxu0 %v120
  %v847 = vpop.f32.mrf.mxu0
  %v848 = vadd.f32 %v703, %v847
  %v849 = vpop.f32.mrf.mxu0
  %850 = vmatprep.mubr.f32.mxu0 %v129
  %851 = vmatmul.mubr.f32.gmra.mxu0 %v128
  %v852 = vpop.f32.mrf.mxu0
  %v853 = vadd.f32 %v708, %v852
  %v854 = vpop.f32.mrf.mxu0
  %855 = vmatprep.mubr.f32.mxu0 %v137
  %856 = vmatmul.mubr.f32.gmra.mxu0 %v136
  %v857 = vpop.f32.mrf.mxu0
  %v858 = vadd.f32 %v713, %v857
  %v859 = vpop.f32.mrf.mxu0
  %860 = vmatprep.mubr.f32.mxu0 %v145
  %861 = vmatmul.mubr.f32.gmra.mxu0 %v144
  %v862 = vpop.f32.mrf.mxu0
  %v863 = vadd.f32 %v718, %v862
  %v864 = vpop.f32.mrf.mxu0
  %865 = vmatprep.mubr.f32.mxu0 %v153
  %866 = vmatmul.mubr.f32.gmra.mxu0 %v152
  %v867 = vpop.f32.mrf.mxu0
  %v868 = vadd.f32 %v723, %v867
  %v869 = vpop.f32.mrf.mxu0
  %870 = vmatprep.mubr.f32.mxu0 %v161
  %871 = vmatmul.mubr.f32.gmra.mxu0 %v160
  %v872 = vpop.f32.mrf.mxu0
  %v873 = vadd.f32 %v728, %v872
  %v874 = vpop.f32.mrf.mxu0
  %875 = vmatprep.mubr.f32.mxu0 %v169
  %876 = vmatmul.mubr.f32.gmra.mxu0 %v168
  %v877 = vpop.f32.mrf.mxu0
  %v878 = vadd.f32 %v733, %v877
  %v879 = vpop.f32.mrf.mxu0
  %880 = vmatprep.mubr.f32.mxu0 %v177
  %881 = vmatmul.mubr.f32.gmra.mxu0 %v176
  %v882 = vpop.f32.mrf.mxu0
  %v883 = vadd.f32 %v738, %v882
  %v884 = vpop.f32.mrf.mxu0
  %885 = vdwg.mxu0
  %v886 = vadd.f32 %v34, %v808
  %v887 = vadd.f32 %v35, %v813
  %v888 = vadd.f32 %v36, %v818
  %v889 = vadd.f32 %v37, %v823
  %v890 = vadd.f32 %v38, %v828
  %v891 = vadd.f32 %v39, %v833
  %v892 = vadd.f32 %v40, %v838
  %v893 = vadd.f32 %v41, %v843
  %v894 = vadd.f32 %v42, %v848
  %v895 = vadd.f32 %v43, %v853
  %v896 = vadd.f32 %v44, %v858
  %v897 = vadd.f32 %v45, %v863
  %v898 = vadd.f32 %v46, %v868
  %v899 = vadd.f32 %v47, %v873
  %v900 = vadd.f32 %v48, %v878
  %v901 = vadd.f32 %v49, %v883
  %902 = vst [vmem:[%s2] sm:$0xff] %v886
  %903 = vst [vmem:[%s2 + $0x8] sm:$0xff] %v887
  %904 = vst [vmem:[%s2 + $0x10] sm:$0xff] %v888
  %905 = vst [vmem:[%s2 + $0x18] sm:$0xff] %v889
  %906 = vst [vmem:[%s2 + $0x20] sm:$0xff] %v890
  %907 = vst [vmem:[%s2 + $0x28] sm:$0xff] %v891
  %908 = vst [vmem:[%s2 + $0x30] sm:$0xff] %v892
  %909 = vst [vmem:[%s2 + $0x38] sm:$0xff] %v893
  %910 = vst [vmem:[%s2 + $0x40] sm:$0xff] %v894
  %911 = vst [vmem:[%s2 + $0x48] sm:$0xff] %v895
  %912 = vst [vmem:[%s2 + $0x50] sm:$0xff] %v896
  %913 = vst [vmem:[%s2 + $0x58] sm:$0xff] %v897
  %914 = vst [vmem:[%s2 + $0x60] sm:$0xff] %v898
  %915 = vst [vmem:[%s2 + $0x68] sm:$0xff] %v899
  %916 = vst [vmem:[%s2 + $0x70] sm:$0xff] %v900
  %917 = vst [vmem:[%s2 + $0x78] sm:$0xff] %v901
  // Predicated region
  $region14: #{patchgan_forward.12} parent=0 // pred_check
    %p918 = pneg %p14
  $region15: #{patchgan_forward.12} parent=0 // pred_check_branch
    %920 = sbr.rel (%p918) target = $region17
  $region16: #{patchgan_forward.12} parent=0 // pred_region
    %v921 = vld [vmem:[%s2] sm:$0xff]
    %v922 = vld [vmem:[%s2 + $0x8] sm:$0xff]
    %v923 = vld [vmem:[%s2 + $0x10] sm:$0xff]
    %v924 = vld [vmem:[%s2 + $0x18] sm:$0xff]
    %v925 = vld [vmem:[%s2 + $0x20] sm:$0xff]
    %v926 = vld [vmem:[%s2 + $0x28] sm:$0xff]
    %v927 = vld [vmem:[%s2 + $0x30] sm:$0xff]
    %v928 = vld [vmem:[%s2 + $0x38] sm:$0xff]
    %v929 = vld [vmem:[%s2 + $0x40] sm:$0xff]
    %v930 = vld [vmem:[%s2 + $0x48] sm:$0xff]
    %v931 = vld [vmem:[%s2 + $0x50] sm:$0xff]
    %v932 = vld [vmem:[%s2 + $0x58] sm:$0xff]
    %v933 = vld [vmem:[%s2 + $0x60] sm:$0xff]
    %v934 = vld [vmem:[%s2 + $0x68] sm:$0xff]
    %v935 = vld [vmem:[%s2 + $0x70] sm:$0xff]
    %v936 = vld [vmem:[%s2 + $0x78] sm:$0xff]
    %v937 = vlaneseq
    %v938 = vshrl.u32 %v937, 7
    %v939 = vadd.s32 %v938, 8
    %v940 = vadd.s32 %v938, 16
    %v941 = vadd.s32 %v938, 24
    %v942 = vadd.s32 %v938, 32
    %v943 = vadd.s32 %v938, 40
    %v944 = vadd.s32 %v938, 48
    %v945 = vadd.s32 %v938, 56
    %v946 = vadd.s32 %v938, 64
    %v947 = vadd.s32 %v938, 72
    %v948 = vadd.s32 %v938, 80
    %v949 = vadd.s32 %v938, 88
    %v950 = vadd.s32 %v938, 96
    %v951 = vadd.s32 %v938, 104
    %v952 = vadd.s32 %v938, 112
    %v953 = vadd.s32 %v938, 120
    %s954 = smul.u32 0, 128
    %v955 = vstv %s954
    %v956 = vadd.s32 %v938, %v955
    %v957 = vadd.s32 %v939, %v955
    %v958 = vadd.s32 %v940, %v955
    %v959 = vadd.s32 %v941, %v955
    %v960 = vadd.s32 %v942, %v955
    %v961 = vadd.s32 %v943, %v955
    %v962 = vadd.s32 %v944, %v955
    %v963 = vadd.s32 %v945, %v955
    %v964 = vadd.s32 %v946, %v955
    %v965 = vadd.s32 %v947, %v955
    %v966 = vadd.s32 %v948, %v955
    %v967 = vadd.s32 %v949, %v955
    %v968 = vadd.s32 %v950, %v955
    %v969 = vadd.s32 %v951, %v955
    %v970 = vadd.s32 %v952, %v955
    %v971 = vadd.s32 %v953, %v955
    %vm972 = vcmp.lt.s32.totalorder %v956, 128
    %vm973 = vcmp.lt.s32.totalorder %v957, 128
    %vm974 = vcmp.lt.s32.totalorder %v958, 128
    %vm975 = vcmp.lt.s32.totalorder %v959, 128
    %vm976 = vcmp.lt.s32.totalorder %v960, 128
    %vm977 = vcmp.lt.s32.totalorder %v961, 128
    %vm978 = vcmp.lt.s32.totalorder %v962, 128
    %vm979 = vcmp.lt.s32.totalorder %v963, 128
    %vm980 = vcmp.lt.s32.totalorder %v964, 128
    %vm981 = vcmp.lt.s32.totalorder %v965, 128
    %vm982 = vcmp.lt.s32.totalorder %v966, 128
    %vm983 = vcmp.lt.s32.totalorder %v967, 128
    %vm984 = vcmp.lt.s32.totalorder %v968, 128
    %vm985 = vcmp.lt.s32.totalorder %v969, 128
    %vm986 = vcmp.lt.s32.totalorder %v970, 128
    %vm987 = vcmp.lt.s32.totalorder %v971, 128
    %v988 = vsel %vm972, %v921, 0.0
    %v989 = vsel %vm973, %v922, 0.0
    %v990 = vsel %vm974, %v923, 0.0
    %v991 = vsel %vm975, %v924, 0.0
    %v992 = vsel %vm976, %v925, 0.0
    %v993 = vsel %vm977, %v926, 0.0
    %v994 = vsel %vm978, %v927, 0.0
    %v995 = vsel %vm979, %v928, 0.0
    %v996 = vsel %vm980, %v929, 0.0
    %v997 = vsel %vm981, %v930, 0.0
    %v998 = vsel %vm982, %v931, 0.0
    %v999 = vsel %vm983, %v932, 0.0
    %v1000 = vsel %vm984, %v933, 0.0
    %v1001 = vsel %vm985, %v934, 0.0
    %v1002 = vsel %vm986, %v935, 0.0
    %v1003 = vsel %vm987, %v936, 0.0
    %v1004 = vadd.f32 %v988, %v989
    %v1005 = vadd.f32 %v1004, %v990
    %v1006 = vadd.f32 %v1005, %v991
    %v1007 = vadd.f32 %v1006, %v992
    %v1008 = vadd.f32 %v1007, %v993
    %v1009 = vadd.f32 %v1008, %v994
    %v1010 = vadd.f32 %v1009, %v995
    %v1011 = vadd.f32 %v1010, %v996
    %v1012 = vadd.f32 %v1011, %v997
    %v1013 = vadd.f32 %v1012, %v998
    %v1014 = vadd.f32 %v1013, %v999
    %v1015 = vadd.f32 %v1014, %v1000
    %v1016 = vadd.f32 %v1015, %v1001
    %v1017 = vadd.f32 %v1016, %v1002
    %v1018 = vadd.f32 %v1017, %v1003
    %1019 = vst [vmem:[%s3] sm:$0xff] %v1018
    %v1020 = vmul.f32 %v988, %v988
    %v1021 = vmul.f32 %v989, %v989
    %v1022 = vmul.f32 %v990, %v990
    %v1023 = vmul.f32 %v991, %v991
    %v1024 = vmul.f32 %v992, %v992
    %v1025 = vmul.f32 %v993, %v993
    %v1026 = vmul.f32 %v994, %v994
    %v1027 = vmul.f32 %v995, %v995
    %v1028 = vmul.f32 %v996, %v996
    %v1029 = vmul.f32 %v997, %v997
    %v1030 = vmul.f32 %v998, %v998
    %v1031 = vmul.f32 %v999, %v999
    %v1032 = vmul.f32 %v1000, %v1000
    %v1033 = vmul.f32 %v1001, %v1001
    %v1034 = vmul.f32 %v1002, %v1002
    %v1035 = vmul.f32 %v1003, %v1003
    %v1036 = vadd.f32 %v1020, %v1021
    %v1037 = vadd.f32 %v1036, %v1022
    %v1038 = vadd.f32 %v1037, %v1023
    %v1039 = vadd.f32 %v1038, %v1024
    %v1040 = vadd.f32 %v1039, %v1025
    %v1041 = vadd.f32 %v1040, %v1026
    %v1042 = vadd.f32 %v1041, %v1027
    %v1043 = vadd.f32 %v1042, %v1028
    %v1044 = vadd.f32 %v1043, %v1029
    %v1045 = vadd.f32 %v1044, %v1030
    %v1046 = vadd.f32 %v1045, %v1031
    %v1047 = vadd.f32 %v1046, %v1032
    %v1048 = vadd.f32 %v1047, %v1033
    %v1049 = vadd.f32 %v1048, %v1034
    %v1050 = vadd.f32 %v1049, %v1035
    %1051 = vst [vmem:[%s4] sm:$0xff] %v1050
  $region17: #{patchgan_forward.12} parent=0 // pred_fallthru
    _
  // Predicated region
  $region18: #{patchgan_forward.12} parent=0 // pred_check
    _
  $region19: #{patchgan_forward.12} parent=0 // pred_check_branch
    %1053 = sbr.rel (0) target = $region21
  $region20: #{patchgan_forward.12} parent=0 // pred_region
    _
  $region21: #{patchgan_forward.12} parent=0 // pred_fallthru
    _
  // Predicated region
  $region22: #{patchgan_forward.12} parent=0 // pred_check
    _
  $region23: #{patchgan_forward.12} parent=0 // pred_check_branch
    %1055 = sbr.rel (0) target = $region25
  $region24: #{patchgan_forward.12} parent=0 // pred_region
    _
  $region25: #{patchgan_forward.12} parent=0 // pred_fallthru
    _
  // Predicated region
  $region26: #{patchgan_forward.12} parent=0 // pred_check
    _
  $region27: #{patchgan_forward.12} parent=0 // pred_check_branch
    %1057 = sbr.rel (0) target = $region29
  $region28: #{patchgan_forward.12} parent=0 // pred_region
    _
  $region29: #{patchgan_forward.12} parent=0 // pred_fallthru
    _
  // Predicated region
  $region30: #{patchgan_forward.12} parent=0 // pred_check
    _
  $region31: #{patchgan_forward.12} parent=0 // pred_check_branch
    %1059 = sbr.rel (0) target = $region33
  $region32: #{patchgan_forward.12} parent=0 // pred_region
    _
  $region33: #{patchgan_forward.12} parent=0 // pred_fallthru
    _
  // Predicated region
  $region34: #{patchgan_forward.12} parent=0 // pred_check
    _
  $region35: #{patchgan_forward.12} parent=0 // pred_check_branch
    %1061 = sbr.rel (0) target = $region37
  $region36: #{patchgan_forward.12} parent=0 // pred_region
    _
  $region37: #{patchgan_forward.12} parent=0 // pred_fallthru
    _
  // Predicated region
  $region38: #{patchgan_forward.12} parent=0 // pred_check
    _
  $region39: #{patchgan_forward.12} parent=0 // pred_check_branch
    %1063 = sbr.rel (0) target = $region41
  $region40: #{patchgan_forward.12} parent=0 // pred_region
    _
  $region41: #{patchgan_forward.12} parent=0 // pred_fallthru
    _

// kernel: patchgan_forward.15
$region0: #{patchgan_forward.15}
  #allocation0 [shape = 'u32[]', space=smem, size = 0x4, offset = 0x4, fixed_abs, tag = 'smem constant byte address 0x4 - core index']
  #allocation1 [shape = 'u32[144,128]{1,0:T(1,128)}', space=vmem, size = 0x12000, scoped, tag = 'internal scratch']
  %s0 = inlined_call_operand.vmem [shape: f32[32,256], index: 0, kind: input, shape index: {}]
  %s1 = inlined_call_operand.vmem [shape: f32[1,256], index: 1, kind: input, shape index: {}]
  %s2 = inlined_call_operand.vmem [shape: f32[1,256], index: 2, kind: input, shape index: {}]
  %s3 = inlined_call_operand.vmem [shape: f32[32,256], index: 3, kind: output, shape index: {}]
  %s4 = sld [smem:[#allocation0]]
  $region22: #{patchgan_forward.15} parent=0
    _
  %s6 = ssub.s32 1, %s4
  %s7 = scalar_select 0, %s6, %s4
  // Predicated region
  $region2: #{patchgan_forward.15} parent=0 // pred_check
    _
  $region3: #{patchgan_forward.15} parent=0 // pred_check_branch
    %9 = sbr.rel (0) target = $region5
  $region4: #{patchgan_forward.15} parent=0 // pred_region
    _
  $region5: #{patchgan_forward.15} parent=0 // pred_fallthru
    _
  // Predicated region
  $region6: #{patchgan_forward.15} parent=0 // pred_check
    _
  $region7: #{patchgan_forward.15} parent=0 // pred_check_branch
    %11 = sbr.rel (0) target = $region9
  $region8: #{patchgan_forward.15} parent=0 // pred_region
    _
  $region9: #{patchgan_forward.15} parent=0 // pred_fallthru
    _
  // Predicated region
  $region10: #{patchgan_forward.15} parent=0 // pred_check
    _
  $region11: #{patchgan_forward.15} parent=0 // pred_check_branch
    %13 = sbr.rel (0) target = $region13
  $region12: #{patchgan_forward.15} parent=0 // pred_region
    _
  $region13: #{patchgan_forward.15} parent=0 // pred_fallthru
    _
  %v14 = vld [vmem:[%s0] sm:$0xff]
  %v15 = vld [vmem:[%s0 + $0x8] sm:$0xff]
  %v16 = vld [vmem:[%s0 + $0x10] sm:$0xff]
  %v17 = vld [vmem:[%s0 + $0x18] sm:$0xff]
  %v18 = vld [vmem:[%s0 + $0x20] sm:$0xff]
  %v19 = vld [vmem:[%s0 + $0x28] sm:$0xff]
  %v20 = vld [vmem:[%s0 + $0x30] sm:$0xff]
  %v21 = vld [vmem:[%s0 + $0x38] sm:$0xff]
  %v22 = vld [vmem:[%s1] sm:$0x3]
  %v24 = vlaneseq
  %v25 = vshrl.u32 %v24, 7
  %v26 = vsub.s32 0, %v25
  %v27 = vrot.slane %v22, %v26
  %v28 = vlaneseq
  %v29 = vshrl.u32 %v28, 7
  %v30 = vsub.s32 1, %v29
  %v31 = vrot.slane %v22, %v30
  %v34 = vmul.f32 %v14, %v27
  %v35 = vmul.f32 %v15, %v31
  %v36 = vmul.f32 %v16, %v27
  %v37 = vmul.f32 %v17, %v31
  %v38 = vmul.f32 %v18, %v27
  %v39 = vmul.f32 %v19, %v31
  %v40 = vmul.f32 %v20, %v27
  %v41 = vmul.f32 %v21, %v31
  %v42 = vld [vmem:[%s2] sm:$0x3]
  %v44 = vlaneseq
  %v45 = vshrl.u32 %v44, 7
  %v46 = vsub.s32 0, %v45
  %v47 = vrot.slane %v42, %v46
  %v48 = vlaneseq
  %v49 = vshrl.u32 %v48, 7
  %v50 = vsub.s32 1, %v49
  %v51 = vrot.slane %v42, %v50
  %v54 = vadd.f32 %v34, %v47
  %v55 = vadd.f32 %v35, %v51
  %v56 = vadd.f32 %v36, %v47
  %v57 = vadd.f32 %v37, %v51
  %v58 = vadd.f32 %v38, %v47
  %v59 = vadd.f32 %v39, %v51
  %v60 = vadd.f32 %v40, %v47
  %v61 = vadd.f32 %v41, %v51
  %v62 = vmax.f32 %v54, 0.0
  %v63 = vmax.f32 %v55, 0.0
  %v64 = vmax.f32 %v56, 0.0
  %v65 = vmax.f32 %v57, 0.0
  %v66 = vmax.f32 %v58, 0.0
  %v67 = vmax.f32 %v59, 0.0
  %v68 = vmax.f32 %v60, 0.0
  %v69 = vmax.f32 %v61, 0.0
  %70 = vst [vmem:[%s3] sm:$0xff] %v62
  %71 = vst [vmem:[%s3 + $0x8] sm:$0xff] %v63
  %72 = vst [vmem:[%s3 + $0x10] sm:$0xff] %v64
  %73 = vst [vmem:[%s3 + $0x18] sm:$0xff] %v65
  %74 = vst [vmem:[%s3 + $0x20] sm:$0xff] %v66
  %75 = vst [vmem:[%s3 + $0x28] sm:$0xff] %v67
  %76 = vst [vmem:[%s3 + $0x30] sm:$0xff] %v68
  %77 = vst [vmem:[%s3 + $0x38] sm:$0xff] %v69
  // Predicated region
  $region14: #{patchgan_forward.15} parent=0 // pred_check
    _
  $region15: #{patchgan_forward.15} parent=0 // pred_check_branch
    %79 = sbr.rel (0) target = $region17
  $region16: #{patchgan_forward.15} parent=0 // pred_region
    _
  $region17: #{patchgan_forward.15} parent=0 // pred_fallthru
    _
  // Predicated region
  $region18: #{patchgan_forward.15} parent=0 // pred_check
    _
  $region19: #{patchgan_forward.15} parent=0 // pred_check_branch
    %81 = sbr.rel (0) target = $region21
  $region20: #{patchgan_forward.15} parent=0 // pred_region
    _
  $region21: #{patchgan_forward.15} parent=0 // pred_fallthru
    _

// kernel: patchgan_forward.14
$region0: #{patchgan_forward.14}
  #allocation0 [shape = 'u32[]', space=smem, size = 0x4, offset = 0x4, fixed_abs, tag = 'smem constant byte address 0x4 - core index']
  #allocation1 [shape = 'u32[144,128]{1,0:T(1,128)}', space=vmem, size = 0x12000, scoped, tag = 'internal scratch']
  %s0 = inlined_call_operand.vmem [shape: f32[32,2048], index: 0, kind: input, shape index: {}]
  %s1 = inlined_call_operand.vmem [shape: f32[2048,256], index: 1, kind: input, shape index: {}]
  %s2 = inlined_call_operand.vmem [shape: f32[32,256], index: 2, kind: output, shape index: {0}]
  %s3 = inlined_call_operand.vmem [shape: f32[8,256], index: 3, kind: output, shape index: {1}]
  %s4 = inlined_call_operand.vmem [shape: f32[8,256], index: 4, kind: output, shape index: {2}]
  %5 = xla_tuple %s2, %s3, %s4
  %s6 = sld [smem:[#allocation0]]
  $region88: #{patchgan_forward.14} parent=0
    _
  %s8 = ssub.s32 1, %s6
  %s9 = scalar_select 0, %s8, %s6
  $region1: #{patchgan_forward.14} parent=0
    #allocation2 [shape = 'u8[262144]{0}', space=vmem, size = 0x40000, scoped, tag = 'input window, operand 0']
    loop: start=0, step=1, limit=4
    $region2: #{patchgan_forward.14} parent=1 // loop_pre_header
      _
    $region3: #{patchgan_forward.14} parent=1 // loop_header
      %s11 = sphi 0, %s15
      %p12 = scmp.ge.s32.totalorder %s11, 4
      %s18 = sphi 0, %s30
      %s19 = sphi 0, %s26
      %s20 = sphi 0, %s18
      %s21 = sphi 0, %s19
      %s22 = sphi 0, %s20
      %s23 = sphi 0, %s21
      %s35 = sphi 0, %s37
      %s38 = sphi 0, %s35
      %s39 = sphi 0, %s38
      %s55 = sphi 0, %s39
      %s61 = sphi 0, %s63
      %s64 = sphi 0, %s61
      %s65 = sphi 0, %s64
      %s81 = sphi 0, %s65
      %s87 = sphi 0, %s89
      %s90 = sphi 0, %s87
      %s91 = sphi 0, %s90
      %s107 = sphi 0, %s91
      %s113 = sphi 0, %s115
      %s116 = sphi 0, %s113
      %s117 = sphi 0, %s116
      %s133 = sphi 0, %s117
      %s139 = sphi 0, %s141
      %s142 = sphi 0, %s139
      %s143 = sphi 0, %s142
      %s159 = sphi 0, %s143
    $region4: #{patchgan_forward.14} parent=1 // loop_header_branch
      %14 = sbr.rel (%p12) target = $region8
    $region5: #{patchgan_forward.14} parent=1 // loop_body
      %s16 = ssub.s32 %s11, 1
      %s17 = ssub.s32 %s11, 2
      %s24 = sadd.s32 1, %s19
      %p25 = scmp.ge.s32.totalorder %s24, 2
      %s26 = scalar_select %p25, 0, %s24
      %s27 = sadd.s32 1, %s18
      %s28 = scalar_select %p25, %s27, %s18
      %p29 = scmp.ge.s32.totalorder %s28, 1
      %s30 = scalar_select %p29, 0, %s28
      %s31 = ssub.s32 %s18, %s30
      %s32 = ssub.s32 %s19, %s26
      %s33 = sor.u32 %s31, %s32
      %p34 = scmp.eq.s32.totalorder %s33, 0
      %s36 = sadd.s32 %s35, 1
      %s37 = scalar_select %p34, %s35, %s36
      %p40 = pneg %p34
      %p41 = scmp.eq.s32.totalorder %s11, 1
      %p42 = por %p40, %p41
      %p43 = scmp.ne.s32.totalorder %s35, %s38
      %p44 = scmp.eq.s32.totalorder %s11, 0
      %p45 = por %p43, %p44
      %p46 = scmp.ne.s32.totalorder %s35, %s38
      %p47 = scmp.eq.s32.totalorder %s16, 1
      %p48 = por %p46, %p47
      %p49 = scmp.ne.s32.totalorder %s38, %s39
      %p50 = scmp.eq.s32.totalorder %s16, 0
      %p51 = por %p49, %p50
      %p52 = scmp.ne.s32.totalorder %s38, %s39
      %p53 = scmp.eq.s32.totalorder %s17, 1
      %p54 = por %p52, %p53
      %p56 = scmp.ne.s32.totalorder %s39, %s55
      %p57 = scmp.eq.s32.totalorder %s17, 0
      %p58 = por %p56, %p57
      %s59 = ssub.s32 %s19, %s26
      %p60 = scmp.eq.s32.totalorder %s59, 0
      %s62 = sadd.s32 %s61, 1
      %s63 = scalar_select %p60, %s61, %s62
      %p66 = pneg %p60
      %p67 = scmp.eq.s32.totalorder %s11, 1
      %p68 = por %p66, %p67
      %p69 = scmp.ne.s32.totalorder %s61, %s64
      %p70 = scmp.eq.s32.totalorder %s11, 0
      %p71 = por %p69, %p70
      %p72 = scmp.ne.s32.totalorder %s61, %s64
      %p73 = scmp.eq.s32.totalorder %s16, 1
      %p74 = por %p72, %p73
      %p75 = scmp.ne.s32.totalorder %s64, %s65
      %p76 = scmp.eq.s32.totalorder %s16, 0
      %p77 = por %p75, %p76
      %p78 = scmp.ne.s32.totalorder %s64, %s65
      %p79 = scmp.eq.s32.totalorder %s17, 1
      %p80 = por %p78, %p79
      %p82 = scmp.ne.s32.totalorder %s65, %s81
      %p83 = scmp.eq.s32.totalorder %s17, 0
      %p84 = por %p82, %p83
      %s85 = ssub.s32 %s18, %s30
      %p86 = scmp.eq.s32.totalorder %s85, 0
      %s88 = sadd.s32 %s87, 1
      %s89 = scalar_select %p86, %s87, %s88
      %p92 = pneg %p86
      %p93 = scmp.eq.s32.totalorder %s11, 1
      %p94 = por %p92, %p93
      %p95 = scmp.ne.s32.totalorder %s87, %s90
      %p96 = scmp.eq.s32.totalorder %s11, 0
      %p97 = por %p95, %p96
      %p98 = scmp.ne.s32.totalorder %s87, %s90
      %p99 = scmp.eq.s32.totalorder %s16, 1
      %p100 = por %p98, %p99
      %p101 = scmp.ne.s32.totalorder %s90, %s91
      %p102 = scmp.eq.s32.totalorder %s16, 0
      %p103 = por %p101, %p102
      %p104 = scmp.ne.s32.totalorder %s90, %s91
      %p105 = scmp.eq.s32.totalorder %s17, 1
      %p106 = por %p104, %p105
      %p108 = scmp.ne.s32.totalorder %s91, %s107
      %p109 = scmp.eq.s32.totalorder %s17, 0
      %p110 = por %p108, %p109
      %s111 = ssub.s32 %s18, %s30
      %p112 = scmp.eq.s32.totalorder %s111, 0
      %s114 = sadd.s32 %s113, 1
      %s115 = scalar_select %p112, %s113, %s114
      %p118 = pneg %p112
      %p119 = scmp.eq.s32.totalorder %s11, 1
      %p120 = por %p118, %p119
      %p121 = scmp.ne.s32.totalorder %s113, %s116
      %p122 = scmp.eq.s32.totalorder %s11, 0
      %p123 = por %p121, %p122
      %p124 = scmp.ne.s32.totalorder %s113, %s116
      %p125 = scmp.eq.s32.totalorder %s16, 1
      %p126 = por %p124, %p125
      %p127 = scmp.ne.s32.totalorder %s116, %s117
      %p128 = scmp.eq.s32.totalorder %s16, 0
      %p129 = por %p127, %p128
      %p130 = scmp.ne.s32.totalorder %s116, %s117
      %p131 = scmp.eq.s32.totalorder %s17, 1
      %p132 = por %p130, %p131
      %p134 = scmp.ne.s32.totalorder %s117, %s133
      %p135 = scmp.eq.s32.totalorder %s17, 0
      %p136 = por %p134, %p135
      %s137 = ssub.s32 %s18, %s30
      %p138 = scmp.eq.s32.totalorder %s137, 0
      %s140 = sadd.s32 %s139, 1
      %s141 = scalar_select %p138, %s139, %s140
      %p144 = pneg %p138
      %p145 = scmp.eq.s32.totalorder %s11, 1
      %p146 = por %p144, %p145
      %p147 = scmp.ne.s32.totalorder %s139, %s142
      %p148 = scmp.eq.s32.totalorder %s11, 0
      %p149 = por %p147, %p148
      %p150 = scmp.ne.s32.totalorder %s139, %s142
      %p151 = scmp.eq.s32.totalorder %s16, 1
      %p152 = por %p150, %p151
      %p153 = scmp.ne.s32.totalorder %s142, %s143
      %p154 = scmp.eq.s32.totalorder %s16, 0
      %p155 = por %p153, %p154
      %p156 = scmp.ne.s32.totalorder %s142, %s143
      %p157 = scmp.eq.s32.totalorder %s17, 1
      %p158 = por %p156, %p157
      %p160 = scmp.ne.s32.totalorder %s143, %s159
      %p161 = scmp.eq.s32.totalorder %s17, 0
      %p162 = por %p160, %p161
      %p163 = scmp.le.s32.totalorder 1, %s11
      %p164 = scmp.lt.s32.totalorder %s11, 3
      %p165 = pnand %p163, %p164
      %p166 = pneg %p165
      // Predicated region
      $region9: #{patchgan_forward.14} parent=5 // pred_check
        _
      $region10: #{patchgan_forward.14} parent=5 // pred_check_branch
        %168 = sbr.rel (%p165) target = $region12
      $region11: #{patchgan_forward.14} parent=5 // pred_region
        %s169 = ssub.s32 %s11, 1
      $region12: #{patchgan_forward.14} parent=5 // pred_fallthru
        _
      %p170 = scmp.lt.s32.totalorder %s11, 2
      // Predicated region
      $region13: #{patchgan_forward.14} parent=5 // pred_check
        %p171 = pneg %p170
      $region14: #{patchgan_forward.14} parent=5 // pred_check_branch
        %173 = sbr.rel (%p171) target = $region16
      $region15: #{patchgan_forward.14} parent=5 // pred_region
        // Predicated region
        $region17: #{patchgan_forward.14} parent=15 // pred_check
          %p174 = pneg %p45
        $region18: #{patchgan_forward.14} parent=15 // pred_check_branch
          %176 = sbr.rel (%p174) target = $region20
        $region19: #{patchgan_forward.14} parent=15 // pred_region
          %s177 = sand.u32 %s35, 1
          %s178 = sand.u32 %s35, 1
          %s179 = smul.addr %s178, 256
          %s180 = scalar_lea.vmem [#allocation2], %s179
          %s181 = smul.u32 4, %s18
          %s182 = smul.u32 8, %s19
          %s183 = smul.addr %s181, 16
          %s184 = sadd.s32 %s182, %s183
          %s185 = smul.addr %s184, 8
          %s186 = scalar_lea.vmem %s0, %s185
          // Predicated region
          $region21: #{patchgan_forward.14} parent=19 // pred_check
            _
          $region22: #{patchgan_forward.14} parent=19 // pred_check_branch
            %188 = sbr.rel (0) target = $region24
          $region23: #{patchgan_forward.14} parent=19 // pred_region
            // Predicated region
            $region25: #{patchgan_forward.14} parent=23 // pred_check
              _
            $region26: #{patchgan_forward.14} parent=23 // pred_check_branch
              %190 = sbr.rel (0) target = $region28
            $region27: #{patchgan_forward.14} parent=23 // pred_region
              loop: start=0, step=1, limit=1
              $region29: #{patchgan_forward.14} parent=27 // loop_pre_header
                _
              $region30: #{patchgan_forward.14} parent=27 // loop_header
                %s192 = sphi 0, %s196
                %p193 = scmp.ge.s32.totalorder %s192, 1
                %s197 = sphi %s186, %s186
                %s198 = sphi %s180, %s180
              $region31: #{patchgan_forward.14} parent=27 // loop_header_branch
                %195 = sbr.rel (%p193) target = $region35
              $region32: #{patchgan_forward.14} parent=27 // loop_body
                %v199 = vld [vmem:[%s197] sm:$0xff]
                %200 = vst [vmem:[%s198] sm:$0xff] %v199
                %v201 = vld [vmem:[%s197 + $0x8] sm:$0xff]
                %202 = vst [vmem:[%s198 + $0x8] sm:$0xff] %v201
                %v203 = vld [vmem:[%s197 + $0x10] sm:$0xff]
                %204 = vst [vmem:[%s198 + $0x10] sm:$0xff] %v203
                %v205 = vld [vmem:[%s197 + $0x18] sm:$0xff]
                %206 = vst [vmem:[%s198 + $0x18] sm:$0xff] %v205
                %v207 = vld [vmem:[%s197 + $0x20] sm:$0xff]
                %208 = vst [vmem:[%s198 + $0x20] sm:$0xff] %v207
                %v209 = vld [vmem:[%s197 + $0x28] sm:$0xff]
                %210 = vst [vmem:[%s198 + $0x28] sm:$0xff] %v209
                %v211 = vld [vmem:[%s197 + $0x30] sm:$0xff]
                %212 = vst [vmem:[%s198 + $0x30] sm:$0xff] %v211
                %v213 = vld [vmem:[%s197 + $0x38] sm:$0xff]
                %214 = vst [vmem:[%s198 + $0x38] sm:$0xff] %v213
                %v215 = vld [vmem:[%s197 + $0x80] sm:$0xff]
                %216 = vst [vmem:[%s198 + $0x40] sm:$0xff] %v215
                %v217 = vld [vmem:[%s197 + $0x88] sm:$0xff]
                %218 = vst [vmem:[%s198 + $0x48] sm:$0xff] %v217
                %v219 = vld [vmem:[%s197 + $0x90] sm:$0xff]
                %220 = vst [vmem:[%s198 + $0x50] sm:$0xff] %v219
                %v221 = vld [vmem:[%s197 + $0x98] sm:$0xff]
                %222 = vst [vmem:[%s198 + $0x58] sm:$0xff] %v221
                %v223 = vld [vmem:[%s197 + $0xa0] sm:$0xff]
                %224 = vst [vmem:[%s198 + $0x60] sm:$0xff] %v223
                %v225 = vld [vmem:[%s197 + $0xa8] sm:$0xff]
                %226 = vst [vmem:[%s198 + $0x68] sm:$0xff] %v225
                %v227 = vld [vmem:[%s197 + $0xb0] sm:$0xff]
                %228 = vst [vmem:[%s198 + $0x70] sm:$0xff] %v227
                %v229 = vld [vmem:[%s197 + $0xb8] sm:$0xff]
                %230 = vst [vmem:[%s198 + $0x78] sm:$0xff] %v229
                %v231 = vld [vmem:[%s197 + $0x100] sm:$0xff]
                %232 = vst [vmem:[%s198 + $0x80] sm:$0xff] %v231
                %v233 = vld [vmem:[%s197 + $0x108] sm:$0xff]
                %234 = vst [vmem:[%s198 + $0x88] sm:$0xff] %v233
                %v235 = vld [vmem:[%s197 + $0x110] sm:$0xff]
                %236 = vst [vmem:[%s198 + $0x90] sm:$0xff] %v235
                %v237 = vld [vmem:[%s197 + $0x118] sm:$0xff]
                %238 = vst [vmem:[%s198 + $0x98] sm:$0xff] %v237
                %v239 = vld [vmem:[%s197 + $0x120] sm:$0xff]
                %240 = vst [vmem:[%s198 + $0xa0] sm:$0xff] %v239
                %v241 = vld [vmem:[%s197 + $0x128] sm:$0xff]
                %242 = vst [vmem:[%s198 + $0xa8] sm:$0xff] %v241
                %v243 = vld [vmem:[%s197 + $0x130] sm:$0xff]
                %244 = vst [vmem:[%s198 + $0xb0] sm:$0xff] %v243
                %v245 = vld [vmem:[%s197 + $0x138] sm:$0xff]
                %246 = vst [vmem:[%s198 + $0xb8] sm:$0xff] %v245
                %v247 = vld [vmem:[%s197 + $0x180] sm:$0xff]
                %248 = vst [vmem:[%s198 + $0xc0] sm:$0xff] %v247
                %v249 = vld [vmem:[%s197 + $0x188] sm:$0xff]
                %250 = vst [vmem:[%s198 + $0xc8] sm:$0xff] %v249
                %v251 = vld [vmem:[%s197 + $0x190] sm:$0xff]
                %252 = vst [vmem:[%s198 + $0xd0] sm:$0xff] %v251
                %v253 = vld [vmem:[%s197 + $0x198] sm:$0xff]
                %254 = vst [vmem:[%s198 + $0xd8] sm:$0xff] %v253
                %v255 = vld [vmem:[%s197 + $0x1a0] sm:$0xff]
                %256 = vst [vmem:[%s198 + $0xe0] sm:$0xff] %v255
                %v257 = vld [vmem:[%s197 + $0x1a8] sm:$0xff]
                %258 = vst [vmem:[%s198 + $0xe8] sm:$0xff] %v257
                %v259 = vld [vmem:[%s197 + $0x1b0] sm:$0xff]
                %260 = vst [vmem:[%s198 + $0xf0] sm:$0xff] %v259
                %v261 = vld [vmem:[%s197 + $0x1b8] sm:$0xff]
                %262 = vst [vmem:[%s198 + $0xf8] sm:$0xff] %v261
              $region33: #{patchgan_forward.14} parent=27 // loop_footer
                %s196 = sadd.s32 1, %s192
              $region34: #{patchgan_forward.14} parent=27 // loop_footer_branch
                %191 = sbr.rel target = $region30
              $region35: #{patchgan_forward.14} parent=27 // loop_exit
                _
            $region28: #{patchgan_forward.14} parent=23 // pred_fallthru
              _
            // Predicated region
            $region36: #{patchgan_forward.14} parent=23 // pred_check
              _
            $region37: #{patchgan_forward.14} parent=23 // pred_check_branch
              %264 = sbr.rel target = $region39
            $region38: #{patchgan_forward.14} parent=23 // pred_region
              _
            $region39: #{patchgan_forward.14} parent=23 // pred_fallthru
              _
          $region24: #{patchgan_forward.14} parent=19 // pred_fallthru
            _
          %265 = vnop
        $region20: #{patchgan_forward.14} parent=15 // pred_fallthru
          _
        // Predicated region
        $region40: #{patchgan_forward.14} parent=15 // pred_check
          %p266 = pneg %p71
        $region41: #{patchgan_forward.14} parent=15 // pred_check_branch
          %268 = sbr.rel (%p266) target = $region43
        $region42: #{patchgan_forward.14} parent=15 // pred_region
          %s269 = smul.u32 128, %s19
          %p270 = scmp.lt.s32.totalorder %s269, 255
          %s271 = scalar_select %p270, %s269, 255
          %s272 = smul.addr %s271, 2
          %s273 = smul.addr %s272, 8
          %s274 = scalar_lea.vmem %s1, %s273
          %s275 = smul.u32 128, %s19
        $region43: #{patchgan_forward.14} parent=15 // pred_fallthru
          _
      $region16: #{patchgan_forward.14} parent=5 // pred_fallthru
        _
      %p276 = scmp.le.s32.totalorder 1, %s11
      %p277 = scmp.lt.s32.totalorder %s11, 3
      %p278 = pnand %p276, %p277
      %p279 = pneg %p278
      // Predicated region
      $region44: #{patchgan_forward.14} parent=5 // pred_check
        _
      $region45: #{patchgan_forward.14} parent=5 // pred_check_branch
        %281 = sbr.rel (%p278) target = $region47
      $region46: #{patchgan_forward.14} parent=5 // pred_region
        %s282 = ssub.s32 %s11, 1
        %s283 = sand.u32 %s38, 1
        %s284 = sand.u32 %s38, 1
        %s285 = smul.addr %s284, 256
        %s286 = scalar_lea.vmem [#allocation2], %s285
        // Predicated region
        $region48: #{patchgan_forward.14} parent=46 // pred_check
          %p287 = pneg %p51
        $region49: #{patchgan_forward.14} parent=46 // pred_check_branch
          %289 = sbr.rel (%p287) target = $region51
        $region50: #{patchgan_forward.14} parent=46 // pred_region
          _
        $region51: #{patchgan_forward.14} parent=46 // pred_fallthru
          _
        %s290 = sand.u32 %s38, 1
        %s291 = sand.u32 %s38, 1
        %s292 = smul.addr %s291, 256
        %s293 = scalar_lea.vmem [#allocation2], %s292
        %p294 = pneg %p51
        %p295 = pneg %p48
        %s296 = smul.u32 128, %s21
        %p297 = scmp.lt.s32.totalorder %s296, 255
        %s298 = scalar_select %p297, %s296, 255
        %s299 = smul.addr %s298, 2
        %s300 = smul.addr %s299, 8
        %s301 = scalar_lea.vmem %s1, %s300
        %p302 = pneg %p77
        %p303 = pneg %p74
        %p304 = pneg %p103
        %p305 = pneg %p100
        %s306 = smul.u32 4, %s20
        %p307 = scmp.lt.s32.totalorder %s306, 3
        %s308 = scalar_select %p307, %s306, 3
        %s309 = smul.addr %s308, 2
        %s310 = smul.addr %s309, 8
        %s311 = scalar_lea.vmem %s2, %s310
        %p312 = pneg %p129
        %p313 = pneg %p126
        %p314 = scmp.lt.s32.totalorder %s20, 0
        %s315 = scalar_select %p314, %s20, 0
        %s316 = smul.addr %s315, 2
        %s317 = smul.addr %s316, 8
        %s318 = scalar_lea.vmem %s3, %s317
        %p319 = pneg %p155
        %p320 = pneg %p152
        %p321 = scmp.lt.s32.totalorder %s20, 0
        %s322 = scalar_select %p321, %s20, 0
        %s323 = smul.addr %s322, 2
        %s324 = smul.addr %s323, 8
        %s325 = scalar_lea.vmem %s4, %s324
        %s326 = smul.u32 4, %s20
        %s327 = smul.u32 8, %s21
        %s328 = smul.u32 128, %s21
        %p329 = scmp.lt.s32.totalorder %s328, 255
        %s330 = scalar_select %p329, %s328, 255
        %s331 = smul.addr %s330, 2
        %s332 = smul.addr %s331, 8
        %s333 = scalar_lea.vmem %s1, %s332
        %s334 = smul.u32 128, %s21
        %s335 = smul.u32 4, %s20
        %p336 = scmp.lt.s32.totalorder %s335, 3
        %s337 = scalar_select %p336, %s335, 3
        %s338 = smul.addr %s337, 2
        %s339 = smul.addr %s338, 8
        %s340 = scalar_lea.vmem %s2, %s339
        %s341 = smul.u32 4, %s20
        %p342 = scmp.lt.s32.totalorder %s20, 0
        %s343 = scalar_select %p342, %s20, 0
        %s344 = smul.addr %s343, 2
        %s345 = smul.addr %s344, 8
        %s346 = scalar_lea.vmem %s3, %s345
        %p347 = scmp.lt.s32.totalorder %s20, 0
        %s348 = scalar_select %p347, %s20, 0
        %s349 = smul.addr %s348, 2
        %s350 = smul.addr %s349, 8
        %s351 = scalar_lea.vmem %s4, %s350
        %p352 = scmp.eq.s32.totalorder %s21, 0
        // Predicated region
        $region52: #{patchgan_forward.14} parent=46 // pred_check
          %p353 = pneg %p352
        $region53: #{patchgan_forward.14} parent=46 // pred_check_branch
          %355 = sbr.rel (%p353) target = $region55
        $region54: #{patchgan_forward.14} parent=46 // pred_region
          %356 = vst [vmem:[%s340] sm:$0xff] 0.0
          %357 = vst [vmem:[%s340 + $0x8] sm:$0xff] 0.0
          %358 = vst [vmem:[%s340 + $0x10] sm:$0xff] 0.0
          %359 = vst [vmem:[%s340 + $0x18] sm:$0xff] 0.0
          %360 = vst [vmem:[%s340 + $0x20] sm:$0xff] 0.0
          %361 = vst [vmem:[%s340 + $0x28] sm:$0xff] 0.0
          %362 = vst [vmem:[%s340 + $0x30] sm:$0xff] 0.0
          %363 = vst [vmem:[%s340 + $0x38] sm:$0xff] 0.0
        $region55: #{patchgan_forward.14} parent=46 // pred_fallthru
          _
        %v364 = vld [vmem:[%s340] sm:$0xff]
        %v365 = vld [vmem:[%s340 + $0x8] sm:$0xff]
        %v366 = vld [vmem:[%s340 + $0x10] sm:$0xff]
        %v367 = vld [vmem:[%s340 + $0x18] sm:$0xff]
        %v368 = vld [vmem:[%s340 + $0x20] sm:$0xff]
        %v369 = vld [vmem:[%s340 + $0x28] sm:$0xff]
        %v370 = vld [vmem:[%s340 + $0x30] sm:$0xff]
        %v371 = vld [vmem:[%s340 + $0x38] sm:$0xff]
        %v372 = vld [vmem:[%s286] sm:$0xff]
        %v373 = vld [vmem:[%s286 + $0x8] sm:$0xff]
        %v374 = vld [vmem:[%s286 + $0x10] sm:$0xff]
        %v375 = vld [vmem:[%s286 + $0x18] sm:$0xff]
        %v376 = vld [vmem:[%s286 + $0x20] sm:$0xff]
        %v377 = vld [vmem:[%s286 + $0x28] sm:$0xff]
        %v378 = vld [vmem:[%s286 + $0x30] sm:$0xff]
        %v379 = vld [vmem:[%s286 + $0x38] sm:$0xff]
        %v380 = vld [vmem:[%s286 + $0x40] sm:$0xff]
        %v381 = vld [vmem:[%s286 + $0x48] sm:$0xff]
        %v382 = vld [vmem:[%s286 + $0x50] sm:$0xff]
        %v383 = vld [vmem:[%s286 + $0x58] sm:$0xff]
        %v384 = vld [vmem:[%s286 + $0x60] sm:$0xff]
        %v385 = vld [vmem:[%s286 + $0x68] sm:$0xff]
        %v386 = vld [vmem:[%s286 + $0x70] sm:$0xff]
        %v387 = vld [vmem:[%s286 + $0x78] sm:$0xff]
        %v388 = vld [vmem:[%s286 + $0x80] sm:$0xff]
        %v389 = vld [vmem:[%s286 + $0x88] sm:$0xff]
        %v390 = vld [vmem:[%s286 + $0x90] sm:$0xff]
        %v391 = vld [vmem:[%s286 + $0x98] sm:$0xff]
        %v392 = vld [vmem:[%s286 + $0xa0] sm:$0xff]
        %v393 = vld [vmem:[%s286 + $0xa8] sm:$0xff]
        %v394 = vld [vmem:[%s286 + $0xb0] sm:$0xff]
        %v395 = vld [vmem:[%s286 + $0xb8] sm:$0xff]
        %v396 = vld [vmem:[%s286 + $0xc0] sm:$0xff]
        %v397 = vld [vmem:[%s286 + $0xc8] sm:$0xff]
        %v398 = vld [vmem:[%s286 + $0xd0] sm:$0xff]
        %v399 = vld [vmem:[%s286 + $0xd8] sm:$0xff]
        %v400 = vld [vmem:[%s286 + $0xe0] sm:$0xff]
        %v401 = vld [vmem:[%s286 + $0xe8] sm:$0xff]
        %v402 = vld [vmem:[%s286 + $0xf0] sm:$0xff]
        %v403 = vld [vmem:[%s286 + $0xf8] sm:$0xff]
        %v404 = vld [vmem:[%s333] sm:$0xff]
        %v405 = vld [vmem:[%s333 + $0x8] sm:$0xff]
        %v406 = vld [vmem:[%s333 + $0x10] sm:$0xff]
        %v407 = vld [vmem:[%s333 + $0x18] sm:$0xff]
        %v408 = vld [vmem:[%s333 + $0x20] sm:$0xff]
        %v409 = vld [vmem:[%s333 + $0x28] sm:$0xff]
        %v410 = vld [vmem:[%s333 + $0x30] sm:$0xff]
        %v411 = vld [vmem:[%s333 + $0x38] sm:$0xff]
        %v412 = vld [vmem:[%s333 + $0x40] sm:$0xff]
        %v413 = vld [vmem:[%s333 + $0x48] sm:$0xff]
        %v414 = vld [vmem:[%s333 + $0x50] sm:$0xff]
        %v415 = vld [vmem:[%s333 + $0x58] sm:$0xff]
        %v416 = vld [vmem:[%s333 + $0x60] sm:$0xff]
        %v417 = vld [vmem:[%s333 + $0x68] sm:$0xff]
        %v418 = vld [vmem:[%s333 + $0x70] sm:$0xff]
        %v419 = vld [vmem:[%s333 + $0x78] sm:$0xff]
        %v420 = vld [vmem:[%s333 + $0x80] sm:$0xff]
        %v421 = vld [vmem:[%s333 + $0x88] sm:$0xff]
        %v422 = vld [vmem:[%s333 + $0x90] sm:$0xff]
        %v423 = vld [vmem:[%s333 + $0x98] sm:$0xff]
        %v424 = vld [vmem:[%s333 + $0xa0] sm:$0xff]
        %v425 = vld [vmem:[%s333 + $0xa8] sm:$0xff]
        %v426 = vld [vmem:[%s333 + $0xb0] sm:$0xff]
        %v427 = vld [vmem:[%s333 + $0xb8] sm:$0xff]
        %v428 = vld [vmem:[%s333 + $0xc0] sm:$0xff]
        %v429 = vld [vmem:[%s333 + $0xc8] sm:$0xff]
        %v430 = vld [vmem:[%s333 + $0xd0] sm:$0xff]
        %v431 = vld [vmem:[%s333 + $0xd8] sm:$0xff]
        %v432 = vld [vmem:[%s333 + $0xe0] sm:$0xff]
        %v433 = vld [vmem:[%s333 + $0xe8] sm:$0xff]
        %v434 = vld [vmem:[%s333 + $0xf0] sm:$0xff]
        %v435 = vld [vmem:[%s333 + $0xf8] sm:$0xff]
        %v436 = vld [vmem:[%s333 + $0x100] sm:$0xff]
        %v437 = vld [vmem:[%s333 + $0x108] sm:$0xff]
        %v438 = vld [vmem:[%s333 + $0x110] sm:$0xff]
        %v439 = vld [vmem:[%s333 + $0x118] sm:$0xff]
        %v440 = vld [vmem:[%s333 + $0x120] sm:$0xff]
        %v441 = vld [vmem:[%s333 + $0x128] sm:$0xff]
        %v442 = vld [vmem:[%s333 + $0x130] sm:$0xff]
        %v443 = vld [vmem:[%s333 + $0x138] sm:$0xff]
        %v444 = vld [vmem:[%s333 + $0x140] sm:$0xff]
        %v445 = vld [vmem:[%s333 + $0x148] sm:$0xff]
        %v446 = vld [vmem:[%s333 + $0x150] sm:$0xff]
        %v447 = vld [vmem:[%s333 + $0x158] sm:$0xff]
        %v448 = vld [vmem:[%s333 + $0x160] sm:$0xff]
        %v449 = vld [vmem:[%s333 + $0x168] sm:$0xff]
        %v450 = vld [vmem:[%s333 + $0x170] sm:$0xff]
        %v451 = vld [vmem:[%s333 + $0x178] sm:$0xff]
        %v452 = vld [vmem:[%s333 + $0x180] sm:$0xff]
        %v453 = vld [vmem:[%s333 + $0x188] sm:$0xff]
        %v454 = vld [vmem:[%s333 + $0x190] sm:$0xff]
        %v455 = vld [vmem:[%s333 + $0x198] sm:$0xff]
        %v456 = vld [vmem:[%s333 + $0x1a0] sm:$0xff]
        %v457 = vld [vmem:[%s333 + $0x1a8] sm:$0xff]
        %v458 = vld [vmem:[%s333 + $0x1b0] sm:$0xff]
        %v459 = vld [vmem:[%s333 + $0x1b8] sm:$0xff]
        %v460 = vld [vmem:[%s333 + $0x1c0] sm:$0xff]
        %v461 = vld [vmem:[%s333 + $0x1c8] sm:$0xff]
        %v462 = vld [vmem:[%s333 + $0x1d0] sm:$0xff]
        %v463 = vld [vmem:[%s333 + $0x1d8] sm:$0xff]
        %v464 = vld [vmem:[%s333 + $0x1e0] sm:$0xff]
        %v465 = vld [vmem:[%s333 + $0x1e8] sm:$0xff]
        %v466 = vld [vmem:[%s333 + $0x1f0] sm:$0xff]
        %v467 = vld [vmem:[%s333 + $0x1f8] sm:$0xff]
        %v468 = vld [vmem:[%s333 + $0x200] sm:$0xff]
        %v469 = vld [vmem:[%s333 + $0x208] sm:$0xff]
        %v470 = vld [vmem:[%s333 + $0x210] sm:$0xff]
        %v471 = vld [vmem:[%s333 + $0x218] sm:$0xff]
        %v472 = vld [vmem:[%s333 + $0x220] sm:$0xff]
        %v473 = vld [vmem:[%s333 + $0x228] sm:$0xff]
        %v474 = vld [vmem:[%s333 + $0x230] sm:$0xff]
        %v475 = vld [vmem:[%s333 + $0x238] sm:$0xff]
        %v476 = vld [vmem:[%s333 + $0x240] sm:$0xff]
        %v477 = vld [vmem:[%s333 + $0x248] sm:$0xff]
        %v478 = vld [vmem:[%s333 + $0x250] sm:$0xff]
        %v479 = vld [vmem:[%s333 + $0x258] sm:$0xff]
        %v480 = vld [vmem:[%s333 + $0x260] sm:$0xff]
        %v481 = vld [vmem:[%s333 + $0x268] sm:$0xff]
        %v482 = vld [vmem:[%s333 + $0x270] sm:$0xff]
        %v483 = vld [vmem:[%s333 + $0x278] sm:$0xff]
        %v484 = vld [vmem:[%s333 + $0x280] sm:$0xff]
        %v485 = vld [vmem:[%s333 + $0x288] sm:$0xff]
        %v486 = vld [vmem:[%s333 + $0x290] sm:$0xff]
        %v487 = vld [vmem:[%s333 + $0x298] sm:$0xff]
        %v488 = vld [vmem:[%s333 + $0x2a0] sm:$0xff]
        %v489 = vld [vmem:[%s333 + $0x2a8] sm:$0xff]
        %v490 = vld [vmem:[%s333 + $0x2b0] sm:$0xff]
        %v491 = vld [vmem:[%s333 + $0x2b8] sm:$0xff]
        %v492 = vld [vmem:[%s333 + $0x2c0] sm:$0xff]
        %v493 = vld [vmem:[%s333 + $0x2c8] sm:$0xff]
        %v494 = vld [vmem:[%s333 + $0x2d0] sm:$0xff]
        %v495 = vld [vmem:[%s333 + $0x2d8] sm:$0xff]
        %v496 = vld [vmem:[%s333 + $0x2e0] sm:$0xff]
        %v497 = vld [vmem:[%s333 + $0x2e8] sm:$0xff]
        %v498 = vld [vmem:[%s333 + $0x2f0] sm:$0xff]
        %v499 = vld [vmem:[%s333 + $0x2f8] sm:$0xff]
        %v500 = vld [vmem:[%s333 + $0x300] sm:$0xff]
        %v501 = vld [vmem:[%s333 + $0x308] sm:$0xff]
        %v502 = vld [vmem:[%s333 + $0x310] sm:$0xff]
        %v503 = vld [vmem:[%s333 + $0x318] sm:$0xff]
        %v504 = vld [vmem:[%s333 + $0x320] sm:$0xff]
        %v505 = vld [vmem:[%s333 + $0x328] sm:$0xff]
        %v506 = vld [vmem:[%s333 + $0x330] sm:$0xff]
        %v507 = vld [vmem:[%s333 + $0x338] sm:$0xff]
        %v508 = vld [vmem:[%s333 + $0x340] sm:$0xff]
        %v509 = vld [vmem:[%s333 + $0x348] sm:$0xff]
        %v510 = vld [vmem:[%s333 + $0x350] sm:$0xff]
        %v511 = vld [vmem:[%s333 + $0x358] sm:$0xff]
        %v512 = vld [vmem:[%s333 + $0x360] sm:$0xff]
        %v513 = vld [vmem:[%s333 + $0x368] sm:$0xff]
        %v514 = vld [vmem:[%s333 + $0x370] sm:$0xff]
        %v515 = vld [vmem:[%s333 + $0x378] sm:$0xff]
        %v516 = vld [vmem:[%s333 + $0x380] sm:$0xff]
        %v517 = vld [vmem:[%s333 + $0x388] sm:$0xff]
        %v518 = vld [vmem:[%s333 + $0x390] sm:$0xff]
        %v519 = vld [vmem:[%s333 + $0x398] sm:$0xff]
        %v520 = vld [vmem:[%s333 + $0x3a0] sm:$0xff]
        %v521 = vld [vmem:[%s333 + $0x3a8] sm:$0xff]
        %v522 = vld [vmem:[%s333 + $0x3b0] sm:$0xff]
        %v523 = vld [vmem:[%s333 + $0x3b8] sm:$0xff]
        %v524 = vld [vmem:[%s333 + $0x3c0] sm:$0xff]
        %v525 = vld [vmem:[%s333 + $0x3c8] sm:$0xff]
        %v526 = vld [vmem:[%s333 + $0x3d0] sm:$0xff]
        %v527 = vld [vmem:[%s333 + $0x3d8] sm:$0xff]
        %v528 = vld [vmem:[%s333 + $0x3e0] sm:$0xff]
        %v529 = vld [vmem:[%s333 + $0x3e8] sm:$0xff]
        %v530 = vld [vmem:[%s333 + $0x3f0] sm:$0xff]
        %v531 = vld [vmem:[%s333 + $0x3f8] sm:$0xff]
        %v532 = vld [vmem:[%s333 + $0x400] sm:$0xff]
        %v533 = vld [vmem:[%s333 + $0x408] sm:$0xff]
        %v534 = vld [vmem:[%s333 + $0x410] sm:$0xff]
        %v535 = vld [vmem:[%s333 + $0x418] sm:$0xff]
        %v536 = vld [vmem:[%s333 + $0x420] sm:$0xff]
        %v537 = vld [vmem:[%s333 + $0x428] sm:$0xff]
        %v538 = vld [vmem:[%s333 + $0x430] sm:$0xff]
        %v539 = vld [vmem:[%s333 + $0x438] sm:$0xff]
        %v540 = vld [vmem:[%s333 + $0x440] sm:$0xff]
        %v541 = vld [vmem:[%s333 + $0x448] sm:$0xff]
        %v542 = vld [vmem:[%s333 + $0x450] sm:$0xff]
        %v543 = vld [vmem:[%s333 + $0x458] sm:$0xff]
        %v544 = vld [vmem:[%s333 + $0x460] sm:$0xff]
        %v545 = vld [vmem:[%s333 + $0x468] sm:$0xff]
        %v546 = vld [vmem:[%s333 + $0x470] sm:$0xff]
        %v547 = vld [vmem:[%s333 + $0x478] sm:$0xff]
        %v548 = vld [vmem:[%s333 + $0x480] sm:$0xff]
        %v549 = vld [vmem:[%s333 + $0x488] sm:$0xff]
        %v550 = vld [vmem:[%s333 + $0x490] sm:$0xff]
        %v551 = vld [vmem:[%s333 + $0x498] sm:$0xff]
        %v552 = vld [vmem:[%s333 + $0x4a0] sm:$0xff]
        %v553 = vld [vmem:[%s333 + $0x4a8] sm:$0xff]
        %v554 = vld [vmem:[%s333 + $0x4b0] sm:$0xff]
        %v555 = vld [vmem:[%s333 + $0x4b8] sm:$0xff]
        %v556 = vld [vmem:[%s333 + $0x4c0] sm:$0xff]
        %v557 = vld [vmem:[%s333 + $0x4c8] sm:$0xff]
        %v558 = vld [vmem:[%s333 + $0x4d0] sm:$0xff]
        %v559 = vld [vmem:[%s333 + $0x4d8] sm:$0xff]
        %v560 = vld [vmem:[%s333 + $0x4e0] sm:$0xff]
        %v561 = vld [vmem:[%s333 + $0x4e8] sm:$0xff]
        %v562 = vld [vmem:[%s333 + $0x4f0] sm:$0xff]
        %v563 = vld [vmem:[%s333 + $0x4f8] sm:$0xff]
        %v564 = vld [vmem:[%s333 + $0x500] sm:$0xff]
        %v565 = vld [vmem:[%s333 + $0x508] sm:$0xff]
        %v566 = vld [vmem:[%s333 + $0x510] sm:$0xff]
        %v567 = vld [vmem:[%s333 + $0x518] sm:$0xff]
        %v568 = vld [vmem:[%s333 + $0x520] sm:$0xff]
        %v569 = vld [vmem:[%s333 + $0x528] sm:$0xff]
        %v570 = vld [vmem:[%s333 + $0x530] sm:$0xff]
        %v571 = vld [vmem:[%s333 + $0x538] sm:$0xff]
        %v572 = vld [vmem:[%s333 + $0x540] sm:$0xff]
        %v573 = vld [vmem:[%s333 + $0x548] sm:$0xff]
        %v574 = vld [vmem:[%s333 + $0x550] sm:$0xff]
        %v575 = vld [vmem:[%s333 + $0x558] sm:$0xff]
        %v576 = vld [vmem:[%s333 + $0x560] sm:$0xff]
        %v577 = vld [vmem:[%s333 + $0x568] sm:$0xff]
        %v578 = vld [vmem:[%s333 + $0x570] sm:$0xff]
        %v579 = vld [vmem:[%s333 + $0x578] sm:$0xff]
        %v580 = vld [vmem:[%s333 + $0x580] sm:$0xff]
        %v581 = vld [vmem:[%s333 + $0x588] sm:$0xff]
        %v582 = vld [vmem:[%s333 + $0x590] sm:$0xff]
        %v583 = vld [vmem:[%s333 + $0x598] sm:$0xff]
        %v584 = vld [vmem:[%s333 + $0x5a0] sm:$0xff]
        %v585 = vld [vmem:[%s333 + $0x5a8] sm:$0xff]
        %v586 = vld [vmem:[%s333 + $0x5b0] sm:$0xff]
        %v587 = vld [vmem:[%s333 + $0x5b8] sm:$0xff]
        %v588 = vld [vmem:[%s333 + $0x5c0] sm:$0xff]
        %v589 = vld [vmem:[%s333 + $0x5c8] sm:$0xff]
        %v590 = vld [vmem:[%s333 + $0x5d0] sm:$0xff]
        %v591 = vld [vmem:[%s333 + $0x5d8] sm:$0xff]
        %v592 = vld [vmem:[%s333 + $0x5e0] sm:$0xff]
        %v593 = vld [vmem:[%s333 + $0x5e8] sm:$0xff]
        %v594 = vld [vmem:[%s333 + $0x5f0] sm:$0xff]
        %v595 = vld [vmem:[%s333 + $0x5f8] sm:$0xff]
        %v596 = vld [vmem:[%s333 + $0x600] sm:$0xff]
        %v597 = vld [vmem:[%s333 + $0x608] sm:$0xff]
        %v598 = vld [vmem:[%s333 + $0x610] sm:$0xff]
        %v599 = vld [vmem:[%s333 + $0x618] sm:$0xff]
        %v600 = vld [vmem:[%s333 + $0x620] sm:$0xff]
        %v601 = vld [vmem:[%s333 + $0x628] sm:$0xff]
        %v602 = vld [vmem:[%s333 + $0x630] sm:$0xff]
        %v603 = vld [vmem:[%s333 + $0x638] sm:$0xff]
        %v604 = vld [vmem:[%s333 + $0x640] sm:$0xff]
        %v605 = vld [vmem:[%s333 + $0x648] sm:$0xff]
        %v606 = vld [vmem:[%s333 + $0x650] sm:$0xff]
        %v607 = vld [vmem:[%s333 + $0x658] sm:$0xff]
        %v608 = vld [vmem:[%s333 + $0x660] sm:$0xff]
        %v609 = vld [vmem:[%s333 + $0x668] sm:$0xff]
        %v610 = vld [vmem:[%s333 + $0x670] sm:$0xff]
        %v611 = vld [vmem:[%s333 + $0x678] sm:$0xff]
        %v612 = vld [vmem:[%s333 + $0x680] sm:$0xff]
        %v613 = vld [vmem:[%s333 + $0x688] sm:$0xff]
        %v614 = vld [vmem:[%s333 + $0x690] sm:$0xff]
        %v615 = vld [vmem:[%s333 + $0x698] sm:$0xff]
        %v616 = vld [vmem:[%s333 + $0x6a0] sm:$0xff]
        %v617 = vld [vmem:[%s333 + $0x6a8] sm:$0xff]
        %v618 = vld [vmem:[%s333 + $0x6b0] sm:$0xff]
        %v619 = vld [vmem:[%s333 + $0x6b8] sm:$0xff]
        %v620 = vld [vmem:[%s333 + $0x6c0] sm:$0xff]
        %v621 = vld [vmem:[%s333 + $0x6c8] sm:$0xff]
        %v622 = vld [vmem:[%s333 + $0x6d0] sm:$0xff]
        %v623 = vld [vmem:[%s333 + $0x6d8] sm:$0xff]
        %v624 = vld [vmem:[%s333 + $0x6e0] sm:$0xff]
        %v625 = vld [vmem:[%s333 + $0x6e8] sm:$0xff]
        %v626 = vld [vmem:[%s333 + $0x6f0] sm:$0xff]
        %v627 = vld [vmem:[%s333 + $0x6f8] sm:$0xff]
        %v628 = vld [vmem:[%s333 + $0x700] sm:$0xff]
        %v629 = vld [vmem:[%s333 + $0x708] sm:$0xff]
        %v630 = vld [vmem:[%s333 + $0x710] sm:$0xff]
        %v631 = vld [vmem:[%s333 + $0x718] sm:$0xff]
        %v632 = vld [vmem:[%s333 + $0x720] sm:$0xff]
        %v633 = vld [vmem:[%s333 + $0x728] sm:$0xff]
        %v634 = vld [vmem:[%s333 + $0x730] sm:$0xff]
        %v635 = vld [vmem:[%s333 + $0x738] sm:$0xff]
        %v636 = vld [vmem:[%s333 + $0x740] sm:$0xff]
        %v637 = vld [vmem:[%s333 + $0x748] sm:$0xff]
        %v638 = vld [vmem:[%s333 + $0x750] sm:$0xff]
        %v639 = vld [vmem:[%s333 + $0x758] sm:$0xff]
        %v640 = vld [vmem:[%s333 + $0x760] sm:$0xff]
        %v641 = vld [vmem:[%s333 + $0x768] sm:$0xff]
        %v642 = vld [vmem:[%s333 + $0x770] sm:$0xff]
        %v643 = vld [vmem:[%s333 + $0x778] sm:$0xff]
        %v644 = vld [vmem:[%s333 + $0x780] sm:$0xff]
        %v645 = vld [vmem:[%s333 + $0x788] sm:$0xff]
        %v646 = vld [vmem:[%s333 + $0x790] sm:$0xff]
        %v647 = vld [vmem:[%s333 + $0x798] sm:$0xff]
        %v648 = vld [vmem:[%s333 + $0x7a0] sm:$0xff]
        %v649 = vld [vmem:[%s333 + $0x7a8] sm:$0xff]
        %v650 = vld [vmem:[%s333 + $0x7b0] sm:$0xff]
        %v651 = vld [vmem:[%s333 + $0x7b8] sm:$0xff]
        %v652 = vld [vmem:[%s333 + $0x7c0] sm:$0xff]
        %v653 = vld [vmem:[%s333 + $0x7c8] sm:$0xff]
        %v654 = vld [vmem:[%s333 + $0x7d0] sm:$0xff]
        %v655 = vld [vmem:[%s333 + $0x7d8] sm:$0xff]
        %v656 = vld [vmem:[%s333 + $0x7e0] sm:$0xff]
        %v657 = vld [vmem:[%s333 + $0x7e8] sm:$0xff]
        %v658 = vld [vmem:[%s333 + $0x7f0] sm:$0xff]
        %v659 = vld [vmem:[%s333 + $0x7f8] sm:$0xff]
        %660 = vmatprep.subr.mxu0 %v435
        %661 = vmatpush1.msra.mxu0 %v434
        %662 = vmatprep.subr.mxu0 %v433
        %663 = vmatpush1.msra.mxu0 %v432
        %664 = vmatprep.subr.mxu0 %v431
        %665 = vmatpush1.msra.mxu0 %v430
        %666 = vmatprep.subr.mxu0 %v429
        %667 = vmatpush1.msra.mxu0 %v428
        %668 = vmatprep.subr.mxu0 %v427
        %669 = vmatpush1.msra.mxu0 %v426
        %670 = vmatprep.subr.mxu0 %v425
        %671 = vmatpush1.msra.mxu0 %v424
        %672 = vmatprep.subr.mxu0 %v423
        %673 = vmatpush1.msra.mxu0 %v422
        %674 = vmatprep.subr.mxu0 %v421
        %675 = vmatpush1.msra.mxu0 %v420
        %676 = vmatprep.subr.mxu0 %v419
        %677 = vmatpush1.msra.mxu0 %v418
        %678 = vmatprep.subr.mxu0 %v417
        %679 = vmatpush1.msra.mxu0 %v416
        %680 = vmatprep.subr.mxu0 %v415
        %681 = vmatpush1.msra.mxu0 %v414
        %682 = vmatprep.subr.mxu0 %v413
        %683 = vmatpush1.msra.mxu0 %v412
        %684 = vmatprep.subr.mxu0 %v411
        %685 = vmatpush1.msra.mxu0 %v410
        %686 = vmatprep.subr.mxu0 %v409
        %687 = vmatpush1.msra.mxu0 %v408
        %688 = vmatprep.subr.mxu0 %v407
        %689 = vmatpush1.msra.mxu0 %v406
        %690 = vmatprep.subr.mxu0 %v405
        %691 = vmatpush1.msra.mxu0 %v404
        %692 = vmatprep.subr.mxu0 %v467
        %693 = vmatpush2.msra.mxu0 %v466
        %694 = vmatprep.subr.mxu0 %v465
        %695 = vmatpush2.msra.mxu0 %v464
        %696 = vmatprep.subr.mxu0 %v463
        %697 = vmatpush2.msra.mxu0 %v462
        %698 = vmatprep.subr.mxu0 %v461
        %699 = vmatpush2.msra.mxu0 %v460
        %700 = vmatprep.subr.mxu0 %v459
        %701 = vmatpush2.msra.mxu0 %v458
        %702 = vmatprep.subr.mxu0 %v457
        %703 = vmatpush2.msra.mxu0 %v456
        %704 = vmatprep.subr.mxu0 %v455
        %705 = vmatpush2.msra.mxu0 %v454
        %706 = vmatprep.subr.mxu0 %v453
        %707 = vmatpush2.msra.mxu0 %v452
        %708 = vmatprep.subr.mxu0 %v451
        %709 = vmatpush2.msra.mxu0 %v450
        %710 = vmatprep.subr.mxu0 %v449
        %711 = vmatpush2.msra.mxu0 %v448
        %712 = vmatprep.subr.mxu0 %v447
        %713 = vmatpush2.msra.mxu0 %v446
        %714 = vmatprep.subr.mxu0 %v445
        %715 = vmatpush2.msra.mxu0 %v444
        %716 = vmatprep.subr.mxu0 %v443
        %717 = vmatpush2.msra.mxu0 %v442
        %718 = vmatprep.subr.mxu0 %v441
        %719 = vmatpush2.msra.mxu0 %v440
        %720 = vmatprep.subr.mxu0 %v439
        %721 = vmatpush2.msra.mxu0 %v438
        %722 = vmatprep.subr.mxu0 %v437
        %723 = vmatpush2.msra.mxu0 %v436
        %724 = vmatprep.mubr.f32.mxu0 %v373
        %725 = vmatmul.mubr.f32.gmra.mxu0 %v372
        %v726 = vpop.f32.mrf.mxu0
        %v727 = vadd.f32 0.0, %v726
        %v728 = vpop.f32.mrf.mxu0
        %v729 = vadd.f32 0.0, %v728
        %730 = vmatprep.mubr.f32.mxu0 %v381
        %731 = vmatmul.mubr.f32.gmra.mxu0 %v380
        %v732 = vpop.f32.mrf.mxu0
        %v733 = vadd.f32 0.0, %v732
        %v734 = vpop.f32.mrf.mxu0
        %v735 = vadd.f32 0.0, %v734
        %736 = vmatprep.mubr.f32.mxu0 %v389
        %737 = vmatmul.mubr.f32.gmra.mxu0 %v388
        %v738 = vpop.f32.mrf.mxu0
        %v739 = vadd.f32 0.0, %v738
        %v740 = vpop.f32.mrf.mxu0
        %v741 = vadd.f32 0.0, %v740
        %742 = vmatprep.mubr.f32.mxu0 %v397
        %743 = vmatmul.mubr.f32.gmra.mxu0 %v396
        %v744 = vpop.f32.mrf.mxu0
        %v745 = vadd.f32 0.0, %v744
        %v746 = vpop.f32.mrf.mxu0
        %v747 = vadd.f32 0.0, %v746
        %748 = vdwg.mxu0
        %749 = vmatprep.subr.mxu0 %v499
        %750 = vmatpush1.msra.mxu0 %v498
        %751 = vmatprep.subr.mxu0 %v497
        %752 = vmatpush1.msra.mxu0 %v496
        %753 = vmatprep.subr.mxu0 %v495
        %754 = vmatpush1.msra.mxu0 %v494
        %755 = vmatprep.subr.mxu0 %v493
        %756 = vmatpush1.msra.mxu0 %v492
        %757 = vmatprep.subr.mxu0 %v491
        %758 = vmatpush1.msra.mxu0 %v490
        %759 = vmatprep.subr.mxu0 %v489
        %760 = vmatpush1.msra.mxu0 %v488
        %761 = vmatprep.subr.mxu0 %v487
        %762 = vmatpush1.msra.mxu0 %v486
        %763 = vmatprep.subr.mxu0 %v485
        %764 = vmatpush1.msra.mxu0 %v484
        %765 = vmatprep.subr.mxu0 %v483
        %766 = vmatpush1.msra.mxu0 %v482
        %767 = vmatprep.subr.mxu0 %v481
        %768 = vmatpush1.msra.mxu0 %v480
        %769 = vmatprep.subr.mxu0 %v479
        %770 = vmatpush1.msra.mxu0 %v478
        %771 = vmatprep.subr.mxu0 %v477
        %772 = vmatpush1.msra.mxu0 %v476
        %773 = vmatprep.subr.mxu0 %v475
        %774 = vmatpush1.msra.mxu0 %v474
        %775 = vmatprep.subr.mxu0 %v473
        %776 = vmatpush1.msra.mxu0 %v472
        %777 = vmatprep.subr.mxu0 %v471
        %778 = vmatpush1.msra.mxu0 %v470
        %779 = vmatprep.subr.mxu0 %v469
        %780 = vmatpush1.msra.mxu0 %v468
        %781 = vmatprep.subr.mxu0 %v531
        %782 = vmatpush2.msra.mxu0 %v530
        %783 = vmatprep.subr.mxu0 %v529
        %784 = vmatpush2.msra.mxu0 %v528
        %785 = vmatprep.subr.mxu0 %v527
        %786 = vmatpush2.msra.mxu0 %v526
        %787 = vmatprep.subr.mxu0 %v525
        %788 = vmatpush2.msra.mxu0 %v524
        %789 = vmatprep.subr.mxu0 %v523
        %790 = vmatpush2.msra.mxu0 %v522
        %791 = vmatprep.subr.mxu0 %v521
        %792 = vmatpush2.msra.mxu0 %v520
        %793 = vmatprep.subr.mxu0 %v519
        %794 = vmatpush2.msra.mxu0 %v518
        %795 = vmatprep.subr.mxu0 %v517
        %796 = vmatpush2.msra.mxu0 %v516
        %797 = vmatprep.subr.mxu0 %v515
        %798 = vmatpush2.msra.mxu0 %v514
        %799 = vmatprep.subr.mxu0 %v513
        %800 = vmatpush2.msra.mxu0 %v512
        %801 = vmatprep.subr.mxu0 %v511
        %802 = vmatpush2.msra.mxu0 %v510
        %803 = vmatprep.subr.mxu0 %v509
        %804 = vmatpush2.msra.mxu0 %v508
        %805 = vmatprep.subr.mxu0 %v507
        %806 = vmatpush2.msra.mxu0 %v506
        %807 = vmatprep.subr.mxu0 %v505
        %808 = vmatpush2.msra.mxu0 %v504
        %809 = vmatprep.subr.mxu0 %v503
        %810 = vmatpush2.msra.mxu0 %v502
        %811 = vmatprep.subr.mxu0 %v501
        %812 = vmatpush2.msra.mxu0 %v500
        %813 = vmatprep.mubr.f32.mxu0 %v375
        %814 = vmatmul.mubr.f32.gmra.mxu0 %v374
        %v815 = vpop.f32.mrf.mxu0
        %v816 = vadd.f32 %v727, %v815
        %v817 = vpop.f32.mrf.mxu0
        %v818 = vadd.f32 %v729, %v817
        %819 = vmatprep.mubr.f32.mxu0 %v383
        %820 = vmatmul.mubr.f32.gmra.mxu0 %v382
        %v821 = vpop.f32.mrf.mxu0
        %v822 = vadd.f32 %v733, %v821
        %v823 = vpop.f32.mrf.mxu0
        %v824 = vadd.f32 %v735, %v823
        %825 = vmatprep.mubr.f32.mxu0 %v391
        %826 = vmatmul.mubr.f32.gmra.mxu0 %v390
        %v827 = vpop.f32.mrf.mxu0
        %v828 = vadd.f32 %v739, %v827
        %v829 = vpop.f32.mrf.mxu0
        %v830 = vadd.f32 %v741, %v829
        %831 = vmatprep.mubr.f32.mxu0 %v399
        %832 = vmatmul.mubr.f32.gmra.mxu0 %v398
        %v833 = vpop.f32.mrf.mxu0
        %v834 = vadd.f32 %v745, %v833
        %v835 = vpop.f32.mrf.mxu0
        %v836 = vadd.f32 %v747, %v835
        %837 = vdwg.mxu0
        %838 = vmatprep.subr.mxu0 %v563
        %839 = vmatpush1.msra.mxu0 %v562
        %840 = vmatprep.subr.mxu0 %v561
        %841 = vmatpush1.msra.mxu0 %v560
        %842 = vmatprep.subr.mxu0 %v559
        %843 = vmatpush1.msra.mxu0 %v558
        %844 = vmatprep.subr.mxu0 %v557
        %845 = vmatpush1.msra.mxu0 %v556
        %846 = vmatprep.subr.mxu0 %v555
        %847 = vmatpush1.msra.mxu0 %v554
        %848 = vmatprep.subr.mxu0 %v553
        %849 = vmatpush1.msra.mxu0 %v552
        %850 = vmatprep.subr.mxu0 %v551
        %851 = vmatpush1.msra.mxu0 %v550
        %852 = vmatprep.subr.mxu0 %v549
        %853 = vmatpush1.msra.mxu0 %v548
        %854 = vmatprep.subr.mxu0 %v547
        %855 = vmatpush1.msra.mxu0 %v546
        %856 = vmatprep.subr.mxu0 %v545
        %857 = vmatpush1.msra.mxu0 %v544
        %858 = vmatprep.subr.mxu0 %v543
        %859 = vmatpush1.msra.mxu0 %v542
        %860 = vmatprep.subr.mxu0 %v541
        %861 = vmatpush1.msra.mxu0 %v540
        %862 = vmatprep.subr.mxu0 %v539
        %863 = vmatpush1.msra.mxu0 %v538
        %864 = vmatprep.subr.mxu0 %v537
        %865 = vmatpush1.msra.mxu0 %v536
        %866 = vmatprep.subr.mxu0 %v535
        %867 = vmatpush1.msra.mxu0 %v534
        %868 = vmatprep.subr.mxu0 %v533
        %869 = vmatpush1.msra.mxu0 %v532
        %870 = vmatprep.subr.mxu0 %v595
        %871 = vmatpush2.msra.mxu0 %v594
        %872 = vmatprep.subr.mxu0 %v593
        %873 = vmatpush2.msra.mxu0 %v592
        %874 = vmatprep.subr.mxu0 %v591
        %875 = vmatpush2.msra.mxu0 %v590
        %876 = vmatprep.subr.mxu0 %v589
        %877 = vmatpush2.msra.mxu0 %v588
        %878 = vmatprep.subr.mxu0 %v587
        %879 = vmatpush2.msra.mxu0 %v586
        %880 = vmatprep.subr.mxu0 %v585
        %881 = vmatpush2.msra.mxu0 %v584
        %882 = vmatprep.subr.mxu0 %v583
        %883 = vmatpush2.msra.mxu0 %v582
        %884 = vmatprep.subr.mxu0 %v581
        %885 = vmatpush2.msra.mxu0 %v580
        %886 = vmatprep.subr.mxu0 %v579
        %887 = vmatpush2.msra.mxu0 %v578
        %888 = vmatprep.subr.mxu0 %v577
        %889 = vmatpush2.msra.mxu0 %v576
        %890 = vmatprep.subr.mxu0 %v575
        %891 = vmatpush2.msra.mxu0 %v574
        %892 = vmatprep.subr.mxu0 %v573
        %893 = vmatpush2.msra.mxu0 %v572
        %894 = vmatprep.subr.mxu0 %v571
        %895 = vmatpush2.msra.mxu0 %v570
        %896 = vmatprep.subr.mxu0 %v569
        %897 = vmatpush2.msra.mxu0 %v568
        %898 = vmatprep.subr.mxu0 %v567
        %899 = vmatpush2.msra.mxu0 %v566
        %900 = vmatprep.subr.mxu0 %v565
        %901 = vmatpush2.msra.mxu0 %v564
        %902 = vmatprep.mubr.f32.mxu0 %v377
        %903 = vmatmul.mubr.f32.gmra.mxu0 %v376
        %v904 = vpop.f32.mrf.mxu0
        %v905 = vadd.f32 %v816, %v904
        %v906 = vpop.f32.mrf.mxu0
        %v907 = vadd.f32 %v818, %v906
        %908 = vmatprep.mubr.f32.mxu0 %v385
        %909 = vmatmul.mubr.f32.gmra.mxu0 %v384
        %v910 = vpop.f32.mrf.mxu0
        %v911 = vadd.f32 %v822, %v910
        %v912 = vpop.f32.mrf.mxu0
        %v913 = vadd.f32 %v824, %v912
        %914 = vmatprep.mubr.f32.mxu0 %v393
        %915 = vmatmul.mubr.f32.gmra.mxu0 %v392
        %v916 = vpop.f32.mrf.mxu0
        %v917 = vadd.f32 %v828, %v916
        %v918 = vpop.f32.mrf.mxu0
        %v919 = vadd.f32 %v830, %v918
        %920 = vmatprep.mubr.f32.mxu0 %v401
        %921 = vmatmul.mubr.f32.gmra.mxu0 %v400
        %v922 = vpop.f32.mrf.mxu0
        %v923 = vadd.f32 %v834, %v922
        %v924 = vpop.f32.mrf.mxu0
        %v925 = vadd.f32 %v836, %v924
        %926 = vdwg.mxu0
        %927 = vmatprep.subr.mxu0 %v627
        %928 = vmatpush1.msra.mxu0 %v626
        %929 = vmatprep.subr.mxu0 %v625
        %930 = vmatpush1.msra.mxu0 %v624
        %931 = vmatprep.subr.mxu0 %v623
        %932 = vmatpush1.msra.mxu0 %v622
        %933 = vmatprep.subr.mxu0 %v621
        %934 = vmatpush1.msra.mxu0 %v620
        %935 = vmatprep.subr.mxu0 %v619
        %936 = vmatpush1.msra.mxu0 %v618
        %937 = vmatprep.subr.mxu0 %v617
        %938 = vmatpush1.msra.mxu0 %v616
        %939 = vmatprep.subr.mxu0 %v615
        %940 = vmatpush1.msra.mxu0 %v614
        %941 = vmatprep.subr.mxu0 %v613
        %942 = vmatpush1.msra.mxu0 %v612
        %943 = vmatprep.subr.mxu0 %v611
        %944 = vmatpush1.msra.mxu0 %v610
        %945 = vmatprep.subr.mxu0 %v609
        %946 = vmatpush1.msra.mxu0 %v608
        %947 = vmatprep.subr.mxu0 %v607
        %948 = vmatpush1.msra.mxu0 %v606
        %949 = vmatprep.subr.mxu0 %v605
        %950 = vmatpush1.msra.mxu0 %v604
        %951 = vmatprep.subr.mxu0 %v603
        %952 = vmatpush1.msra.mxu0 %v602
        %953 = vmatprep.subr.mxu0 %v601
        %954 = vmatpush1.msra.mxu0 %v600
        %955 = vmatprep.subr.mxu0 %v599
        %956 = vmatpush1.msra.mxu0 %v598
        %957 = vmatprep.subr.mxu0 %v597
        %958 = vmatpush1.msra.mxu0 %v596
        %959 = vmatprep.subr.mxu0 %v659
        %960 = vmatpush2.msra.mxu0 %v658
        %961 = vmatprep.subr.mxu0 %v657
        %962 = vmatpush2.msra.mxu0 %v656
        %963 = vmatprep.subr.mxu0 %v655
        %964 = vmatpush2.msra.mxu0 %v654
        %965 = vmatprep.subr.mxu0 %v653
        %966 = vmatpush2.msra.mxu0 %v652
        %967 = vmatprep.subr.mxu0 %v651
        %968 = vmatpush2.msra.mxu0 %v650
        %969 = vmatprep.subr.mxu0 %v649
        %970 = vmatpush2.msra.mxu0 %v648
        %971 = vmatprep.subr.mxu0 %v647
        %972 = vmatpush2.msra.mxu0 %v646
        %973 = vmatprep.subr.mxu0 %v645
        %974 = vmatpush2.msra.mxu0 %v644
        %975 = vmatprep.subr.mxu0 %v643
        %976 = vmatpush2.msra.mxu0 %v642
        %977 = vmatprep.subr.mxu0 %v641
        %978 = vmatpush2.msra.mxu0 %v640
        %979 = vmatprep.subr.mxu0 %v639
        %980 = vmatpush2.msra.mxu0 %v638
        %981 = vmatprep.subr.mxu0 %v637
        %982 = vmatpush2.msra.mxu0 %v636
        %983 = vmatprep.subr.mxu0 %v635
        %984 = vmatpush2.msra.mxu0 %v634
        %985 = vmatprep.subr.mxu0 %v633
        %986 = vmatpush2.msra.mxu0 %v632
        %987 = vmatprep.subr.mxu0 %v631
        %988 = vmatpush2.msra.mxu0 %v630
        %989 = vmatprep.subr.mxu0 %v629
        %990 = vmatpush2.msra.mxu0 %v628
        %991 = vmatprep.mubr.f32.mxu0 %v379
        %992 = vmatmul.mubr.f32.gmra.mxu0 %v378
        %v993 = vpop.f32.mrf.mxu0
        %v994 = vadd.f32 %v905, %v993
        %v995 = vpop.f32.mrf.mxu0
        %v996 = vadd.f32 %v907, %v995
        %997 = vmatprep.mubr.f32.mxu0 %v387
        %998 = vmatmul.mubr.f32.gmra.mxu0 %v386
        %v999 = vpop.f32.mrf.mxu0
        %v1000 = vadd.f32 %v911, %v999
        %v1001 = vpop.f32.mrf.mxu0
        %v1002 = vadd.f32 %v913, %v1001
        %1003 = vmatprep.mubr.f32.mxu0 %v395
        %1004 = vmatmul.mubr.f32.gmra.mxu0 %v394
        %v1005 = vpop.f32.mrf.mxu0
        %v1006 = vadd.f32 %v917, %v1005
        %v1007 = vpop.f32.mrf.mxu0
        %v1008 = vadd.f32 %v919, %v1007
        %1009 = vmatprep.mubr.f32.mxu0 %v403
        %1010 = vmatmul.mubr.f32.gmra.mxu0 %v402
        %v1011 = vpop.f32.mrf.mxu0
        %v1012 = vadd.f32 %v923, %v1011
        %v1013 = vpop.f32.mrf.mxu0
        %v1014 = vadd.f32 %v925, %v1013
        %1015 = vdwg.mxu0
        %v1016 = vadd.f32 %v364, %v994
        %v1017 = vadd.f32 %v365, %v996
        %v1018 = vadd.f32 %v366, %v1000
        %v1019 = vadd.f32 %v367, %v1002
        %v1020 = vadd.f32 %v368, %v1006
        %v1021 = vadd.f32 %v369, %v1008
        %v1022 = vadd.f32 %v370, %v1012
        %v1023 = vadd.f32 %v371, %v1014
        %1024 = vst [vmem:[%s340] sm:$0xff] %v1016
        %1025 = vst [vmem:[%s340 + $0x8] sm:$0xff] %v1017
        %1026 = vst [vmem:[%s340 + $0x10] sm:$0xff] %v1018
        %1027 = vst [vmem:[%s340 + $0x18] sm:$0xff] %v1019
        %1028 = vst [vmem:[%s340 + $0x20] sm:$0xff] %v1020
        %1029 = vst [vmem:[%s340 + $0x28] sm:$0xff] %v1021
        %1030 = vst [vmem:[%s340 + $0x30] sm:$0xff] %v1022
        %1031 = vst [vmem:[%s340 + $0x38] sm:$0xff] %v1023
        %p1032 = scmp.eq.s32.totalorder %s21, 1
        // Predicated region
        $region56: #{patchgan_forward.14} parent=46 // pred_check
          %p1033 = pneg %p1032
        $region57: #{patchgan_forward.14} parent=46 // pred_check_branch
          %1035 = sbr.rel (%p1033) target = $region59
        $region58: #{patchgan_forward.14} parent=46 // pred_region
          %v1036 = vld [vmem:[%s340] sm:$0xff]
          %v1037 = vld [vmem:[%s340 + $0x8] sm:$0xff]
          %v1038 = vld [vmem:[%s340 + $0x10] sm:$0xff]
          %v1039 = vld [vmem:[%s340 + $0x18] sm:$0xff]
          %v1040 = vld [vmem:[%s340 + $0x20] sm:$0xff]
          %v1041 = vld [vmem:[%s340 + $0x28] sm:$0xff]
          %v1042 = vld [vmem:[%s340 + $0x30] sm:$0xff]
          %v1043 = vld [vmem:[%s340 + $0x38] sm:$0xff]
          %v1044 = vlaneseq
          %v1045 = vshrl.u32 %v1044, 7
          %v1046 = vadd.s32 %v1045, 8
          %v1047 = vadd.s32 %v1045, 16
          %v1048 = vadd.s32 %v1045, 24
          %s1049 = smul.u32 %s20, 32
          %v1050 = vstv %s1049
          %v1051 = vadd.s32 %v1045, %v1050
          %v1052 = vadd.s32 %v1046, %v1050
          %v1053 = vadd.s32 %v1047, %v1050
          %v1054 = vadd.s32 %v1048, %v1050
          %vm1055 = vcmp.lt.s32.totalorder %v1051, 32
          %vm1056 = vcmp.lt.s32.totalorder %v1052, 32
          %vm1057 = vcmp.lt.s32.totalorder %v1053, 32
          %vm1058 = vcmp.lt.s32.totalorder %v1054, 32
          %v1059 = vsel %vm1055, %v1036, 0.0
          %v1060 = vsel %vm1055, %v1037, 0.0
          %v1061 = vsel %vm1056, %v1038, 0.0
          %v1062 = vsel %vm1056, %v1039, 0.0
          %v1063 = vsel %vm1057, %v1040, 0.0
          %v1064 = vsel %vm1057, %v1041, 0.0
          %v1065 = vsel %vm1058, %v1042, 0.0
          %v1066 = vsel %vm1058, %v1043, 0.0
          %v1067 = vadd.f32 %v1059, %v1061
          %v1068 = vadd.f32 %v1067, %v1063
          %v1069 = vadd.f32 %v1068, %v1065
          %v1070 = vadd.f32 %v1060, %v1062
          %v1071 = vadd.f32 %v1070, %v1064
          %v1072 = vadd.f32 %v1071, %v1066
          %1073 = vst [vmem:[%s346] sm:$0xff] %v1069
          %1074 = vst [vmem:[%s346 + $0x8] sm:$0xff] %v1072
          %v1075 = vmul.f32 %v1059, %v1059
          %v1076 = vmul.f32 %v1060, %v1060
          %v1077 = vmul.f32 %v1061, %v1061
          %v1078 = vmul.f32 %v1062, %v1062
          %v1079 = vmul.f32 %v1063, %v1063
          %v1080 = vmul.f32 %v1064, %v1064
          %v1081 = vmul.f32 %v1065, %v1065
          %v1082 = vmul.f32 %v1066, %v1066
          %v1083 = vadd.f32 %v1075, %v1077
          %v1084 = vadd.f32 %v1083, %v1079
          %v1085 = vadd.f32 %v1084, %v1081
          %v1086 = vadd.f32 %v1076, %v1078
          %v1087 = vadd.f32 %v1086, %v1080
          %v1088 = vadd.f32 %v1087, %v1082
          %1089 = vst [vmem:[%s351] sm:$0xff] %v1085
          %1090 = vst [vmem:[%s351 + $0x8] sm:$0xff] %v1088
        $region59: #{patchgan_forward.14} parent=46 // pred_fallthru
          _
        %s1091 = smul.u32 4, %s20
        %p1092 = scmp.lt.s32.totalorder %s1091, 3
        %s1093 = scalar_select %p1092, %s1091, 3
        %s1094 = smul.addr %s1093, 2
        %s1095 = smul.addr %s1094, 8
        %s1096 = scalar_lea.vmem %s2, %s1095
        %p1097 = scmp.lt.s32.totalorder %s20, 0
        %s1098 = scalar_select %p1097, %s20, 0
        %s1099 = smul.addr %s1098, 2
        %s1100 = smul.addr %s1099, 8
        %s1101 = scalar_lea.vmem %s3, %s1100
        %p1102 = scmp.lt.s32.totalorder %s20, 0
        %s1103 = scalar_select %p1102, %s20, 0
        %s1104 = smul.addr %s1103, 2
        %s1105 = smul.addr %s1104, 8
        %s1106 = scalar_lea.vmem %s4, %s1105
        // Predicated region
        $region60: #{patchgan_forward.14} parent=46 // pred_check
          %p1107 = pneg %p100
        $region61: #{patchgan_forward.14} parent=46 // pred_check_branch
          %1109 = sbr.rel (%p1107) target = $region63
        $region62: #{patchgan_forward.14} parent=46 // pred_region
          %s1110 = smul.u32 4, %s20
        $region63: #{patchgan_forward.14} parent=46 // pred_fallthru
          _
        // Predicated region
        $region64: #{patchgan_forward.14} parent=46 // pred_check
          %p1111 = pneg %p126
        $region65: #{patchgan_forward.14} parent=46 // pred_check_branch
          %1113 = sbr.rel (%p1111) target = $region67
        $region66: #{patchgan_forward.14} parent=46 // pred_region
          _
        $region67: #{patchgan_forward.14} parent=46 // pred_fallthru
          _
        // Predicated region
        $region68: #{patchgan_forward.14} parent=46 // pred_check
          %p1114 = pneg %p152
        $region69: #{patchgan_forward.14} parent=46 // pred_check_branch
          %1116 = sbr.rel (%p1114) target = $region71
        $region70: #{patchgan_forward.14} parent=46 // pred_region
          _
        $region71: #{patchgan_forward.14} parent=46 // pred_fallthru
          _
        // Predicated region
        $region72: #{patchgan_forward.14} parent=46 // pred_check
          %p1117 = pneg %p100
        $region73: #{patchgan_forward.14} parent=46 // pred_check_branch
          %1119 = sbr.rel (%p1117) target = $region75
        $region74: #{patchgan_forward.14} parent=46 // pred_region
          %s1120 = smul.u32 4, %s20
          %p1121 = scmp.lt.s32.totalorder %s1120, 3
          %s1122 = scalar_select %p1121, %s1120, 3
          %s1123 = smul.addr %s1122, 2
          %s1124 = smul.addr %s1123, 8
          %s1125 = scalar_lea.vmem %s2, %s1124
        $region75: #{patchgan_forward.14} parent=46 // pred_fallthru
          _
        // Predicated region
        $region76: #{patchgan_forward.14} parent=46 // pred_check
          %p1126 = pneg %p126
        $region77: #{patchgan_forward.14} parent=46 // pred_check_branch
          %1128 = sbr.rel (%p1126) target = $region79
        $region78: #{patchgan_forward.14} parent=46 // pred_region
          %p1129 = scmp.lt.s32.totalorder %s20, 0
          %s1130 = scalar_select %p1129, %s20, 0
          %s1131 = smul.addr %s1130, 2
          %s1132 = smul.addr %s1131, 8
          %s1133 = scalar_lea.vmem %s3, %s1132
        $region79: #{patchgan_forward.14} parent=46 // pred_fallthru
          _
        // Predicated region
        $region80: #{patchgan_forward.14} parent=46 // pred_check
          %p1134 = pneg %p152
        $region81: #{patchgan_forward.14} parent=46 // pred_check_branch
          %1136 = sbr.rel (%p1134) target = $region83
        $region82: #{patchgan_forward.14} parent=46 // pred_region
          %p1137 = scmp.lt.s32.totalorder %s20, 0
          %s1138 = scalar_select %p1137, %s20, 0
          %s1139 = smul.addr %s1138, 2
          %s1140 = smul.addr %s1139, 8
          %s1141 = scalar_lea.vmem %s4, %s1140
        $region83: #{patchgan_forward.14} parent=46 // pred_fallthru
          _
      $region47: #{patchgan_forward.14} parent=5 // pred_fallthru
        _
      %p1142 = scmp.le.s32.totalorder 2, %s11
      // Predicated region
      $region84: #{patchgan_forward.14} parent=5 // pred_check
        %p1143 = pneg %p1142
      $region85: #{patchgan_forward.14} parent=5 // pred_check_branch
        %1145 = sbr.rel (%p1143) target = $region87
      $region86: #{patchgan_forward.14} parent=5 // pred_region
        %s1146 = ssub.s32 %s11, 2
      $region87: #{patchgan_forward.14} parent=5 // pred_fallthru
        _
    $region6: #{patchgan_forward.14} parent=1 // loop_footer
      %s15 = sadd.s32 1, %s11
    $region7: #{patchgan_forward.14} parent=1 // loop_footer_branch
      %10 = sbr.rel target = $region3
    $region8: #{patchgan_forward.14} parent=1 // loop_exit
      _

// kernel: patchgan_forward.17
$region0: #{patchgan_forward.17}
  #allocation0 [shape = 'u32[]', space=smem, size = 0x4, offset = 0x4, fixed_abs, tag = 'smem constant byte address 0x4 - core index']
  #allocation1 [shape = 'u32[144,128]{1,0:T(1,128)}', space=vmem, size = 0x12000, scoped, tag = 'internal scratch']
  %s0 = inlined_call_operand.vmem [shape: f32[24,512], index: 0, kind: input, shape index: {}]
  %s1 = inlined_call_operand.vmem [shape: f32[1,512], index: 1, kind: input, shape index: {}]
  %s2 = inlined_call_operand.vmem [shape: f32[1,512], index: 2, kind: input, shape index: {}]
  %s3 = inlined_call_operand.vmem [shape: f32[24,512], index: 3, kind: output, shape index: {}]
  %s4 = sld [smem:[#allocation0]]
  $region22: #{patchgan_forward.17} parent=0
    _
  %s6 = ssub.s32 1, %s4
  %s7 = scalar_select 0, %s6, %s4
  // Predicated region
  $region2: #{patchgan_forward.17} parent=0 // pred_check
    _
  $region3: #{patchgan_forward.17} parent=0 // pred_check_branch
    %9 = sbr.rel (0) target = $region5
  $region4: #{patchgan_forward.17} parent=0 // pred_region
    _
  $region5: #{patchgan_forward.17} parent=0 // pred_fallthru
    _
  // Predicated region
  $region6: #{patchgan_forward.17} parent=0 // pred_check
    _
  $region7: #{patchgan_forward.17} parent=0 // pred_check_branch
    %11 = sbr.rel (0) target = $region9
  $region8: #{patchgan_forward.17} parent=0 // pred_region
    _
  $region9: #{patchgan_forward.17} parent=0 // pred_fallthru
    _
  // Predicated region
  $region10: #{patchgan_forward.17} parent=0 // pred_check
    _
  $region11: #{patchgan_forward.17} parent=0 // pred_check_branch
    %13 = sbr.rel (0) target = $region13
  $region12: #{patchgan_forward.17} parent=0 // pred_region
    _
  $region13: #{patchgan_forward.17} parent=0 // pred_fallthru
    _
  %v14 = vld [vmem:[%s0] sm:$0xff]
  %v15 = vld [vmem:[%s0 + $0x8] sm:$0xff]
  %v16 = vld [vmem:[%s0 + $0x10] sm:$0xff]
  %v17 = vld [vmem:[%s0 + $0x18] sm:$0xff]
  %v18 = vld [vmem:[%s0 + $0x20] sm:$0xff]
  %v19 = vld [vmem:[%s0 + $0x28] sm:$0xff]
  %v20 = vld [vmem:[%s0 + $0x30] sm:$0xff]
  %v21 = vld [vmem:[%s0 + $0x38] sm:$0xff]
  %v22 = vld [vmem:[%s0 + $0x40] sm:$0xff]
  %v23 = vld [vmem:[%s0 + $0x48] sm:$0xff]
  %v24 = vld [vmem:[%s0 + $0x50] sm:$0xff]
  %v25 = vld [vmem:[%s0 + $0x58] sm:$0xff]
  %v26 = vld [vmem:[%s1] sm:$0xf]
  %v28 = vlaneseq
  %v29 = vshrl.u32 %v28, 7
  %v30 = vsub.s32 0, %v29
  %v31 = vrot.slane %v26, %v30
  %v32 = vlaneseq
  %v33 = vshrl.u32 %v32, 7
  %v34 = vsub.s32 1, %v33
  %v35 = vrot.slane %v26, %v34
  %v36 = vlaneseq
  %v37 = vshrl.u32 %v36, 7
  %v38 = vsub.s32 2, %v37
  %v39 = vrot.slane %v26, %v38
  %v40 = vlaneseq
  %v41 = vshrl.u32 %v40, 7
  %v42 = vsub.s32 3, %v41
  %v43 = vrot.slane %v26, %v42
  %v48 = vmul.f32 %v14, %v31
  %v49 = vmul.f32 %v15, %v35
  %v50 = vmul.f32 %v16, %v39
  %v51 = vmul.f32 %v17, %v43
  %v52 = vmul.f32 %v18, %v31
  %v53 = vmul.f32 %v19, %v35
  %v54 = vmul.f32 %v20, %v39
  %v55 = vmul.f32 %v21, %v43
  %v56 = vmul.f32 %v22, %v31
  %v57 = vmul.f32 %v23, %v35
  %v58 = vmul.f32 %v24, %v39
  %v59 = vmul.f32 %v25, %v43
  %v60 = vld [vmem:[%s2] sm:$0xf]
  %v62 = vlaneseq
  %v63 = vshrl.u32 %v62, 7
  %v64 = vsub.s32 0, %v63
  %v65 = vrot.slane %v60, %v64
  %v66 = vlaneseq
  %v67 = vshrl.u32 %v66, 7
  %v68 = vsub.s32 1, %v67
  %v69 = vrot.slane %v60, %v68
  %v70 = vlaneseq
  %v71 = vshrl.u32 %v70, 7
  %v72 = vsub.s32 2, %v71
  %v73 = vrot.slane %v60, %v72
  %v74 = vlaneseq
  %v75 = vshrl.u32 %v74, 7
  %v76 = vsub.s32 3, %v75
  %v77 = vrot.slane %v60, %v76
  %v82 = vadd.f32 %v48, %v65
  %v83 = vadd.f32 %v49, %v69
  %v84 = vadd.f32 %v50, %v73
  %v85 = vadd.f32 %v51, %v77
  %v86 = vadd.f32 %v52, %v65
  %v87 = vadd.f32 %v53, %v69
  %v88 = vadd.f32 %v54, %v73
  %v89 = vadd.f32 %v55, %v77
  %v90 = vadd.f32 %v56, %v65
  %v91 = vadd.f32 %v57, %v69
  %v92 = vadd.f32 %v58, %v73
  %v93 = vadd.f32 %v59, %v77
  %v94 = vmax.f32 %v82, 0.0
  %v95 = vmax.f32 %v83, 0.0
  %v96 = vmax.f32 %v84, 0.0
  %v97 = vmax.f32 %v85, 0.0
  %v98 = vmax.f32 %v86, 0.0
  %v99 = vmax.f32 %v87, 0.0
  %v100 = vmax.f32 %v88, 0.0
  %v101 = vmax.f32 %v89, 0.0
  %v102 = vmax.f32 %v90, 0.0
  %v103 = vmax.f32 %v91, 0.0
  %v104 = vmax.f32 %v92, 0.0
  %v105 = vmax.f32 %v93, 0.0
  %106 = vst [vmem:[%s3] sm:$0xff] %v94
  %107 = vst [vmem:[%s3 + $0x8] sm:$0xff] %v95
  %108 = vst [vmem:[%s3 + $0x10] sm:$0xff] %v96
  %109 = vst [vmem:[%s3 + $0x18] sm:$0xff] %v97
  %110 = vst [vmem:[%s3 + $0x20] sm:$0xff] %v98
  %111 = vst [vmem:[%s3 + $0x28] sm:$0xff] %v99
  %112 = vst [vmem:[%s3 + $0x30] sm:$0xff] %v100
  %113 = vst [vmem:[%s3 + $0x38] sm:$0xff] %v101
  %114 = vst [vmem:[%s3 + $0x40] sm:$0xff] %v102
  %115 = vst [vmem:[%s3 + $0x48] sm:$0xff] %v103
  %116 = vst [vmem:[%s3 + $0x50] sm:$0xff] %v104
  %117 = vst [vmem:[%s3 + $0x58] sm:$0xff] %v105
  // Predicated region
  $region14: #{patchgan_forward.17} parent=0 // pred_check
    _
  $region15: #{patchgan_forward.17} parent=0 // pred_check_branch
    %119 = sbr.rel (0) target = $region17
  $region16: #{patchgan_forward.17} parent=0 // pred_region
    _
  $region17: #{patchgan_forward.17} parent=0 // pred_fallthru
    _
  // Predicated region
  $region18: #{patchgan_forward.17} parent=0 // pred_check
    _
  $region19: #{patchgan_forward.17} parent=0 // pred_check_branch
    %121 = sbr.rel (0) target = $region21
  $region20: #{patchgan_forward.17} parent=0 // pred_region
    _
  $region21: #{patchgan_forward.17} parent=0 // pred_fallthru
    _

// kernel: patchgan_forward.16
$region0: #{patchgan_forward.16}
  #allocation0 [shape = 'u32[]', space=smem, size = 0x4, offset = 0x4, fixed_abs, tag = 'smem constant byte address 0x4 - core index']
  #allocation1 [shape = 'u32[144,128]{1,0:T(1,128)}', space=vmem, size = 0x12000, scoped, tag = 'internal scratch']
  %s0 = inlined_call_operand.vmem [shape: f32[24,4096], index: 0, kind: input, shape index: {}]
  %s1 = inlined_call_operand.vmem [shape: f32[4096,512], index: 1, kind: input, shape index: {}]
  %s2 = inlined_call_operand.vmem [shape: f32[24,512], index: 2, kind: output, shape index: {0}]
  %s3 = inlined_call_operand.vmem [shape: f32[8,512], index: 3, kind: output, shape index: {1}]
  %s4 = inlined_call_operand.vmem [shape: f32[8,512], index: 4, kind: output, shape index: {2}]
  %5 = xla_tuple %s2, %s3, %s4
  %s6 = sld [smem:[#allocation0]]
  $region88: #{patchgan_forward.16} parent=0
    _
  %s8 = ssub.s32 1, %s6
  %s9 = scalar_select 0, %s8, %s6
  $region1: #{patchgan_forward.16} parent=0
    #allocation2 [shape = 'u8[196608]{0}', space=vmem, size = 0x30000, scoped, tag = 'input window, operand 0']
    loop: start=0, step=1, limit=6
    $region2: #{patchgan_forward.16} parent=1 // loop_pre_header
      _
    $region3: #{patchgan_forward.16} parent=1 // loop_header
      %s11 = sphi 0, %s15
      %p12 = scmp.ge.s32.totalorder %s11, 6
      %s18 = sphi 0, %s30
      %s19 = sphi 0, %s26
      %s20 = sphi 0, %s18
      %s21 = sphi 0, %s19
      %s22 = sphi 0, %s20
      %s23 = sphi 0, %s21
      %s35 = sphi 0, %s37
      %s38 = sphi 0, %s35
      %s39 = sphi 0, %s38
      %s55 = sphi 0, %s39
      %s61 = sphi 0, %s63
      %s64 = sphi 0, %s61
      %s65 = sphi 0, %s64
      %s81 = sphi 0, %s65
      %s87 = sphi 0, %s89
      %s90 = sphi 0, %s87
      %s91 = sphi 0, %s90
      %s107 = sphi 0, %s91
      %s113 = sphi 0, %s115
      %s116 = sphi 0, %s113
      %s117 = sphi 0, %s116
      %s133 = sphi 0, %s117
      %s139 = sphi 0, %s141
      %s142 = sphi 0, %s139
      %s143 = sphi 0, %s142
      %s159 = sphi 0, %s143
    $region4: #{patchgan_forward.16} parent=1 // loop_header_branch
      %14 = sbr.rel (%p12) target = $region8
    $region5: #{patchgan_forward.16} parent=1 // loop_body
      %s16 = ssub.s32 %s11, 1
      %s17 = ssub.s32 %s11, 2
      %s24 = sadd.s32 1, %s19
      %p25 = scmp.ge.s32.totalorder %s24, 4
      %s26 = scalar_select %p25, 0, %s24
      %s27 = sadd.s32 1, %s18
      %s28 = scalar_select %p25, %s27, %s18
      %p29 = scmp.ge.s32.totalorder %s28, 1
      %s30 = scalar_select %p29, 0, %s28
      %s31 = ssub.s32 %s18, %s30
      %s32 = ssub.s32 %s19, %s26
      %s33 = sor.u32 %s31, %s32
      %p34 = scmp.eq.s32.totalorder %s33, 0
      %s36 = sadd.s32 %s35, 1
      %s37 = scalar_select %p34, %s35, %s36
      %p40 = pneg %p34
      %p41 = scmp.eq.s32.totalorder %s11, 3
      %p42 = por %p40, %p41
      %p43 = scmp.ne.s32.totalorder %s35, %s38
      %p44 = scmp.eq.s32.totalorder %s11, 0
      %p45 = por %p43, %p44
      %p46 = scmp.ne.s32.totalorder %s35, %s38
      %p47 = scmp.eq.s32.totalorder %s16, 3
      %p48 = por %p46, %p47
      %p49 = scmp.ne.s32.totalorder %s38, %s39
      %p50 = scmp.eq.s32.totalorder %s16, 0
      %p51 = por %p49, %p50
      %p52 = scmp.ne.s32.totalorder %s38, %s39
      %p53 = scmp.eq.s32.totalorder %s17, 3
      %p54 = por %p52, %p53
      %p56 = scmp.ne.s32.totalorder %s39, %s55
      %p57 = scmp.eq.s32.totalorder %s17, 0
      %p58 = por %p56, %p57
      %s59 = ssub.s32 %s19, %s26
      %p60 = scmp.eq.s32.totalorder %s59, 0
      %s62 = sadd.s32 %s61, 1
      %s63 = scalar_select %p60, %s61, %s62
      %p66 = pneg %p60
      %p67 = scmp.eq.s32.totalorder %s11, 3
      %p68 = por %p66, %p67
      %p69 = scmp.ne.s32.totalorder %s61, %s64
      %p70 = scmp.eq.s32.totalorder %s11, 0
      %p71 = por %p69, %p70
      %p72 = scmp.ne.s32.totalorder %s61, %s64
      %p73 = scmp.eq.s32.totalorder %s16, 3
      %p74 = por %p72, %p73
      %p75 = scmp.ne.s32.totalorder %s64, %s65
      %p76 = scmp.eq.s32.totalorder %s16, 0
      %p77 = por %p75, %p76
      %p78 = scmp.ne.s32.totalorder %s64, %s65
      %p79 = scmp.eq.s32.totalorder %s17, 3
      %p80 = por %p78, %p79
      %p82 = scmp.ne.s32.totalorder %s65, %s81
      %p83 = scmp.eq.s32.totalorder %s17, 0
      %p84 = por %p82, %p83
      %s85 = ssub.s32 %s18, %s30
      %p86 = scmp.eq.s32.totalorder %s85, 0
      %s88 = sadd.s32 %s87, 1
      %s89 = scalar_select %p86, %s87, %s88
      %p92 = pneg %p86
      %p93 = scmp.eq.s32.totalorder %s11, 3
      %p94 = por %p92, %p93
      %p95 = scmp.ne.s32.totalorder %s87, %s90
      %p96 = scmp.eq.s32.totalorder %s11, 0
      %p97 = por %p95, %p96
      %p98 = scmp.ne.s32.totalorder %s87, %s90
      %p99 = scmp.eq.s32.totalorder %s16, 3
      %p100 = por %p98, %p99
      %p101 = scmp.ne.s32.totalorder %s90, %s91
      %p102 = scmp.eq.s32.totalorder %s16, 0
      %p103 = por %p101, %p102
      %p104 = scmp.ne.s32.totalorder %s90, %s91
      %p105 = scmp.eq.s32.totalorder %s17, 3
      %p106 = por %p104, %p105
      %p108 = scmp.ne.s32.totalorder %s91, %s107
      %p109 = scmp.eq.s32.totalorder %s17, 0
      %p110 = por %p108, %p109
      %s111 = ssub.s32 %s18, %s30
      %p112 = scmp.eq.s32.totalorder %s111, 0
      %s114 = sadd.s32 %s113, 1
      %s115 = scalar_select %p112, %s113, %s114
      %p118 = pneg %p112
      %p119 = scmp.eq.s32.totalorder %s11, 3
      %p120 = por %p118, %p119
      %p121 = scmp.ne.s32.totalorder %s113, %s116
      %p122 = scmp.eq.s32.totalorder %s11, 0
      %p123 = por %p121, %p122
      %p124 = scmp.ne.s32.totalorder %s113, %s116
      %p125 = scmp.eq.s32.totalorder %s16, 3
      %p126 = por %p124, %p125
      %p127 = scmp.ne.s32.totalorder %s116, %s117
      %p128 = scmp.eq.s32.totalorder %s16, 0
      %p129 = por %p127, %p128
      %p130 = scmp.ne.s32.totalorder %s116, %s117
      %p131 = scmp.eq.s32.totalorder %s17, 3
      %p132 = por %p130, %p131
      %p134 = scmp.ne.s32.totalorder %s117, %s133
      %p135 = scmp.eq.s32.totalorder %s17, 0
      %p136 = por %p134, %p135
      %s137 = ssub.s32 %s18, %s30
      %p138 = scmp.eq.s32.totalorder %s137, 0
      %s140 = sadd.s32 %s139, 1
      %s141 = scalar_select %p138, %s139, %s140
      %p144 = pneg %p138
      %p145 = scmp.eq.s32.totalorder %s11, 3
      %p146 = por %p144, %p145
      %p147 = scmp.ne.s32.totalorder %s139, %s142
      %p148 = scmp.eq.s32.totalorder %s11, 0
      %p149 = por %p147, %p148
      %p150 = scmp.ne.s32.totalorder %s139, %s142
      %p151 = scmp.eq.s32.totalorder %s16, 3
      %p152 = por %p150, %p151
      %p153 = scmp.ne.s32.totalorder %s142, %s143
      %p154 = scmp.eq.s32.totalorder %s16, 0
      %p155 = por %p153, %p154
      %p156 = scmp.ne.s32.totalorder %s142, %s143
      %p157 = scmp.eq.s32.totalorder %s17, 3
      %p158 = por %p156, %p157
      %p160 = scmp.ne.s32.totalorder %s143, %s159
      %p161 = scmp.eq.s32.totalorder %s17, 0
      %p162 = por %p160, %p161
      %p163 = scmp.le.s32.totalorder 1, %s11
      %p164 = scmp.lt.s32.totalorder %s11, 5
      %p165 = pnand %p163, %p164
      %p166 = pneg %p165
      // Predicated region
      $region9: #{patchgan_forward.16} parent=5 // pred_check
        _
      $region10: #{patchgan_forward.16} parent=5 // pred_check_branch
        %168 = sbr.rel (%p165) target = $region12
      $region11: #{patchgan_forward.16} parent=5 // pred_region
        %s169 = ssub.s32 %s11, 1
      $region12: #{patchgan_forward.16} parent=5 // pred_fallthru
        _
      %p170 = scmp.lt.s32.totalorder %s11, 4
      // Predicated region
      $region13: #{patchgan_forward.16} parent=5 // pred_check
        %p171 = pneg %p170
      $region14: #{patchgan_forward.16} parent=5 // pred_check_branch
        %173 = sbr.rel (%p171) target = $region16
      $region15: #{patchgan_forward.16} parent=5 // pred_region
        // Predicated region
        $region17: #{patchgan_forward.16} parent=15 // pred_check
          %p174 = pneg %p45
        $region18: #{patchgan_forward.16} parent=15 // pred_check_branch
          %176 = sbr.rel (%p174) target = $region20
        $region19: #{patchgan_forward.16} parent=15 // pred_region
          %s177 = sand.u32 %s35, 1
          %s178 = sand.u32 %s35, 1
          %s179 = smul.addr %s178, 192
          %s180 = scalar_lea.vmem [#allocation2], %s179
          %s181 = smul.u32 3, %s18
          %s182 = smul.u32 8, %s19
          %s183 = smul.addr %s181, 32
          %s184 = sadd.s32 %s182, %s183
          %s185 = smul.addr %s184, 8
          %s186 = scalar_lea.vmem %s0, %s185
          // Predicated region
          $region21: #{patchgan_forward.16} parent=19 // pred_check
            _
          $region22: #{patchgan_forward.16} parent=19 // pred_check_branch
            %188 = sbr.rel (0) target = $region24
          $region23: #{patchgan_forward.16} parent=19 // pred_region
            // Predicated region
            $region25: #{patchgan_forward.16} parent=23 // pred_check
              _
            $region26: #{patchgan_forward.16} parent=23 // pred_check_branch
              %190 = sbr.rel (0) target = $region28
            $region27: #{patchgan_forward.16} parent=23 // pred_region
              loop: start=0, step=1, limit=1
              $region29: #{patchgan_forward.16} parent=27 // loop_pre_header
                _
              $region30: #{patchgan_forward.16} parent=27 // loop_header
                %s192 = sphi 0, %s196
                %p193 = scmp.ge.s32.totalorder %s192, 1
                %s197 = sphi %s186, %s186
                %s198 = sphi %s180, %s180
              $region31: #{patchgan_forward.16} parent=27 // loop_header_branch
                %195 = sbr.rel (%p193) target = $region35
              $region32: #{patchgan_forward.16} parent=27 // loop_body
                %v199 = vld [vmem:[%s197] sm:$0xff]
                %200 = vst [vmem:[%s198] sm:$0xff] %v199
                %v201 = vld [vmem:[%s197 + $0x8] sm:$0xff]
                %202 = vst [vmem:[%s198 + $0x8] sm:$0xff] %v201
                %v203 = vld [vmem:[%s197 + $0x10] sm:$0xff]
                %204 = vst [vmem:[%s198 + $0x10] sm:$0xff] %v203
                %v205 = vld [vmem:[%s197 + $0x18] sm:$0xff]
                %206 = vst [vmem:[%s198 + $0x18] sm:$0xff] %v205
                %v207 = vld [vmem:[%s197 + $0x20] sm:$0xff]
                %208 = vst [vmem:[%s198 + $0x20] sm:$0xff] %v207
                %v209 = vld [vmem:[%s197 + $0x28] sm:$0xff]
                %210 = vst [vmem:[%s198 + $0x28] sm:$0xff] %v209
                %v211 = vld [vmem:[%s197 + $0x30] sm:$0xff]
                %212 = vst [vmem:[%s198 + $0x30] sm:$0xff] %v211
                %v213 = vld [vmem:[%s197 + $0x38] sm:$0xff]
                %214 = vst [vmem:[%s198 + $0x38] sm:$0xff] %v213
                %v215 = vld [vmem:[%s197 + $0x100] sm:$0xff]
                %216 = vst [vmem:[%s198 + $0x40] sm:$0xff] %v215
                %v217 = vld [vmem:[%s197 + $0x108] sm:$0xff]
                %218 = vst [vmem:[%s198 + $0x48] sm:$0xff] %v217
                %v219 = vld [vmem:[%s197 + $0x110] sm:$0xff]
                %220 = vst [vmem:[%s198 + $0x50] sm:$0xff] %v219
                %v221 = vld [vmem:[%s197 + $0x118] sm:$0xff]
                %222 = vst [vmem:[%s198 + $0x58] sm:$0xff] %v221
                %v223 = vld [vmem:[%s197 + $0x120] sm:$0xff]
                %224 = vst [vmem:[%s198 + $0x60] sm:$0xff] %v223
                %v225 = vld [vmem:[%s197 + $0x128] sm:$0xff]
                %226 = vst [vmem:[%s198 + $0x68] sm:$0xff] %v225
                %v227 = vld [vmem:[%s197 + $0x130] sm:$0xff]
                %228 = vst [vmem:[%s198 + $0x70] sm:$0xff] %v227
                %v229 = vld [vmem:[%s197 + $0x138] sm:$0xff]
                %230 = vst [vmem:[%s198 + $0x78] sm:$0xff] %v229
                %v231 = vld [vmem:[%s197 + $0x200] sm:$0xff]
                %232 = vst [vmem:[%s198 + $0x80] sm:$0xff] %v231
                %v233 = vld [vmem:[%s197 + $0x208] sm:$0xff]
                %234 = vst [vmem:[%s198 + $0x88] sm:$0xff] %v233
                %v235 = vld [vmem:[%s197 + $0x210] sm:$0xff]
                %236 = vst [vmem:[%s198 + $0x90] sm:$0xff] %v235
                %v237 = vld [vmem:[%s197 + $0x218] sm:$0xff]
                %238 = vst [vmem:[%s198 + $0x98] sm:$0xff] %v237
                %v239 = vld [vmem:[%s197 + $0x220] sm:$0xff]
                %240 = vst [vmem:[%s198 + $0xa0] sm:$0xff] %v239
                %v241 = vld [vmem:[%s197 + $0x228] sm:$0xff]
                %242 = vst [vmem:[%s198 + $0xa8] sm:$0xff] %v241
                %v243 = vld [vmem:[%s197 + $0x230] sm:$0xff]
                %244 = vst [vmem:[%s198 + $0xb0] sm:$0xff] %v243
                %v245 = vld [vmem:[%s197 + $0x238] sm:$0xff]
                %246 = vst [vmem:[%s198 + $0xb8] sm:$0xff] %v245
              $region33: #{patchgan_forward.16} parent=27 // loop_footer
                %s196 = sadd.s32 1, %s192
              $region34: #{patchgan_forward.16} parent=27 // loop_footer_branch
                %191 = sbr.rel target = $region30
              $region35: #{patchgan_forward.16} parent=27 // loop_exit
                _
            $region28: #{patchgan_forward.16} parent=23 // pred_fallthru
              _
            // Predicated region
            $region36: #{patchgan_forward.16} parent=23 // pred_check
              _
            $region37: #{patchgan_forward.16} parent=23 // pred_check_branch
              %248 = sbr.rel target = $region39
            $region38: #{patchgan_forward.16} parent=23 // pred_region
              _
            $region39: #{patchgan_forward.16} parent=23 // pred_fallthru
              _
          $region24: #{patchgan_forward.16} parent=19 // pred_fallthru
            _
          %249 = vnop
        $region20: #{patchgan_forward.16} parent=15 // pred_fallthru
          _
        // Predicated region
        $region40: #{patchgan_forward.16} parent=15 // pred_check
          %p250 = pneg %p71
        $region41: #{patchgan_forward.16} parent=15 // pred_check_branch
          %252 = sbr.rel (%p250) target = $region43
        $region42: #{patchgan_forward.16} parent=15 // pred_region
          %s253 = smul.u32 128, %s19
          %p254 = scmp.lt.s32.totalorder %s253, 511
          %s255 = scalar_select %p254, %s253, 511
          %s256 = smul.addr %s255, 4
          %s257 = smul.addr %s256, 8
          %s258 = scalar_lea.vmem %s1, %s257
          %s259 = smul.u32 128, %s19
        $region43: #{patchgan_forward.16} parent=15 // pred_fallthru
          _
      $region16: #{patchgan_forward.16} parent=5 // pred_fallthru
        _
      %p260 = scmp.le.s32.totalorder 1, %s11
      %p261 = scmp.lt.s32.totalorder %s11, 5
      %p262 = pnand %p260, %p261
      %p263 = pneg %p262
      // Predicated region
      $region44: #{patchgan_forward.16} parent=5 // pred_check
        _
      $region45: #{patchgan_forward.16} parent=5 // pred_check_branch
        %265 = sbr.rel (%p262) target = $region47
      $region46: #{patchgan_forward.16} parent=5 // pred_region
        %s266 = ssub.s32 %s11, 1
        %s267 = sand.u32 %s38, 1
        %s268 = sand.u32 %s38, 1
        %s269 = smul.addr %s268, 192
        %s270 = scalar_lea.vmem [#allocation2], %s269
        // Predicated region
        $region48: #{patchgan_forward.16} parent=46 // pred_check
          %p271 = pneg %p51
        $region49: #{patchgan_forward.16} parent=46 // pred_check_branch
          %273 = sbr.rel (%p271) target = $region51
        $region50: #{patchgan_forward.16} parent=46 // pred_region
          _
        $region51: #{patchgan_forward.16} parent=46 // pred_fallthru
          _
        %s274 = sand.u32 %s38, 1
        %s275 = sand.u32 %s38, 1
        %s276 = smul.addr %s275, 192
        %s277 = scalar_lea.vmem [#allocation2], %s276
        %p278 = pneg %p51
        %p279 = pneg %p48
        %s280 = smul.u32 128, %s21
        %p281 = scmp.lt.s32.totalorder %s280, 511
        %s282 = scalar_select %p281, %s280, 511
        %s283 = smul.addr %s282, 4
        %s284 = smul.addr %s283, 8
        %s285 = scalar_lea.vmem %s1, %s284
        %p286 = pneg %p77
        %p287 = pneg %p74
        %p288 = pneg %p103
        %p289 = pneg %p100
        %s290 = smul.u32 3, %s20
        %p291 = scmp.lt.s32.totalorder %s290, 2
        %s292 = scalar_select %p291, %s290, 2
        %s293 = smul.addr %s292, 4
        %s294 = smul.addr %s293, 8
        %s295 = scalar_lea.vmem %s2, %s294
        %p296 = pneg %p129
        %p297 = pneg %p126
        %p298 = scmp.lt.s32.totalorder %s20, 0
        %s299 = scalar_select %p298, %s20, 0
        %s300 = smul.addr %s299, 4
        %s301 = smul.addr %s300, 8
        %s302 = scalar_lea.vmem %s3, %s301
        %p303 = pneg %p155
        %p304 = pneg %p152
        %p305 = scmp.lt.s32.totalorder %s20, 0
        %s306 = scalar_select %p305, %s20, 0
        %s307 = smul.addr %s306, 4
        %s308 = smul.addr %s307, 8
        %s309 = scalar_lea.vmem %s4, %s308
        %s310 = smul.u32 3, %s20
        %s311 = smul.u32 8, %s21
        %s312 = smul.u32 128, %s21
        %p313 = scmp.lt.s32.totalorder %s312, 511
        %s314 = scalar_select %p313, %s312, 511
        %s315 = smul.addr %s314, 4
        %s316 = smul.addr %s315, 8
        %s317 = scalar_lea.vmem %s1, %s316
        %s318 = smul.u32 128, %s21
        %s319 = smul.u32 3, %s20
        %p320 = scmp.lt.s32.totalorder %s319, 2
        %s321 = scalar_select %p320, %s319, 2
        %s322 = smul.addr %s321, 4
        %s323 = smul.addr %s322, 8
        %s324 = scalar_lea.vmem %s2, %s323
        %s325 = smul.u32 3, %s20
        %p326 = scmp.lt.s32.totalorder %s20, 0
        %s327 = scalar_select %p326, %s20, 0
        %s328 = smul.addr %s327, 4
        %s329 = smul.addr %s328, 8
        %s330 = scalar_lea.vmem %s3, %s329
        %p331 = scmp.lt.s32.totalorder %s20, 0
        %s332 = scalar_select %p331, %s20, 0
        %s333 = smul.addr %s332, 4
        %s334 = smul.addr %s333, 8
        %s335 = scalar_lea.vmem %s4, %s334
        %p336 = scmp.eq.s32.totalorder %s21, 0
        // Predicated region
        $region52: #{patchgan_forward.16} parent=46 // pred_check
          %p337 = pneg %p336
        $region53: #{patchgan_forward.16} parent=46 // pred_check_branch
          %339 = sbr.rel (%p337) target = $region55
        $region54: #{patchgan_forward.16} parent=46 // pred_region
          %340 = vst [vmem:[%s324] sm:$0xff] 0.0
          %341 = vst [vmem:[%s324 + $0x8] sm:$0xff] 0.0
          %342 = vst [vmem:[%s324 + $0x10] sm:$0xff] 0.0
          %343 = vst [vmem:[%s324 + $0x18] sm:$0xff] 0.0
          %344 = vst [vmem:[%s324 + $0x20] sm:$0xff] 0.0
          %345 = vst [vmem:[%s324 + $0x28] sm:$0xff] 0.0
          %346 = vst [vmem:[%s324 + $0x30] sm:$0xff] 0.0
          %347 = vst [vmem:[%s324 + $0x38] sm:$0xff] 0.0
          %348 = vst [vmem:[%s324 + $0x40] sm:$0xff] 0.0
          %349 = vst [vmem:[%s324 + $0x48] sm:$0xff] 0.0
          %350 = vst [vmem:[%s324 + $0x50] sm:$0xff] 0.0
          %351 = vst [vmem:[%s324 + $0x58] sm:$0xff] 0.0
        $region55: #{patchgan_forward.16} parent=46 // pred_fallthru
          _
        %v352 = vld [vmem:[%s324] sm:$0xff]
        %v353 = vld [vmem:[%s324 + $0x8] sm:$0xff]
        %v354 = vld [vmem:[%s324 + $0x10] sm:$0xff]
        %v355 = vld [vmem:[%s324 + $0x18] sm:$0xff]
        %v356 = vld [vmem:[%s324 + $0x20] sm:$0xff]
        %v357 = vld [vmem:[%s324 + $0x28] sm:$0xff]
        %v358 = vld [vmem:[%s324 + $0x30] sm:$0xff]
        %v359 = vld [vmem:[%s324 + $0x38] sm:$0xff]
        %v360 = vld [vmem:[%s324 + $0x40] sm:$0xff]
        %v361 = vld [vmem:[%s324 + $0x48] sm:$0xff]
        %v362 = vld [vmem:[%s324 + $0x50] sm:$0xff]
        %v363 = vld [vmem:[%s324 + $0x58] sm:$0xff]
        %v364 = vld [vmem:[%s270] sm:$0xff]
        %v365 = vld [vmem:[%s270 + $0x8] sm:$0xff]
        %v366 = vld [vmem:[%s270 + $0x10] sm:$0xff]
        %v367 = vld [vmem:[%s270 + $0x18] sm:$0xff]
        %v368 = vld [vmem:[%s270 + $0x20] sm:$0xff]
        %v369 = vld [vmem:[%s270 + $0x28] sm:$0xff]
        %v370 = vld [vmem:[%s270 + $0x30] sm:$0xff]
        %v371 = vld [vmem:[%s270 + $0x38] sm:$0xff]
        %v372 = vld [vmem:[%s270 + $0x40] sm:$0xff]
        %v373 = vld [vmem:[%s270 + $0x48] sm:$0xff]
        %v374 = vld [vmem:[%s270 + $0x50] sm:$0xff]
        %v375 = vld [vmem:[%s270 + $0x58] sm:$0xff]
        %v376 = vld [vmem:[%s270 + $0x60] sm:$0xff]
        %v377 = vld [vmem:[%s270 + $0x68] sm:$0xff]
        %v378 = vld [vmem:[%s270 + $0x70] sm:$0xff]
        %v379 = vld [vmem:[%s270 + $0x78] sm:$0xff]
        %v380 = vld [vmem:[%s270 + $0x80] sm:$0xff]
        %v381 = vld [vmem:[%s270 + $0x88] sm:$0xff]
        %v382 = vld [vmem:[%s270 + $0x90] sm:$0xff]
        %v383 = vld [vmem:[%s270 + $0x98] sm:$0xff]
        %v384 = vld [vmem:[%s270 + $0xa0] sm:$0xff]
        %v385 = vld [vmem:[%s270 + $0xa8] sm:$0xff]
        %v386 = vld [vmem:[%s270 + $0xb0] sm:$0xff]
        %v387 = vld [vmem:[%s270 + $0xb8] sm:$0xff]
        %v388 = vld [vmem:[%s317] sm:$0xff]
        %v389 = vld [vmem:[%s317 + $0x8] sm:$0xff]
        %v390 = vld [vmem:[%s317 + $0x10] sm:$0xff]
        %v391 = vld [vmem:[%s317 + $0x18] sm:$0xff]
        %v392 = vld [vmem:[%s317 + $0x20] sm:$0xff]
        %v393 = vld [vmem:[%s317 + $0x28] sm:$0xff]
        %v394 = vld [vmem:[%s317 + $0x30] sm:$0xff]
        %v395 = vld [vmem:[%s317 + $0x38] sm:$0xff]
        %v396 = vld [vmem:[%s317 + $0x40] sm:$0xff]
        %v397 = vld [vmem:[%s317 + $0x48] sm:$0xff]
        %v398 = vld [vmem:[%s317 + $0x50] sm:$0xff]
        %v399 = vld [vmem:[%s317 + $0x58] sm:$0xff]
        %v400 = vld [vmem:[%s317 + $0x60] sm:$0xff]
        %v401 = vld [vmem:[%s317 + $0x68] sm:$0xff]
        %v402 = vld [vmem:[%s317 + $0x70] sm:$0xff]
        %v403 = vld [vmem:[%s317 + $0x78] sm:$0xff]
        %v404 = vld [vmem:[%s317 + $0x80] sm:$0xff]
        %v405 = vld [vmem:[%s317 + $0x88] sm:$0xff]
        %v406 = vld [vmem:[%s317 + $0x90] sm:$0xff]
        %v407 = vld [vmem:[%s317 + $0x98] sm:$0xff]
        %v408 = vld [vmem:[%s317 + $0xa0] sm:$0xff]
        %v409 = vld [vmem:[%s317 + $0xa8] sm:$0xff]
        %v410 = vld [vmem:[%s317 + $0xb0] sm:$0xff]
        %v411 = vld [vmem:[%s317 + $0xb8] sm:$0xff]
        %v412 = vld [vmem:[%s317 + $0xc0] sm:$0xff]
        %v413 = vld [vmem:[%s317 + $0xc8] sm:$0xff]
        %v414 = vld [vmem:[%s317 + $0xd0] sm:$0xff]
        %v415 = vld [vmem:[%s317 + $0xd8] sm:$0xff]
        %v416 = vld [vmem:[%s317 + $0xe0] sm:$0xff]
        %v417 = vld [vmem:[%s317 + $0xe8] sm:$0xff]
        %v418 = vld [vmem:[%s317 + $0xf0] sm:$0xff]
        %v419 = vld [vmem:[%s317 + $0xf8] sm:$0xff]
        %v420 = vld [vmem:[%s317 + $0x100] sm:$0xff]
        %v421 = vld [vmem:[%s317 + $0x108] sm:$0xff]
        %v422 = vld [vmem:[%s317 + $0x110] sm:$0xff]
        %v423 = vld [vmem:[%s317 + $0x118] sm:$0xff]
        %v424 = vld [vmem:[%s317 + $0x120] sm:$0xff]
        %v425 = vld [vmem:[%s317 + $0x128] sm:$0xff]
        %v426 = vld [vmem:[%s317 + $0x130] sm:$0xff]
        %v427 = vld [vmem:[%s317 + $0x138] sm:$0xff]
        %v428 = vld [vmem:[%s317 + $0x140] sm:$0xff]
        %v429 = vld [vmem:[%s317 + $0x148] sm:$0xff]
        %v430 = vld [vmem:[%s317 + $0x150] sm:$0xff]
        %v431 = vld [vmem:[%s317 + $0x158] sm:$0xff]
        %v432 = vld [vmem:[%s317 + $0x160] sm:$0xff]
        %v433 = vld [vmem:[%s317 + $0x168] sm:$0xff]
        %v434 = vld [vmem:[%s317 + $0x170] sm:$0xff]
        %v435 = vld [vmem:[%s317 + $0x178] sm:$0xff]
        %v436 = vld [vmem:[%s317 + $0x180] sm:$0xff]
        %v437 = vld [vmem:[%s317 + $0x188] sm:$0xff]
        %v438 = vld [vmem:[%s317 + $0x190] sm:$0xff]
        %v439 = vld [vmem:[%s317 + $0x198] sm:$0xff]
        %v440 = vld [vmem:[%s317 + $0x1a0] sm:$0xff]
        %v441 = vld [vmem:[%s317 + $0x1a8] sm:$0xff]
        %v442 = vld [vmem:[%s317 + $0x1b0] sm:$0xff]
        %v443 = vld [vmem:[%s317 + $0x1b8] sm:$0xff]
        %v444 = vld [vmem:[%s317 + $0x1c0] sm:$0xff]
        %v445 = vld [vmem:[%s317 + $0x1c8] sm:$0xff]
        %v446 = vld [vmem:[%s317 + $0x1d0] sm:$0xff]
        %v447 = vld [vmem:[%s317 + $0x1d8] sm:$0xff]
        %v448 = vld [vmem:[%s317 + $0x1e0] sm:$0xff]
        %v449 = vld [vmem:[%s317 + $0x1e8] sm:$0xff]
        %v450 = vld [vmem:[%s317 + $0x1f0] sm:$0xff]
        %v451 = vld [vmem:[%s317 + $0x1f8] sm:$0xff]
        %v452 = vld [vmem:[%s317 + $0x200] sm:$0xff]
        %v453 = vld [vmem:[%s317 + $0x208] sm:$0xff]
        %v454 = vld [vmem:[%s317 + $0x210] sm:$0xff]
        %v455 = vld [vmem:[%s317 + $0x218] sm:$0xff]
        %v456 = vld [vmem:[%s317 + $0x220] sm:$0xff]
        %v457 = vld [vmem:[%s317 + $0x228] sm:$0xff]
        %v458 = vld [vmem:[%s317 + $0x230] sm:$0xff]
        %v459 = vld [vmem:[%s317 + $0x238] sm:$0xff]
        %v460 = vld [vmem:[%s317 + $0x240] sm:$0xff]
        %v461 = vld [vmem:[%s317 + $0x248] sm:$0xff]
        %v462 = vld [vmem:[%s317 + $0x250] sm:$0xff]
        %v463 = vld [vmem:[%s317 + $0x258] sm:$0xff]
        %v464 = vld [vmem:[%s317 + $0x260] sm:$0xff]
        %v465 = vld [vmem:[%s317 + $0x268] sm:$0xff]
        %v466 = vld [vmem:[%s317 + $0x270] sm:$0xff]
        %v467 = vld [vmem:[%s317 + $0x278] sm:$0xff]
        %v468 = vld [vmem:[%s317 + $0x280] sm:$0xff]
        %v469 = vld [vmem:[%s317 + $0x288] sm:$0xff]
        %v470 = vld [vmem:[%s317 + $0x290] sm:$0xff]
        %v471 = vld [vmem:[%s317 + $0x298] sm:$0xff]
        %v472 = vld [vmem:[%s317 + $0x2a0] sm:$0xff]
        %v473 = vld [vmem:[%s317 + $0x2a8] sm:$0xff]
        %v474 = vld [vmem:[%s317 + $0x2b0] sm:$0xff]
        %v475 = vld [vmem:[%s317 + $0x2b8] sm:$0xff]
        %v476 = vld [vmem:[%s317 + $0x2c0] sm:$0xff]
        %v477 = vld [vmem:[%s317 + $0x2c8] sm:$0xff]
        %v478 = vld [vmem:[%s317 + $0x2d0] sm:$0xff]
        %v479 = vld [vmem:[%s317 + $0x2d8] sm:$0xff]
        %v480 = vld [vmem:[%s317 + $0x2e0] sm:$0xff]
        %v481 = vld [vmem:[%s317 + $0x2e8] sm:$0xff]
        %v482 = vld [vmem:[%s317 + $0x2f0] sm:$0xff]
        %v483 = vld [vmem:[%s317 + $0x2f8] sm:$0xff]
        %v484 = vld [vmem:[%s317 + $0x300] sm:$0xff]
        %v485 = vld [vmem:[%s317 + $0x308] sm:$0xff]
        %v486 = vld [vmem:[%s317 + $0x310] sm:$0xff]
        %v487 = vld [vmem:[%s317 + $0x318] sm:$0xff]
        %v488 = vld [vmem:[%s317 + $0x320] sm:$0xff]
        %v489 = vld [vmem:[%s317 + $0x328] sm:$0xff]
        %v490 = vld [vmem:[%s317 + $0x330] sm:$0xff]
        %v491 = vld [vmem:[%s317 + $0x338] sm:$0xff]
        %v492 = vld [vmem:[%s317 + $0x340] sm:$0xff]
        %v493 = vld [vmem:[%s317 + $0x348] sm:$0xff]
        %v494 = vld [vmem:[%s317 + $0x350] sm:$0xff]
        %v495 = vld [vmem:[%s317 + $0x358] sm:$0xff]
        %v496 = vld [vmem:[%s317 + $0x360] sm:$0xff]
        %v497 = vld [vmem:[%s317 + $0x368] sm:$0xff]
        %v498 = vld [vmem:[%s317 + $0x370] sm:$0xff]
        %v499 = vld [vmem:[%s317 + $0x378] sm:$0xff]
        %v500 = vld [vmem:[%s317 + $0x380] sm:$0xff]
        %v501 = vld [vmem:[%s317 + $0x388] sm:$0xff]
        %v502 = vld [vmem:[%s317 + $0x390] sm:$0xff]
        %v503 = vld [vmem:[%s317 + $0x398] sm:$0xff]
        %v504 = vld [vmem:[%s317 + $0x3a0] sm:$0xff]
        %v505 = vld [vmem:[%s317 + $0x3a8] sm:$0xff]
        %v506 = vld [vmem:[%s317 + $0x3b0] sm:$0xff]
        %v507 = vld [vmem:[%s317 + $0x3b8] sm:$0xff]
        %v508 = vld [vmem:[%s317 + $0x3c0] sm:$0xff]
        %v509 = vld [vmem:[%s317 + $0x3c8] sm:$0xff]
        %v510 = vld [vmem:[%s317 + $0x3d0] sm:$0xff]
        %v511 = vld [vmem:[%s317 + $0x3d8] sm:$0xff]
        %v512 = vld [vmem:[%s317 + $0x3e0] sm:$0xff]
        %v513 = vld [vmem:[%s317 + $0x3e8] sm:$0xff]
        %v514 = vld [vmem:[%s317 + $0x3f0] sm:$0xff]
        %v515 = vld [vmem:[%s317 + $0x3f8] sm:$0xff]
        %v516 = vld [vmem:[%s317 + $0x400] sm:$0xff]
        %v517 = vld [vmem:[%s317 + $0x408] sm:$0xff]
        %v518 = vld [vmem:[%s317 + $0x410] sm:$0xff]
        %v519 = vld [vmem:[%s317 + $0x418] sm:$0xff]
        %v520 = vld [vmem:[%s317 + $0x420] sm:$0xff]
        %v521 = vld [vmem:[%s317 + $0x428] sm:$0xff]
        %v522 = vld [vmem:[%s317 + $0x430] sm:$0xff]
        %v523 = vld [vmem:[%s317 + $0x438] sm:$0xff]
        %v524 = vld [vmem:[%s317 + $0x440] sm:$0xff]
        %v525 = vld [vmem:[%s317 + $0x448] sm:$0xff]
        %v526 = vld [vmem:[%s317 + $0x450] sm:$0xff]
        %v527 = vld [vmem:[%s317 + $0x458] sm:$0xff]
        %v528 = vld [vmem:[%s317 + $0x460] sm:$0xff]
        %v529 = vld [vmem:[%s317 + $0x468] sm:$0xff]
        %v530 = vld [vmem:[%s317 + $0x470] sm:$0xff]
        %v531 = vld [vmem:[%s317 + $0x478] sm:$0xff]
        %v532 = vld [vmem:[%s317 + $0x480] sm:$0xff]
        %v533 = vld [vmem:[%s317 + $0x488] sm:$0xff]
        %v534 = vld [vmem:[%s317 + $0x490] sm:$0xff]
        %v535 = vld [vmem:[%s317 + $0x498] sm:$0xff]
        %v536 = vld [vmem:[%s317 + $0x4a0] sm:$0xff]
        %v537 = vld [vmem:[%s317 + $0x4a8] sm:$0xff]
        %v538 = vld [vmem:[%s317 + $0x4b0] sm:$0xff]
        %v539 = vld [vmem:[%s317 + $0x4b8] sm:$0xff]
        %v540 = vld [vmem:[%s317 + $0x4c0] sm:$0xff]
        %v541 = vld [vmem:[%s317 + $0x4c8] sm:$0xff]
        %v542 = vld [vmem:[%s317 + $0x4d0] sm:$0xff]
        %v543 = vld [vmem:[%s317 + $0x4d8] sm:$0xff]
        %v544 = vld [vmem:[%s317 + $0x4e0] sm:$0xff]
        %v545 = vld [vmem:[%s317 + $0x4e8] sm:$0xff]
        %v546 = vld [vmem:[%s317 + $0x4f0] sm:$0xff]
        %v547 = vld [vmem:[%s317 + $0x4f8] sm:$0xff]
        %v548 = vld [vmem:[%s317 + $0x500] sm:$0xff]
        %v549 = vld [vmem:[%s317 + $0x508] sm:$0xff]
        %v550 = vld [vmem:[%s317 + $0x510] sm:$0xff]
        %v551 = vld [vmem:[%s317 + $0x518] sm:$0xff]
        %v552 = vld [vmem:[%s317 + $0x520] sm:$0xff]
        %v553 = vld [vmem:[%s317 + $0x528] sm:$0xff]
        %v554 = vld [vmem:[%s317 + $0x530] sm:$0xff]
        %v555 = vld [vmem:[%s317 + $0x538] sm:$0xff]
        %v556 = vld [vmem:[%s317 + $0x540] sm:$0xff]
        %v557 = vld [vmem:[%s317 + $0x548] sm:$0xff]
        %v558 = vld [vmem:[%s317 + $0x550] sm:$0xff]
        %v559 = vld [vmem:[%s317 + $0x558] sm:$0xff]
        %v560 = vld [vmem:[%s317 + $0x560] sm:$0xff]
        %v561 = vld [vmem:[%s317 + $0x568] sm:$0xff]
        %v562 = vld [vmem:[%s317 + $0x570] sm:$0xff]
        %v563 = vld [vmem:[%s317 + $0x578] sm:$0xff]
        %v564 = vld [vmem:[%s317 + $0x580] sm:$0xff]
        %v565 = vld [vmem:[%s317 + $0x588] sm:$0xff]
        %v566 = vld [vmem:[%s317 + $0x590] sm:$0xff]
        %v567 = vld [vmem:[%s317 + $0x598] sm:$0xff]
        %v568 = vld [vmem:[%s317 + $0x5a0] sm:$0xff]
        %v569 = vld [vmem:[%s317 + $0x5a8] sm:$0xff]
        %v570 = vld [vmem:[%s317 + $0x5b0] sm:$0xff]
        %v571 = vld [vmem:[%s317 + $0x5b8] sm:$0xff]
        %v572 = vld [vmem:[%s317 + $0x5c0] sm:$0xff]
        %v573 = vld [vmem:[%s317 + $0x5c8] sm:$0xff]
        %v574 = vld [vmem:[%s317 + $0x5d0] sm:$0xff]
        %v575 = vld [vmem:[%s317 + $0x5d8] sm:$0xff]
        %v576 = vld [vmem:[%s317 + $0x5e0] sm:$0xff]
        %v577 = vld [vmem:[%s317 + $0x5e8] sm:$0xff]
        %v578 = vld [vmem:[%s317 + $0x5f0] sm:$0xff]
        %v579 = vld [vmem:[%s317 + $0x5f8] sm:$0xff]
        %v580 = vld [vmem:[%s317 + $0x600] sm:$0xff]
        %v581 = vld [vmem:[%s317 + $0x608] sm:$0xff]
        %v582 = vld [vmem:[%s317 + $0x610] sm:$0xff]
        %v583 = vld [vmem:[%s317 + $0x618] sm:$0xff]
        %v584 = vld [vmem:[%s317 + $0x620] sm:$0xff]
        %v585 = vld [vmem:[%s317 + $0x628] sm:$0xff]
        %v586 = vld [vmem:[%s317 + $0x630] sm:$0xff]
        %v587 = vld [vmem:[%s317 + $0x638] sm:$0xff]
        %v588 = vld [vmem:[%s317 + $0x640] sm:$0xff]
        %v589 = vld [vmem:[%s317 + $0x648] sm:$0xff]
        %v590 = vld [vmem:[%s317 + $0x650] sm:$0xff]
        %v591 = vld [vmem:[%s317 + $0x658] sm:$0xff]
        %v592 = vld [vmem:[%s317 + $0x660] sm:$0xff]
        %v593 = vld [vmem:[%s317 + $0x668] sm:$0xff]
        %v594 = vld [vmem:[%s317 + $0x670] sm:$0xff]
        %v595 = vld [vmem:[%s317 + $0x678] sm:$0xff]
        %v596 = vld [vmem:[%s317 + $0x680] sm:$0xff]
        %v597 = vld [vmem:[%s317 + $0x688] sm:$0xff]
        %v598 = vld [vmem:[%s317 + $0x690] sm:$0xff]
        %v599 = vld [vmem:[%s317 + $0x698] sm:$0xff]
        %v600 = vld [vmem:[%s317 + $0x6a0] sm:$0xff]
        %v601 = vld [vmem:[%s317 + $0x6a8] sm:$0xff]
        %v602 = vld [vmem:[%s317 + $0x6b0] sm:$0xff]
        %v603 = vld [vmem:[%s317 + $0x6b8] sm:$0xff]
        %v604 = vld [vmem:[%s317 + $0x6c0] sm:$0xff]
        %v605 = vld [vmem:[%s317 + $0x6c8] sm:$0xff]
        %v606 = vld [vmem:[%s317 + $0x6d0] sm:$0xff]
        %v607 = vld [vmem:[%s317 + $0x6d8] sm:$0xff]
        %v608 = vld [vmem:[%s317 + $0x6e0] sm:$0xff]
        %v609 = vld [vmem:[%s317 + $0x6e8] sm:$0xff]
        %v610 = vld [vmem:[%s317 + $0x6f0] sm:$0xff]
        %v611 = vld [vmem:[%s317 + $0x6f8] sm:$0xff]
        %v612 = vld [vmem:[%s317 + $0x700] sm:$0xff]
        %v613 = vld [vmem:[%s317 + $0x708] sm:$0xff]
        %v614 = vld [vmem:[%s317 + $0x710] sm:$0xff]
        %v615 = vld [vmem:[%s317 + $0x718] sm:$0xff]
        %v616 = vld [vmem:[%s317 + $0x720] sm:$0xff]
        %v617 = vld [vmem:[%s317 + $0x728] sm:$0xff]
        %v618 = vld [vmem:[%s317 + $0x730] sm:$0xff]
        %v619 = vld [vmem:[%s317 + $0x738] sm:$0xff]
        %v620 = vld [vmem:[%s317 + $0x740] sm:$0xff]
        %v621 = vld [vmem:[%s317 + $0x748] sm:$0xff]
        %v622 = vld [vmem:[%s317 + $0x750] sm:$0xff]
        %v623 = vld [vmem:[%s317 + $0x758] sm:$0xff]
        %v624 = vld [vmem:[%s317 + $0x760] sm:$0xff]
        %v625 = vld [vmem:[%s317 + $0x768] sm:$0xff]
        %v626 = vld [vmem:[%s317 + $0x770] sm:$0xff]
        %v627 = vld [vmem:[%s317 + $0x778] sm:$0xff]
        %v628 = vld [vmem:[%s317 + $0x780] sm:$0xff]
        %v629 = vld [vmem:[%s317 + $0x788] sm:$0xff]
        %v630 = vld [vmem:[%s317 + $0x790] sm:$0xff]
        %v631 = vld [vmem:[%s317 + $0x798] sm:$0xff]
        %v632 = vld [vmem:[%s317 + $0x7a0] sm:$0xff]
        %v633 = vld [vmem:[%s317 + $0x7a8] sm:$0xff]
        %v634 = vld [vmem:[%s317 + $0x7b0] sm:$0xff]
        %v635 = vld [vmem:[%s317 + $0x7b8] sm:$0xff]
        %v636 = vld [vmem:[%s317 + $0x7c0] sm:$0xff]
        %v637 = vld [vmem:[%s317 + $0x7c8] sm:$0xff]
        %v638 = vld [vmem:[%s317 + $0x7d0] sm:$0xff]
        %v639 = vld [vmem:[%s317 + $0x7d8] sm:$0xff]
        %v640 = vld [vmem:[%s317 + $0x7e0] sm:$0xff]
        %v641 = vld [vmem:[%s317 + $0x7e8] sm:$0xff]
        %v642 = vld [vmem:[%s317 + $0x7f0] sm:$0xff]
        %v643 = vld [vmem:[%s317 + $0x7f8] sm:$0xff]
        %v644 = vld [vmem:[%s317 + $0x800] sm:$0xff]
        %v645 = vld [vmem:[%s317 + $0x808] sm:$0xff]
        %v646 = vld [vmem:[%s317 + $0x810] sm:$0xff]
        %v647 = vld [vmem:[%s317 + $0x818] sm:$0xff]
        %v648 = vld [vmem:[%s317 + $0x820] sm:$0xff]
        %v649 = vld [vmem:[%s317 + $0x828] sm:$0xff]
        %v650 = vld [vmem:[%s317 + $0x830] sm:$0xff]
        %v651 = vld [vmem:[%s317 + $0x838] sm:$0xff]
        %v652 = vld [vmem:[%s317 + $0x840] sm:$0xff]
        %v653 = vld [vmem:[%s317 + $0x848] sm:$0xff]
        %v654 = vld [vmem:[%s317 + $0x850] sm:$0xff]
        %v655 = vld [vmem:[%s317 + $0x858] sm:$0xff]
        %v656 = vld [vmem:[%s317 + $0x860] sm:$0xff]
        %v657 = vld [vmem:[%s317 + $0x868] sm:$0xff]
        %v658 = vld [vmem:[%s317 + $0x870] sm:$0xff]
        %v659 = vld [vmem:[%s317 + $0x878] sm:$0xff]
        %v660 = vld [vmem:[%s317 + $0x880] sm:$0xff]
        %v661 = vld [vmem:[%s317 + $0x888] sm:$0xff]
        %v662 = vld [vmem:[%s317 + $0x890] sm:$0xff]
        %v663 = vld [vmem:[%s317 + $0x898] sm:$0xff]
        %v664 = vld [vmem:[%s317 + $0x8a0] sm:$0xff]
        %v665 = vld [vmem:[%s317 + $0x8a8] sm:$0xff]
        %v666 = vld [vmem:[%s317 + $0x8b0] sm:$0xff]
        %v667 = vld [vmem:[%s317 + $0x8b8] sm:$0xff]
        %v668 = vld [vmem:[%s317 + $0x8c0] sm:$0xff]
        %v669 = vld [vmem:[%s317 + $0x8c8] sm:$0xff]
        %v670 = vld [vmem:[%s317 + $0x8d0] sm:$0xff]
        %v671 = vld [vmem:[%s317 + $0x8d8] sm:$0xff]
        %v672 = vld [vmem:[%s317 + $0x8e0] sm:$0xff]
        %v673 = vld [vmem:[%s317 + $0x8e8] sm:$0xff]
        %v674 = vld [vmem:[%s317 + $0x8f0] sm:$0xff]
        %v675 = vld [vmem:[%s317 + $0x8f8] sm:$0xff]
        %v676 = vld [vmem:[%s317 + $0x900] sm:$0xff]
        %v677 = vld [vmem:[%s317 + $0x908] sm:$0xff]
        %v678 = vld [vmem:[%s317 + $0x910] sm:$0xff]
        %v679 = vld [vmem:[%s317 + $0x918] sm:$0xff]
        %v680 = vld [vmem:[%s317 + $0x920] sm:$0xff]
        %v681 = vld [vmem:[%s317 + $0x928] sm:$0xff]
        %v682 = vld [vmem:[%s317 + $0x930] sm:$0xff]
        %v683 = vld [vmem:[%s317 + $0x938] sm:$0xff]
        %v684 = vld [vmem:[%s317 + $0x940] sm:$0xff]
        %v685 = vld [vmem:[%s317 + $0x948] sm:$0xff]
        %v686 = vld [vmem:[%s317 + $0x950] sm:$0xff]
        %v687 = vld [vmem:[%s317 + $0x958] sm:$0xff]
        %v688 = vld [vmem:[%s317 + $0x960] sm:$0xff]
        %v689 = vld [vmem:[%s317 + $0x968] sm:$0xff]
        %v690 = vld [vmem:[%s317 + $0x970] sm:$0xff]
        %v691 = vld [vmem:[%s317 + $0x978] sm:$0xff]
        %v692 = vld [vmem:[%s317 + $0x980] sm:$0xff]
        %v693 = vld [vmem:[%s317 + $0x988] sm:$0xff]
        %v694 = vld [vmem:[%s317 + $0x990] sm:$0xff]
        %v695 = vld [vmem:[%s317 + $0x998] sm:$0xff]
        %v696 = vld [vmem:[%s317 + $0x9a0] sm:$0xff]
        %v697 = vld [vmem:[%s317 + $0x9a8] sm:$0xff]
        %v698 = vld [vmem:[%s317 + $0x9b0] sm:$0xff]
        %v699 = vld [vmem:[%s317 + $0x9b8] sm:$0xff]
        %v700 = vld [vmem:[%s317 + $0x9c0] sm:$0xff]
        %v701 = vld [vmem:[%s317 + $0x9c8] sm:$0xff]
        %v702 = vld [vmem:[%s317 + $0x9d0] sm:$0xff]
        %v703 = vld [vmem:[%s317 + $0x9d8] sm:$0xff]
        %v704 = vld [vmem:[%s317 + $0x9e0] sm:$0xff]
        %v705 = vld [vmem:[%s317 + $0x9e8] sm:$0xff]
        %v706 = vld [vmem:[%s317 + $0x9f0] sm:$0xff]
        %v707 = vld [vmem:[%s317 + $0x9f8] sm:$0xff]
        %v708 = vld [vmem:[%s317 + $0xa00] sm:$0xff]
        %v709 = vld [vmem:[%s317 + $0xa08] sm:$0xff]
        %v710 = vld [vmem:[%s317 + $0xa10] sm:$0xff]
        %v711 = vld [vmem:[%s317 + $0xa18] sm:$0xff]
        %v712 = vld [vmem:[%s317 + $0xa20] sm:$0xff]
        %v713 = vld [vmem:[%s317 + $0xa28] sm:$0xff]
        %v714 = vld [vmem:[%s317 + $0xa30] sm:$0xff]
        %v715 = vld [vmem:[%s317 + $0xa38] sm:$0xff]
        %v716 = vld [vmem:[%s317 + $0xa40] sm:$0xff]
        %v717 = vld [vmem:[%s317 + $0xa48] sm:$0xff]
        %v718 = vld [vmem:[%s317 + $0xa50] sm:$0xff]
        %v719 = vld [vmem:[%s317 + $0xa58] sm:$0xff]
        %v720 = vld [vmem:[%s317 + $0xa60] sm:$0xff]
        %v721 = vld [vmem:[%s317 + $0xa68] sm:$0xff]
        %v722 = vld [vmem:[%s317 + $0xa70] sm:$0xff]
        %v723 = vld [vmem:[%s317 + $0xa78] sm:$0xff]
        %v724 = vld [vmem:[%s317 + $0xa80] sm:$0xff]
        %v725 = vld [vmem:[%s317 + $0xa88] sm:$0xff]
        %v726 = vld [vmem:[%s317 + $0xa90] sm:$0xff]
        %v727 = vld [vmem:[%s317 + $0xa98] sm:$0xff]
        %v728 = vld [vmem:[%s317 + $0xaa0] sm:$0xff]
        %v729 = vld [vmem:[%s317 + $0xaa8] sm:$0xff]
        %v730 = vld [vmem:[%s317 + $0xab0] sm:$0xff]
        %v731 = vld [vmem:[%s317 + $0xab8] sm:$0xff]
        %v732 = vld [vmem:[%s317 + $0xac0] sm:$0xff]
        %v733 = vld [vmem:[%s317 + $0xac8] sm:$0xff]
        %v734 = vld [vmem:[%s317 + $0xad0] sm:$0xff]
        %v735 = vld [vmem:[%s317 + $0xad8] sm:$0xff]
        %v736 = vld [vmem:[%s317 + $0xae0] sm:$0xff]
        %v737 = vld [vmem:[%s317 + $0xae8] sm:$0xff]
        %v738 = vld [vmem:[%s317 + $0xaf0] sm:$0xff]
        %v739 = vld [vmem:[%s317 + $0xaf8] sm:$0xff]
        %v740 = vld [vmem:[%s317 + $0xb00] sm:$0xff]
        %v741 = vld [vmem:[%s317 + $0xb08] sm:$0xff]
        %v742 = vld [vmem:[%s317 + $0xb10] sm:$0xff]
        %v743 = vld [vmem:[%s317 + $0xb18] sm:$0xff]
        %v744 = vld [vmem:[%s317 + $0xb20] sm:$0xff]
        %v745 = vld [vmem:[%s317 + $0xb28] sm:$0xff]
        %v746 = vld [vmem:[%s317 + $0xb30] sm:$0xff]
        %v747 = vld [vmem:[%s317 + $0xb38] sm:$0xff]
        %v748 = vld [vmem:[%s317 + $0xb40] sm:$0xff]
        %v749 = vld [vmem:[%s317 + $0xb48] sm:$0xff]
        %v750 = vld [vmem:[%s317 + $0xb50] sm:$0xff]
        %v751 = vld [vmem:[%s317 + $0xb58] sm:$0xff]
        %v752 = vld [vmem:[%s317 + $0xb60] sm:$0xff]
        %v753 = vld [vmem:[%s317 + $0xb68] sm:$0xff]
        %v754 = vld [vmem:[%s317 + $0xb70] sm:$0xff]
        %v755 = vld [vmem:[%s317 + $0xb78] sm:$0xff]
        %v756 = vld [vmem:[%s317 + $0xb80] sm:$0xff]
        %v757 = vld [vmem:[%s317 + $0xb88] sm:$0xff]
        %v758 = vld [vmem:[%s317 + $0xb90] sm:$0xff]
        %v759 = vld [vmem:[%s317 + $0xb98] sm:$0xff]
        %v760 = vld [vmem:[%s317 + $0xba0] sm:$0xff]
        %v761 = vld [vmem:[%s317 + $0xba8] sm:$0xff]
        %v762 = vld [vmem:[%s317 + $0xbb0] sm:$0xff]
        %v763 = vld [vmem:[%s317 + $0xbb8] sm:$0xff]
        %v764 = vld [vmem:[%s317 + $0xbc0] sm:$0xff]
        %v765 = vld [vmem:[%s317 + $0xbc8] sm:$0xff]
        %v766 = vld [vmem:[%s317 + $0xbd0] sm:$0xff]
        %v767 = vld [vmem:[%s317 + $0xbd8] sm:$0xff]
        %v768 = vld [vmem:[%s317 + $0xbe0] sm:$0xff]
        %v769 = vld [vmem:[%s317 + $0xbe8] sm:$0xff]
        %v770 = vld [vmem:[%s317 + $0xbf0] sm:$0xff]
        %v771 = vld [vmem:[%s317 + $0xbf8] sm:$0xff]
        %v772 = vld [vmem:[%s317 + $0xc00] sm:$0xff]
        %v773 = vld [vmem:[%s317 + $0xc08] sm:$0xff]
        %v774 = vld [vmem:[%s317 + $0xc10] sm:$0xff]
        %v775 = vld [vmem:[%s317 + $0xc18] sm:$0xff]
        %v776 = vld [vmem:[%s317 + $0xc20] sm:$0xff]
        %v777 = vld [vmem:[%s317 + $0xc28] sm:$0xff]
        %v778 = vld [vmem:[%s317 + $0xc30] sm:$0xff]
        %v779 = vld [vmem:[%s317 + $0xc38] sm:$0xff]
        %v780 = vld [vmem:[%s317 + $0xc40] sm:$0xff]
        %v781 = vld [vmem:[%s317 + $0xc48] sm:$0xff]
        %v782 = vld [vmem:[%s317 + $0xc50] sm:$0xff]
        %v783 = vld [vmem:[%s317 + $0xc58] sm:$0xff]
        %v784 = vld [vmem:[%s317 + $0xc60] sm:$0xff]
        %v785 = vld [vmem:[%s317 + $0xc68] sm:$0xff]
        %v786 = vld [vmem:[%s317 + $0xc70] sm:$0xff]
        %v787 = vld [vmem:[%s317 + $0xc78] sm:$0xff]
        %v788 = vld [vmem:[%s317 + $0xc80] sm:$0xff]
        %v789 = vld [vmem:[%s317 + $0xc88] sm:$0xff]
        %v790 = vld [vmem:[%s317 + $0xc90] sm:$0xff]
        %v791 = vld [vmem:[%s317 + $0xc98] sm:$0xff]
        %v792 = vld [vmem:[%s317 + $0xca0] sm:$0xff]
        %v793 = vld [vmem:[%s317 + $0xca8] sm:$0xff]
        %v794 = vld [vmem:[%s317 + $0xcb0] sm:$0xff]
        %v795 = vld [vmem:[%s317 + $0xcb8] sm:$0xff]
        %v796 = vld [vmem:[%s317 + $0xcc0] sm:$0xff]
        %v797 = vld [vmem:[%s317 + $0xcc8] sm:$0xff]
        %v798 = vld [vmem:[%s317 + $0xcd0] sm:$0xff]
        %v799 = vld [vmem:[%s317 + $0xcd8] sm:$0xff]
        %v800 = vld [vmem:[%s317 + $0xce0] sm:$0xff]
        %v801 = vld [vmem:[%s317 + $0xce8] sm:$0xff]
        %v802 = vld [vmem:[%s317 + $0xcf0] sm:$0xff]
        %v803 = vld [vmem:[%s317 + $0xcf8] sm:$0xff]
        %v804 = vld [vmem:[%s317 + $0xd00] sm:$0xff]
        %v805 = vld [vmem:[%s317 + $0xd08] sm:$0xff]
        %v806 = vld [vmem:[%s317 + $0xd10] sm:$0xff]
        %v807 = vld [vmem:[%s317 + $0xd18] sm:$0xff]
        %v808 = vld [vmem:[%s317 + $0xd20] sm:$0xff]
        %v809 = vld [vmem:[%s317 + $0xd28] sm:$0xff]
        %v810 = vld [vmem:[%s317 + $0xd30] sm:$0xff]
        %v811 = vld [vmem:[%s317 + $0xd38] sm:$0xff]
        %v812 = vld [vmem:[%s317 + $0xd40] sm:$0xff]
        %v813 = vld [vmem:[%s317 + $0xd48] sm:$0xff]
        %v814 = vld [vmem:[%s317 + $0xd50] sm:$0xff]
        %v815 = vld [vmem:[%s317 + $0xd58] sm:$0xff]
        %v816 = vld [vmem:[%s317 + $0xd60] sm:$0xff]
        %v817 = vld [vmem:[%s317 + $0xd68] sm:$0xff]
        %v818 = vld [vmem:[%s317 + $0xd70] sm:$0xff]
        %v819 = vld [vmem:[%s317 + $0xd78] sm:$0xff]
        %v820 = vld [vmem:[%s317 + $0xd80] sm:$0xff]
        %v821 = vld [vmem:[%s317 + $0xd88] sm:$0xff]
        %v822 = vld [vmem:[%s317 + $0xd90] sm:$0xff]
        %v823 = vld [vmem:[%s317 + $0xd98] sm:$0xff]
        %v824 = vld [vmem:[%s317 + $0xda0] sm:$0xff]
        %v825 = vld [vmem:[%s317 + $0xda8] sm:$0xff]
        %v826 = vld [vmem:[%s317 + $0xdb0] sm:$0xff]
        %v827 = vld [vmem:[%s317 + $0xdb8] sm:$0xff]
        %v828 = vld [vmem:[%s317 + $0xdc0] sm:$0xff]
        %v829 = vld [vmem:[%s317 + $0xdc8] sm:$0xff]
        %v830 = vld [vmem:[%s317 + $0xdd0] sm:$0xff]
        %v831 = vld [vmem:[%s317 + $0xdd8] sm:$0xff]
        %v832 = vld [vmem:[%s317 + $0xde0] sm:$0xff]
        %v833 = vld [vmem:[%s317 + $0xde8] sm:$0xff]
        %v834 = vld [vmem:[%s317 + $0xdf0] sm:$0xff]
        %v835 = vld [vmem:[%s317 + $0xdf8] sm:$0xff]
        %v836 = vld [vmem:[%s317 + $0xe00] sm:$0xff]
        %v837 = vld [vmem:[%s317 + $0xe08] sm:$0xff]
        %v838 = vld [vmem:[%s317 + $0xe10] sm:$0xff]
        %v839 = vld [vmem:[%s317 + $0xe18] sm:$0xff]
        %v840 = vld [vmem:[%s317 + $0xe20] sm:$0xff]
        %v841 = vld [vmem:[%s317 + $0xe28] sm:$0xff]
        %v842 = vld [vmem:[%s317 + $0xe30] sm:$0xff]
        %v843 = vld [vmem:[%s317 + $0xe38] sm:$0xff]
        %v844 = vld [vmem:[%s317 + $0xe40] sm:$0xff]
        %v845 = vld [vmem:[%s317 + $0xe48] sm:$0xff]
        %v846 = vld [vmem:[%s317 + $0xe50] sm:$0xff]
        %v847 = vld [vmem:[%s317 + $0xe58] sm:$0xff]
        %v848 = vld [vmem:[%s317 + $0xe60] sm:$0xff]
        %v849 = vld [vmem:[%s317 + $0xe68] sm:$0xff]
        %v850 = vld [vmem:[%s317 + $0xe70] sm:$0xff]
        %v851 = vld [vmem:[%s317 + $0xe78] sm:$0xff]
        %v852 = vld [vmem:[%s317 + $0xe80] sm:$0xff]
        %v853 = vld [vmem:[%s317 + $0xe88] sm:$0xff]
        %v854 = vld [vmem:[%s317 + $0xe90] sm:$0xff]
        %v855 = vld [vmem:[%s317 + $0xe98] sm:$0xff]
        %v856 = vld [vmem:[%s317 + $0xea0] sm:$0xff]
        %v857 = vld [vmem:[%s317 + $0xea8] sm:$0xff]
        %v858 = vld [vmem:[%s317 + $0xeb0] sm:$0xff]
        %v859 = vld [vmem:[%s317 + $0xeb8] sm:$0xff]
        %v860 = vld [vmem:[%s317 + $0xec0] sm:$0xff]
        %v861 = vld [vmem:[%s317 + $0xec8] sm:$0xff]
        %v862 = vld [vmem:[%s317 + $0xed0] sm:$0xff]
        %v863 = vld [vmem:[%s317 + $0xed8] sm:$0xff]
        %v864 = vld [vmem:[%s317 + $0xee0] sm:$0xff]
        %v865 = vld [vmem:[%s317 + $0xee8] sm:$0xff]
        %v866 = vld [vmem:[%s317 + $0xef0] sm:$0xff]
        %v867 = vld [vmem:[%s317 + $0xef8] sm:$0xff]
        %v868 = vld [vmem:[%s317 + $0xf00] sm:$0xff]
        %v869 = vld [vmem:[%s317 + $0xf08] sm:$0xff]
        %v870 = vld [vmem:[%s317 + $0xf10] sm:$0xff]
        %v871 = vld [vmem:[%s317 + $0xf18] sm:$0xff]
        %v872 = vld [vmem:[%s317 + $0xf20] sm:$0xff]
        %v873 = vld [vmem:[%s317 + $0xf28] sm:$0xff]
        %v874 = vld [vmem:[%s317 + $0xf30] sm:$0xff]
        %v875 = vld [vmem:[%s317 + $0xf38] sm:$0xff]
        %v876 = vld [vmem:[%s317 + $0xf40] sm:$0xff]
        %v877 = vld [vmem:[%s317 + $0xf48] sm:$0xff]
        %v878 = vld [vmem:[%s317 + $0xf50] sm:$0xff]
        %v879 = vld [vmem:[%s317 + $0xf58] sm:$0xff]
        %v880 = vld [vmem:[%s317 + $0xf60] sm:$0xff]
        %v881 = vld [vmem:[%s317 + $0xf68] sm:$0xff]
        %v882 = vld [vmem:[%s317 + $0xf70] sm:$0xff]
        %v883 = vld [vmem:[%s317 + $0xf78] sm:$0xff]
        %v884 = vld [vmem:[%s317 + $0xf80] sm:$0xff]
        %v885 = vld [vmem:[%s317 + $0xf88] sm:$0xff]
        %v886 = vld [vmem:[%s317 + $0xf90] sm:$0xff]
        %v887 = vld [vmem:[%s317 + $0xf98] sm:$0xff]
        %v888 = vld [vmem:[%s317 + $0xfa0] sm:$0xff]
        %v889 = vld [vmem:[%s317 + $0xfa8] sm:$0xff]
        %v890 = vld [vmem:[%s317 + $0xfb0] sm:$0xff]
        %v891 = vld [vmem:[%s317 + $0xfb8] sm:$0xff]
        %v892 = vld [vmem:[%s317 + $0xfc0] sm:$0xff]
        %v893 = vld [vmem:[%s317 + $0xfc8] sm:$0xff]
        %v894 = vld [vmem:[%s317 + $0xfd0] sm:$0xff]
        %v895 = vld [vmem:[%s317 + $0xfd8] sm:$0xff]
        %v896 = vld [vmem:[%s317 + $0xfe0] sm:$0xff]
        %v897 = vld [vmem:[%s317 + $0xfe8] sm:$0xff]
        %v898 = vld [vmem:[%s317 + $0xff0] sm:$0xff]
        %v899 = vld [vmem:[%s317 + $0xff8] sm:$0xff]
        %900 = vmatprep.subr.mxu0 %v449
        %901 = vmatpush1.msra.mxu0 %v448
        %902 = vmatprep.subr.mxu0 %v445
        %903 = vmatpush1.msra.mxu0 %v444
        %904 = vmatprep.subr.mxu0 %v441
        %905 = vmatpush1.msra.mxu0 %v440
        %906 = vmatprep.subr.mxu0 %v437
        %907 = vmatpush1.msra.mxu0 %v436
        %908 = vmatprep.subr.mxu0 %v433
        %909 = vmatpush1.msra.mxu0 %v432
        %910 = vmatprep.subr.mxu0 %v429
        %911 = vmatpush1.msra.mxu0 %v428
        %912 = vmatprep.subr.mxu0 %v425
        %913 = vmatpush1.msra.mxu0 %v424
        %914 = vmatprep.subr.mxu0 %v421
        %915 = vmatpush1.msra.mxu0 %v420
        %916 = vmatprep.subr.mxu0 %v417
        %917 = vmatpush1.msra.mxu0 %v416
        %918 = vmatprep.subr.mxu0 %v413
        %919 = vmatpush1.msra.mxu0 %v412
        %920 = vmatprep.subr.mxu0 %v409
        %921 = vmatpush1.msra.mxu0 %v408
        %922 = vmatprep.subr.mxu0 %v405
        %923 = vmatpush1.msra.mxu0 %v404
        %924 = vmatprep.subr.mxu0 %v401
        %925 = vmatpush1.msra.mxu0 %v400
        %926 = vmatprep.subr.mxu0 %v397
        %927 = vmatpush1.msra.mxu0 %v396
        %928 = vmatprep.subr.mxu0 %v393
        %929 = vmatpush1.msra.mxu0 %v392
        %930 = vmatprep.subr.mxu0 %v389
        %931 = vmatpush1.msra.mxu0 %v388
        %932 = vmatprep.subr.mxu0 %v513
        %933 = vmatpush2.msra.mxu0 %v512
        %934 = vmatprep.subr.mxu0 %v509
        %935 = vmatpush2.msra.mxu0 %v508
        %936 = vmatprep.subr.mxu0 %v505
        %937 = vmatpush2.msra.mxu0 %v504
        %938 = vmatprep.subr.mxu0 %v501
        %939 = vmatpush2.msra.mxu0 %v500
        %940 = vmatprep.subr.mxu0 %v497
        %941 = vmatpush2.msra.mxu0 %v496
        %942 = vmatprep.subr.mxu0 %v493
        %943 = vmatpush2.msra.mxu0 %v492
        %944 = vmatprep.subr.mxu0 %v489
        %945 = vmatpush2.msra.mxu0 %v488
        %946 = vmatprep.subr.mxu0 %v485
        %947 = vmatpush2.msra.mxu0 %v484
        %948 = vmatprep.subr.mxu0 %v481
        %949 = vmatpush2.msra.mxu0 %v480
        %950 = vmatprep.subr.mxu0 %v477
        %951 = vmatpush2.msra.mxu0 %v476
        %952 = vmatprep.subr.mxu0 %v473
        %953 = vmatpush2.msra.mxu0 %v472
        %954 = vmatprep.subr.mxu0 %v469
        %955 = vmatpush2.msra.mxu0 %v468
        %956 = vmatprep.subr.mxu0 %v465
        %957 = vmatpush2.msra.mxu0 %v464
        %958 = vmatprep.subr.mxu0 %v461
        %959 = vmatpush2.msra.mxu0 %v460
        %960 = vmatprep.subr.mxu0 %v457
        %961 = vmatpush2.msra.mxu0 %v456
        %962 = vmatprep.subr.mxu0 %v453
        %963 = vmatpush2.msra.mxu0 %v452
        %964 = vmatprep.mubr.f32.mxu0 %v365
        %965 = vmatmul.mubr.f32.gmra.mxu0 %v364
        %v966 = vpop.f32.mrf.mxu0
        %v967 = vadd.f32 0.0, %v966
        %v968 = vpop.f32.mrf.mxu0
        %v969 = vadd.f32 0.0, %v968
        %970 = vmatprep.mubr.f32.mxu0 %v373
        %971 = vmatmul.mubr.f32.gmra.mxu0 %v372
        %v972 = vpop.f32.mrf.mxu0
        %v973 = vadd.f32 0.0, %v972
        %v974 = vpop.f32.mrf.mxu0
        %v975 = vadd.f32 0.0, %v974
        %976 = vmatprep.mubr.f32.mxu0 %v381
        %977 = vmatmul.mubr.f32.gmra.mxu0 %v380
        %v978 = vpop.f32.mrf.mxu0
        %v979 = vadd.f32 0.0, %v978
        %v980 = vpop.f32.mrf.mxu0
        %v981 = vadd.f32 0.0, %v980
        %982 = vdwg.mxu0
        %983 = vmatprep.subr.mxu0 %v577
        %984 = vmatpush1.msra.mxu0 %v576
        %985 = vmatprep.subr.mxu0 %v573
        %986 = vmatpush1.msra.mxu0 %v572
        %987 = vmatprep.subr.mxu0 %v569
        %988 = vmatpush1.msra.mxu0 %v568
        %989 = vmatprep.subr.mxu0 %v565
        %990 = vmatpush1.msra.mxu0 %v564
        %991 = vmatprep.subr.mxu0 %v561
        %992 = vmatpush1.msra.mxu0 %v560
        %993 = vmatprep.subr.mxu0 %v557
        %994 = vmatpush1.msra.mxu0 %v556
        %995 = vmatprep.subr.mxu0 %v553
        %996 = vmatpush1.msra.mxu0 %v552
        %997 = vmatprep.subr.mxu0 %v549
        %998 = vmatpush1.msra.mxu0 %v548
        %999 = vmatprep.subr.mxu0 %v545
        %1000 = vmatpush1.msra.mxu0 %v544
        %1001 = vmatprep.subr.mxu0 %v541
        %1002 = vmatpush1.msra.mxu0 %v540
        %1003 = vmatprep.subr.mxu0 %v537
        %1004 = vmatpush1.msra.mxu0 %v536
        %1005 = vmatprep.subr.mxu0 %v533
        %1006 = vmatpush1.msra.mxu0 %v532
        %1007 = vmatprep.subr.mxu0 %v529
        %1008 = vmatpush1.msra.mxu0 %v528
        %1009 = vmatprep.subr.mxu0 %v525
        %1010 = vmatpush1.msra.mxu0 %v524
        %1011 = vmatprep.subr.mxu0 %v521
        %1012 = vmatpush1.msra.mxu0 %v520
        %1013 = vmatprep.subr.mxu0 %v517
        %1014 = vmatpush1.msra.mxu0 %v516
        %1015 = vmatprep.subr.mxu0 %v641
        %1016 = vmatpush2.msra.mxu0 %v640
        %1017 = vmatprep.subr.mxu0 %v637
        %1018 = vmatpush2.msra.mxu0 %v636
        %1019 = vmatprep.subr.mxu0 %v633
        %1020 = vmatpush2.msra.mxu0 %v632
        %1021 = vmatprep.subr.mxu0 %v629
        %1022 = vmatpush2.msra.mxu0 %v628
        %1023 = vmatprep.subr.mxu0 %v625
        %1024 = vmatpush2.msra.mxu0 %v624
        %1025 = vmatprep.subr.mxu0 %v621
        %1026 = vmatpush2.msra.mxu0 %v620
        %1027 = vmatprep.subr.mxu0 %v617
        %1028 = vmatpush2.msra.mxu0 %v616
        %1029 = vmatprep.subr.mxu0 %v613
        %1030 = vmatpush2.msra.mxu0 %v612
        %1031 = vmatprep.subr.mxu0 %v609
        %1032 = vmatpush2.msra.mxu0 %v608
        %1033 = vmatprep.subr.mxu0 %v605
        %1034 = vmatpush2.msra.mxu0 %v604
        %1035 = vmatprep.subr.mxu0 %v601
        %1036 = vmatpush2.msra.mxu0 %v600
        %1037 = vmatprep.subr.mxu0 %v597
        %1038 = vmatpush2.msra.mxu0 %v596
        %1039 = vmatprep.subr.mxu0 %v593
        %1040 = vmatpush2.msra.mxu0 %v592
        %1041 = vmatprep.subr.mxu0 %v589
        %1042 = vmatpush2.msra.mxu0 %v588
        %1043 = vmatprep.subr.mxu0 %v585
        %1044 = vmatpush2.msra.mxu0 %v584
        %1045 = vmatprep.subr.mxu0 %v581
        %1046 = vmatpush2.msra.mxu0 %v580
        %1047 = vmatprep.mubr.f32.mxu0 %v367
        %1048 = vmatmul.mubr.f32.gmra.mxu0 %v366
        %v1049 = vpop.f32.mrf.mxu0
        %v1050 = vadd.f32 %v967, %v1049
        %v1051 = vpop.f32.mrf.mxu0
        %v1052 = vadd.f32 %v969, %v1051
        %1053 = vmatprep.mubr.f32.mxu0 %v375
        %1054 = vmatmul.mubr.f32.gmra.mxu0 %v374
        %v1055 = vpop.f32.mrf.mxu0
        %v1056 = vadd.f32 %v973, %v1055
        %v1057 = vpop.f32.mrf.mxu0
        %v1058 = vadd.f32 %v975, %v1057
        %1059 = vmatprep.mubr.f32.mxu0 %v383
        %1060 = vmatmul.mubr.f32.gmra.mxu0 %v382
        %v1061 = vpop.f32.mrf.mxu0
        %v1062 = vadd.f32 %v979, %v1061
        %v1063 = vpop.f32.mrf.mxu0
        %v1064 = vadd.f32 %v981, %v1063
        %1065 = vdwg.mxu0
        %1066 = vmatprep.subr.mxu0 %v705
        %1067 = vmatpush1.msra.mxu0 %v704
        %1068 = vmatprep.subr.mxu0 %v701
        %1069 = vmatpush1.msra.mxu0 %v700
        %1070 = vmatprep.subr.mxu0 %v697
        %1071 = vmatpush1.msra.mxu0 %v696
        %1072 = vmatprep.subr.mxu0 %v693
        %1073 = vmatpush1.msra.mxu0 %v692
        %1074 = vmatprep.subr.mxu0 %v689
        %1075 = vmatpush1.msra.mxu0 %v688
        %1076 = vmatprep.subr.mxu0 %v685
        %1077 = vmatpush1.msra.mxu0 %v684
        %1078 = vmatprep.subr.mxu0 %v681
        %1079 = vmatpush1.msra.mxu0 %v680
        %1080 = vmatprep.subr.mxu0 %v677
        %1081 = vmatpush1.msra.mxu0 %v676
        %1082 = vmatprep.subr.mxu0 %v673
        %1083 = vmatpush1.msra.mxu0 %v672
        %1084 = vmatprep.subr.mxu0 %v669
        %1085 = vmatpush1.msra.mxu0 %v668
        %1086 = vmatprep.subr.mxu0 %v665
        %1087 = vmatpush1.msra.mxu0 %v664
        %1088 = vmatprep.subr.mxu0 %v661
        %1089 = vmatpush1.msra.mxu0 %v660
        %1090 = vmatprep.subr.mxu0 %v657
        %1091 = vmatpush1.msra.mxu0 %v656
        %1092 = vmatprep.subr.mxu0 %v653
        %1093 = vmatpush1.msra.mxu0 %v652
        %1094 = vmatprep.subr.mxu0 %v649
        %1095 = vmatpush1.msra.mxu0 %v648
        %1096 = vmatprep.subr.mxu0 %v645
        %1097 = vmatpush1.msra.mxu0 %v644
        %1098 = vmatprep.subr.mxu0 %v769
        %1099 = vmatpush2.msra.mxu0 %v768
        %1100 = vmatprep.subr.mxu0 %v765
        %1101 = vmatpush2.msra.mxu0 %v764
        %1102 = vmatprep.subr.mxu0 %v761
        %1103 = vmatpush2.msra.mxu0 %v760
        %1104 = vmatprep.subr.mxu0 %v757
        %1105 = vmatpush2.msra.mxu0 %v756
        %1106 = vmatprep.subr.mxu0 %v753
        %1107 = vmatpush2.msra.mxu0 %v752
        %1108 = vmatprep.subr.mxu0 %v749
        %1109 = vmatpush2.msra.mxu0 %v748
        %1110 = vmatprep.subr.mxu0 %v745
        %1111 = vmatpush2.msra.mxu0 %v744
        %1112 = vmatprep.subr.mxu0 %v741
        %1113 = vmatpush2.msra.mxu0 %v740
        %1114 = vmatprep.subr.mxu0 %v737
        %1115 = vmatpush2.msra.mxu0 %v736
        %1116 = vmatprep.subr.mxu0 %v733
        %1117 = vmatpush2.msra.mxu0 %v732
        %1118 = vmatprep.subr.mxu0 %v729
        %1119 = vmatpush2.msra.mxu0 %v728
        %1120 = vmatprep.subr.mxu0 %v725
        %1121 = vmatpush2.msra.mxu0 %v724
        %1122 = vmatprep.subr.mxu0 %v721
        %1123 = vmatpush2.msra.mxu0 %v720
        %1124 = vmatprep.subr.mxu0 %v717
        %1125 = vmatpush2.msra.mxu0 %v716
        %1126 = vmatprep.subr.mxu0 %v713
        %1127 = vmatpush2.msra.mxu0 %v712
        %1128 = vmatprep.subr.mxu0 %v709
        %1129 = vmatpush2.msra.mxu0 %v708
        %1130 = vmatprep.mubr.f32.mxu0 %v369
        %1131 = vmatmul.mubr.f32.gmra.mxu0 %v368
        %v1132 = vpop.f32.mrf.mxu0
        %v1133 = vadd.f32 %v1050, %v1132
        %v1134 = vpop.f32.mrf.mxu0
        %v1135 = vadd.f32 %v1052, %v1134
        %1136 = vmatprep.mubr.f32.mxu0 %v377
        %1137 = vmatmul.mubr.f32.gmra.mxu0 %v376
        %v1138 = vpop.f32.mrf.mxu0
        %v1139 = vadd.f32 %v1056, %v1138
        %v1140 = vpop.f32.mrf.mxu0
        %v1141 = vadd.f32 %v1058, %v1140
        %1142 = vmatprep.mubr.f32.mxu0 %v385
        %1143 = vmatmul.mubr.f32.gmra.mxu0 %v384
        %v1144 = vpop.f32.mrf.mxu0
        %v1145 = vadd.f32 %v1062, %v1144
        %v1146 = vpop.f32.mrf.mxu0
        %v1147 = vadd.f32 %v1064, %v1146
        %1148 = vdwg.mxu0
        %1149 = vmatprep.subr.mxu0 %v833
        %1150 = vmatpush1.msra.mxu0 %v832
        %1151 = vmatprep.subr.mxu0 %v829
        %1152 = vmatpush1.msra.mxu0 %v828
        %1153 = vmatprep.subr.mxu0 %v825
        %1154 = vmatpush1.msra.mxu0 %v824
        %1155 = vmatprep.subr.mxu0 %v821
        %1156 = vmatpush1.msra.mxu0 %v820
        %1157 = vmatprep.subr.mxu0 %v817
        %1158 = vmatpush1.msra.mxu0 %v816
        %1159 = vmatprep.subr.mxu0 %v813
        %1160 = vmatpush1.msra.mxu0 %v812
        %1161 = vmatprep.subr.mxu0 %v809
        %1162 = vmatpush1.msra.mxu0 %v808
        %1163 = vmatprep.subr.mxu0 %v805
        %1164 = vmatpush1.msra.mxu0 %v804
        %1165 = vmatprep.subr.mxu0 %v801
        %1166 = vmatpush1.msra.mxu0 %v800
        %1167 = vmatprep.subr.mxu0 %v797
        %1168 = vmatpush1.msra.mxu0 %v796
        %1169 = vmatprep.subr.mxu0 %v793
        %1170 = vmatpush1.msra.mxu0 %v792
        %1171 = vmatprep.subr.mxu0 %v789
        %1172 = vmatpush1.msra.mxu0 %v788
        %1173 = vmatprep.subr.mxu0 %v785
        %1174 = vmatpush1.msra.mxu0 %v784
        %1175 = vmatprep.subr.mxu0 %v781
        %1176 = vmatpush1.msra.mxu0 %v780
        %1177 = vmatprep.subr.mxu0 %v777
        %1178 = vmatpush1.msra.mxu0 %v776
        %1179 = vmatprep.subr.mxu0 %v773
        %1180 = vmatpush1.msra.mxu0 %v772
        %1181 = vmatprep.subr.mxu0 %v897
        %1182 = vmatpush2.msra.mxu0 %v896
        %1183 = vmatprep.subr.mxu0 %v893
        %1184 = vmatpush2.msra.mxu0 %v892
        %1185 = vmatprep.subr.mxu0 %v889
        %1186 = vmatpush2.msra.mxu0 %v888
        %1187 = vmatprep.subr.mxu0 %v885
        %1188 = vmatpush2.msra.mxu0 %v884
        %1189 = vmatprep.subr.mxu0 %v881
        %1190 = vmatpush2.msra.mxu0 %v880
        %1191 = vmatprep.subr.mxu0 %v877
        %1192 = vmatpush2.msra.mxu0 %v876
        %1193 = vmatprep.subr.mxu0 %v873
        %1194 = vmatpush2.msra.mxu0 %v872
        %1195 = vmatprep.subr.mxu0 %v869
        %1196 = vmatpush2.msra.mxu0 %v868
        %1197 = vmatprep.subr.mxu0 %v865
        %1198 = vmatpush2.msra.mxu0 %v864
        %1199 = vmatprep.subr.mxu0 %v861
        %1200 = vmatpush2.msra.mxu0 %v860
        %1201 = vmatprep.subr.mxu0 %v857
        %1202 = vmatpush2.msra.mxu0 %v856
        %1203 = vmatprep.subr.mxu0 %v853
        %1204 = vmatpush2.msra.mxu0 %v852
        %1205 = vmatprep.subr.mxu0 %v849
        %1206 = vmatpush2.msra.mxu0 %v848
        %1207 = vmatprep.subr.mxu0 %v845
        %1208 = vmatpush2.msra.mxu0 %v844
        %1209 = vmatprep.subr.mxu0 %v841
        %1210 = vmatpush2.msra.mxu0 %v840
        %1211 = vmatprep.subr.mxu0 %v837
        %1212 = vmatpush2.msra.mxu0 %v836
        %1213 = vmatprep.mubr.f32.mxu0 %v371
        %1214 = vmatmul.mubr.f32.gmra.mxu0 %v370
        %v1215 = vpop.f32.mrf.mxu0
        %v1216 = vadd.f32 %v1133, %v1215
        %v1217 = vpop.f32.mrf.mxu0
        %v1218 = vadd.f32 %v1135, %v1217
        %1219 = vmatprep.mubr.f32.mxu0 %v379
        %1220 = vmatmul.mubr.f32.gmra.mxu0 %v378
        %v1221 = vpop.f32.mrf.mxu0
        %v1222 = vadd.f32 %v1139, %v1221
        %v1223 = vpop.f32.mrf.mxu0
        %v1224 = vadd.f32 %v1141, %v1223
        %1225 = vmatprep.mubr.f32.mxu0 %v387
        %1226 = vmatmul.mubr.f32.gmra.mxu0 %v386
        %v1227 = vpop.f32.mrf.mxu0
        %v1228 = vadd.f32 %v1145, %v1227
        %v1229 = vpop.f32.mrf.mxu0
        %v1230 = vadd.f32 %v1147, %v1229
        %1231 = vdwg.mxu0
        %1232 = vmatprep.subr.mxu0 %v451
        %1233 = vmatpush1.msra.mxu0 %v450
        %1234 = vmatprep.subr.mxu0 %v447
        %1235 = vmatpush1.msra.mxu0 %v446
        %1236 = vmatprep.subr.mxu0 %v443
        %1237 = vmatpush1.msra.mxu0 %v442
        %1238 = vmatprep.subr.mxu0 %v439
        %1239 = vmatpush1.msra.mxu0 %v438
        %1240 = vmatprep.subr.mxu0 %v435
        %1241 = vmatpush1.msra.mxu0 %v434
        %1242 = vmatprep.subr.mxu0 %v431
        %1243 = vmatpush1.msra.mxu0 %v430
        %1244 = vmatprep.subr.mxu0 %v427
        %1245 = vmatpush1.msra.mxu0 %v426
        %1246 = vmatprep.subr.mxu0 %v423
        %1247 = vmatpush1.msra.mxu0 %v422
        %1248 = vmatprep.subr.mxu0 %v419
        %1249 = vmatpush1.msra.mxu0 %v418
        %1250 = vmatprep.subr.mxu0 %v415
        %1251 = vmatpush1.msra.mxu0 %v414
        %1252 = vmatprep.subr.mxu0 %v411
        %1253 = vmatpush1.msra.mxu0 %v410
        %1254 = vmatprep.subr.mxu0 %v407
        %1255 = vmatpush1.msra.mxu0 %v406
        %1256 = vmatprep.subr.mxu0 %v403
        %1257 = vmatpush1.msra.mxu0 %v402
        %1258 = vmatprep.subr.mxu0 %v399
        %1259 = vmatpush1.msra.mxu0 %v398
        %1260 = vmatprep.subr.mxu0 %v395
        %1261 = vmatpush1.msra.mxu0 %v394
        %1262 = vmatprep.subr.mxu0 %v391
        %1263 = vmatpush1.msra.mxu0 %v390
        %1264 = vmatprep.subr.mxu0 %v515
        %1265 = vmatpush2.msra.mxu0 %v514
        %1266 = vmatprep.subr.mxu0 %v511
        %1267 = vmatpush2.msra.mxu0 %v510
        %1268 = vmatprep.subr.mxu0 %v507
        %1269 = vmatpush2.msra.mxu0 %v506
        %1270 = vmatprep.subr.mxu0 %v503
        %1271 = vmatpush2.msra.mxu0 %v502
        %1272 = vmatprep.subr.mxu0 %v499
        %1273 = vmatpush2.msra.mxu0 %v498
        %1274 = vmatprep.subr.mxu0 %v495
        %1275 = vmatpush2.msra.mxu0 %v494
        %1276 = vmatprep.subr.mxu0 %v491
        %1277 = vmatpush2.msra.mxu0 %v490
        %1278 = vmatprep.subr.mxu0 %v487
        %1279 = vmatpush2.msra.mxu0 %v486
        %1280 = vmatprep.subr.mxu0 %v483
        %1281 = vmatpush2.msra.mxu0 %v482
        %1282 = vmatprep.subr.mxu0 %v479
        %1283 = vmatpush2.msra.mxu0 %v478
        %1284 = vmatprep.subr.mxu0 %v475
        %1285 = vmatpush2.msra.mxu0 %v474
        %1286 = vmatprep.subr.mxu0 %v471
        %1287 = vmatpush2.msra.mxu0 %v470
        %1288 = vmatprep.subr.mxu0 %v467
        %1289 = vmatpush2.msra.mxu0 %v466
        %1290 = vmatprep.subr.mxu0 %v463
        %1291 = vmatpush2.msra.mxu0 %v462
        %1292 = vmatprep.subr.mxu0 %v459
        %1293 = vmatpush2.msra.mxu0 %v458
        %1294 = vmatprep.subr.mxu0 %v455
        %1295 = vmatpush2.msra.mxu0 %v454
        %1296 = vmatprep.mubr.f32.mxu0 %v365
        %1297 = vmatmul.mubr.f32.gmra.mxu0 %v364
        %v1298 = vpop.f32.mrf.mxu0
        %v1299 = vadd.f32 0.0, %v1298
        %v1300 = vpop.f32.mrf.mxu0
        %v1301 = vadd.f32 0.0, %v1300
        %1302 = vmatprep.mubr.f32.mxu0 %v373
        %1303 = vmatmul.mubr.f32.gmra.mxu0 %v372
        %v1304 = vpop.f32.mrf.mxu0
        %v1305 = vadd.f32 0.0, %v1304
        %v1306 = vpop.f32.mrf.mxu0
        %v1307 = vadd.f32 0.0, %v1306
        %1308 = vmatprep.mubr.f32.mxu0 %v381
        %1309 = vmatmul.mubr.f32.gmra.mxu0 %v380
        %v1310 = vpop.f32.mrf.mxu0
        %v1311 = vadd.f32 0.0, %v1310
        %v1312 = vpop.f32.mrf.mxu0
        %v1313 = vadd.f32 0.0, %v1312
        %1314 = vdwg.mxu0
        %1315 = vmatprep.subr.mxu0 %v579
        %1316 = vmatpush1.msra.mxu0 %v578
        %1317 = vmatprep.subr.mxu0 %v575
        %1318 = vmatpush1.msra.mxu0 %v574
        %1319 = vmatprep.subr.mxu0 %v571
        %1320 = vmatpush1.msra.mxu0 %v570
        %1321 = vmatprep.subr.mxu0 %v567
        %1322 = vmatpush1.msra.mxu0 %v566
        %1323 = vmatprep.subr.mxu0 %v563
        %1324 = vmatpush1.msra.mxu0 %v562
        %1325 = vmatprep.subr.mxu0 %v559
        %1326 = vmatpush1.msra.mxu0 %v558
        %1327 = vmatprep.subr.mxu0 %v555
        %1328 = vmatpush1.msra.mxu0 %v554
        %1329 = vmatprep.subr.mxu0 %v551
        %1330 = vmatpush1.msra.mxu0 %v550
        %1331 = vmatprep.subr.mxu0 %v547
        %1332 = vmatpush1.msra.mxu0 %v546
        %1333 = vmatprep.subr.mxu0 %v543
        %1334 = vmatpush1.msra.mxu0 %v542
        %1335 = vmatprep.subr.mxu0 %v539
        %1336 = vmatpush1.msra.mxu0 %v538
        %1337 = vmatprep.subr.mxu0 %v535
        %1338 = vmatpush1.msra.mxu0 %v534
        %1339 = vmatprep.subr.mxu0 %v531
        %1340 = vmatpush1.msra.mxu0 %v530
        %1341 = vmatprep.subr.mxu0 %v527
        %1342 = vmatpush1.msra.mxu0 %v526
        %1343 = vmatprep.subr.mxu0 %v523
        %1344 = vmatpush1.msra.mxu0 %v522
        %1345 = vmatprep.subr.mxu0 %v519
        %1346 = vmatpush1.msra.mxu0 %v518
        %1347 = vmatprep.subr.mxu0 %v643
        %1348 = vmatpush2.msra.mxu0 %v642
        %1349 = vmatprep.subr.mxu0 %v639
        %1350 = vmatpush2.msra.mxu0 %v638
        %1351 = vmatprep.subr.mxu0 %v635
        %1352 = vmatpush2.msra.mxu0 %v634
        %1353 = vmatprep.subr.mxu0 %v631
        %1354 = vmatpush2.msra.mxu0 %v630
        %1355 = vmatprep.subr.mxu0 %v627
        %1356 = vmatpush2.msra.mxu0 %v626
        %1357 = vmatprep.subr.mxu0 %v623
        %1358 = vmatpush2.msra.mxu0 %v622
        %1359 = vmatprep.subr.mxu0 %v619
        %1360 = vmatpush2.msra.mxu0 %v618
        %1361 = vmatprep.subr.mxu0 %v615
        %1362 = vmatpush2.msra.mxu0 %v614
        %1363 = vmatprep.subr.mxu0 %v611
        %1364 = vmatpush2.msra.mxu0 %v610
        %1365 = vmatprep.subr.mxu0 %v607
        %1366 = vmatpush2.msra.mxu0 %v606
        %1367 = vmatprep.subr.mxu0 %v603
        %1368 = vmatpush2.msra.mxu0 %v602
        %1369 = vmatprep.subr.mxu0 %v599
        %1370 = vmatpush2.msra.mxu0 %v598
        %1371 = vmatprep.subr.mxu0 %v595
        %1372 = vmatpush2.msra.mxu0 %v594
        %1373 = vmatprep.subr.mxu0 %v591
        %1374 = vmatpush2.msra.mxu0 %v590
        %1375 = vmatprep.subr.mxu0 %v587
        %1376 = vmatpush2.msra.mxu0 %v586
        %1377 = vmatprep.subr.mxu0 %v583
        %1378 = vmatpush2.msra.mxu0 %v582
        %1379 = vmatprep.mubr.f32.mxu0 %v367
        %1380 = vmatmul.mubr.f32.gmra.mxu0 %v366
        %v1381 = vpop.f32.mrf.mxu0
        %v1382 = vadd.f32 %v1299, %v1381
        %v1383 = vpop.f32.mrf.mxu0
        %v1384 = vadd.f32 %v1301, %v1383
        %1385 = vmatprep.mubr.f32.mxu0 %v375
        %1386 = vmatmul.mubr.f32.gmra.mxu0 %v374
        %v1387 = vpop.f32.mrf.mxu0
        %v1388 = vadd.f32 %v1305, %v1387
        %v1389 = vpop.f32.mrf.mxu0
        %v1390 = vadd.f32 %v1307, %v1389
        %1391 = vmatprep.mubr.f32.mxu0 %v383
        %1392 = vmatmul.mubr.f32.gmra.mxu0 %v382
        %v1393 = vpop.f32.mrf.mxu0
        %v1394 = vadd.f32 %v1311, %v1393
        %v1395 = vpop.f32.mrf.mxu0
        %v1396 = vadd.f32 %v1313, %v1395
        %1397 = vdwg.mxu0
        %1398 = vmatprep.subr.mxu0 %v707
        %1399 = vmatpush1.msra.mxu0 %v706
        %1400 = vmatprep.subr.mxu0 %v703
        %1401 = vmatpush1.msra.mxu0 %v702
        %1402 = vmatprep.subr.mxu0 %v699
        %1403 = vmatpush1.msra.mxu0 %v698
        %1404 = vmatprep.subr.mxu0 %v695
        %1405 = vmatpush1.msra.mxu0 %v694
        %1406 = vmatprep.subr.mxu0 %v691
        %1407 = vmatpush1.msra.mxu0 %v690
        %1408 = vmatprep.subr.mxu0 %v687
        %1409 = vmatpush1.msra.mxu0 %v686
        %1410 = vmatprep.subr.mxu0 %v683
        %1411 = vmatpush1.msra.mxu0 %v682
        %1412 = vmatprep.subr.mxu0 %v679
        %1413 = vmatpush1.msra.mxu0 %v678
        %1414 = vmatprep.subr.mxu0 %v675
        %1415 = vmatpush1.msra.mxu0 %v674
        %1416 = vmatprep.subr.mxu0 %v671
        %1417 = vmatpush1.msra.mxu0 %v670
        %1418 = vmatprep.subr.mxu0 %v667
        %1419 = vmatpush1.msra.mxu0 %v666
        %1420 = vmatprep.subr.mxu0 %v663
        %1421 = vmatpush1.msra.mxu0 %v662
        %1422 = vmatprep.subr.mxu0 %v659
        %1423 = vmatpush1.msra.mxu0 %v658
        %1424 = vmatprep.subr.mxu0 %v655
        %1425 = vmatpush1.msra.mxu0 %v654
        %1426 = vmatprep.subr.mxu0 %v651
        %1427 = vmatpush1.msra.mxu0 %v650
        %1428 = vmatprep.subr.mxu0 %v647
        %1429 = vmatpush1.msra.mxu0 %v646
        %1430 = vmatprep.subr.mxu0 %v771
        %1431 = vmatpush2.msra.mxu0 %v770
        %1432 = vmatprep.subr.mxu0 %v767
        %1433 = vmatpush2.msra.mxu0 %v766
        %1434 = vmatprep.subr.mxu0 %v763
        %1435 = vmatpush2.msra.mxu0 %v762
        %1436 = vmatprep.subr.mxu0 %v759
        %1437 = vmatpush2.msra.mxu0 %v758
        %1438 = vmatprep.subr.mxu0 %v755
        %1439 = vmatpush2.msra.mxu0 %v754
        %1440 = vmatprep.subr.mxu0 %v751
        %1441 = vmatpush2.msra.mxu0 %v750
        %1442 = vmatprep.subr.mxu0 %v747
        %1443 = vmatpush2.msra.mxu0 %v746
        %1444 = vmatprep.subr.mxu0 %v743
        %1445 = vmatpush2.msra.mxu0 %v742
        %1446 = vmatprep.subr.mxu0 %v739
        %1447 = vmatpush2.msra.mxu0 %v738
        %1448 = vmatprep.subr.mxu0 %v735
        %1449 = vmatpush2.msra.mxu0 %v734
        %1450 = vmatprep.subr.mxu0 %v731
        %1451 = vmatpush2.msra.mxu0 %v730
        %1452 = vmatprep.subr.mxu0 %v727
        %1453 = vmatpush2.msra.mxu0 %v726
        %1454 = vmatprep.subr.mxu0 %v723
        %1455 = vmatpush2.msra.mxu0 %v722
        %1456 = vmatprep.subr.mxu0 %v719
        %1457 = vmatpush2.msra.mxu0 %v718
        %1458 = vmatprep.subr.mxu0 %v715
        %1459 = vmatpush2.msra.mxu0 %v714
        %1460 = vmatprep.subr.mxu0 %v711
        %1461 = vmatpush2.msra.mxu0 %v710
        %1462 = vmatprep.mubr.f32.mxu0 %v369
        %1463 = vmatmul.mubr.f32.gmra.mxu0 %v368
        %v1464 = vpop.f32.mrf.mxu0
        %v1465 = vadd.f32 %v1382, %v1464
        %v1466 = vpop.f32.mrf.mxu0
        %v1467 = vadd.f32 %v1384, %v1466
        %1468 = vmatprep.mubr.f32.mxu0 %v377
        %1469 = vmatmul.mubr.f32.gmra.mxu0 %v376
        %v1470 = vpop.f32.mrf.mxu0
        %v1471 = vadd.f32 %v1388, %v1470
        %v1472 = vpop.f32.mrf.mxu0
        %v1473 = vadd.f32 %v1390, %v1472
        %1474 = vmatprep.mubr.f32.mxu0 %v385
        %1475 = vmatmul.mubr.f32.gmra.mxu0 %v384
        %v1476 = vpop.f32.mrf.mxu0
        %v1477 = vadd.f32 %v1394, %v1476
        %v1478 = vpop.f32.mrf.mxu0
        %v1479 = vadd.f32 %v1396, %v1478
        %1480 = vdwg.mxu0
        %1481 = vmatprep.subr.mxu0 %v835
        %1482 = vmatpush1.msra.mxu0 %v834
        %1483 = vmatprep.subr.mxu0 %v831
        %1484 = vmatpush1.msra.mxu0 %v830
        %1485 = vmatprep.subr.mxu0 %v827
        %1486 = vmatpush1.msra.mxu0 %v826
        %1487 = vmatprep.subr.mxu0 %v823
        %1488 = vmatpush1.msra.mxu0 %v822
        %1489 = vmatprep.subr.mxu0 %v819
        %1490 = vmatpush1.msra.mxu0 %v818
        %1491 = vmatprep.subr.mxu0 %v815
        %1492 = vmatpush1.msra.mxu0 %v814
        %1493 = vmatprep.subr.mxu0 %v811
        %1494 = vmatpush1.msra.mxu0 %v810
        %1495 = vmatprep.subr.mxu0 %v807
        %1496 = vmatpush1.msra.mxu0 %v806
        %1497 = vmatprep.subr.mxu0 %v803
        %1498 = vmatpush1.msra.mxu0 %v802
        %1499 = vmatprep.subr.mxu0 %v799
        %1500 = vmatpush1.msra.mxu0 %v798
        %1501 = vmatprep.subr.mxu0 %v795
        %1502 = vmatpush1.msra.mxu0 %v794
        %1503 = vmatprep.subr.mxu0 %v791
        %1504 = vmatpush1.msra.mxu0 %v790
        %1505 = vmatprep.subr.mxu0 %v787
        %1506 = vmatpush1.msra.mxu0 %v786
        %1507 = vmatprep.subr.mxu0 %v783
        %1508 = vmatpush1.msra.mxu0 %v782
        %1509 = vmatprep.subr.mxu0 %v779
        %1510 = vmatpush1.msra.mxu0 %v778
        %1511 = vmatprep.subr.mxu0 %v775
        %1512 = vmatpush1.msra.mxu0 %v774
        %1513 = vmatprep.subr.mxu0 %v899
        %1514 = vmatpush2.msra.mxu0 %v898
        %1515 = vmatprep.subr.mxu0 %v895
        %1516 = vmatpush2.msra.mxu0 %v894
        %1517 = vmatprep.subr.mxu0 %v891
        %1518 = vmatpush2.msra.mxu0 %v890
        %1519 = vmatprep.subr.mxu0 %v887
        %1520 = vmatpush2.msra.mxu0 %v886
        %1521 = vmatprep.subr.mxu0 %v883
        %1522 = vmatpush2.msra.mxu0 %v882
        %1523 = vmatprep.subr.mxu0 %v879
        %1524 = vmatpush2.msra.mxu0 %v878
        %1525 = vmatprep.subr.mxu0 %v875
        %1526 = vmatpush2.msra.mxu0 %v874
        %1527 = vmatprep.subr.mxu0 %v871
        %1528 = vmatpush2.msra.mxu0 %v870
        %1529 = vmatprep.subr.mxu0 %v867
        %1530 = vmatpush2.msra.mxu0 %v866
        %1531 = vmatprep.subr.mxu0 %v863
        %1532 = vmatpush2.msra.mxu0 %v862
        %1533 = vmatprep.subr.mxu0 %v859
        %1534 = vmatpush2.msra.mxu0 %v858
        %1535 = vmatprep.subr.mxu0 %v855
        %1536 = vmatpush2.msra.mxu0 %v854
        %1537 = vmatprep.subr.mxu0 %v851
        %1538 = vmatpush2.msra.mxu0 %v850
        %1539 = vmatprep.subr.mxu0 %v847
        %1540 = vmatpush2.msra.mxu0 %v846
        %1541 = vmatprep.subr.mxu0 %v843
        %1542 = vmatpush2.msra.mxu0 %v842
        %1543 = vmatprep.subr.mxu0 %v839
        %1544 = vmatpush2.msra.mxu0 %v838
        %1545 = vmatprep.mubr.f32.mxu0 %v371
        %1546 = vmatmul.mubr.f32.gmra.mxu0 %v370
        %v1547 = vpop.f32.mrf.mxu0
        %v1548 = vadd.f32 %v1465, %v1547
        %v1549 = vpop.f32.mrf.mxu0
        %v1550 = vadd.f32 %v1467, %v1549
        %1551 = vmatprep.mubr.f32.mxu0 %v379
        %1552 = vmatmul.mubr.f32.gmra.mxu0 %v378
        %v1553 = vpop.f32.mrf.mxu0
        %v1554 = vadd.f32 %v1471, %v1553
        %v1555 = vpop.f32.mrf.mxu0
        %v1556 = vadd.f32 %v1473, %v1555
        %1557 = vmatprep.mubr.f32.mxu0 %v387
        %1558 = vmatmul.mubr.f32.gmra.mxu0 %v386
        %v1559 = vpop.f32.mrf.mxu0
        %v1560 = vadd.f32 %v1477, %v1559
        %v1561 = vpop.f32.mrf.mxu0
        %v1562 = vadd.f32 %v1479, %v1561
        %1563 = vdwg.mxu0
        %v1564 = vadd.f32 %v352, %v1216
        %v1565 = vadd.f32 %v353, %v1218
        %v1566 = vadd.f32 %v354, %v1548
        %v1567 = vadd.f32 %v355, %v1550
        %v1568 = vadd.f32 %v356, %v1222
        %v1569 = vadd.f32 %v357, %v1224
        %v1570 = vadd.f32 %v358, %v1554
        %v1571 = vadd.f32 %v359, %v1556
        %v1572 = vadd.f32 %v360, %v1228
        %v1573 = vadd.f32 %v361, %v1230
        %v1574 = vadd.f32 %v362, %v1560
        %v1575 = vadd.f32 %v363, %v1562
        %1576 = vst [vmem:[%s324] sm:$0xff] %v1564
        %1577 = vst [vmem:[%s324 + $0x8] sm:$0xff] %v1565
        %1578 = vst [vmem:[%s324 + $0x10] sm:$0xff] %v1566
        %1579 = vst [vmem:[%s324 + $0x18] sm:$0xff] %v1567
        %1580 = vst [vmem:[%s324 + $0x20] sm:$0xff] %v1568
        %1581 = vst [vmem:[%s324 + $0x28] sm:$0xff] %v1569
        %1582 = vst [vmem:[%s324 + $0x30] sm:$0xff] %v1570
        %1583 = vst [vmem:[%s324 + $0x38] sm:$0xff] %v1571
        %1584 = vst [vmem:[%s324 + $0x40] sm:$0xff] %v1572
        %1585 = vst [vmem:[%s324 + $0x48] sm:$0xff] %v1573
        %1586 = vst [vmem:[%s324 + $0x50] sm:$0xff] %v1574
        %1587 = vst [vmem:[%s324 + $0x58] sm:$0xff] %v1575
        %p1588 = scmp.eq.s32.totalorder %s21, 3
        // Predicated region
        $region56: #{patchgan_forward.16} parent=46 // pred_check
          %p1589 = pneg %p1588
        $region57: #{patchgan_forward.16} parent=46 // pred_check_branch
          %1591 = sbr.rel (%p1589) target = $region59
        $region58: #{patchgan_forward.16} parent=46 // pred_region
          %v1592 = vld [vmem:[%s324] sm:$0xff]
          %v1593 = vld [vmem:[%s324 + $0x8] sm:$0xff]
          %v1594 = vld [vmem:[%s324 + $0x10] sm:$0xff]
          %v1595 = vld [vmem:[%s324 + $0x18] sm:$0xff]
          %v1596 = vld [vmem:[%s324 + $0x20] sm:$0xff]
          %v1597 = vld [vmem:[%s324 + $0x28] sm:$0xff]
          %v1598 = vld [vmem:[%s324 + $0x30] sm:$0xff]
          %v1599 = vld [vmem:[%s324 + $0x38] sm:$0xff]
          %v1600 = vld [vmem:[%s324 + $0x40] sm:$0xff]
          %v1601 = vld [vmem:[%s324 + $0x48] sm:$0xff]
          %v1602 = vld [vmem:[%s324 + $0x50] sm:$0xff]
          %v1603 = vld [vmem:[%s324 + $0x58] sm:$0xff]
          %v1604 = vlaneseq
          %v1605 = vshrl.u32 %v1604, 7
          %v1606 = vadd.s32 %v1605, 8
          %v1607 = vadd.s32 %v1605, 16
          %s1608 = smul.u32 %s20, 24
          %v1609 = vstv %s1608
          %v1610 = vadd.s32 %v1605, %v1609
          %v1611 = vadd.s32 %v1606, %v1609
          %v1612 = vadd.s32 %v1607, %v1609
          %vm1613 = vcmp.lt.s32.totalorder %v1610, 18
          %vm1614 = vcmp.lt.s32.totalorder %v1611, 18
          %vm1615 = vcmp.lt.s32.totalorder %v1612, 18
          %v1616 = vsel %vm1613, %v1592, 0.0
          %v1617 = vsel %vm1613, %v1593, 0.0
          %v1618 = vsel %vm1613, %v1594, 0.0
          %v1619 = vsel %vm1613, %v1595, 0.0
          %v1620 = vsel %vm1614, %v1596, 0.0
          %v1621 = vsel %vm1614, %v1597, 0.0
          %v1622 = vsel %vm1614, %v1598, 0.0
          %v1623 = vsel %vm1614, %v1599, 0.0
          %v1624 = vsel %vm1615, %v1600, 0.0
          %v1625 = vsel %vm1615, %v1601, 0.0
          %v1626 = vsel %vm1615, %v1602, 0.0
          %v1627 = vsel %vm1615, %v1603, 0.0
          %v1628 = vadd.f32 %v1616, %v1620
          %v1629 = vadd.f32 %v1628, %v1624
          %v1630 = vadd.f32 %v1617, %v1621
          %v1631 = vadd.f32 %v1630, %v1625
          %v1632 = vadd.f32 %v1618, %v1622
          %v1633 = vadd.f32 %v1632, %v1626
          %v1634 = vadd.f32 %v1619, %v1623
          %v1635 = vadd.f32 %v1634, %v1627
          %1636 = vst [vmem:[%s330] sm:$0xff] %v1629
          %1637 = vst [vmem:[%s330 + $0x8] sm:$0xff] %v1631
          %1638 = vst [vmem:[%s330 + $0x10] sm:$0xff] %v1633
          %1639 = vst [vmem:[%s330 + $0x18] sm:$0xff] %v1635
          %v1640 = vmul.f32 %v1616, %v1616
          %v1641 = vmul.f32 %v1617, %v1617
          %v1642 = vmul.f32 %v1618, %v1618
          %v1643 = vmul.f32 %v1619, %v1619
          %v1644 = vmul.f32 %v1620, %v1620
          %v1645 = vmul.f32 %v1621, %v1621
          %v1646 = vmul.f32 %v1622, %v1622
          %v1647 = vmul.f32 %v1623, %v1623
          %v1648 = vmul.f32 %v1624, %v1624
          %v1649 = vmul.f32 %v1625, %v1625
          %v1650 = vmul.f32 %v1626, %v1626
          %v1651 = vmul.f32 %v1627, %v1627
          %v1652 = vadd.f32 %v1640, %v1644
          %v1653 = vadd.f32 %v1652, %v1648
          %v1654 = vadd.f32 %v1641, %v1645
          %v1655 = vadd.f32 %v1654, %v1649
          %v1656 = vadd.f32 %v1642, %v1646
          %v1657 = vadd.f32 %v1656, %v1650
          %v1658 = vadd.f32 %v1643, %v1647
          %v1659 = vadd.f32 %v1658, %v1651
          %1660 = vst [vmem:[%s335] sm:$0xff] %v1653
          %1661 = vst [vmem:[%s335 + $0x8] sm:$0xff] %v1655
          %1662 = vst [vmem:[%s335 + $0x10] sm:$0xff] %v1657
          %1663 = vst [vmem:[%s335 + $0x18] sm:$0xff] %v1659
        $region59: #{patchgan_forward.16} parent=46 // pred_fallthru
          _
        %s1664 = smul.u32 3, %s20
        %p1665 = scmp.lt.s32.totalorder %s1664, 2
        %s1666 = scalar_select %p1665, %s1664, 2
        %s1667 = smul.addr %s1666, 4
        %s1668 = smul.addr %s1667, 8
        %s1669 = scalar_lea.vmem %s2, %s1668
        %p1670 = scmp.lt.s32.totalorder %s20, 0
        %s1671 = scalar_select %p1670, %s20, 0
        %s1672 = smul.addr %s1671, 4
        %s1673 = smul.addr %s1672, 8
        %s1674 = scalar_lea.vmem %s3, %s1673
        %p1675 = scmp.lt.s32.totalorder %s20, 0
        %s1676 = scalar_select %p1675, %s20, 0
        %s1677 = smul.addr %s1676, 4
        %s1678 = smul.addr %s1677, 8
        %s1679 = scalar_lea.vmem %s4, %s1678
        // Predicated region
        $region60: #{patchgan_forward.16} parent=46 // pred_check
          %p1680 = pneg %p100
        $region61: #{patchgan_forward.16} parent=46 // pred_check_branch
          %1682 = sbr.rel (%p1680) target = $region63
        $region62: #{patchgan_forward.16} parent=46 // pred_region
          %s1683 = smul.u32 3, %s20
        $region63: #{patchgan_forward.16} parent=46 // pred_fallthru
          _
        // Predicated region
        $region64: #{patchgan_forward.16} parent=46 // pred_check
          %p1684 = pneg %p126
        $region65: #{patchgan_forward.16} parent=46 // pred_check_branch
          %1686 = sbr.rel (%p1684) target = $region67
        $region66: #{patchgan_forward.16} parent=46 // pred_region
          _
        $region67: #{patchgan_forward.16} parent=46 // pred_fallthru
          _
        // Predicated region
        $region68: #{patchgan_forward.16} parent=46 // pred_check
          %p1687 = pneg %p152
        $region69: #{patchgan_forward.16} parent=46 // pred_check_branch
          %1689 = sbr.rel (%p1687) target = $region71
        $region70: #{patchgan_forward.16} parent=46 // pred_region
          _
        $region71: #{patchgan_forward.16} parent=46 // pred_fallthru
          _
        // Predicated region
        $region72: #{patchgan_forward.16} parent=46 // pred_check
          %p1690 = pneg %p100
        $region73: #{patchgan_forward.16} parent=46 // pred_check_branch
          %1692 = sbr.rel (%p1690) target = $region75
        $region74: #{patchgan_forward.16} parent=46 // pred_region
          %s1693 = smul.u32 3, %s20
          %p1694 = scmp.lt.s32.totalorder %s1693, 2
          %s1695 = scalar_select %p1694, %s1693, 2
          %s1696 = smul.addr %s1695, 4
          %s1697 = smul.addr %s1696, 8
          %s1698 = scalar_lea.vmem %s2, %s1697
        $region75: #{patchgan_forward.16} parent=46 // pred_fallthru
          _
        // Predicated region
        $region76: #{patchgan_forward.16} parent=46 // pred_check
          %p1699 = pneg %p126
        $region77: #{patchgan_forward.16} parent=46 // pred_check_branch
          %1701 = sbr.rel (%p1699) target = $region79
        $region78: #{patchgan_forward.16} parent=46 // pred_region
          %p1702 = scmp.lt.s32.totalorder %s20, 0
          %s1703 = scalar_select %p1702, %s20, 0
          %s1704 = smul.addr %s1703, 4
          %s1705 = smul.addr %s1704, 8
          %s1706 = scalar_lea.vmem %s3, %s1705
        $region79: #{patchgan_forward.16} parent=46 // pred_fallthru
          _
        // Predicated region
        $region80: #{patchgan_forward.16} parent=46 // pred_check
          %p1707 = pneg %p152
        $region81: #{patchgan_forward.16} parent=46 // pred_check_branch
          %1709 = sbr.rel (%p1707) target = $region83
        $region82: #{patchgan_forward.16} parent=46 // pred_region
          %p1710 = scmp.lt.s32.totalorder %s20, 0
          %s1711 = scalar_select %p1710, %s20, 0
          %s1712 = smul.addr %s1711, 4
          %s1713 = smul.addr %s1712, 8
          %s1714 = scalar_lea.vmem %s4, %s1713
        $region83: #{patchgan_forward.16} parent=46 // pred_fallthru
          _
      $region47: #{patchgan_forward.16} parent=5 // pred_fallthru
        _
      %p1715 = scmp.le.s32.totalorder 2, %s11
      // Predicated region
      $region84: #{patchgan_forward.16} parent=5 // pred_check
        %p1716 = pneg %p1715
      $region85: #{patchgan_forward.16} parent=5 // pred_check_branch
        %1718 = sbr.rel (%p1716) target = $region87
      $region86: #{patchgan_forward.16} parent=5 // pred_region
        %s1719 = ssub.s32 %s11, 2
      $region87: #{patchgan_forward.16} parent=5 // pred_fallthru
        _
    $region6: #{patchgan_forward.16} parent=1 // loop_footer
      %s15 = sadd.s32 1, %s11
    $region7: #{patchgan_forward.16} parent=1 // loop_footer_branch
      %10 = sbr.rel target = $region3
    $region8: #{patchgan_forward.16} parent=1 // loop_exit
      _

// kernel: patchgan_forward.18
$region0: #{patchgan_forward.18}
  #allocation0 [shape = 'u32[]', space=smem, size = 0x4, offset = 0x4, fixed_abs, tag = 'smem constant byte address 0x4 - core index']
  #allocation1 [shape = 'u32[144,128]{1,0:T(1,128)}', space=vmem, size = 0x12000, scoped, tag = 'internal scratch']
  %s0 = inlined_call_operand.vmem [shape: f32[8,8192], index: 0, kind: input, shape index: {}]
  %s1 = inlined_call_operand.vmem [shape: f32[8192,128], index: 1, kind: input, shape index: {}]
  %s2 = inlined_call_operand.vmem [shape: f32[8,128], index: 2, kind: output, shape index: {0}]
  %s3 = inlined_call_operand.vmem [shape: f32[8,128], index: 3, kind: output, shape index: {1}]
  %s4 = inlined_call_operand.vmem [shape: f32[8,128], index: 4, kind: output, shape index: {2}]
  %5 = xla_tuple %s2, %s3, %s4
  %s6 = sld [smem:[#allocation0]]
  $region65: #{patchgan_forward.18} parent=0
    _
  %s8 = ssub.s32 1, %s6
  %s9 = scalar_select 0, %s8, %s6
  loop: start=0, step=1, limit=10
  $region2: #{patchgan_forward.18} parent=0 // loop_pre_header
    _
  $region3: #{patchgan_forward.18} parent=0 // loop_header
    %s11 = sphi 0, %s15
    %p12 = scmp.ge.s32.totalorder %s11, 10
    %s18 = sphi 0, %s30
    %s19 = sphi 0, %s26
    %s20 = sphi 0, %s18
    %s21 = sphi 0, %s19
    %s22 = sphi 0, %s20
    %s23 = sphi 0, %s21
    %s35 = sphi 0, %s37
    %s38 = sphi 0, %s35
    %s39 = sphi 0, %s38
    %s55 = sphi 0, %s39
    %s61 = sphi 0, %s63
    %s64 = sphi 0, %s61
    %s65 = sphi 0, %s64
    %s81 = sphi 0, %s65
    %s87 = sphi 0, %s89
    %s90 = sphi 0, %s87
    %s91 = sphi 0, %s90
    %s107 = sphi 0, %s91
    %s113 = sphi 0, %s115
    %s116 = sphi 0, %s113
    %s117 = sphi 0, %s116
    %s133 = sphi 0, %s117
    %s139 = sphi 0, %s141
    %s142 = sphi 0, %s139
    %s143 = sphi 0, %s142
    %s159 = sphi 0, %s143
  $region4: #{patchgan_forward.18} parent=0 // loop_header_branch
    %14 = sbr.rel (%p12) target = $region8
  $region5: #{patchgan_forward.18} parent=0 // loop_body
    %s16 = ssub.s32 %s11, 1
    %s17 = ssub.s32 %s11, 2
    %s24 = sadd.s32 1, %s19
    %p25 = scmp.ge.s32.totalorder %s24, 8
    %s26 = scalar_select %p25, 0, %s24
    %s27 = sadd.s32 1, %s18
    %s28 = scalar_select %p25, %s27, %s18
    %p29 = scmp.ge.s32.totalorder %s28, 1
    %s30 = scalar_select %p29, 0, %s28
    %s31 = ssub.s32 %s18, %s30
    %s32 = ssub.s32 %s19, %s26
    %s33 = sor.u32 %s31, %s32
    %p34 = scmp.eq.s32.totalorder %s33, 0
    %s36 = sadd.s32 %s35, 1
    %s37 = scalar_select %p34, %s35, %s36
    %p40 = pneg %p34
    %p41 = scmp.eq.s32.totalorder %s11, 7
    %p42 = por %p40, %p41
    %p43 = scmp.ne.s32.totalorder %s35, %s38
    %p44 = scmp.eq.s32.totalorder %s11, 0
    %p45 = por %p43, %p44
    %p46 = scmp.ne.s32.totalorder %s35, %s38
    %p47 = scmp.eq.s32.totalorder %s16, 7
    %p48 = por %p46, %p47
    %p49 = scmp.ne.s32.totalorder %s38, %s39
    %p50 = scmp.eq.s32.totalorder %s16, 0
    %p51 = por %p49, %p50
    %p52 = scmp.ne.s32.totalorder %s38, %s39
    %p53 = scmp.eq.s32.totalorder %s17, 7
    %p54 = por %p52, %p53
    %p56 = scmp.ne.s32.totalorder %s39, %s55
    %p57 = scmp.eq.s32.totalorder %s17, 0
    %p58 = por %p56, %p57
    %s59 = ssub.s32 %s19, %s26
    %p60 = scmp.eq.s32.totalorder %s59, 0
    %s62 = sadd.s32 %s61, 1
    %s63 = scalar_select %p60, %s61, %s62
    %p66 = pneg %p60
    %p67 = scmp.eq.s32.totalorder %s11, 7
    %p68 = por %p66, %p67
    %p69 = scmp.ne.s32.totalorder %s61, %s64
    %p70 = scmp.eq.s32.totalorder %s11, 0
    %p71 = por %p69, %p70
    %p72 = scmp.ne.s32.totalorder %s61, %s64
    %p73 = scmp.eq.s32.totalorder %s16, 7
    %p74 = por %p72, %p73
    %p75 = scmp.ne.s32.totalorder %s64, %s65
    %p76 = scmp.eq.s32.totalorder %s16, 0
    %p77 = por %p75, %p76
    %p78 = scmp.ne.s32.totalorder %s64, %s65
    %p79 = scmp.eq.s32.totalorder %s17, 7
    %p80 = por %p78, %p79
    %p82 = scmp.ne.s32.totalorder %s65, %s81
    %p83 = scmp.eq.s32.totalorder %s17, 0
    %p84 = por %p82, %p83
    %s85 = ssub.s32 %s18, %s30
    %p86 = scmp.eq.s32.totalorder %s85, 0
    %s88 = sadd.s32 %s87, 1
    %s89 = scalar_select %p86, %s87, %s88
    %p92 = pneg %p86
    %p93 = scmp.eq.s32.totalorder %s11, 7
    %p94 = por %p92, %p93
    %p95 = scmp.ne.s32.totalorder %s87, %s90
    %p96 = scmp.eq.s32.totalorder %s11, 0
    %p97 = por %p95, %p96
    %p98 = scmp.ne.s32.totalorder %s87, %s90
    %p99 = scmp.eq.s32.totalorder %s16, 7
    %p100 = por %p98, %p99
    %p101 = scmp.ne.s32.totalorder %s90, %s91
    %p102 = scmp.eq.s32.totalorder %s16, 0
    %p103 = por %p101, %p102
    %p104 = scmp.ne.s32.totalorder %s90, %s91
    %p105 = scmp.eq.s32.totalorder %s17, 7
    %p106 = por %p104, %p105
    %p108 = scmp.ne.s32.totalorder %s91, %s107
    %p109 = scmp.eq.s32.totalorder %s17, 0
    %p110 = por %p108, %p109
    %s111 = ssub.s32 %s18, %s30
    %p112 = scmp.eq.s32.totalorder %s111, 0
    %s114 = sadd.s32 %s113, 1
    %s115 = scalar_select %p112, %s113, %s114
    %p118 = pneg %p112
    %p119 = scmp.eq.s32.totalorder %s11, 7
    %p120 = por %p118, %p119
    %p121 = scmp.ne.s32.totalorder %s113, %s116
    %p122 = scmp.eq.s32.totalorder %s11, 0
    %p123 = por %p121, %p122
    %p124 = scmp.ne.s32.totalorder %s113, %s116
    %p125 = scmp.eq.s32.totalorder %s16, 7
    %p126 = por %p124, %p125
    %p127 = scmp.ne.s32.totalorder %s116, %s117
    %p128 = scmp.eq.s32.totalorder %s16, 0
    %p129 = por %p127, %p128
    %p130 = scmp.ne.s32.totalorder %s116, %s117
    %p131 = scmp.eq.s32.totalorder %s17, 7
    %p132 = por %p130, %p131
    %p134 = scmp.ne.s32.totalorder %s117, %s133
    %p135 = scmp.eq.s32.totalorder %s17, 0
    %p136 = por %p134, %p135
    %s137 = ssub.s32 %s18, %s30
    %p138 = scmp.eq.s32.totalorder %s137, 0
    %s140 = sadd.s32 %s139, 1
    %s141 = scalar_select %p138, %s139, %s140
    %p144 = pneg %p138
    %p145 = scmp.eq.s32.totalorder %s11, 7
    %p146 = por %p144, %p145
    %p147 = scmp.ne.s32.totalorder %s139, %s142
    %p148 = scmp.eq.s32.totalorder %s11, 0
    %p149 = por %p147, %p148
    %p150 = scmp.ne.s32.totalorder %s139, %s142
    %p151 = scmp.eq.s32.totalorder %s16, 7
    %p152 = por %p150, %p151
    %p153 = scmp.ne.s32.totalorder %s142, %s143
    %p154 = scmp.eq.s32.totalorder %s16, 0
    %p155 = por %p153, %p154
    %p156 = scmp.ne.s32.totalorder %s142, %s143
    %p157 = scmp.eq.s32.totalorder %s17, 7
    %p158 = por %p156, %p157
    %p160 = scmp.ne.s32.totalorder %s143, %s159
    %p161 = scmp.eq.s32.totalorder %s17, 0
    %p162 = por %p160, %p161
    %p163 = scmp.le.s32.totalorder 1, %s11
    %p164 = scmp.lt.s32.totalorder %s11, 9
    %p165 = pnand %p163, %p164
    %p166 = pneg %p165
    // Predicated region
    $region9: #{patchgan_forward.18} parent=5 // pred_check
      _
    $region10: #{patchgan_forward.18} parent=5 // pred_check_branch
      %168 = sbr.rel (%p165) target = $region12
    $region11: #{patchgan_forward.18} parent=5 // pred_region
      %s169 = ssub.s32 %s11, 1
    $region12: #{patchgan_forward.18} parent=5 // pred_fallthru
      _
    %p170 = scmp.lt.s32.totalorder %s11, 8
    // Predicated region
    $region13: #{patchgan_forward.18} parent=5 // pred_check
      %p171 = pneg %p170
    $region14: #{patchgan_forward.18} parent=5 // pred_check_branch
      %173 = sbr.rel (%p171) target = $region16
    $region15: #{patchgan_forward.18} parent=5 // pred_region
      // Predicated region
      $region17: #{patchgan_forward.18} parent=15 // pred_check
        %p174 = pneg %p45
      $region18: #{patchgan_forward.18} parent=15 // pred_check_branch
        %176 = sbr.rel (%p174) target = $region20
      $region19: #{patchgan_forward.18} parent=15 // pred_region
        %s177 = smul.u32 8, %s19
        %p178 = scmp.lt.s32.totalorder %s18, 0
        %s179 = scalar_select %p178, %s18, 0
        %p180 = scmp.lt.s32.totalorder %s177, 63
        %s181 = scalar_select %p180, %s177, 63
        %s182 = smul.addr %s179, 64
        %s183 = sadd.s32 %s181, %s182
        %s184 = smul.addr %s183, 8
        %s185 = scalar_lea.vmem %s0, %s184
        %s186 = smul.u32 8, %s19
      $region20: #{patchgan_forward.18} parent=15 // pred_fallthru
        _
      // Predicated region
      $region21: #{patchgan_forward.18} parent=15 // pred_check
        %p187 = pneg %p71
      $region22: #{patchgan_forward.18} parent=15 // pred_check_branch
        %189 = sbr.rel (%p187) target = $region24
      $region23: #{patchgan_forward.18} parent=15 // pred_region
        %s190 = smul.u32 128, %s19
        %p191 = scmp.lt.s32.totalorder %s190, 1023
        %s192 = scalar_select %p191, %s190, 1023
        %s193 = smul.addr %s192, 8
        %s194 = scalar_lea.vmem %s1, %s193
        %s195 = smul.u32 128, %s19
      $region24: #{patchgan_forward.18} parent=15 // pred_fallthru
        _
    $region16: #{patchgan_forward.18} parent=5 // pred_fallthru
      _
    %p196 = scmp.le.s32.totalorder 1, %s11
    %p197 = scmp.lt.s32.totalorder %s11, 9
    %p198 = pnand %p196, %p197
    %p199 = pneg %p198
    // Predicated region
    $region25: #{patchgan_forward.18} parent=5 // pred_check
      _
    $region26: #{patchgan_forward.18} parent=5 // pred_check_branch
      %201 = sbr.rel (%p198) target = $region28
    $region27: #{patchgan_forward.18} parent=5 // pred_region
      %s202 = ssub.s32 %s11, 1
      %s203 = smul.u32 8, %s21
      %p204 = scmp.lt.s32.totalorder %s20, 0
      %s205 = scalar_select %p204, %s20, 0
      %p206 = scmp.lt.s32.totalorder %s203, 63
      %s207 = scalar_select %p206, %s203, 63
      %s208 = smul.addr %s205, 64
      %s209 = sadd.s32 %s207, %s208
      %s210 = smul.addr %s209, 8
      %s211 = scalar_lea.vmem %s0, %s210
      %p212 = pneg %p51
      %p213 = pneg %p48
      %s214 = smul.u32 128, %s21
      %p215 = scmp.lt.s32.totalorder %s214, 1023
      %s216 = scalar_select %p215, %s214, 1023
      %s217 = smul.addr %s216, 8
      %s218 = scalar_lea.vmem %s1, %s217
      %p219 = pneg %p77
      %p220 = pneg %p74
      %p221 = pneg %p103
      %p222 = pneg %p100
      %p223 = scmp.lt.s32.totalorder %s20, 0
      %s224 = scalar_select %p223, %s20, 0
      %s225 = smul.addr %s224, 8
      %s226 = scalar_lea.vmem %s2, %s225
      %p227 = pneg %p129
      %p228 = pneg %p126
      %p229 = scmp.lt.s32.totalorder %s20, 0
      %s230 = scalar_select %p229, %s20, 0
      %s231 = smul.addr %s230, 8
      %s232 = scalar_lea.vmem %s3, %s231
      %p233 = pneg %p155
      %p234 = pneg %p152
      %p235 = scmp.lt.s32.totalorder %s20, 0
      %s236 = scalar_select %p235, %s20, 0
      %s237 = smul.addr %s236, 8
      %s238 = scalar_lea.vmem %s4, %s237
      %s239 = smul.u32 8, %s21
      %p240 = scmp.lt.s32.totalorder %s20, 0
      %s241 = scalar_select %p240, %s20, 0
      %p242 = scmp.lt.s32.totalorder %s239, 63
      %s243 = scalar_select %p242, %s239, 63
      %s244 = smul.addr %s241, 64
      %s245 = sadd.s32 %s243, %s244
      %s246 = smul.addr %s245, 8
      %s247 = scalar_lea.vmem %s0, %s246
      %s248 = smul.u32 8, %s21
      %s249 = smul.u32 128, %s21
      %p250 = scmp.lt.s32.totalorder %s249, 1023
      %s251 = scalar_select %p250, %s249, 1023
      %s252 = smul.addr %s251, 8
      %s253 = scalar_lea.vmem %s1, %s252
      %s254 = smul.u32 128, %s21
      %p255 = scmp.lt.s32.totalorder %s20, 0
      %s256 = scalar_select %p255, %s20, 0
      %s257 = smul.addr %s256, 8
      %s258 = scalar_lea.vmem %s2, %s257
      %p259 = scmp.lt.s32.totalorder %s20, 0
      %s260 = scalar_select %p259, %s20, 0
      %s261 = smul.addr %s260, 8
      %s262 = scalar_lea.vmem %s3, %s261
      %p263 = scmp.lt.s32.totalorder %s20, 0
      %s264 = scalar_select %p263, %s20, 0
      %s265 = smul.addr %s264, 8
      %s266 = scalar_lea.vmem %s4, %s265
      %p267 = scmp.eq.s32.totalorder %s21, 0
      // Predicated region
      $region29: #{patchgan_forward.18} parent=27 // pred_check
        %p268 = pneg %p267
      $region30: #{patchgan_forward.18} parent=27 // pred_check_branch
        %270 = sbr.rel (%p268) target = $region32
      $region31: #{patchgan_forward.18} parent=27 // pred_region
        %271 = vst [vmem:[%s258] sm:$0xff] 0.0
      $region32: #{patchgan_forward.18} parent=27 // pred_fallthru
        _
      %v272 = vld [vmem:[%s258] sm:$0xff]
      %v273 = vld [vmem:[%s247] sm:$0xff]
      %v274 = vld [vmem:[%s247 + $0x8] sm:$0xff]
      %v275 = vld [vmem:[%s247 + $0x10] sm:$0xff]
      %v276 = vld [vmem:[%s247 + $0x18] sm:$0xff]
      %v277 = vld [vmem:[%s247 + $0x20] sm:$0xff]
      %v278 = vld [vmem:[%s247 + $0x28] sm:$0xff]
      %v279 = vld [vmem:[%s247 + $0x30] sm:$0xff]
      %v280 = vld [vmem:[%s247 + $0x38] sm:$0xff]
      %v281 = vld [vmem:[%s253] sm:$0xff]
      %v282 = vld [vmem:[%s253 + $0x8] sm:$0xff]
      %v283 = vld [vmem:[%s253 + $0x10] sm:$0xff]
      %v284 = vld [vmem:[%s253 + $0x18] sm:$0xff]
      %v285 = vld [vmem:[%s253 + $0x20] sm:$0xff]
      %v286 = vld [vmem:[%s253 + $0x28] sm:$0xff]
      %v287 = vld [vmem:[%s253 + $0x30] sm:$0xff]
      %v288 = vld [vmem:[%s253 + $0x38] sm:$0xff]
      %v289 = vld [vmem:[%s253 + $0x40] sm:$0xff]
      %v290 = vld [vmem:[%s253 + $0x48] sm:$0xff]
      %v291 = vld [vmem:[%s253 + $0x50] sm:$0xff]
      %v292 = vld [vmem:[%s253 + $0x58] sm:$0xff]
      %v293 = vld [vmem:[%s253 + $0x60] sm:$0xff]
      %v294 = vld [vmem:[%s253 + $0x68] sm:$0xff]
      %v295 = vld [vmem:[%s253 + $0x70] sm:$0xff]
      %v296 = vld [vmem:[%s253 + $0x78] sm:$0xff]
      %v297 = vld [vmem:[%s253 + $0x80] sm:$0xff]
      %v298 = vld [vmem:[%s253 + $0x88] sm:$0xff]
      %v299 = vld [vmem:[%s253 + $0x90] sm:$0xff]
      %v300 = vld [vmem:[%s253 + $0x98] sm:$0xff]
      %v301 = vld [vmem:[%s253 + $0xa0] sm:$0xff]
      %v302 = vld [vmem:[%s253 + $0xa8] sm:$0xff]
      %v303 = vld [vmem:[%s253 + $0xb0] sm:$0xff]
      %v304 = vld [vmem:[%s253 + $0xb8] sm:$0xff]
      %v305 = vld [vmem:[%s253 + $0xc0] sm:$0xff]
      %v306 = vld [vmem:[%s253 + $0xc8] sm:$0xff]
      %v307 = vld [vmem:[%s253 + $0xd0] sm:$0xff]
      %v308 = vld [vmem:[%s253 + $0xd8] sm:$0xff]
      %v309 = vld [vmem:[%s253 + $0xe0] sm:$0xff]
      %v310 = vld [vmem:[%s253 + $0xe8] sm:$0xff]
      %v311 = vld [vmem:[%s253 + $0xf0] sm:$0xff]
      %v312 = vld [vmem:[%s253 + $0xf8] sm:$0xff]
      %v313 = vld [vmem:[%s253 + $0x100] sm:$0xff]
      %v314 = vld [vmem:[%s253 + $0x108] sm:$0xff]
      %v315 = vld [vmem:[%s253 + $0x110] sm:$0xff]
      %v316 = vld [vmem:[%s253 + $0x118] sm:$0xff]
      %v317 = vld [vmem:[%s253 + $0x120] sm:$0xff]
      %v318 = vld [vmem:[%s253 + $0x128] sm:$0xff]
      %v319 = vld [vmem:[%s253 + $0x130] sm:$0xff]
      %v320 = vld [vmem:[%s253 + $0x138] sm:$0xff]
      %v321 = vld [vmem:[%s253 + $0x140] sm:$0xff]
      %v322 = vld [vmem:[%s253 + $0x148] sm:$0xff]
      %v323 = vld [vmem:[%s253 + $0x150] sm:$0xff]
      %v324 = vld [vmem:[%s253 + $0x158] sm:$0xff]
      %v325 = vld [vmem:[%s253 + $0x160] sm:$0xff]
      %v326 = vld [vmem:[%s253 + $0x168] sm:$0xff]
      %v327 = vld [vmem:[%s253 + $0x170] sm:$0xff]
      %v328 = vld [vmem:[%s253 + $0x178] sm:$0xff]
      %v329 = vld [vmem:[%s253 + $0x180] sm:$0xff]
      %v330 = vld [vmem:[%s253 + $0x188] sm:$0xff]
      %v331 = vld [vmem:[%s253 + $0x190] sm:$0xff]
      %v332 = vld [vmem:[%s253 + $0x198] sm:$0xff]
      %v333 = vld [vmem:[%s253 + $0x1a0] sm:$0xff]
      %v334 = vld [vmem:[%s253 + $0x1a8] sm:$0xff]
      %v335 = vld [vmem:[%s253 + $0x1b0] sm:$0xff]
      %v336 = vld [vmem:[%s253 + $0x1b8] sm:$0xff]
      %v337 = vld [vmem:[%s253 + $0x1c0] sm:$0xff]
      %v338 = vld [vmem:[%s253 + $0x1c8] sm:$0xff]
      %v339 = vld [vmem:[%s253 + $0x1d0] sm:$0xff]
      %v340 = vld [vmem:[%s253 + $0x1d8] sm:$0xff]
      %v341 = vld [vmem:[%s253 + $0x1e0] sm:$0xff]
      %v342 = vld [vmem:[%s253 + $0x1e8] sm:$0xff]
      %v343 = vld [vmem:[%s253 + $0x1f0] sm:$0xff]
      %v344 = vld [vmem:[%s253 + $0x1f8] sm:$0xff]
      %v345 = vld [vmem:[%s253 + $0x200] sm:$0xff]
      %v346 = vld [vmem:[%s253 + $0x208] sm:$0xff]
      %v347 = vld [vmem:[%s253 + $0x210] sm:$0xff]
      %v348 = vld [vmem:[%s253 + $0x218] sm:$0xff]
      %v349 = vld [vmem:[%s253 + $0x220] sm:$0xff]
      %v350 = vld [vmem:[%s253 + $0x228] sm:$0xff]
      %v351 = vld [vmem:[%s253 + $0x230] sm:$0xff]
      %v352 = vld [vmem:[%s253 + $0x238] sm:$0xff]
      %v353 = vld [vmem:[%s253 + $0x240] sm:$0xff]
      %v354 = vld [vmem:[%s253 + $0x248] sm:$0xff]
      %v355 = vld [vmem:[%s253 + $0x250] sm:$0xff]
      %v356 = vld [vmem:[%s253 + $0x258] sm:$0xff]
      %v357 = vld [vmem:[%s253 + $0x260] sm:$0xff]
      %v358 = vld [vmem:[%s253 + $0x268] sm:$0xff]
      %v359 = vld [vmem:[%s253 + $0x270] sm:$0xff]
      %v360 = vld [vmem:[%s253 + $0x278] sm:$0xff]
      %v361 = vld [vmem:[%s253 + $0x280] sm:$0xff]
      %v362 = vld [vmem:[%s253 + $0x288] sm:$0xff]
      %v363 = vld [vmem:[%s253 + $0x290] sm:$0xff]
      %v364 = vld [vmem:[%s253 + $0x298] sm:$0xff]
      %v365 = vld [vmem:[%s253 + $0x2a0] sm:$0xff]
      %v366 = vld [vmem:[%s253 + $0x2a8] sm:$0xff]
      %v367 = vld [vmem:[%s253 + $0x2b0] sm:$0xff]
      %v368 = vld [vmem:[%s253 + $0x2b8] sm:$0xff]
      %v369 = vld [vmem:[%s253 + $0x2c0] sm:$0xff]
      %v370 = vld [vmem:[%s253 + $0x2c8] sm:$0xff]
      %v371 = vld [vmem:[%s253 + $0x2d0] sm:$0xff]
      %v372 = vld [vmem:[%s253 + $0x2d8] sm:$0xff]
      %v373 = vld [vmem:[%s253 + $0x2e0] sm:$0xff]
      %v374 = vld [vmem:[%s253 + $0x2e8] sm:$0xff]
      %v375 = vld [vmem:[%s253 + $0x2f0] sm:$0xff]
      %v376 = vld [vmem:[%s253 + $0x2f8] sm:$0xff]
      %v377 = vld [vmem:[%s253 + $0x300] sm:$0xff]
      %v378 = vld [vmem:[%s253 + $0x308] sm:$0xff]
      %v379 = vld [vmem:[%s253 + $0x310] sm:$0xff]
      %v380 = vld [vmem:[%s253 + $0x318] sm:$0xff]
      %v381 = vld [vmem:[%s253 + $0x320] sm:$0xff]
      %v382 = vld [vmem:[%s253 + $0x328] sm:$0xff]
      %v383 = vld [vmem:[%s253 + $0x330] sm:$0xff]
      %v384 = vld [vmem:[%s253 + $0x338] sm:$0xff]
      %v385 = vld [vmem:[%s253 + $0x340] sm:$0xff]
      %v386 = vld [vmem:[%s253 + $0x348] sm:$0xff]
      %v387 = vld [vmem:[%s253 + $0x350] sm:$0xff]
      %v388 = vld [vmem:[%s253 + $0x358] sm:$0xff]
      %v389 = vld [vmem:[%s253 + $0x360] sm:$0xff]
      %v390 = vld [vmem:[%s253 + $0x368] sm:$0xff]
      %v391 = vld [vmem:[%s253 + $0x370] sm:$0xff]
      %v392 = vld [vmem:[%s253 + $0x378] sm:$0xff]
      %v393 = vld [vmem:[%s253 + $0x380] sm:$0xff]
      %v394 = vld [vmem:[%s253 + $0x388] sm:$0xff]
      %v395 = vld [vmem:[%s253 + $0x390] sm:$0xff]
      %v396 = vld [vmem:[%s253 + $0x398] sm:$0xff]
      %v397 = vld [vmem:[%s253 + $0x3a0] sm:$0xff]
      %v398 = vld [vmem:[%s253 + $0x3a8] sm:$0xff]
      %v399 = vld [vmem:[%s253 + $0x3b0] sm:$0xff]
      %v400 = vld [vmem:[%s253 + $0x3b8] sm:$0xff]
      %v401 = vld [vmem:[%s253 + $0x3c0] sm:$0xff]
      %v402 = vld [vmem:[%s253 + $0x3c8] sm:$0xff]
      %v403 = vld [vmem:[%s253 + $0x3d0] sm:$0xff]
      %v404 = vld [vmem:[%s253 + $0x3d8] sm:$0xff]
      %v405 = vld [vmem:[%s253 + $0x3e0] sm:$0xff]
      %v406 = vld [vmem:[%s253 + $0x3e8] sm:$0xff]
      %v407 = vld [vmem:[%s253 + $0x3f0] sm:$0xff]
      %v408 = vld [vmem:[%s253 + $0x3f8] sm:$0xff]
      %409 = vmatprep.subr.mxu0 0.0
      %410 = vmatpush1.msra.mxu0 %v296
      %411 = vmatprep.subr.mxu0 0.0
      %412 = vmatpush1.msra.mxu0 %v295
      %413 = vmatprep.subr.mxu0 0.0
      %414 = vmatpush1.msra.mxu0 %v294
      %415 = vmatprep.subr.mxu0 0.0
      %416 = vmatpush1.msra.mxu0 %v293
      %417 = vmatprep.subr.mxu0 0.0
      %418 = vmatpush1.msra.mxu0 %v292
      %419 = vmatprep.subr.mxu0 0.0
      %420 = vmatpush1.msra.mxu0 %v291
      %421 = vmatprep.subr.mxu0 0.0
      %422 = vmatpush1.msra.mxu0 %v290
      %423 = vmatprep.subr.mxu0 0.0
      %424 = vmatpush1.msra.mxu0 %v289
      %425 = vmatprep.subr.mxu0 0.0
      %426 = vmatpush1.msra.mxu0 %v288
      %427 = vmatprep.subr.mxu0 0.0
      %428 = vmatpush1.msra.mxu0 %v287
      %429 = vmatprep.subr.mxu0 0.0
      %430 = vmatpush1.msra.mxu0 %v286
      %431 = vmatprep.subr.mxu0 0.0
      %432 = vmatpush1.msra.mxu0 %v285
      %433 = vmatprep.subr.mxu0 0.0
      %434 = vmatpush1.msra.mxu0 %v284
      %435 = vmatprep.subr.mxu0 0.0
      %436 = vmatpush1.msra.mxu0 %v283
      %437 = vmatprep.subr.mxu0 0.0
      %438 = vmatpush1.msra.mxu0 %v282
      %439 = vmatprep.subr.mxu0 0.0
      %440 = vmatpush1.msra.mxu0 %v281
      %441 = vmatprep.subr.mxu0 0.0
      %442 = vmatpush2.msra.mxu0 %v312
      %443 = vmatprep.subr.mxu0 0.0
      %444 = vmatpush2.msra.mxu0 %v311
      %445 = vmatprep.subr.mxu0 0.0
      %446 = vmatpush2.msra.mxu0 %v310
      %447 = vmatprep.subr.mxu0 0.0
      %448 = vmatpush2.msra.mxu0 %v309
      %449 = vmatprep.subr.mxu0 0.0
      %450 = vmatpush2.msra.mxu0 %v308
      %451 = vmatprep.subr.mxu0 0.0
      %452 = vmatpush2.msra.mxu0 %v307
      %453 = vmatprep.subr.mxu0 0.0
      %454 = vmatpush2.msra.mxu0 %v306
      %455 = vmatprep.subr.mxu0 0.0
      %456 = vmatpush2.msra.mxu0 %v305
      %457 = vmatprep.subr.mxu0 0.0
      %458 = vmatpush2.msra.mxu0 %v304
      %459 = vmatprep.subr.mxu0 0.0
      %460 = vmatpush2.msra.mxu0 %v303
      %461 = vmatprep.subr.mxu0 0.0
      %462 = vmatpush2.msra.mxu0 %v302
      %463 = vmatprep.subr.mxu0 0.0
      %464 = vmatpush2.msra.mxu0 %v301
      %465 = vmatprep.subr.mxu0 0.0
      %466 = vmatpush2.msra.mxu0 %v300
      %467 = vmatprep.subr.mxu0 0.0
      %468 = vmatpush2.msra.mxu0 %v299
      %469 = vmatprep.subr.mxu0 0.0
      %470 = vmatpush2.msra.mxu0 %v298
      %471 = vmatprep.subr.mxu0 0.0
      %472 = vmatpush2.msra.mxu0 %v297
      %473 = vmatprep.mubr.f32.mxu0 %v274
      %474 = vmatmul.mubr.f32.gmra.mxu0 %v273
      %v475 = vpop.f32.mrf.mxu0
      %v476 = vadd.f32 0.0, %v475
      %v477 = vpop.f32.mrf.mxu0
      %478 = vdwg.mxu0
      %479 = vmatprep.subr.mxu0 0.0
      %480 = vmatpush1.msra.mxu0 %v328
      %481 = vmatprep.subr.mxu0 0.0
      %482 = vmatpush1.msra.mxu0 %v327
      %483 = vmatprep.subr.mxu0 0.0
      %484 = vmatpush1.msra.mxu0 %v326
      %485 = vmatprep.subr.mxu0 0.0
      %486 = vmatpush1.msra.mxu0 %v325
      %487 = vmatprep.subr.mxu0 0.0
      %488 = vmatpush1.msra.mxu0 %v324
      %489 = vmatprep.subr.mxu0 0.0
      %490 = vmatpush1.msra.mxu0 %v323
      %491 = vmatprep.subr.mxu0 0.0
      %492 = vmatpush1.msra.mxu0 %v322
      %493 = vmatprep.subr.mxu0 0.0
      %494 = vmatpush1.msra.mxu0 %v321
      %495 = vmatprep.subr.mxu0 0.0
      %496 = vmatpush1.msra.mxu0 %v320
      %497 = vmatprep.subr.mxu0 0.0
      %498 = vmatpush1.msra.mxu0 %v319
      %499 = vmatprep.subr.mxu0 0.0
      %500 = vmatpush1.msra.mxu0 %v318
      %501 = vmatprep.subr.mxu0 0.0
      %502 = vmatpush1.msra.mxu0 %v317
      %503 = vmatprep.subr.mxu0 0.0
      %504 = vmatpush1.msra.mxu0 %v316
      %505 = vmatprep.subr.mxu0 0.0
      %506 = vmatpush1.msra.mxu0 %v315
      %507 = vmatprep.subr.mxu0 0.0
      %508 = vmatpush1.msra.mxu0 %v314
      %509 = vmatprep.subr.mxu0 0.0
      %510 = vmatpush1.msra.mxu0 %v313
      %511 = vmatprep.subr.mxu0 0.0
      %512 = vmatpush2.msra.mxu0 %v344
      %513 = vmatprep.subr.mxu0 0.0
      %514 = vmatpush2.msra.mxu0 %v343
      %515 = vmatprep.subr.mxu0 0.0
      %516 = vmatpush2.msra.mxu0 %v342
      %517 = vmatprep.subr.mxu0 0.0
      %518 = vmatpush2.msra.mxu0 %v341
      %519 = vmatprep.subr.mxu0 0.0
      %520 = vmatpush2.msra.mxu0 %v340
      %521 = vmatprep.subr.mxu0 0.0
      %522 = vmatpush2.msra.mxu0 %v339
      %523 = vmatprep.subr.mxu0 0.0
      %524 = vmatpush2.msra.mxu0 %v338
      %525 = vmatprep.subr.mxu0 0.0
      %526 = vmatpush2.msra.mxu0 %v337
      %527 = vmatprep.subr.mxu0 0.0
      %528 = vmatpush2.msra.mxu0 %v336
      %529 = vmatprep.subr.mxu0 0.0
      %530 = vmatpush2.msra.mxu0 %v335
      %531 = vmatprep.subr.mxu0 0.0
      %532 = vmatpush2.msra.mxu0 %v334
      %533 = vmatprep.subr.mxu0 0.0
      %534 = vmatpush2.msra.mxu0 %v333
      %535 = vmatprep.subr.mxu0 0.0
      %536 = vmatpush2.msra.mxu0 %v332
      %537 = vmatprep.subr.mxu0 0.0
      %538 = vmatpush2.msra.mxu0 %v331
      %539 = vmatprep.subr.mxu0 0.0
      %540 = vmatpush2.msra.mxu0 %v330
      %541 = vmatprep.subr.mxu0 0.0
      %542 = vmatpush2.msra.mxu0 %v329
      %543 = vmatprep.mubr.f32.mxu0 %v276
      %544 = vmatmul.mubr.f32.gmra.mxu0 %v275
      %v545 = vpop.f32.mrf.mxu0
      %v546 = vadd.f32 %v476, %v545
      %v547 = vpop.f32.mrf.mxu0
      %548 = vdwg.mxu0
      %549 = vmatprep.subr.mxu0 0.0
      %550 = vmatpush1.msra.mxu0 %v360
      %551 = vmatprep.subr.mxu0 0.0
      %552 = vmatpush1.msra.mxu0 %v359
      %553 = vmatprep.subr.mxu0 0.0
      %554 = vmatpush1.msra.mxu0 %v358
      %555 = vmatprep.subr.mxu0 0.0
      %556 = vmatpush1.msra.mxu0 %v357
      %557 = vmatprep.subr.mxu0 0.0
      %558 = vmatpush1.msra.mxu0 %v356
      %559 = vmatprep.subr.mxu0 0.0
      %560 = vmatpush1.msra.mxu0 %v355
      %561 = vmatprep.subr.mxu0 0.0
      %562 = vmatpush1.msra.mxu0 %v354
      %563 = vmatprep.subr.mxu0 0.0
      %564 = vmatpush1.msra.mxu0 %v353
      %565 = vmatprep.subr.mxu0 0.0
      %566 = vmatpush1.msra.mxu0 %v352
      %567 = vmatprep.subr.mxu0 0.0
      %568 = vmatpush1.msra.mxu0 %v351
      %569 = vmatprep.subr.mxu0 0.0
      %570 = vmatpush1.msra.mxu0 %v350
      %571 = vmatprep.subr.mxu0 0.0
      %572 = vmatpush1.msra.mxu0 %v349
      %573 = vmatprep.subr.mxu0 0.0
      %574 = vmatpush1.msra.mxu0 %v348
      %575 = vmatprep.subr.mxu0 0.0
      %576 = vmatpush1.msra.mxu0 %v347
      %577 = vmatprep.subr.mxu0 0.0
      %578 = vmatpush1.msra.mxu0 %v346
      %579 = vmatprep.subr.mxu0 0.0
      %580 = vmatpush1.msra.mxu0 %v345
      %581 = vmatprep.subr.mxu0 0.0
      %582 = vmatpush2.msra.mxu0 %v376
      %583 = vmatprep.subr.mxu0 0.0
      %584 = vmatpush2.msra.mxu0 %v375
      %585 = vmatprep.subr.mxu0 0.0
      %586 = vmatpush2.msra.mxu0 %v374
      %587 = vmatprep.subr.mxu0 0.0
      %588 = vmatpush2.msra.mxu0 %v373
      %589 = vmatprep.subr.mxu0 0.0
      %590 = vmatpush2.msra.mxu0 %v372
      %591 = vmatprep.subr.mxu0 0.0
      %592 = vmatpush2.msra.mxu0 %v371
      %593 = vmatprep.subr.mxu0 0.0
      %594 = vmatpush2.msra.mxu0 %v370
      %595 = vmatprep.subr.mxu0 0.0
      %596 = vmatpush2.msra.mxu0 %v369
      %597 = vmatprep.subr.mxu0 0.0
      %598 = vmatpush2.msra.mxu0 %v368
      %599 = vmatprep.subr.mxu0 0.0
      %600 = vmatpush2.msra.mxu0 %v367
      %601 = vmatprep.subr.mxu0 0.0
      %602 = vmatpush2.msra.mxu0 %v366
      %603 = vmatprep.subr.mxu0 0.0
      %604 = vmatpush2.msra.mxu0 %v365
      %605 = vmatprep.subr.mxu0 0.0
      %606 = vmatpush2.msra.mxu0 %v364
      %607 = vmatprep.subr.mxu0 0.0
      %608 = vmatpush2.msra.mxu0 %v363
      %609 = vmatprep.subr.mxu0 0.0
      %610 = vmatpush2.msra.mxu0 %v362
      %611 = vmatprep.subr.mxu0 0.0
      %612 = vmatpush2.msra.mxu0 %v361
      %613 = vmatprep.mubr.f32.mxu0 %v278
      %614 = vmatmul.mubr.f32.gmra.mxu0 %v277
      %v615 = vpop.f32.mrf.mxu0
      %v616 = vadd.f32 %v546, %v615
      %v617 = vpop.f32.mrf.mxu0
      %618 = vdwg.mxu0
      %619 = vmatprep.subr.mxu0 0.0
      %620 = vmatpush1.msra.mxu0 %v392
      %621 = vmatprep.subr.mxu0 0.0
      %622 = vmatpush1.msra.mxu0 %v391
      %623 = vmatprep.subr.mxu0 0.0
      %624 = vmatpush1.msra.mxu0 %v390
      %625 = vmatprep.subr.mxu0 0.0
      %626 = vmatpush1.msra.mxu0 %v389
      %627 = vmatprep.subr.mxu0 0.0
      %628 = vmatpush1.msra.mxu0 %v388
      %629 = vmatprep.subr.mxu0 0.0
      %630 = vmatpush1.msra.mxu0 %v387
      %631 = vmatprep.subr.mxu0 0.0
      %632 = vmatpush1.msra.mxu0 %v386
      %633 = vmatprep.subr.mxu0 0.0
      %634 = vmatpush1.msra.mxu0 %v385
      %635 = vmatprep.subr.mxu0 0.0
      %636 = vmatpush1.msra.mxu0 %v384
      %637 = vmatprep.subr.mxu0 0.0
      %638 = vmatpush1.msra.mxu0 %v383
      %639 = vmatprep.subr.mxu0 0.0
      %640 = vmatpush1.msra.mxu0 %v382
      %641 = vmatprep.subr.mxu0 0.0
      %642 = vmatpush1.msra.mxu0 %v381
      %643 = vmatprep.subr.mxu0 0.0
      %644 = vmatpush1.msra.mxu0 %v380
      %645 = vmatprep.subr.mxu0 0.0
      %646 = vmatpush1.msra.mxu0 %v379
      %647 = vmatprep.subr.mxu0 0.0
      %648 = vmatpush1.msra.mxu0 %v378
      %649 = vmatprep.subr.mxu0 0.0
      %650 = vmatpush1.msra.mxu0 %v377
      %651 = vmatprep.subr.mxu0 0.0
      %652 = vmatpush2.msra.mxu0 %v408
      %653 = vmatprep.subr.mxu0 0.0
      %654 = vmatpush2.msra.mxu0 %v407
      %655 = vmatprep.subr.mxu0 0.0
      %656 = vmatpush2.msra.mxu0 %v406
      %657 = vmatprep.subr.mxu0 0.0
      %658 = vmatpush2.msra.mxu0 %v405
      %659 = vmatprep.subr.mxu0 0.0
      %660 = vmatpush2.msra.mxu0 %v404
      %661 = vmatprep.subr.mxu0 0.0
      %662 = vmatpush2.msra.mxu0 %v403
      %663 = vmatprep.subr.mxu0 0.0
      %664 = vmatpush2.msra.mxu0 %v402
      %665 = vmatprep.subr.mxu0 0.0
      %666 = vmatpush2.msra.mxu0 %v401
      %667 = vmatprep.subr.mxu0 0.0
      %668 = vmatpush2.msra.mxu0 %v400
      %669 = vmatprep.subr.mxu0 0.0
      %670 = vmatpush2.msra.mxu0 %v399
      %671 = vmatprep.subr.mxu0 0.0
      %672 = vmatpush2.msra.mxu0 %v398
      %673 = vmatprep.subr.mxu0 0.0
      %674 = vmatpush2.msra.mxu0 %v397
      %675 = vmatprep.subr.mxu0 0.0
      %676 = vmatpush2.msra.mxu0 %v396
      %677 = vmatprep.subr.mxu0 0.0
      %678 = vmatpush2.msra.mxu0 %v395
      %679 = vmatprep.subr.mxu0 0.0
      %680 = vmatpush2.msra.mxu0 %v394
      %681 = vmatprep.subr.mxu0 0.0
      %682 = vmatpush2.msra.mxu0 %v393
      %683 = vmatprep.mubr.f32.mxu0 %v280
      %684 = vmatmul.mubr.f32.gmra.mxu0 %v279
      %v685 = vpop.f32.mrf.mxu0
      %v686 = vadd.f32 %v616, %v685
      %v687 = vpop.f32.mrf.mxu0
      %688 = vdwg.mxu0
      %v689 = vadd.f32 %v272, %v686
      %690 = vst [vmem:[%s258] sm:$0xff] %v689
      %p691 = scmp.eq.s32.totalorder %s21, 7
      // Predicated region
      $region33: #{patchgan_forward.18} parent=27 // pred_check
        %p692 = pneg %p691
      $region34: #{patchgan_forward.18} parent=27 // pred_check_branch
        %694 = sbr.rel (%p692) target = $region36
      $region35: #{patchgan_forward.18} parent=27 // pred_region
        %v695 = vld [vmem:[%s258] sm:$0xff]
        %v696 = vlaneseq
        %v697 = vshrl.u32 %v696, 7
        %s698 = smul.u32 %s20, 8
        %v699 = vstv %s698
        %v700 = vadd.s32 %v697, %v699
        %vm701 = vcmp.lt.s32.totalorder %v700, 8
        %v702 = vsel %vm701, %v695, 0.0
        %v703 = vadd.f32 %v702, 0.0
        %704 = vst [vmem:[%s262] sm:$0xff] %v703
        %v705 = vmul.f32 %v702, %v702
        %v706 = vadd.f32 %v705, 0.0
        %707 = vst [vmem:[%s266] sm:$0xff] %v706
      $region36: #{patchgan_forward.18} parent=27 // pred_fallthru
        _
      %p708 = scmp.lt.s32.totalorder %s20, 0
      %s709 = scalar_select %p708, %s20, 0
      %s710 = smul.addr %s709, 8
      %s711 = scalar_lea.vmem %s2, %s710
      %p712 = scmp.lt.s32.totalorder %s20, 0
      %s713 = scalar_select %p712, %s20, 0
      %s714 = smul.addr %s713, 8
      %s715 = scalar_lea.vmem %s3, %s714
      %p716 = scmp.lt.s32.totalorder %s20, 0
      %s717 = scalar_select %p716, %s20, 0
      %s718 = smul.addr %s717, 8
      %s719 = scalar_lea.vmem %s4, %s718
      // Predicated region
      $region37: #{patchgan_forward.18} parent=27 // pred_check
        %p720 = pneg %p100
      $region38: #{patchgan_forward.18} parent=27 // pred_check_branch
        %722 = sbr.rel (%p720) target = $region40
      $region39: #{patchgan_forward.18} parent=27 // pred_region
        _
      $region40: #{patchgan_forward.18} parent=27 // pred_fallthru
        _
      // Predicated region
      $region41: #{patchgan_forward.18} parent=27 // pred_check
        %p723 = pneg %p126
      $region42: #{patchgan_forward.18} parent=27 // pred_check_branch
        %725 = sbr.rel (%p723) target = $region44
      $region43: #{patchgan_forward.18} parent=27 // pred_region
        _
      $region44: #{patchgan_forward.18} parent=27 // pred_fallthru
        _
      // Predicated region
      $region45: #{patchgan_forward.18} parent=27 // pred_check
        %p726 = pneg %p152
      $region46: #{patchgan_forward.18} parent=27 // pred_check_branch
        %728 = sbr.rel (%p726) target = $region48
      $region47: #{patchgan_forward.18} parent=27 // pred_region
        _
      $region48: #{patchgan_forward.18} parent=27 // pred_fallthru
        _
      // Predicated region
      $region49: #{patchgan_forward.18} parent=27 // pred_check
        %p729 = pneg %p100
      $region50: #{patchgan_forward.18} parent=27 // pred_check_branch
        %731 = sbr.rel (%p729) target = $region52
      $region51: #{patchgan_forward.18} parent=27 // pred_region
        %p732 = scmp.lt.s32.totalorder %s20, 0
        %s733 = scalar_select %p732, %s20, 0
        %s734 = smul.addr %s733, 8
        %s735 = scalar_lea.vmem %s2, %s734
      $region52: #{patchgan_forward.18} parent=27 // pred_fallthru
        _
      // Predicated region
      $region53: #{patchgan_forward.18} parent=27 // pred_check
        %p736 = pneg %p126
      $region54: #{patchgan_forward.18} parent=27 // pred_check_branch
        %738 = sbr.rel (%p736) target = $region56
      $region55: #{patchgan_forward.18} parent=27 // pred_region
        %p739 = scmp.lt.s32.totalorder %s20, 0
        %s740 = scalar_select %p739, %s20, 0
        %s741 = smul.addr %s740, 8
        %s742 = scalar_lea.vmem %s3, %s741
      $region56: #{patchgan_forward.18} parent=27 // pred_fallthru
        _
      // Predicated region
      $region57: #{patchgan_forward.18} parent=27 // pred_check
        %p743 = pneg %p152
      $region58: #{patchgan_forward.18} parent=27 // pred_check_branch
        %745 = sbr.rel (%p743) target = $region60
      $region59: #{patchgan_forward.18} parent=27 // pred_region
        %p746 = scmp.lt.s32.totalorder %s20, 0
        %s747 = scalar_select %p746, %s20, 0
        %s748 = smul.addr %s747, 8
        %s749 = scalar_lea.vmem %s4, %s748
      $region60: #{patchgan_forward.18} parent=27 // pred_fallthru
        _
    $region28: #{patchgan_forward.18} parent=5 // pred_fallthru
      _
    %p750 = scmp.le.s32.totalorder 2, %s11
    // Predicated region
    $region61: #{patchgan_forward.18} parent=5 // pred_check
      %p751 = pneg %p750
    $region62: #{patchgan_forward.18} parent=5 // pred_check_branch
      %753 = sbr.rel (%p751) target = $region64
    $region63: #{patchgan_forward.18} parent=5 // pred_region
      %s754 = ssub.s32 %s11, 2
    $region64: #{patchgan_forward.18} parent=5 // pred_fallthru
      _
  $region6: #{patchgan_forward.18} parent=0 // loop_footer
    %s15 = sadd.s32 1, %s11
  $region7: #{patchgan_forward.18} parent=0 // loop_footer_branch
    %10 = sbr.rel target = $region3
  $region8: #{patchgan_forward.18} parent=0 // loop_exit
    _

// kernel: patchgan_forward.19
$region0: #{patchgan_forward.19}
  #allocation0 [shape = 'u32[]', space=smem, size = 0x4, offset = 0x4, fixed_abs, tag = 'smem constant byte address 0x4 - core index']
  #allocation1 [shape = 'u32[144,128]{1,0:T(1,128)}', space=vmem, size = 0x12000, scoped, tag = 'internal scratch']
  %s0 = inlined_call_operand.vmem [shape: f32[8,128], index: 0, kind: input, shape index: {}]
  %s1 = inlined_call_operand.vmem [shape: f32[1,128], index: 1, kind: input, shape index: {}]
  %s2 = inlined_call_operand.vmem [shape: f32[1,128], index: 2, kind: input, shape index: {}]
  %s3 = inlined_call_operand.vmem [shape: f32[8,1], index: 3, kind: output, shape index: {}]
  %s4 = sld [smem:[#allocation0]]
  $region22: #{patchgan_forward.19} parent=0
    _
  %s6 = ssub.s32 1, %s4
  %s7 = scalar_select 0, %s6, %s4
  // Predicated region
  $region2: #{patchgan_forward.19} parent=0 // pred_check
    _
  $region3: #{patchgan_forward.19} parent=0 // pred_check_branch
    %9 = sbr.rel (0) target = $region5
  $region4: #{patchgan_forward.19} parent=0 // pred_region
    _
  $region5: #{patchgan_forward.19} parent=0 // pred_fallthru
    _
  // Predicated region
  $region6: #{patchgan_forward.19} parent=0 // pred_check
    _
  $region7: #{patchgan_forward.19} parent=0 // pred_check_branch
    %11 = sbr.rel (0) target = $region9
  $region8: #{patchgan_forward.19} parent=0 // pred_region
    _
  $region9: #{patchgan_forward.19} parent=0 // pred_fallthru
    _
  // Predicated region
  $region10: #{patchgan_forward.19} parent=0 // pred_check
    _
  $region11: #{patchgan_forward.19} parent=0 // pred_check_branch
    %13 = sbr.rel (0) target = $region13
  $region12: #{patchgan_forward.19} parent=0 // pred_region
    _
  $region13: #{patchgan_forward.19} parent=0 // pred_fallthru
    _
  %v14 = vld [vmem:[%s0] sm:$0xff]
  %v15 = vld [vmem:[%s1] sm:$0x1]
  %v17 = vlaneseq
  %v18 = vshrl.u32 %v17, 7
  %v19 = vsub.s32 0, %v18
  %v20 = vrot.slane %v15, %v19
  %v22 = vmul.f32 %v14, %v20
  %v23 = vld [vmem:[%s2] sm:$0x1]
  %v25 = vlaneseq
  %v26 = vshrl.u32 %v25, 7
  %v27 = vsub.s32 0, %v26
  %v28 = vrot.slane %v23, %v27
  %v30 = vadd.f32 %v22, %v28
  %v31 = vsub.f32 0.0, %v30
  %v32 = vmul.f32 %v31, 1.442695
  %v33 = vpow.pop %v32
  %v34 = vadd.f32 %v33, 1.0
  %v35 = vrcp.pop %v34
  %v36 = vmul.f32 1.0, %v35
  %vm37 = vcmask 7168
  %38 = vst.msk [vmem:[%s3] sm:$0xff] %vm37, %v36
  // Predicated region
  $region14: #{patchgan_forward.19} parent=0 // pred_check
    _
  $region15: #{patchgan_forward.19} parent=0 // pred_check_branch
    %40 = sbr.rel (0) target = $region17
  $region16: #{patchgan_forward.19} parent=0 // pred_region
    _
  $region17: #{patchgan_forward.19} parent=0 // pred_fallthru
    _
  // Predicated region
  $region18: #{patchgan_forward.19} parent=0 // pred_check
    _
  $region19: #{patchgan_forward.19} parent=0 // pred_check_branch
    %42 = sbr.rel (0) target = $region21
  $region20: #{patchgan_forward.19} parent=0 // pred_region
    _
  $region21: #{patchgan_forward.19} parent=0 // pred_fallthru
    _

</llo_original>
